<compile_context>
chip_gen: v6e
topology: v6e:2x2x1
jax: 0.10.0
libtpu: 0.0.40
codegen_flags: <defaults>
</compile_context>

<pallas_src>
import functools

import jax
import jax.numpy as jnp
from jax.experimental import pallas as pl
from jax.experimental.pallas import tpu as pltpu


# ---------------------------------------------------------------------------
# Fused encoder kernel: all layers, both directions, full recurrence.
# Gate order follows PyTorch nn.LSTM: i, f, g, o; columns are interleaved per
# gate as [gate_fwd(H) | gate_bwd(H)] so each gate slice is a contiguous 2H
# block and the carried h/c are [B_pad, 2H] with fwd in cols 0:H, bwd in H:2H.
# ---------------------------------------------------------------------------
def _make_encoder_kernel(T, B_pad, D_max, H, n_layers):
    H2 = 2 * H        # concatenated fwd/bwd hidden width
    G2 = 8 * H        # combined gate width (4 gates x 2 directions)

    def kernel(x_ref, wih_ref, whh_ref, b_ref, y_ref, hn_ref, cn_ref,
               gx_ref, act_ref):
        # x_ref:   [T*B_pad, D_max]   time-major, batch/feature zero-padded
        # wih_ref: [L, D_max, 8H]     combined input weights (+bias folded in b)
        # whh_ref: [L, 2H, 8H]        block-diagonal recurrent weights
        # b_ref:   [L, 1, 8H]         b_ih + b_hh, both directions
        # y_ref:   [T*B_pad, 2H]      last layer outputs
        # hn_ref:  [2L, B_pad, H]     final hidden states (2*layer + dir)
        # cn_ref:  [2L, B_pad, H]     final cell states
        # gx_ref:  VMEM [T*B_pad, 8H] hoisted x @ W_ih + b for current layer
        # act_ref: VMEM [T*B_pad, 2H] current layer outputs / next layer input

        # Lane mask: True on forward-direction gate columns (col % 2H < H).
        cols = jax.lax.broadcasted_iota(jnp.int32, (B_pad, G2), 1)
        fwd_mask = (cols % H2) < H

        for layer in range(n_layers):
            # ---- hoisted input projection: one big matmul per layer --------
            if layer == 0:
                x_in = x_ref[...]                    # [T*B_pad, D_max]
                w = wih_ref[layer]                   # [D_max, 8H]
            else:
                x_in = act_ref[...]                  # [T*B_pad, 2H]
                w = wih_ref[layer][:H2, :]           # [2H, 8H]
            gx_ref[...] = (
                jnp.dot(x_in, w, preferred_element_type=jnp.float32)
                + b_ref[layer]
            )

            whh = whh_ref[layer]                     # [2H, 8H]

            # ---- fused fwd+bwd recurrence, fully unrolled over T -----------
            h = jnp.zeros((B_pad, H2), jnp.float32)
            c = jnp.zeros((B_pad, H2), jnp.float32)
            for s in range(T):
                of = s * B_pad                 # forward consumes time s
                ob = (T - 1 - s) * B_pad       # backward consumes time T-1-s
                hh = jnp.dot(h, whh, preferred_element_type=jnp.float32)
                gx = jnp.where(fwd_mask,
                               gx_ref[of:of + B_pad, :],
                               gx_ref[ob:ob + B_pad, :])
                gates = gx + hh                # [B_pad, 8H], lane-dense
                i_g = jax.nn.sigmoid(gates[:, 0 * H2:1 * H2])
                f_g = jax.nn.sigmoid(gates[:, 1 * H2:2 * H2])
                g_g = jnp.tanh(gates[:, 2 * H2:3 * H2])
                o_g = jax.nn.sigmoid(gates[:, 3 * H2:4 * H2])
                c = f_g * c + i_g * g_g
                h = o_g * jnp.tanh(c)
                # layer output: fwd half at time s, bwd half at time T-1-s
                act_ref[of:of + B_pad, 0:H] = h[:, 0:H]
                act_ref[ob:ob + B_pad, H:H2] = h[:, H:H2]

            # ---- final states (PyTorch layout index = 2*layer + direction) -
            hn_ref[2 * layer] = h[:, 0:H]
            hn_ref[2 * layer + 1] = h[:, H:H2]
            cn_ref[2 * layer] = c[:, 0:H]
            cn_ref[2 * layer + 1] = c[:, H:H2]

        # last layer's outputs -> y, one contiguous store
        y_ref[...] = act_ref[...]

    return kernel


# ---------------------------------------------------------------------------
# Parameter construction (deterministic, PyTorch-style uniform init).
# Stored per (layer, direction) as (wih [d_in,4H], whh [H,4H], b [1,4H]),
# i.e. transposed PyTorch weights with fused bias — so real nn.LSTM weights
# could be slotted in the same way.
# ---------------------------------------------------------------------------
def init_encoder_params(key, input_size, hidden_size, n_layers=4):
    H = hidden_size // 2  # per-direction hidden size
    bound = 1.0 / jnp.sqrt(jnp.float32(H))
    params = {}
    for layer in range(n_layers):
        d_in = input_size if layer == 0 else 2 * H
        for direction in range(2):
            key, k1, k2, k3, k4 = jax.random.split(key, 5)
            wih = jax.random.uniform(k1, (d_in, 4 * H), jnp.float32, -bound, bound)
            whh = jax.random.uniform(k2, (H, 4 * H), jnp.float32, -bound, bound)
            b_ih = jax.random.uniform(k3, (4 * H,), jnp.float32, -bound, bound)
            b_hh = jax.random.uniform(k4, (4 * H,), jnp.float32, -bound, bound)
            b = (b_ih + b_hh).reshape(1, 4 * H)
            params[(layer, direction)] = (wih, whh, b)
    return params


def _interleave_gates(a_f, a_b, H):
    """[..., 4H] fwd/bwd -> [..., 8H] with per-gate interleave [g_fwd | g_bwd]."""
    lead = a_f.shape[:-1]
    f4 = a_f.reshape(lead + (4, H))
    b4 = a_b.reshape(lead + (4, H))
    return jnp.concatenate([f4, b4], axis=-1).reshape(lead + (8 * H,))


def pack_encoder_params(params, input_size, hidden_size, n_layers=4):
    """Pack per-(layer, direction) params into the fused kernel's weight slabs."""
    H = hidden_size // 2
    H2 = 2 * H
    D_max = max(input_size, H2)
    zH = jnp.zeros((H, 4 * H), jnp.float32)
    wih_all, whh_all, b_all = [], [], []
    for layer in range(n_layers):
        wih_f, whh_f, b_f = params[(layer, 0)]
        wih_b, whh_b, b_b = params[(layer, 1)]
        pad = D_max - wih_f.shape[0]
        if pad:
            wih_f = jnp.pad(wih_f, ((0, pad), (0, 0)))
            wih_b = jnp.pad(wih_b, ((0, pad), (0, 0)))
        wih_all.append(_interleave_gates(wih_f, wih_b, H))            # [D_max, 8H]
        whh_all.append(_interleave_gates(
            jnp.concatenate([whh_f, zH], axis=0),                      # fwd rows 0:H
            jnp.concatenate([zH, whh_b], axis=0), H))                  # bwd rows H:2H
        b_all.append(_interleave_gates(b_f, b_b, H))                   # [1, 8H]
    return jnp.stack(wih_all), jnp.stack(whh_all), jnp.stack(b_all)


# ---------------------------------------------------------------------------
# Encoder forward pass: one fused Pallas call, thin XLA glue around it.
# ---------------------------------------------------------------------------
def encoder_forward(emb, params, n_layers=4):
    """emb: [B, T, input_size] (batch_first, like the PyTorch module)."""
    B, T, D0 = emb.shape
    H = params[(0, 0)][1].shape[0]        # per-direction hidden size
    H2 = 2 * H
    G2 = 8 * H
    D_max = max(D0, H2)
    B_pad = -(-B // 8) * 8                # pad batch to sublane multiple

    wih_all, whh_all, b_all = pack_encoder_params(params, D0, 2 * H, n_layers)

    # time-major, pad batch/features with zeros, flatten to [T*B_pad, D_max]
    x = jnp.transpose(emb, (1, 0, 2)).astype(jnp.float32)
    x = jnp.pad(x, ((0, 0), (0, B_pad - B), (0, D_max - D0)))
    x = x.reshape(T * B_pad, D_max)

    full = lambda shape: pl.BlockSpec(shape, lambda i: (0,) * len(shape))
    kernel = _make_encoder_kernel(T, B_pad, D_max, H, n_layers)

    y_flat, hn_pad, cn_pad = pl.pallas_call(
        kernel,
        grid=(1,),
        in_specs=[
            full((T * B_pad, D_max)),
            full((n_layers, D_max, G2)),
            full((n_layers, H2, G2)),
            full((n_layers, 1, G2)),
        ],
        out_specs=[
            full((T * B_pad, H2)),
            full((2 * n_layers, B_pad, H)),
            full((2 * n_layers, B_pad, H)),
        ],
        out_shape=(
            jax.ShapeDtypeStruct((T * B_pad, H2), jnp.float32),
            jax.ShapeDtypeStruct((2 * n_layers, B_pad, H), jnp.float32),
            jax.ShapeDtypeStruct((2 * n_layers, B_pad, H), jnp.float32),
        ),
        scratch_shapes=[
            pltpu.VMEM((T * B_pad, G2), jnp.float32),   # hoisted x@W_ih + b
            pltpu.VMEM((T * B_pad, H2), jnp.float32),   # inter-layer activations
        ],
        compiler_params=pltpu.CompilerParams(
            dimension_semantics=("arbitrary",)),
    )(x, wih_all, whh_all, b_all)

    y = jnp.transpose(y_flat.reshape(T, B_pad, H2)[:, :B, :], (1, 0, 2))
    h_n = hn_pad[:, :B, :]
    c_n = cn_pad[:, :B, :]
    return y, (h_n, c_n)


if __name__ == "__main__":
    B, T = 2, 8
    input_size = 32
    hidden_size = 32  # per-direction hidden = 16 -> combined gate width = 128
    n_layers = 4

    key = jax.random.PRNGKey(0)
    key, k_emb = jax.random.split(key)
    emb = jax.random.normal(k_emb, (B, T, input_size), jnp.float32)

    params = init_encoder_params(key, input_size, hidden_size, n_layers)

    fwd = jax.jit(functools.partial(encoder_forward, n_layers=n_layers))
    y, (h_n, c_n) = fwd(emb, params)

    jax.block_until_ready((y, h_n, c_n))
    assert y.shape == (B, T, hidden_size)
    assert h_n.shape == (2 * n_layers, B, hidden_size // 2)
    assert c_n.shape == (2 * n_layers, B, hidden_size // 2)
    print("KERNEL_OK")
</pallas_src>

<mosaic_0001>
module attributes {stable_mosaic.version = 11 : i64} {
  func.func @kernel(%arg0: i32, %arg1: memref<64x32xf32, #tpu.memory_space<vmem>>, %arg2: memref<4x32x128xf32, #tpu.memory_space<vmem>>, %arg3: memref<4x32x128xf32, #tpu.memory_space<vmem>>, %arg4: memref<4x1x128xf32, #tpu.memory_space<vmem>>, %arg5: memref<64x32xf32, #tpu.memory_space<vmem>>, %arg6: memref<8x8x16xf32, #tpu.memory_space<vmem>>, %arg7: memref<8x8x16xf32, #tpu.memory_space<vmem>>, %arg8: memref<64x128xf32, #tpu.memory_space<vmem>>, %arg9: memref<64x32xf32, #tpu.memory_space<vmem>>) attributes {dimension_semantics = [#tpu.dimension_semantics<arbitrary>], iteration_bounds = array<i64: 1>, scalar_prefetch = 0 : i64, scratch_operands = 2 : i64, tpu.core_type = #tpu.core_type<tc>, window_params = [{pipeline_mode = #tpu.pipeline_mode<synchronous>, transform_indices = @transform_0, window_bounds = array<i64: 64, 32>}, {pipeline_mode = #tpu.pipeline_mode<synchronous>, transform_indices = @transform_1, window_bounds = array<i64: 4, 32, 128>}, {pipeline_mode = #tpu.pipeline_mode<synchronous>, transform_indices = @transform_2, window_bounds = array<i64: 4, 32, 128>}, {pipeline_mode = #tpu.pipeline_mode<synchronous>, transform_indices = @transform_3, window_bounds = array<i64: 4, 1, 128>}, {pipeline_mode = #tpu.pipeline_mode<synchronous>, transform_indices = @transform_4, window_bounds = array<i64: 64, 32>}, {pipeline_mode = #tpu.pipeline_mode<synchronous>, transform_indices = @transform_5, window_bounds = array<i64: 8, 8, 16>}, {pipeline_mode = #tpu.pipeline_mode<synchronous>, transform_indices = @transform_6, window_bounds = array<i64: 8, 8, 16>}]} {
    %0 = tpu.iota {dimensions = array<i32: 1>} : vector<8x128xi32>
    %c32_i32 = arith.constant 32 : i32
    %c0_i32 = arith.constant 0 : i32
    %1 = arith.cmpi eq, %c32_i32, %c0_i32 : i32
    %c1_i32 = arith.constant 1 : i32
    %2 = arith.select %1, %c1_i32, %c32_i32 : i32
    %3 = vector.broadcast %2 : i32 to vector<8x128xi32>
    %4 = arith.remsi %0, %3 : vector<8x128xi32>
    %c0_i32_0 = arith.constant 0 : i32
    %5 = vector.broadcast %c0_i32_0 : i32 to vector<8x128xi32>
    %6 = arith.cmpi ne, %4, %5 : vector<8x128xi32>
    %c0_i32_1 = arith.constant 0 : i32
    %7 = vector.broadcast %c0_i32_1 : i32 to vector<8x128xi32>
    %8 = arith.cmpi slt, %4, %7 : vector<8x128xi32>
    %c0_i32_2 = arith.constant 0 : i32
    %9 = arith.cmpi slt, %2, %c0_i32_2 : i32
    %10 = vector.broadcast %9 : i1 to vector<8x128xi1>
    %11 = vector.broadcast %10 : vector<8x128xi1> to vector<8x128xi1>
    %12 = arith.xori %8, %11 : vector<8x128xi1>
    %13 = arith.andi %12, %6 : vector<8x128xi1>
    %14 = vector.broadcast %2 : i32 to vector<8x128xi32>
    %15 = arith.addi %4, %14 : vector<8x128xi32>
    %16 = arith.select %13, %15, %4 : vector<8x128xi1>, vector<8x128xi32>
    %c16_i32 = arith.constant 16 : i32
    %17 = vector.broadcast %c16_i32 : i32 to vector<8x128xi32>
    %18 = arith.cmpi slt, %16, %17 : vector<8x128xi32>
    %c0 = arith.constant 0 : index
    %c0_3 = arith.constant 0 : index
    %19 = vector.load %arg1[%c0, %c0_3] : memref<64x32xf32, #tpu.memory_space<vmem>>, vector<64x32xf32>
    %c0_4 = arith.constant 0 : index
    %c0_5 = arith.constant 0 : index
    %c0_6 = arith.constant 0 : index
    %20 = vector.load %arg2[%c0_4, %c0_5, %c0_6] : memref<4x32x128xf32, #tpu.memory_space<vmem>>, vector<1x32x128xf32>
    %21 = vector.shape_cast %20 : vector<1x32x128xf32> to vector<32x128xf32>
    %cst = arith.constant dense<0.000000e+00> : vector<64x128xf32>
    %22 = tpu.matmul %19, %21, %cst {dimension_numbers = #tpu.dot_dimension_numbers<[1], [0], [0], [1], [0, 0, 1, 1], [], []>} : vector<64x32xf32>, vector<32x128xf32>, vector<64x128xf32> -> vector<64x128xf32>
    %c0_7 = arith.constant 0 : index
    %c0_8 = arith.constant 0 : index
    %c0_9 = arith.constant 0 : index
    %23 = vector.load %arg4[%c0_7, %c0_8, %c0_9] : memref<4x1x128xf32, #tpu.memory_space<vmem>>, vector<1x1x128xf32>
    %24 = vector.shape_cast %23 : vector<1x1x128xf32> to vector<1x128xf32>
    %25 = vector.broadcast %24 : vector<1x128xf32> to vector<64x128xf32>
    %26 = arith.addf %22, %25 : vector<64x128xf32>
    %c0_10 = arith.constant 0 : index
    %c0_11 = arith.constant 0 : index
    %27 = vector.load %arg8[%c0_10, %c0_11] : memref<64x128xf32, #tpu.memory_space<vmem>>, vector<64x128xf32>
    tpu.vector_store %arg8[%c0_10, %c0_11], %26 {strides = array<i32>} : memref<64x128xf32, #tpu.memory_space<vmem>>, vector<64x128xf32>,
    %c0_12 = arith.constant 0 : index
    %c0_13 = arith.constant 0 : index
    %c0_14 = arith.constant 0 : index
    %28 = vector.load %arg3[%c0_12, %c0_13, %c0_14] : memref<4x32x128xf32, #tpu.memory_space<vmem>>, vector<1x32x128xf32>
    %29 = vector.shape_cast %28 : vector<1x32x128xf32> to vector<32x128xf32>
    %cst_15 = arith.constant 0.000000e+00 : f32
    %30 = vector.broadcast %cst_15 : f32 to vector<8x32xf32>
    %cst_16 = arith.constant 0.000000e+00 : f32
    %31 = vector.broadcast %cst_16 : f32 to vector<8x32xf32>
    %cst_17 = arith.constant dense<0.000000e+00> : vector<8x128xf32>
    %32 = tpu.matmul %30, %29, %cst_17 {dimension_numbers = #tpu.dot_dimension_numbers<[1], [0], [0], [1], [0, 0, 1, 1], [], []>} : vector<8x32xf32>, vector<32x128xf32>, vector<8x128xf32> -> vector<8x128xf32>
    %c0_18 = arith.constant 0 : index
    %c0_19 = arith.constant 0 : index
    %33 = vector.load %arg8[%c0_18, %c0_19] : memref<64x128xf32, #tpu.memory_space<vmem>>, vector<8x128xf32>
    %c56 = arith.constant 56 : index
    %c0_20 = arith.constant 0 : index
    %34 = vector.load %arg8[%c56, %c0_20] : memref<64x128xf32, #tpu.memory_space<vmem>>, vector<8x128xf32>
    %35 = arith.select %18, %33, %34 : vector<8x128xi1>, vector<8x128xf32>
    %36 = arith.addf %35, %32 : vector<8x128xf32>
    %37 = vector.extract_strided_slice %36 {offsets = [0, 0], sizes = [8, 32], strides = [1, 1]} : vector<8x128xf32> to vector<8x32xf32>
    %38 = arith.negf %37 : vector<8x32xf32>
    %39 = math.exp %38 : vector<8x32xf32>
    %cst_21 = arith.constant 1.000000e+00 : f32
    %40 = vector.broadcast %cst_21 : f32 to vector<8x32xf32>
    %41 = arith.addf %40, %39 : vector<8x32xf32>
    %42 = arith.divf %40, %41 : vector<8x32xf32>
    %43 = vector.extract_strided_slice %36 {offsets = [0, 32], sizes = [8, 32], strides = [1, 1]} : vector<8x128xf32> to vector<8x32xf32>
    %44 = arith.negf %43 : vector<8x32xf32>
    %45 = math.exp %44 : vector<8x32xf32>
    %cst_22 = arith.constant 1.000000e+00 : f32
    %46 = vector.broadcast %cst_22 : f32 to vector<8x32xf32>
    %47 = arith.addf %46, %45 : vector<8x32xf32>
    %48 = arith.divf %46, %47 : vector<8x32xf32>
    %49 = vector.extract_strided_slice %36 {offsets = [0, 64], sizes = [8, 32], strides = [1, 1]} : vector<8x128xf32> to vector<8x32xf32>
    %50 = math.tanh %49 : vector<8x32xf32>
    %51 = vector.extract_strided_slice %36 {offsets = [0, 96], sizes = [8, 32], strides = [1, 1]} : vector<8x128xf32> to vector<8x32xf32>
    %52 = arith.negf %51 : vector<8x32xf32>
    %53 = math.exp %52 : vector<8x32xf32>
    %cst_23 = arith.constant 1.000000e+00 : f32
    %54 = vector.broadcast %cst_23 : f32 to vector<8x32xf32>
    %55 = arith.addf %54, %53 : vector<8x32xf32>
    %56 = arith.divf %54, %55 : vector<8x32xf32>
    %57 = arith.mulf %48, %31 : vector<8x32xf32>
    %58 = arith.mulf %42, %50 : vector<8x32xf32>
    %59 = arith.addf %57, %58 : vector<8x32xf32>
    %60 = math.tanh %59 : vector<8x32xf32>
    %61 = arith.mulf %56, %60 : vector<8x32xf32>
    %62 = vector.extract_strided_slice %61 {offsets = [0, 0], sizes = [8, 16], strides = [1, 1]} : vector<8x32xf32> to vector<8x16xf32>
    %c0_24 = arith.constant 0 : index
    %c0_25 = arith.constant 0 : index
    %63 = vector.load %arg9[%c0_24, %c0_25] : memref<64x32xf32, #tpu.memory_space<vmem>>, vector<8x16xf32>
    tpu.vector_store %arg9[%c0_24, %c0_25], %62 {strides = array<i32>} : memref<64x32xf32, #tpu.memory_space<vmem>>, vector<8x16xf32>,
    %64 = vector.extract_strided_slice %61 {offsets = [0, 16], sizes = [8, 16], strides = [1, 1]} : vector<8x32xf32> to vector<8x16xf32>
    %c56_26 = arith.constant 56 : index
    %c16 = arith.constant 16 : index
    %65 = vector.load %arg9[%c56_26, %c16] : memref<64x32xf32, #tpu.memory_space<vmem>>, vector<8x16xf32>
    tpu.vector_store %arg9[%c56_26, %c16], %64 {strides = array<i32>} : memref<64x32xf32, #tpu.memory_space<vmem>>, vector<8x16xf32>,
    %cst_27 = arith.constant dense<0.000000e+00> : vector<8x128xf32>
    %66 = tpu.matmul %61, %29, %cst_27 {dimension_numbers = #tpu.dot_dimension_numbers<[1], [0], [0], [1], [0, 0, 1, 1], [], []>} : vector<8x32xf32>, vector<32x128xf32>, vector<8x128xf32> -> vector<8x128xf32>
    %c8 = arith.constant 8 : index
    %c0_28 = arith.constant 0 : index
    %67 = vector.load %arg8[%c8, %c0_28] : memref<64x128xf32, #tpu.memory_space<vmem>>, vector<8x128xf32>
    %c48 = arith.constant 48 : index
    %c0_29 = arith.constant 0 : index
    %68 = vector.load %arg8[%c48, %c0_29] : memref<64x128xf32, #tpu.memory_space<vmem>>, vector<8x128xf32>
    %69 = arith.select %18, %67, %68 : vector<8x128xi1>, vector<8x128xf32>
    %70 = arith.addf %69, %66 : vector<8x128xf32>
    %71 = vector.extract_strided_slice %70 {offsets = [0, 0], sizes = [8, 32], strides = [1, 1]} : vector<8x128xf32> to vector<8x32xf32>
    %72 = arith.negf %71 : vector<8x32xf32>
    %73 = math.exp %72 : vector<8x32xf32>
    %cst_30 = arith.constant 1.000000e+00 : f32
    %74 = vector.broadcast %cst_30 : f32 to vector<8x32xf32>
    %75 = arith.addf %74, %73 : vector<8x32xf32>
    %76 = arith.divf %74, %75 : vector<8x32xf32>
    %77 = vector.extract_strided_slice %70 {offsets = [0, 32], sizes = [8, 32], strides = [1, 1]} : vector<8x128xf32> to vector<8x32xf32>
    %78 = arith.negf %77 : vector<8x32xf32>
    %79 = math.exp %78 : vector<8x32xf32>
    %cst_31 = arith.constant 1.000000e+00 : f32
    %80 = vector.broadcast %cst_31 : f32 to vector<8x32xf32>
    %81 = arith.addf %80, %79 : vector<8x32xf32>
    %82 = arith.divf %80, %81 : vector<8x32xf32>
    %83 = vector.extract_strided_slice %70 {offsets = [0, 64], sizes = [8, 32], strides = [1, 1]} : vector<8x128xf32> to vector<8x32xf32>
    %84 = math.tanh %83 : vector<8x32xf32>
    %85 = vector.extract_strided_slice %70 {offsets = [0, 96], sizes = [8, 32], strides = [1, 1]} : vector<8x128xf32> to vector<8x32xf32>
    %86 = arith.negf %85 : vector<8x32xf32>
    %87 = math.exp %86 : vector<8x32xf32>
    %cst_32 = arith.constant 1.000000e+00 : f32
    %88 = vector.broadcast %cst_32 : f32 to vector<8x32xf32>
    %89 = arith.addf %88, %87 : vector<8x32xf32>
    %90 = arith.divf %88, %89 : vector<8x32xf32>
    %91 = arith.mulf %82, %59 : vector<8x32xf32>
    %92 = arith.mulf %76, %84 : vector<8x32xf32>
    %93 = arith.addf %91, %92 : vector<8x32xf32>
    %94 = math.tanh %93 : vector<8x32xf32>
    %95 = arith.mulf %90, %94 : vector<8x32xf32>
    %96 = vector.extract_strided_slice %95 {offsets = [0, 0], sizes = [8, 16], strides = [1, 1]} : vector<8x32xf32> to vector<8x16xf32>
    %c8_33 = arith.constant 8 : index
    %c0_34 = arith.constant 0 : index
    %97 = vector.load %arg9[%c8_33, %c0_34] : memref<64x32xf32, #tpu.memory_space<vmem>>, vector<8x16xf32>
    tpu.vector_store %arg9[%c8_33, %c0_34], %96 {strides = array<i32>} : memref<64x32xf32, #tpu.memory_space<vmem>>, vector<8x16xf32>,
    %98 = vector.extract_strided_slice %95 {offsets = [0, 16], sizes = [8, 16], strides = [1, 1]} : vector<8x32xf32> to vector<8x16xf32>
    %c48_35 = arith.constant 48 : index
    %c16_36 = arith.constant 16 : index
    %99 = vector.load %arg9[%c48_35, %c16_36] : memref<64x32xf32, #tpu.memory_space<vmem>>, vector<8x16xf32>
    tpu.vector_store %arg9[%c48_35, %c16_36], %98 {strides = array<i32>} : memref<64x32xf32, #tpu.memory_space<vmem>>, vector<8x16xf32>,
    %cst_37 = arith.constant dense<0.000000e+00> : vector<8x128xf32>
    %100 = tpu.matmul %95, %29, %cst_37 {dimension_numbers = #tpu.dot_dimension_numbers<[1], [0], [0], [1], [0, 0, 1, 1], [], []>} : vector<8x32xf32>, vector<32x128xf32>, vector<8x128xf32> -> vector<8x128xf32>
    %c16_38 = arith.constant 16 : index
    %c0_39 = arith.constant 0 : index
    %101 = vector.load %arg8[%c16_38, %c0_39] : memref<64x128xf32, #tpu.memory_space<vmem>>, vector<8x128xf32>
    %c40 = arith.constant 40 : index
    %c0_40 = arith.constant 0 : index
    %102 = vector.load %arg8[%c40, %c0_40] : memref<64x128xf32, #tpu.memory_space<vmem>>, vector<8x128xf32>
    %103 = arith.select %18, %101, %102 : vector<8x128xi1>, vector<8x128xf32>
    %104 = arith.addf %103, %100 : vector<8x128xf32>
    %105 = vector.extract_strided_slice %104 {offsets = [0, 0], sizes = [8, 32], strides = [1, 1]} : vector<8x128xf32> to vector<8x32xf32>
    %106 = arith.negf %105 : vector<8x32xf32>
    %107 = math.exp %106 : vector<8x32xf32>
    %cst_41 = arith.constant 1.000000e+00 : f32
    %108 = vector.broadcast %cst_41 : f32 to vector<8x32xf32>
    %109 = arith.addf %108, %107 : vector<8x32xf32>
    %110 = arith.divf %108, %109 : vector<8x32xf32>
    %111 = vector.extract_strided_slice %104 {offsets = [0, 32], sizes = [8, 32], strides = [1, 1]} : vector<8x128xf32> to vector<8x32xf32>
    %112 = arith.negf %111 : vector<8x32xf32>
    %113 = math.exp %112 : vector<8x32xf32>
    %cst_42 = arith.constant 1.000000e+00 : f32
    %114 = vector.broadcast %cst_42 : f32 to vector<8x32xf32>
    %115 = arith.addf %114, %113 : vector<8x32xf32>
    %116 = arith.divf %114, %115 : vector<8x32xf32>
    %117 = vector.extract_strided_slice %104 {offsets = [0, 64], sizes = [8, 32], strides = [1, 1]} : vector<8x128xf32> to vector<8x32xf32>
    %118 = math.tanh %117 : vector<8x32xf32>
    %119 = vector.extract_strided_slice %104 {offsets = [0, 96], sizes = [8, 32], strides = [1, 1]} : vector<8x128xf32> to vector<8x32xf32>
    %120 = arith.negf %119 : vector<8x32xf32>
    %121 = math.exp %120 : vector<8x32xf32>
    %cst_43 = arith.constant 1.000000e+00 : f32
    %122 = vector.broadcast %cst_43 : f32 to vector<8x32xf32>
    %123 = arith.addf %122, %121 : vector<8x32xf32>
    %124 = arith.divf %122, %123 : vector<8x32xf32>
    %125 = arith.mulf %116, %93 : vector<8x32xf32>
    %126 = arith.mulf %110, %118 : vector<8x32xf32>
    %127 = arith.addf %125, %126 : vector<8x32xf32>
    %128 = math.tanh %127 : vector<8x32xf32>
    %129 = arith.mulf %124, %128 : vector<8x32xf32>
    %130 = vector.extract_strided_slice %129 {offsets = [0, 0], sizes = [8, 16], strides = [1, 1]} : vector<8x32xf32> to vector<8x16xf32>
    %c16_44 = arith.constant 16 : index
    %c0_45 = arith.constant 0 : index
    %131 = vector.load %arg9[%c16_44, %c0_45] : memref<64x32xf32, #tpu.memory_space<vmem>>, vector<8x16xf32>
    tpu.vector_store %arg9[%c16_44, %c0_45], %130 {strides = array<i32>} : memref<64x32xf32, #tpu.memory_space<vmem>>, vector<8x16xf32>,
    %132 = vector.extract_strided_slice %129 {offsets = [0, 16], sizes = [8, 16], strides = [1, 1]} : vector<8x32xf32> to vector<8x16xf32>
    %c40_46 = arith.constant 40 : index
    %c16_47 = arith.constant 16 : index
    %133 = vector.load %arg9[%c40_46, %c16_47] : memref<64x32xf32, #tpu.memory_space<vmem>>, vector<8x16xf32>
    tpu.vector_store %arg9[%c40_46, %c16_47], %132 {strides = array<i32>} : memref<64x32xf32, #tpu.memory_space<vmem>>, vector<8x16xf32>,
    %cst_48 = arith.constant dense<0.000000e+00> : vector<8x128xf32>
    %134 = tpu.matmul %129, %29, %cst_48 {dimension_numbers = #tpu.dot_dimension_numbers<[1], [0], [0], [1], [0, 0, 1, 1], [], []>} : vector<8x32xf32>, vector<32x128xf32>, vector<8x128xf32> -> vector<8x128xf32>
    %c24 = arith.constant 24 : index
    %c0_49 = arith.constant 0 : index
    %135 = vector.load %arg8[%c24, %c0_49] : memref<64x128xf32, #tpu.memory_space<vmem>>, vector<8x128xf32>
    %c32 = arith.constant 32 : index
    %c0_50 = arith.constant 0 : index
    %136 = vector.load %arg8[%c32, %c0_50] : memref<64x128xf32, #tpu.memory_space<vmem>>, vector<8x128xf32>
    %137 = arith.select %18, %135, %136 : vector<8x128xi1>, vector<8x128xf32>
    %138 = arith.addf %137, %134 : vector<8x128xf32>
    %139 = vector.extract_strided_slice %138 {offsets = [0, 0], sizes = [8, 32], strides = [1, 1]} : vector<8x128xf32> to vector<8x32xf32>
    %140 = arith.negf %139 : vector<8x32xf32>
    %141 = math.exp %140 : vector<8x32xf32>
    %cst_51 = arith.constant 1.000000e+00 : f32
    %142 = vector.broadcast %cst_51 : f32 to vector<8x32xf32>
    %143 = arith.addf %142, %141 : vector<8x32xf32>
    %144 = arith.divf %142, %143 : vector<8x32xf32>
    %145 = vector.extract_strided_slice %138 {offsets = [0, 32], sizes = [8, 32], strides = [1, 1]} : vector<8x128xf32> to vector<8x32xf32>
    %146 = arith.negf %145 : vector<8x32xf32>
    %147 = math.exp %146 : vector<8x32xf32>
    %cst_52 = arith.constant 1.000000e+00 : f32
    %148 = vector.broadcast %cst_52 : f32 to vector<8x32xf32>
    %149 = arith.addf %148, %147 : vector<8x32xf32>
    %150 = arith.divf %148, %149 : vector<8x32xf32>
    %151 = vector.extract_strided_slice %138 {offsets = [0, 64], sizes = [8, 32], strides = [1, 1]} : vector<8x128xf32> to vector<8x32xf32>
    %152 = math.tanh %151 : vector<8x32xf32>
    %153 = vector.extract_strided_slice %138 {offsets = [0, 96], sizes = [8, 32], strides = [1, 1]} : vector<8x128xf32> to vector<8x32xf32>
    %154 = arith.negf %153 : vector<8x32xf32>
    %155 = math.exp %154 : vector<8x32xf32>
    %cst_53 = arith.constant 1.000000e+00 : f32
    %156 = vector.broadcast %cst_53 : f32 to vector<8x32xf32>
    %157 = arith.addf %156, %155 : vector<8x32xf32>
    %158 = arith.divf %156, %157 : vector<8x32xf32>
    %159 = arith.mulf %150, %127 : vector<8x32xf32>
    %160 = arith.mulf %144, %152 : vector<8x32xf32>
    %161 = arith.addf %159, %160 : vector<8x32xf32>
    %162 = math.tanh %161 : vector<8x32xf32>
    %163 = arith.mulf %158, %162 : vector<8x32xf32>
    %164 = vector.extract_strided_slice %163 {offsets = [0, 0], sizes = [8, 16], strides = [1, 1]} : vector<8x32xf32> to vector<8x16xf32>
    %c24_54 = arith.constant 24 : index
    %c0_55 = arith.constant 0 : index
    %165 = vector.load %arg9[%c24_54, %c0_55] : memref<64x32xf32, #tpu.memory_space<vmem>>, vector<8x16xf32>
    tpu.vector_store %arg9[%c24_54, %c0_55], %164 {strides = array<i32>} : memref<64x32xf32, #tpu.memory_space<vmem>>, vector<8x16xf32>,
    %166 = vector.extract_strided_slice %163 {offsets = [0, 16], sizes = [8, 16], strides = [1, 1]} : vector<8x32xf32> to vector<8x16xf32>
    %c32_56 = arith.constant 32 : index
    %c16_57 = arith.constant 16 : index
    %167 = vector.load %arg9[%c32_56, %c16_57] : memref<64x32xf32, #tpu.memory_space<vmem>>, vector<8x16xf32>
    tpu.vector_store %arg9[%c32_56, %c16_57], %166 {strides = array<i32>} : memref<64x32xf32, #tpu.memory_space<vmem>>, vector<8x16xf32>,
    %cst_58 = arith.constant dense<0.000000e+00> : vector<8x128xf32>
    %168 = tpu.matmul %163, %29, %cst_58 {dimension_numbers = #tpu.dot_dimension_numbers<[1], [0], [0], [1], [0, 0, 1, 1], [], []>} : vector<8x32xf32>, vector<32x128xf32>, vector<8x128xf32> -> vector<8x128xf32>
    %c32_59 = arith.constant 32 : index
    %c0_60 = arith.constant 0 : index
    %169 = vector.load %arg8[%c32_59, %c0_60] : memref<64x128xf32, #tpu.memory_space<vmem>>, vector<8x128xf32>
    %c24_61 = arith.constant 24 : index
    %c0_62 = arith.constant 0 : index
    %170 = vector.load %arg8[%c24_61, %c0_62] : memref<64x128xf32, #tpu.memory_space<vmem>>, vector<8x128xf32>
    %171 = arith.select %18, %169, %170 : vector<8x128xi1>, vector<8x128xf32>
    %172 = arith.addf %171, %168 : vector<8x128xf32>
    %173 = vector.extract_strided_slice %172 {offsets = [0, 0], sizes = [8, 32], strides = [1, 1]} : vector<8x128xf32> to vector<8x32xf32>
    %174 = arith.negf %173 : vector<8x32xf32>
    %175 = math.exp %174 : vector<8x32xf32>
    %cst_63 = arith.constant 1.000000e+00 : f32
    %176 = vector.broadcast %cst_63 : f32 to vector<8x32xf32>
    %177 = arith.addf %176, %175 : vector<8x32xf32>
    %178 = arith.divf %176, %177 : vector<8x32xf32>
    %179 = vector.extract_strided_slice %172 {offsets = [0, 32], sizes = [8, 32], strides = [1, 1]} : vector<8x128xf32> to vector<8x32xf32>
    %180 = arith.negf %179 : vector<8x32xf32>
    %181 = math.exp %180 : vector<8x32xf32>
    %cst_64 = arith.constant 1.000000e+00 : f32
    %182 = vector.broadcast %cst_64 : f32 to vector<8x32xf32>
    %183 = arith.addf %182, %181 : vector<8x32xf32>
    %184 = arith.divf %182, %183 : vector<8x32xf32>
    %185 = vector.extract_strided_slice %172 {offsets = [0, 64], sizes = [8, 32], strides = [1, 1]} : vector<8x128xf32> to vector<8x32xf32>
    %186 = math.tanh %185 : vector<8x32xf32>
    %187 = vector.extract_strided_slice %172 {offsets = [0, 96], sizes = [8, 32], strides = [1, 1]} : vector<8x128xf32> to vector<8x32xf32>
    %188 = arith.negf %187 : vector<8x32xf32>
    %189 = math.exp %188 : vector<8x32xf32>
    %cst_65 = arith.constant 1.000000e+00 : f32
    %190 = vector.broadcast %cst_65 : f32 to vector<8x32xf32>
    %191 = arith.addf %190, %189 : vector<8x32xf32>
    %192 = arith.divf %190, %191 : vector<8x32xf32>
    %193 = arith.mulf %184, %161 : vector<8x32xf32>
    %194 = arith.mulf %178, %186 : vector<8x32xf32>
    %195 = arith.addf %193, %194 : vector<8x32xf32>
    %196 = math.tanh %195 : vector<8x32xf32>
    %197 = arith.mulf %192, %196 : vector<8x32xf32>
    %198 = vector.extract_strided_slice %197 {offsets = [0, 0], sizes = [8, 16], strides = [1, 1]} : vector<8x32xf32> to vector<8x16xf32>
    %c32_66 = arith.constant 32 : index
    %c0_67 = arith.constant 0 : index
    %199 = vector.load %arg9[%c32_66, %c0_67] : memref<64x32xf32, #tpu.memory_space<vmem>>, vector<8x16xf32>
    tpu.vector_store %arg9[%c32_66, %c0_67], %198 {strides = array<i32>} : memref<64x32xf32, #tpu.memory_space<vmem>>, vector<8x16xf32>,
    %200 = vector.extract_strided_slice %197 {offsets = [0, 16], sizes = [8, 16], strides = [1, 1]} : vector<8x32xf32> to vector<8x16xf32>
    %c24_68 = arith.constant 24 : index
    %c16_69 = arith.constant 16 : index
    %201 = vector.load %arg9[%c24_68, %c16_69] : memref<64x32xf32, #tpu.memory_space<vmem>>, vector<8x16xf32>
    tpu.vector_store %arg9[%c24_68, %c16_69], %200 {strides = array<i32>} : memref<64x32xf32, #tpu.memory_space<vmem>>, vector<8x16xf32>,
    %cst_70 = arith.constant dense<0.000000e+00> : vector<8x128xf32>
    %202 = tpu.matmul %197, %29, %cst_70 {dimension_numbers = #tpu.dot_dimension_numbers<[1], [0], [0], [1], [0, 0, 1, 1], [], []>} : vector<8x32xf32>, vector<32x128xf32>, vector<8x128xf32> -> vector<8x128xf32>
    %c40_71 = arith.constant 40 : index
    %c0_72 = arith.constant 0 : index
    %203 = vector.load %arg8[%c40_71, %c0_72] : memref<64x128xf32, #tpu.memory_space<vmem>>, vector<8x128xf32>
    %c16_73 = arith.constant 16 : index
    %c0_74 = arith.constant 0 : index
    %204 = vector.load %arg8[%c16_73, %c0_74] : memref<64x128xf32, #tpu.memory_space<vmem>>, vector<8x128xf32>
    %205 = arith.select %18, %203, %204 : vector<8x128xi1>, vector<8x128xf32>
    %206 = arith.addf %205, %202 : vector<8x128xf32>
    %207 = vector.extract_strided_slice %206 {offsets = [0, 0], sizes = [8, 32], strides = [1, 1]} : vector<8x128xf32> to vector<8x32xf32>
    %208 = arith.negf %207 : vector<8x32xf32>
    %209 = math.exp %208 : vector<8x32xf32>
    %cst_75 = arith.constant 1.000000e+00 : f32
    %210 = vector.broadcast %cst_75 : f32 to vector<8x32xf32>
    %211 = arith.addf %210, %209 : vector<8x32xf32>
    %212 = arith.divf %210, %211 : vector<8x32xf32>
    %213 = vector.extract_strided_slice %206 {offsets = [0, 32], sizes = [8, 32], strides = [1, 1]} : vector<8x128xf32> to vector<8x32xf32>
    %214 = arith.negf %213 : vector<8x32xf32>
    %215 = math.exp %214 : vector<8x32xf32>
    %cst_76 = arith.constant 1.000000e+00 : f32
    %216 = vector.broadcast %cst_76 : f32 to vector<8x32xf32>
    %217 = arith.addf %216, %215 : vector<8x32xf32>
    %218 = arith.divf %216, %217 : vector<8x32xf32>
    %219 = vector.extract_strided_slice %206 {offsets = [0, 64], sizes = [8, 32], strides = [1, 1]} : vector<8x128xf32> to vector<8x32xf32>
    %220 = math.tanh %219 : vector<8x32xf32>
    %221 = vector.extract_strided_slice %206 {offsets = [0, 96], sizes = [8, 32], strides = [1, 1]} : vector<8x128xf32> to vector<8x32xf32>
    %222 = arith.negf %221 : vector<8x32xf32>
    %223 = math.exp %222 : vector<8x32xf32>
    %cst_77 = arith.constant 1.000000e+00 : f32
    %224 = vector.broadcast %cst_77 : f32 to vector<8x32xf32>
    %225 = arith.addf %224, %223 : vector<8x32xf32>
    %226 = arith.divf %224, %225 : vector<8x32xf32>
    %227 = arith.mulf %218, %195 : vector<8x32xf32>
    %228 = arith.mulf %212, %220 : vector<8x32xf32>
    %229 = arith.addf %227, %228 : vector<8x32xf32>
    %230 = math.tanh %229 : vector<8x32xf32>
    %231 = arith.mulf %226, %230 : vector<8x32xf32>
    %232 = vector.extract_strided_slice %231 {offsets = [0, 0], sizes = [8, 16], strides = [1, 1]} : vector<8x32xf32> to vector<8x16xf32>
    %c40_78 = arith.constant 40 : index
    %c0_79 = arith.constant 0 : index
    %233 = vector.load %arg9[%c40_78, %c0_79] : memref<64x32xf32, #tpu.memory_space<vmem>>, vector<8x16xf32>
    tpu.vector_store %arg9[%c40_78, %c0_79], %232 {strides = array<i32>} : memref<64x32xf32, #tpu.memory_space<vmem>>, vector<8x16xf32>,
    %234 = vector.extract_strided_slice %231 {offsets = [0, 16], sizes = [8, 16], strides = [1, 1]} : vector<8x32xf32> to vector<8x16xf32>
    %c16_80 = arith.constant 16 : index
    %c16_81 = arith.constant 16 : index
    %235 = vector.load %arg9[%c16_80, %c16_81] : memref<64x32xf32, #tpu.memory_space<vmem>>, vector<8x16xf32>
    tpu.vector_store %arg9[%c16_80, %c16_81], %234 {strides = array<i32>} : memref<64x32xf32, #tpu.memory_space<vmem>>, vector<8x16xf32>,
    %cst_82 = arith.constant dense<0.000000e+00> : vector<8x128xf32>
    %236 = tpu.matmul %231, %29, %cst_82 {dimension_numbers = #tpu.dot_dimension_numbers<[1], [0], [0], [1], [0, 0, 1, 1], [], []>} : vector<8x32xf32>, vector<32x128xf32>, vector<8x128xf32> -> vector<8x128xf32>
    %c48_83 = arith.constant 48 : index
    %c0_84 = arith.constant 0 : index
    %237 = vector.load %arg8[%c48_83, %c0_84] : memref<64x128xf32, #tpu.memory_space<vmem>>, vector<8x128xf32>
    %c8_85 = arith.constant 8 : index
    %c0_86 = arith.constant 0 : index
    %238 = vector.load %arg8[%c8_85, %c0_86] : memref<64x128xf32, #tpu.memory_space<vmem>>, vector<8x128xf32>
    %239 = arith.select %18, %237, %238 : vector<8x128xi1>, vector<8x128xf32>
    %240 = arith.addf %239, %236 : vector<8x128xf32>
    %241 = vector.extract_strided_slice %240 {offsets = [0, 0], sizes = [8, 32], strides = [1, 1]} : vector<8x128xf32> to vector<8x32xf32>
    %242 = arith.negf %241 : vector<8x32xf32>
    %243 = math.exp %242 : vector<8x32xf32>
    %cst_87 = arith.constant 1.000000e+00 : f32
    %244 = vector.broadcast %cst_87 : f32 to vector<8x32xf32>
    %245 = arith.addf %244, %243 : vector<8x32xf32>
    %246 = arith.divf %244, %245 : vector<8x32xf32>
    %247 = vector.extract_strided_slice %240 {offsets = [0, 32], sizes = [8, 32], strides = [1, 1]} : vector<8x128xf32> to vector<8x32xf32>
    %248 = arith.negf %247 : vector<8x32xf32>
    %249 = math.exp %248 : vector<8x32xf32>
    %cst_88 = arith.constant 1.000000e+00 : f32
    %250 = vector.broadcast %cst_88 : f32 to vector<8x32xf32>
    %251 = arith.addf %250, %249 : vector<8x32xf32>
    %252 = arith.divf %250, %251 : vector<8x32xf32>
    %253 = vector.extract_strided_slice %240 {offsets = [0, 64], sizes = [8, 32], strides = [1, 1]} : vector<8x128xf32> to vector<8x32xf32>
    %254 = math.tanh %253 : vector<8x32xf32>
    %255 = vector.extract_strided_slice %240 {offsets = [0, 96], sizes = [8, 32], strides = [1, 1]} : vector<8x128xf32> to vector<8x32xf32>
    %256 = arith.negf %255 : vector<8x32xf32>
    %257 = math.exp %256 : vector<8x32xf32>
    %cst_89 = arith.constant 1.000000e+00 : f32
    %258 = vector.broadcast %cst_89 : f32 to vector<8x32xf32>
    %259 = arith.addf %258, %257 : vector<8x32xf32>
    %260 = arith.divf %258, %259 : vector<8x32xf32>
    %261 = arith.mulf %252, %229 : vector<8x32xf32>
    %262 = arith.mulf %246, %254 : vector<8x32xf32>
    %263 = arith.addf %261, %262 : vector<8x32xf32>
    %264 = math.tanh %263 : vector<8x32xf32>
    %265 = arith.mulf %260, %264 : vector<8x32xf32>
    %266 = vector.extract_strided_slice %265 {offsets = [0, 0], sizes = [8, 16], strides = [1, 1]} : vector<8x32xf32> to vector<8x16xf32>
    %c48_90 = arith.constant 48 : index
    %c0_91 = arith.constant 0 : index
    %267 = vector.load %arg9[%c48_90, %c0_91] : memref<64x32xf32, #tpu.memory_space<vmem>>, vector<8x16xf32>
    tpu.vector_store %arg9[%c48_90, %c0_91], %266 {strides = array<i32>} : memref<64x32xf32, #tpu.memory_space<vmem>>, vector<8x16xf32>,
    %268 = vector.extract_strided_slice %265 {offsets = [0, 16], sizes = [8, 16], strides = [1, 1]} : vector<8x32xf32> to vector<8x16xf32>
    %c8_92 = arith.constant 8 : index
    %c16_93 = arith.constant 16 : index
    %269 = vector.load %arg9[%c8_92, %c16_93] : memref<64x32xf32, #tpu.memory_space<vmem>>, vector<8x16xf32>
    tpu.vector_store %arg9[%c8_92, %c16_93], %268 {strides = array<i32>} : memref<64x32xf32, #tpu.memory_space<vmem>>, vector<8x16xf32>,
    %cst_94 = arith.constant dense<0.000000e+00> : vector<8x128xf32>
    %270 = tpu.matmul %265, %29, %cst_94 {dimension_numbers = #tpu.dot_dimension_numbers<[1], [0], [0], [1], [0, 0, 1, 1], [], []>} : vector<8x32xf32>, vector<32x128xf32>, vector<8x128xf32> -> vector<8x128xf32>
    %c56_95 = arith.constant 56 : index
    %c0_96 = arith.constant 0 : index
    %271 = vector.load %arg8[%c56_95, %c0_96] : memref<64x128xf32, #tpu.memory_space<vmem>>, vector<8x128xf32>
    %c0_97 = arith.constant 0 : index
    %c0_98 = arith.constant 0 : index
    %272 = vector.load %arg8[%c0_97, %c0_98] : memref<64x128xf32, #tpu.memory_space<vmem>>, vector<8x128xf32>
    %273 = arith.select %18, %271, %272 : vector<8x128xi1>, vector<8x128xf32>
    %274 = arith.addf %273, %270 : vector<8x128xf32>
    %275 = vector.extract_strided_slice %274 {offsets = [0, 0], sizes = [8, 32], strides = [1, 1]} : vector<8x128xf32> to vector<8x32xf32>
    %276 = arith.negf %275 : vector<8x32xf32>
    %277 = math.exp %276 : vector<8x32xf32>
    %cst_99 = arith.constant 1.000000e+00 : f32
    %278 = vector.broadcast %cst_99 : f32 to vector<8x32xf32>
    %279 = arith.addf %278, %277 : vector<8x32xf32>
    %280 = arith.divf %278, %279 : vector<8x32xf32>
    %281 = vector.extract_strided_slice %274 {offsets = [0, 32], sizes = [8, 32], strides = [1, 1]} : vector<8x128xf32> to vector<8x32xf32>
    %282 = arith.negf %281 : vector<8x32xf32>
    %283 = math.exp %282 : vector<8x32xf32>
    %cst_100 = arith.constant 1.000000e+00 : f32
    %284 = vector.broadcast %cst_100 : f32 to vector<8x32xf32>
    %285 = arith.addf %284, %283 : vector<8x32xf32>
    %286 = arith.divf %284, %285 : vector<8x32xf32>
    %287 = vector.extract_strided_slice %274 {offsets = [0, 64], sizes = [8, 32], strides = [1, 1]} : vector<8x128xf32> to vector<8x32xf32>
    %288 = math.tanh %287 : vector<8x32xf32>
    %289 = vector.extract_strided_slice %274 {offsets = [0, 96], sizes = [8, 32], strides = [1, 1]} : vector<8x128xf32> to vector<8x32xf32>
    %290 = arith.negf %289 : vector<8x32xf32>
    %291 = math.exp %290 : vector<8x32xf32>
    %cst_101 = arith.constant 1.000000e+00 : f32
    %292 = vector.broadcast %cst_101 : f32 to vector<8x32xf32>
    %293 = arith.addf %292, %291 : vector<8x32xf32>
    %294 = arith.divf %292, %293 : vector<8x32xf32>
    %295 = arith.mulf %286, %263 : vector<8x32xf32>
    %296 = arith.mulf %280, %288 : vector<8x32xf32>
    %297 = arith.addf %295, %296 : vector<8x32xf32>
    %298 = math.tanh %297 : vector<8x32xf32>
    %299 = arith.mulf %294, %298 : vector<8x32xf32>
    %300 = vector.extract_strided_slice %299 {offsets = [0, 0], sizes = [8, 16], strides = [1, 1]} : vector<8x32xf32> to vector<8x16xf32>
    %c56_102 = arith.constant 56 : index
    %c0_103 = arith.constant 0 : index
    %301 = vector.load %arg9[%c56_102, %c0_103] : memref<64x32xf32, #tpu.memory_space<vmem>>, vector<8x16xf32>
    tpu.vector_store %arg9[%c56_102, %c0_103], %300 {strides = array<i32>} : memref<64x32xf32, #tpu.memory_space<vmem>>, vector<8x16xf32>,
    %302 = vector.extract_strided_slice %299 {offsets = [0, 16], sizes = [8, 16], strides = [1, 1]} : vector<8x32xf32> to vector<8x16xf32>
    %c0_104 = arith.constant 0 : index
    %c16_105 = arith.constant 16 : index
    %303 = vector.load %arg9[%c0_104, %c16_105] : memref<64x32xf32, #tpu.memory_space<vmem>>, vector<8x16xf32>
    tpu.vector_store %arg9[%c0_104, %c16_105], %302 {strides = array<i32>} : memref<64x32xf32, #tpu.memory_space<vmem>>, vector<8x16xf32>,
    %304 = vector.extract_strided_slice %299 {offsets = [0, 0], sizes = [8, 16], strides = [1, 1]} : vector<8x32xf32> to vector<8x16xf32>
    %c0_106 = arith.constant 0 : index
    %c0_107 = arith.constant 0 : index
    %c0_108 = arith.constant 0 : index
    %305 = vector.load %arg6[%c0_106, %c0_107, %c0_108] : memref<8x8x16xf32, #tpu.memory_space<vmem>>, vector<1x8x16xf32>
    %306 = vector.shape_cast %305 : vector<1x8x16xf32> to vector<8x16xf32>
    %307 = vector.shape_cast %304 : vector<8x16xf32> to vector<1x8x16xf32>
    tpu.vector_store %arg6[%c0_106, %c0_107, %c0_108], %307 {strides = array<i32>} : memref<8x8x16xf32, #tpu.memory_space<vmem>>, vector<1x8x16xf32>,
    %308 = vector.extract_strided_slice %299 {offsets = [0, 16], sizes = [8, 16], strides = [1, 1]} : vector<8x32xf32> to vector<8x16xf32>
    %c1 = arith.constant 1 : index
    %c0_109 = arith.constant 0 : index
    %c0_110 = arith.constant 0 : index
    %309 = vector.load %arg6[%c1, %c0_109, %c0_110] : memref<8x8x16xf32, #tpu.memory_space<vmem>>, vector<1x8x16xf32>
    %310 = vector.shape_cast %309 : vector<1x8x16xf32> to vector<8x16xf32>
    %311 = vector.shape_cast %308 : vector<8x16xf32> to vector<1x8x16xf32>
    tpu.vector_store %arg6[%c1, %c0_109, %c0_110], %311 {strides = array<i32>} : memref<8x8x16xf32, #tpu.memory_space<vmem>>, vector<1x8x16xf32>,
    %312 = vector.extract_strided_slice %297 {offsets = [0, 0], sizes = [8, 16], strides = [1, 1]} : vector<8x32xf32> to vector<8x16xf32>
    %c0_111 = arith.constant 0 : index
    %c0_112 = arith.constant 0 : index
    %c0_113 = arith.constant 0 : index
    %313 = vector.load %arg7[%c0_111, %c0_112, %c0_113] : memref<8x8x16xf32, #tpu.memory_space<vmem>>, vector<1x8x16xf32>
    %314 = vector.shape_cast %313 : vector<1x8x16xf32> to vector<8x16xf32>
    %315 = vector.shape_cast %312 : vector<8x16xf32> to vector<1x8x16xf32>
    tpu.vector_store %arg7[%c0_111, %c0_112, %c0_113], %315 {strides = array<i32>} : memref<8x8x16xf32, #tpu.memory_space<vmem>>, vector<1x8x16xf32>,
    %316 = vector.extract_strided_slice %297 {offsets = [0, 16], sizes = [8, 16], strides = [1, 1]} : vector<8x32xf32> to vector<8x16xf32>
    %c1_114 = arith.constant 1 : index
    %c0_115 = arith.constant 0 : index
    %c0_116 = arith.constant 0 : index
    %317 = vector.load %arg7[%c1_114, %c0_115, %c0_116] : memref<8x8x16xf32, #tpu.memory_space<vmem>>, vector<1x8x16xf32>
    %318 = vector.shape_cast %317 : vector<1x8x16xf32> to vector<8x16xf32>
    %319 = vector.shape_cast %316 : vector<8x16xf32> to vector<1x8x16xf32>
    tpu.vector_store %arg7[%c1_114, %c0_115, %c0_116], %319 {strides = array<i32>} : memref<8x8x16xf32, #tpu.memory_space<vmem>>, vector<1x8x16xf32>,
    %c0_117 = arith.constant 0 : index
    %c0_118 = arith.constant 0 : index
    %320 = vector.load %arg9[%c0_117, %c0_118] : memref<64x32xf32, #tpu.memory_space<vmem>>, vector<64x32xf32>
    %c1_119 = arith.constant 1 : index
    %c0_120 = arith.constant 0 : index
    %c0_121 = arith.constant 0 : index
    %321 = vector.load %arg2[%c1_119, %c0_120, %c0_121] : memref<4x32x128xf32, #tpu.memory_space<vmem>>, vector<1x32x128xf32>
    %322 = vector.shape_cast %321 : vector<1x32x128xf32> to vector<32x128xf32>
    %cst_122 = arith.constant dense<0.000000e+00> : vector<64x128xf32>
    %323 = tpu.matmul %320, %322, %cst_122 {dimension_numbers = #tpu.dot_dimension_numbers<[1], [0], [0], [1], [0, 0, 1, 1], [], []>} : vector<64x32xf32>, vector<32x128xf32>, vector<64x128xf32> -> vector<64x128xf32>
    %c1_123 = arith.constant 1 : index
    %c0_124 = arith.constant 0 : index
    %c0_125 = arith.constant 0 : index
    %324 = vector.load %arg4[%c1_123, %c0_124, %c0_125] : memref<4x1x128xf32, #tpu.memory_space<vmem>>, vector<1x1x128xf32>
    %325 = vector.shape_cast %324 : vector<1x1x128xf32> to vector<1x128xf32>
    %326 = vector.broadcast %325 : vector<1x128xf32> to vector<64x128xf32>
    %327 = arith.addf %323, %326 : vector<64x128xf32>
    %c0_126 = arith.constant 0 : index
    %c0_127 = arith.constant 0 : index
    %328 = vector.load %arg8[%c0_126, %c0_127] : memref<64x128xf32, #tpu.memory_space<vmem>>, vector<64x128xf32>
    tpu.vector_store %arg8[%c0_126, %c0_127], %327 {strides = array<i32>} : memref<64x128xf32, #tpu.memory_space<vmem>>, vector<64x128xf32>,
    %c1_128 = arith.constant 1 : index
    %c0_129 = arith.constant 0 : index
    %c0_130 = arith.constant 0 : index
    %329 = vector.load %arg3[%c1_128, %c0_129, %c0_130] : memref<4x32x128xf32, #tpu.memory_space<vmem>>, vector<1x32x128xf32>
    %330 = vector.shape_cast %329 : vector<1x32x128xf32> to vector<32x128xf32>
    %cst_131 = arith.constant 0.000000e+00 : f32
    %331 = vector.broadcast %cst_131 : f32 to vector<8x32xf32>
    %cst_132 = arith.constant 0.000000e+00 : f32
    %332 = vector.broadcast %cst_132 : f32 to vector<8x32xf32>
    %cst_133 = arith.constant dense<0.000000e+00> : vector<8x128xf32>
    %333 = tpu.matmul %331, %330, %cst_133 {dimension_numbers = #tpu.dot_dimension_numbers<[1], [0], [0], [1], [0, 0, 1, 1], [], []>} : vector<8x32xf32>, vector<32x128xf32>, vector<8x128xf32> -> vector<8x128xf32>
    %c0_134 = arith.constant 0 : index
    %c0_135 = arith.constant 0 : index
    %334 = vector.load %arg8[%c0_134, %c0_135] : memref<64x128xf32, #tpu.memory_space<vmem>>, vector<8x128xf32>
    %c56_136 = arith.constant 56 : index
    %c0_137 = arith.constant 0 : index
    %335 = vector.load %arg8[%c56_136, %c0_137] : memref<64x128xf32, #tpu.memory_space<vmem>>, vector<8x128xf32>
    %336 = arith.select %18, %334, %335 : vector<8x128xi1>, vector<8x128xf32>
    %337 = arith.addf %336, %333 : vector<8x128xf32>
    %338 = vector.extract_strided_slice %337 {offsets = [0, 0], sizes = [8, 32], strides = [1, 1]} : vector<8x128xf32> to vector<8x32xf32>
    %339 = arith.negf %338 : vector<8x32xf32>
    %340 = math.exp %339 : vector<8x32xf32>
    %cst_138 = arith.constant 1.000000e+00 : f32
    %341 = vector.broadcast %cst_138 : f32 to vector<8x32xf32>
    %342 = arith.addf %341, %340 : vector<8x32xf32>
    %343 = arith.divf %341, %342 : vector<8x32xf32>
    %344 = vector.extract_strided_slice %337 {offsets = [0, 32], sizes = [8, 32], strides = [1, 1]} : vector<8x128xf32> to vector<8x32xf32>
    %345 = arith.negf %344 : vector<8x32xf32>
    %346 = math.exp %345 : vector<8x32xf32>
    %cst_139 = arith.constant 1.000000e+00 : f32
    %347 = vector.broadcast %cst_139 : f32 to vector<8x32xf32>
    %348 = arith.addf %347, %346 : vector<8x32xf32>
    %349 = arith.divf %347, %348 : vector<8x32xf32>
    %350 = vector.extract_strided_slice %337 {offsets = [0, 64], sizes = [8, 32], strides = [1, 1]} : vector<8x128xf32> to vector<8x32xf32>
    %351 = math.tanh %350 : vector<8x32xf32>
    %352 = vector.extract_strided_slice %337 {offsets = [0, 96], sizes = [8, 32], strides = [1, 1]} : vector<8x128xf32> to vector<8x32xf32>
    %353 = arith.negf %352 : vector<8x32xf32>
    %354 = math.exp %353 : vector<8x32xf32>
    %cst_140 = arith.constant 1.000000e+00 : f32
    %355 = vector.broadcast %cst_140 : f32 to vector<8x32xf32>
    %356 = arith.addf %355, %354 : vector<8x32xf32>
    %357 = arith.divf %355, %356 : vector<8x32xf32>
    %358 = arith.mulf %349, %332 : vector<8x32xf32>
    %359 = arith.mulf %343, %351 : vector<8x32xf32>
    %360 = arith.addf %358, %359 : vector<8x32xf32>
    %361 = math.tanh %360 : vector<8x32xf32>
    %362 = arith.mulf %357, %361 : vector<8x32xf32>
    %363 = vector.extract_strided_slice %362 {offsets = [0, 0], sizes = [8, 16], strides = [1, 1]} : vector<8x32xf32> to vector<8x16xf32>
    %c0_141 = arith.constant 0 : index
    %c0_142 = arith.constant 0 : index
    %364 = vector.load %arg9[%c0_141, %c0_142] : memref<64x32xf32, #tpu.memory_space<vmem>>, vector<8x16xf32>
    tpu.vector_store %arg9[%c0_141, %c0_142], %363 {strides = array<i32>} : memref<64x32xf32, #tpu.memory_space<vmem>>, vector<8x16xf32>,
    %365 = vector.extract_strided_slice %362 {offsets = [0, 16], sizes = [8, 16], strides = [1, 1]} : vector<8x32xf32> to vector<8x16xf32>
    %c56_143 = arith.constant 56 : index
    %c16_144 = arith.constant 16 : index
    %366 = vector.load %arg9[%c56_143, %c16_144] : memref<64x32xf32, #tpu.memory_space<vmem>>, vector<8x16xf32>
    tpu.vector_store %arg9[%c56_143, %c16_144], %365 {strides = array<i32>} : memref<64x32xf32, #tpu.memory_space<vmem>>, vector<8x16xf32>,
    %cst_145 = arith.constant dense<0.000000e+00> : vector<8x128xf32>
    %367 = tpu.matmul %362, %330, %cst_145 {dimension_numbers = #tpu.dot_dimension_numbers<[1], [0], [0], [1], [0, 0, 1, 1], [], []>} : vector<8x32xf32>, vector<32x128xf32>, vector<8x128xf32> -> vector<8x128xf32>
    %c8_146 = arith.constant 8 : index
    %c0_147 = arith.constant 0 : index
    %368 = vector.load %arg8[%c8_146, %c0_147] : memref<64x128xf32, #tpu.memory_space<vmem>>, vector<8x128xf32>
    %c48_148 = arith.constant 48 : index
    %c0_149 = arith.constant 0 : index
    %369 = vector.load %arg8[%c48_148, %c0_149] : memref<64x128xf32, #tpu.memory_space<vmem>>, vector<8x128xf32>
    %370 = arith.select %18, %368, %369 : vector<8x128xi1>, vector<8x128xf32>
    %371 = arith.addf %370, %367 : vector<8x128xf32>
    %372 = vector.extract_strided_slice %371 {offsets = [0, 0], sizes = [8, 32], strides = [1, 1]} : vector<8x128xf32> to vector<8x32xf32>
    %373 = arith.negf %372 : vector<8x32xf32>
    %374 = math.exp %373 : vector<8x32xf32>
    %cst_150 = arith.constant 1.000000e+00 : f32
    %375 = vector.broadcast %cst_150 : f32 to vector<8x32xf32>
    %376 = arith.addf %375, %374 : vector<8x32xf32>
    %377 = arith.divf %375, %376 : vector<8x32xf32>
    %378 = vector.extract_strided_slice %371 {offsets = [0, 32], sizes = [8, 32], strides = [1, 1]} : vector<8x128xf32> to vector<8x32xf32>
    %379 = arith.negf %378 : vector<8x32xf32>
    %380 = math.exp %379 : vector<8x32xf32>
    %cst_151 = arith.constant 1.000000e+00 : f32
    %381 = vector.broadcast %cst_151 : f32 to vector<8x32xf32>
    %382 = arith.addf %381, %380 : vector<8x32xf32>
    %383 = arith.divf %381, %382 : vector<8x32xf32>
    %384 = vector.extract_strided_slice %371 {offsets = [0, 64], sizes = [8, 32], strides = [1, 1]} : vector<8x128xf32> to vector<8x32xf32>
    %385 = math.tanh %384 : vector<8x32xf32>
    %386 = vector.extract_strided_slice %371 {offsets = [0, 96], sizes = [8, 32], strides = [1, 1]} : vector<8x128xf32> to vector<8x32xf32>
    %387 = arith.negf %386 : vector<8x32xf32>
    %388 = math.exp %387 : vector<8x32xf32>
    %cst_152 = arith.constant 1.000000e+00 : f32
    %389 = vector.broadcast %cst_152 : f32 to vector<8x32xf32>
    %390 = arith.addf %389, %388 : vector<8x32xf32>
    %391 = arith.divf %389, %390 : vector<8x32xf32>
    %392 = arith.mulf %383, %360 : vector<8x32xf32>
    %393 = arith.mulf %377, %385 : vector<8x32xf32>
    %394 = arith.addf %392, %393 : vector<8x32xf32>
    %395 = math.tanh %394 : vector<8x32xf32>
    %396 = arith.mulf %391, %395 : vector<8x32xf32>
    %397 = vector.extract_strided_slice %396 {offsets = [0, 0], sizes = [8, 16], strides = [1, 1]} : vector<8x32xf32> to vector<8x16xf32>
    %c8_153 = arith.constant 8 : index
    %c0_154 = arith.constant 0 : index
    %398 = vector.load %arg9[%c8_153, %c0_154] : memref<64x32xf32, #tpu.memory_space<vmem>>, vector<8x16xf32>
    tpu.vector_store %arg9[%c8_153, %c0_154], %397 {strides = array<i32>} : memref<64x32xf32, #tpu.memory_space<vmem>>, vector<8x16xf32>,
    %399 = vector.extract_strided_slice %396 {offsets = [0, 16], sizes = [8, 16], strides = [1, 1]} : vector<8x32xf32> to vector<8x16xf32>
    %c48_155 = arith.constant 48 : index
    %c16_156 = arith.constant 16 : index
    %400 = vector.load %arg9[%c48_155, %c16_156] : memref<64x32xf32, #tpu.memory_space<vmem>>, vector<8x16xf32>
    tpu.vector_store %arg9[%c48_155, %c16_156], %399 {strides = array<i32>} : memref<64x32xf32, #tpu.memory_space<vmem>>, vector<8x16xf32>,
    %cst_157 = arith.constant dense<0.000000e+00> : vector<8x128xf32>
    %401 = tpu.matmul %396, %330, %cst_157 {dimension_numbers = #tpu.dot_dimension_numbers<[1], [0], [0], [1], [0, 0, 1, 1], [], []>} : vector<8x32xf32>, vector<32x128xf32>, vector<8x128xf32> -> vector<8x128xf32>
    %c16_158 = arith.constant 16 : index
    %c0_159 = arith.constant 0 : index
    %402 = vector.load %arg8[%c16_158, %c0_159] : memref<64x128xf32, #tpu.memory_space<vmem>>, vector<8x128xf32>
    %c40_160 = arith.constant 40 : index
    %c0_161 = arith.constant 0 : index
    %403 = vector.load %arg8[%c40_160, %c0_161] : memref<64x128xf32, #tpu.memory_space<vmem>>, vector<8x128xf32>
    %404 = arith.select %18, %402, %403 : vector<8x128xi1>, vector<8x128xf32>
    %405 = arith.addf %404, %401 : vector<8x128xf32>
    %406 = vector.extract_strided_slice %405 {offsets = [0, 0], sizes = [8, 32], strides = [1, 1]} : vector<8x128xf32> to vector<8x32xf32>
    %407 = arith.negf %406 : vector<8x32xf32>
    %408 = math.exp %407 : vector<8x32xf32>
    %cst_162 = arith.constant 1.000000e+00 : f32
    %409 = vector.broadcast %cst_162 : f32 to vector<8x32xf32>
    %410 = arith.addf %409, %408 : vector<8x32xf32>
    %411 = arith.divf %409, %410 : vector<8x32xf32>
    %412 = vector.extract_strided_slice %405 {offsets = [0, 32], sizes = [8, 32], strides = [1, 1]} : vector<8x128xf32> to vector<8x32xf32>
    %413 = arith.negf %412 : vector<8x32xf32>
    %414 = math.exp %413 : vector<8x32xf32>
    %cst_163 = arith.constant 1.000000e+00 : f32
    %415 = vector.broadcast %cst_163 : f32 to vector<8x32xf32>
    %416 = arith.addf %415, %414 : vector<8x32xf32>
    %417 = arith.divf %415, %416 : vector<8x32xf32>
    %418 = vector.extract_strided_slice %405 {offsets = [0, 64], sizes = [8, 32], strides = [1, 1]} : vector<8x128xf32> to vector<8x32xf32>
    %419 = math.tanh %418 : vector<8x32xf32>
    %420 = vector.extract_strided_slice %405 {offsets = [0, 96], sizes = [8, 32], strides = [1, 1]} : vector<8x128xf32> to vector<8x32xf32>
    %421 = arith.negf %420 : vector<8x32xf32>
    %422 = math.exp %421 : vector<8x32xf32>
    %cst_164 = arith.constant 1.000000e+00 : f32
    %423 = vector.broadcast %cst_164 : f32 to vector<8x32xf32>
    %424 = arith.addf %423, %422 : vector<8x32xf32>
    %425 = arith.divf %423, %424 : vector<8x32xf32>
    %426 = arith.mulf %417, %394 : vector<8x32xf32>
    %427 = arith.mulf %411, %419 : vector<8x32xf32>
    %428 = arith.addf %426, %427 : vector<8x32xf32>
    %429 = math.tanh %428 : vector<8x32xf32>
    %430 = arith.mulf %425, %429 : vector<8x32xf32>
    %431 = vector.extract_strided_slice %430 {offsets = [0, 0], sizes = [8, 16], strides = [1, 1]} : vector<8x32xf32> to vector<8x16xf32>
    %c16_165 = arith.constant 16 : index
    %c0_166 = arith.constant 0 : index
    %432 = vector.load %arg9[%c16_165, %c0_166] : memref<64x32xf32, #tpu.memory_space<vmem>>, vector<8x16xf32>
    tpu.vector_store %arg9[%c16_165, %c0_166], %431 {strides = array<i32>} : memref<64x32xf32, #tpu.memory_space<vmem>>, vector<8x16xf32>,
    %433 = vector.extract_strided_slice %430 {offsets = [0, 16], sizes = [8, 16], strides = [1, 1]} : vector<8x32xf32> to vector<8x16xf32>
    %c40_167 = arith.constant 40 : index
    %c16_168 = arith.constant 16 : index
    %434 = vector.load %arg9[%c40_167, %c16_168] : memref<64x32xf32, #tpu.memory_space<vmem>>, vector<8x16xf32>
    tpu.vector_store %arg9[%c40_167, %c16_168], %433 {strides = array<i32>} : memref<64x32xf32, #tpu.memory_space<vmem>>, vector<8x16xf32>,
    %cst_169 = arith.constant dense<0.000000e+00> : vector<8x128xf32>
    %435 = tpu.matmul %430, %330, %cst_169 {dimension_numbers = #tpu.dot_dimension_numbers<[1], [0], [0], [1], [0, 0, 1, 1], [], []>} : vector<8x32xf32>, vector<32x128xf32>, vector<8x128xf32> -> vector<8x128xf32>
    %c24_170 = arith.constant 24 : index
    %c0_171 = arith.constant 0 : index
    %436 = vector.load %arg8[%c24_170, %c0_171] : memref<64x128xf32, #tpu.memory_space<vmem>>, vector<8x128xf32>
    %c32_172 = arith.constant 32 : index
    %c0_173 = arith.constant 0 : index
    %437 = vector.load %arg8[%c32_172, %c0_173] : memref<64x128xf32, #tpu.memory_space<vmem>>, vector<8x128xf32>
    %438 = arith.select %18, %436, %437 : vector<8x128xi1>, vector<8x128xf32>
    %439 = arith.addf %438, %435 : vector<8x128xf32>
    %440 = vector.extract_strided_slice %439 {offsets = [0, 0], sizes = [8, 32], strides = [1, 1]} : vector<8x128xf32> to vector<8x32xf32>
    %441 = arith.negf %440 : vector<8x32xf32>
    %442 = math.exp %441 : vector<8x32xf32>
    %cst_174 = arith.constant 1.000000e+00 : f32
    %443 = vector.broadcast %cst_174 : f32 to vector<8x32xf32>
    %444 = arith.addf %443, %442 : vector<8x32xf32>
    %445 = arith.divf %443, %444 : vector<8x32xf32>
    %446 = vector.extract_strided_slice %439 {offsets = [0, 32], sizes = [8, 32], strides = [1, 1]} : vector<8x128xf32> to vector<8x32xf32>
    %447 = arith.negf %446 : vector<8x32xf32>
    %448 = math.exp %447 : vector<8x32xf32>
    %cst_175 = arith.constant 1.000000e+00 : f32
    %449 = vector.broadcast %cst_175 : f32 to vector<8x32xf32>
    %450 = arith.addf %449, %448 : vector<8x32xf32>
    %451 = arith.divf %449, %450 : vector<8x32xf32>
    %452 = vector.extract_strided_slice %439 {offsets = [0, 64], sizes = [8, 32], strides = [1, 1]} : vector<8x128xf32> to vector<8x32xf32>
    %453 = math.tanh %452 : vector<8x32xf32>
    %454 = vector.extract_strided_slice %439 {offsets = [0, 96], sizes = [8, 32], strides = [1, 1]} : vector<8x128xf32> to vector<8x32xf32>
    %455 = arith.negf %454 : vector<8x32xf32>
    %456 = math.exp %455 : vector<8x32xf32>
    %cst_176 = arith.constant 1.000000e+00 : f32
    %457 = vector.broadcast %cst_176 : f32 to vector<8x32xf32>
    %458 = arith.addf %457, %456 : vector<8x32xf32>
    %459 = arith.divf %457, %458 : vector<8x32xf32>
    %460 = arith.mulf %451, %428 : vector<8x32xf32>
    %461 = arith.mulf %445, %453 : vector<8x32xf32>
    %462 = arith.addf %460, %461 : vector<8x32xf32>
    %463 = math.tanh %462 : vector<8x32xf32>
    %464 = arith.mulf %459, %463 : vector<8x32xf32>
    %465 = vector.extract_strided_slice %464 {offsets = [0, 0], sizes = [8, 16], strides = [1, 1]} : vector<8x32xf32> to vector<8x16xf32>
    %c24_177 = arith.constant 24 : index
    %c0_178 = arith.constant 0 : index
    %466 = vector.load %arg9[%c24_177, %c0_178] : memref<64x32xf32, #tpu.memory_space<vmem>>, vector<8x16xf32>
    tpu.vector_store %arg9[%c24_177, %c0_178], %465 {strides = array<i32>} : memref<64x32xf32, #tpu.memory_space<vmem>>, vector<8x16xf32>,
    %467 = vector.extract_strided_slice %464 {offsets = [0, 16], sizes = [8, 16], strides = [1, 1]} : vector<8x32xf32> to vector<8x16xf32>
    %c32_179 = arith.constant 32 : index
    %c16_180 = arith.constant 16 : index
    %468 = vector.load %arg9[%c32_179, %c16_180] : memref<64x32xf32, #tpu.memory_space<vmem>>, vector<8x16xf32>
    tpu.vector_store %arg9[%c32_179, %c16_180], %467 {strides = array<i32>} : memref<64x32xf32, #tpu.memory_space<vmem>>, vector<8x16xf32>,
    %cst_181 = arith.constant dense<0.000000e+00> : vector<8x128xf32>
    %469 = tpu.matmul %464, %330, %cst_181 {dimension_numbers = #tpu.dot_dimension_numbers<[1], [0], [0], [1], [0, 0, 1, 1], [], []>} : vector<8x32xf32>, vector<32x128xf32>, vector<8x128xf32> -> vector<8x128xf32>
    %c32_182 = arith.constant 32 : index
    %c0_183 = arith.constant 0 : index
    %470 = vector.load %arg8[%c32_182, %c0_183] : memref<64x128xf32, #tpu.memory_space<vmem>>, vector<8x128xf32>
    %c24_184 = arith.constant 24 : index
    %c0_185 = arith.constant 0 : index
    %471 = vector.load %arg8[%c24_184, %c0_185] : memref<64x128xf32, #tpu.memory_space<vmem>>, vector<8x128xf32>
    %472 = arith.select %18, %470, %471 : vector<8x128xi1>, vector<8x128xf32>
    %473 = arith.addf %472, %469 : vector<8x128xf32>
    %474 = vector.extract_strided_slice %473 {offsets = [0, 0], sizes = [8, 32], strides = [1, 1]} : vector<8x128xf32> to vector<8x32xf32>
    %475 = arith.negf %474 : vector<8x32xf32>
    %476 = math.exp %475 : vector<8x32xf32>
    %cst_186 = arith.constant 1.000000e+00 : f32
    %477 = vector.broadcast %cst_186 : f32 to vector<8x32xf32>
    %478 = arith.addf %477, %476 : vector<8x32xf32>
    %479 = arith.divf %477, %478 : vector<8x32xf32>
    %480 = vector.extract_strided_slice %473 {offsets = [0, 32], sizes = [8, 32], strides = [1, 1]} : vector<8x128xf32> to vector<8x32xf32>
    %481 = arith.negf %480 : vector<8x32xf32>
    %482 = math.exp %481 : vector<8x32xf32>
    %cst_187 = arith.constant 1.000000e+00 : f32
    %483 = vector.broadcast %cst_187 : f32 to vector<8x32xf32>
    %484 = arith.addf %483, %482 : vector<8x32xf32>
    %485 = arith.divf %483, %484 : vector<8x32xf32>
    %486 = vector.extract_strided_slice %473 {offsets = [0, 64], sizes = [8, 32], strides = [1, 1]} : vector<8x128xf32> to vector<8x32xf32>
    %487 = math.tanh %486 : vector<8x32xf32>
    %488 = vector.extract_strided_slice %473 {offsets = [0, 96], sizes = [8, 32], strides = [1, 1]} : vector<8x128xf32> to vector<8x32xf32>
    %489 = arith.negf %488 : vector<8x32xf32>
    %490 = math.exp %489 : vector<8x32xf32>
    %cst_188 = arith.constant 1.000000e+00 : f32
    %491 = vector.broadcast %cst_188 : f32 to vector<8x32xf32>
    %492 = arith.addf %491, %490 : vector<8x32xf32>
    %493 = arith.divf %491, %492 : vector<8x32xf32>
    %494 = arith.mulf %485, %462 : vector<8x32xf32>
    %495 = arith.mulf %479, %487 : vector<8x32xf32>
    %496 = arith.addf %494, %495 : vector<8x32xf32>
    %497 = math.tanh %496 : vector<8x32xf32>
    %498 = arith.mulf %493, %497 : vector<8x32xf32>
    %499 = vector.extract_strided_slice %498 {offsets = [0, 0], sizes = [8, 16], strides = [1, 1]} : vector<8x32xf32> to vector<8x16xf32>
    %c32_189 = arith.constant 32 : index
    %c0_190 = arith.constant 0 : index
    %500 = vector.load %arg9[%c32_189, %c0_190] : memref<64x32xf32, #tpu.memory_space<vmem>>, vector<8x16xf32>
    tpu.vector_store %arg9[%c32_189, %c0_190], %499 {strides = array<i32>} : memref<64x32xf32, #tpu.memory_space<vmem>>, vector<8x16xf32>,
    %501 = vector.extract_strided_slice %498 {offsets = [0, 16], sizes = [8, 16], strides = [1, 1]} : vector<8x32xf32> to vector<8x16xf32>
    %c24_191 = arith.constant 24 : index
    %c16_192 = arith.constant 16 : index
    %502 = vector.load %arg9[%c24_191, %c16_192] : memref<64x32xf32, #tpu.memory_space<vmem>>, vector<8x16xf32>
    tpu.vector_store %arg9[%c24_191, %c16_192], %501 {strides = array<i32>} : memref<64x32xf32, #tpu.memory_space<vmem>>, vector<8x16xf32>,
    %cst_193 = arith.constant dense<0.000000e+00> : vector<8x128xf32>
    %503 = tpu.matmul %498, %330, %cst_193 {dimension_numbers = #tpu.dot_dimension_numbers<[1], [0], [0], [1], [0, 0, 1, 1], [], []>} : vector<8x32xf32>, vector<32x128xf32>, vector<8x128xf32> -> vector<8x128xf32>
    %c40_194 = arith.constant 40 : index
    %c0_195 = arith.constant 0 : index
    %504 = vector.load %arg8[%c40_194, %c0_195] : memref<64x128xf32, #tpu.memory_space<vmem>>, vector<8x128xf32>
    %c16_196 = arith.constant 16 : index
    %c0_197 = arith.constant 0 : index
    %505 = vector.load %arg8[%c16_196, %c0_197] : memref<64x128xf32, #tpu.memory_space<vmem>>, vector<8x128xf32>
    %506 = arith.select %18, %504, %505 : vector<8x128xi1>, vector<8x128xf32>
    %507 = arith.addf %506, %503 : vector<8x128xf32>
    %508 = vector.extract_strided_slice %507 {offsets = [0, 0], sizes = [8, 32], strides = [1, 1]} : vector<8x128xf32> to vector<8x32xf32>
    %509 = arith.negf %508 : vector<8x32xf32>
    %510 = math.exp %509 : vector<8x32xf32>
    %cst_198 = arith.constant 1.000000e+00 : f32
    %511 = vector.broadcast %cst_198 : f32 to vector<8x32xf32>
    %512 = arith.addf %511, %510 : vector<8x32xf32>
    %513 = arith.divf %511, %512 : vector<8x32xf32>
    %514 = vector.extract_strided_slice %507 {offsets = [0, 32], sizes = [8, 32], strides = [1, 1]} : vector<8x128xf32> to vector<8x32xf32>
    %515 = arith.negf %514 : vector<8x32xf32>
    %516 = math.exp %515 : vector<8x32xf32>
    %cst_199 = arith.constant 1.000000e+00 : f32
    %517 = vector.broadcast %cst_199 : f32 to vector<8x32xf32>
    %518 = arith.addf %517, %516 : vector<8x32xf32>
    %519 = arith.divf %517, %518 : vector<8x32xf32>
    %520 = vector.extract_strided_slice %507 {offsets = [0, 64], sizes = [8, 32], strides = [1, 1]} : vector<8x128xf32> to vector<8x32xf32>
    %521 = math.tanh %520 : vector<8x32xf32>
    %522 = vector.extract_strided_slice %507 {offsets = [0, 96], sizes = [8, 32], strides = [1, 1]} : vector<8x128xf32> to vector<8x32xf32>
    %523 = arith.negf %522 : vector<8x32xf32>
    %524 = math.exp %523 : vector<8x32xf32>
    %cst_200 = arith.constant 1.000000e+00 : f32
    %525 = vector.broadcast %cst_200 : f32 to vector<8x32xf32>
    %526 = arith.addf %525, %524 : vector<8x32xf32>
    %527 = arith.divf %525, %526 : vector<8x32xf32>
    %528 = arith.mulf %519, %496 : vector<8x32xf32>
    %529 = arith.mulf %513, %521 : vector<8x32xf32>
    %530 = arith.addf %528, %529 : vector<8x32xf32>
    %531 = math.tanh %530 : vector<8x32xf32>
    %532 = arith.mulf %527, %531 : vector<8x32xf32>
    %533 = vector.extract_strided_slice %532 {offsets = [0, 0], sizes = [8, 16], strides = [1, 1]} : vector<8x32xf32> to vector<8x16xf32>
    %c40_201 = arith.constant 40 : index
    %c0_202 = arith.constant 0 : index
    %534 = vector.load %arg9[%c40_201, %c0_202] : memref<64x32xf32, #tpu.memory_space<vmem>>, vector<8x16xf32>
    tpu.vector_store %arg9[%c40_201, %c0_202], %533 {strides = array<i32>} : memref<64x32xf32, #tpu.memory_space<vmem>>, vector<8x16xf32>,
    %535 = vector.extract_strided_slice %532 {offsets = [0, 16], sizes = [8, 16], strides = [1, 1]} : vector<8x32xf32> to vector<8x16xf32>
    %c16_203 = arith.constant 16 : index
    %c16_204 = arith.constant 16 : index
    %536 = vector.load %arg9[%c16_203, %c16_204] : memref<64x32xf32, #tpu.memory_space<vmem>>, vector<8x16xf32>
    tpu.vector_store %arg9[%c16_203, %c16_204], %535 {strides = array<i32>} : memref<64x32xf32, #tpu.memory_space<vmem>>, vector<8x16xf32>,
    %cst_205 = arith.constant dense<0.000000e+00> : vector<8x128xf32>
    %537 = tpu.matmul %532, %330, %cst_205 {dimension_numbers = #tpu.dot_dimension_numbers<[1], [0], [0], [1], [0, 0, 1, 1], [], []>} : vector<8x32xf32>, vector<32x128xf32>, vector<8x128xf32> -> vector<8x128xf32>
    %c48_206 = arith.constant 48 : index
    %c0_207 = arith.constant 0 : index
    %538 = vector.load %arg8[%c48_206, %c0_207] : memref<64x128xf32, #tpu.memory_space<vmem>>, vector<8x128xf32>
    %c8_208 = arith.constant 8 : index
    %c0_209 = arith.constant 0 : index
    %539 = vector.load %arg8[%c8_208, %c0_209] : memref<64x128xf32, #tpu.memory_space<vmem>>, vector<8x128xf32>
    %540 = arith.select %18, %538, %539 : vector<8x128xi1>, vector<8x128xf32>
    %541 = arith.addf %540, %537 : vector<8x128xf32>
    %542 = vector.extract_strided_slice %541 {offsets = [0, 0], sizes = [8, 32], strides = [1, 1]} : vector<8x128xf32> to vector<8x32xf32>
    %543 = arith.negf %542 : vector<8x32xf32>
    %544 = math.exp %543 : vector<8x32xf32>
    %cst_210 = arith.constant 1.000000e+00 : f32
    %545 = vector.broadcast %cst_210 : f32 to vector<8x32xf32>
    %546 = arith.addf %545, %544 : vector<8x32xf32>
    %547 = arith.divf %545, %546 : vector<8x32xf32>
    %548 = vector.extract_strided_slice %541 {offsets = [0, 32], sizes = [8, 32], strides = [1, 1]} : vector<8x128xf32> to vector<8x32xf32>
    %549 = arith.negf %548 : vector<8x32xf32>
    %550 = math.exp %549 : vector<8x32xf32>
    %cst_211 = arith.constant 1.000000e+00 : f32
    %551 = vector.broadcast %cst_211 : f32 to vector<8x32xf32>
    %552 = arith.addf %551, %550 : vector<8x32xf32>
    %553 = arith.divf %551, %552 : vector<8x32xf32>
    %554 = vector.extract_strided_slice %541 {offsets = [0, 64], sizes = [8, 32], strides = [1, 1]} : vector<8x128xf32> to vector<8x32xf32>
    %555 = math.tanh %554 : vector<8x32xf32>
    %556 = vector.extract_strided_slice %541 {offsets = [0, 96], sizes = [8, 32], strides = [1, 1]} : vector<8x128xf32> to vector<8x32xf32>
    %557 = arith.negf %556 : vector<8x32xf32>
    %558 = math.exp %557 : vector<8x32xf32>
    %cst_212 = arith.constant 1.000000e+00 : f32
    %559 = vector.broadcast %cst_212 : f32 to vector<8x32xf32>
    %560 = arith.addf %559, %558 : vector<8x32xf32>
    %561 = arith.divf %559, %560 : vector<8x32xf32>
    %562 = arith.mulf %553, %530 : vector<8x32xf32>
    %563 = arith.mulf %547, %555 : vector<8x32xf32>
    %564 = arith.addf %562, %563 : vector<8x32xf32>
    %565 = math.tanh %564 : vector<8x32xf32>
    %566 = arith.mulf %561, %565 : vector<8x32xf32>
    %567 = vector.extract_strided_slice %566 {offsets = [0, 0], sizes = [8, 16], strides = [1, 1]} : vector<8x32xf32> to vector<8x16xf32>
    %c48_213 = arith.constant 48 : index
    %c0_214 = arith.constant 0 : index
    %568 = vector.load %arg9[%c48_213, %c0_214] : memref<64x32xf32, #tpu.memory_space<vmem>>, vector<8x16xf32>
    tpu.vector_store %arg9[%c48_213, %c0_214], %567 {strides = array<i32>} : memref<64x32xf32, #tpu.memory_space<vmem>>, vector<8x16xf32>,
    %569 = vector.extract_strided_slice %566 {offsets = [0, 16], sizes = [8, 16], strides = [1, 1]} : vector<8x32xf32> to vector<8x16xf32>
    %c8_215 = arith.constant 8 : index
    %c16_216 = arith.constant 16 : index
    %570 = vector.load %arg9[%c8_215, %c16_216] : memref<64x32xf32, #tpu.memory_space<vmem>>, vector<8x16xf32>
    tpu.vector_store %arg9[%c8_215, %c16_216], %569 {strides = array<i32>} : memref<64x32xf32, #tpu.memory_space<vmem>>, vector<8x16xf32>,
    %cst_217 = arith.constant dense<0.000000e+00> : vector<8x128xf32>
    %571 = tpu.matmul %566, %330, %cst_217 {dimension_numbers = #tpu.dot_dimension_numbers<[1], [0], [0], [1], [0, 0, 1, 1], [], []>} : vector<8x32xf32>, vector<32x128xf32>, vector<8x128xf32> -> vector<8x128xf32>
    %c56_218 = arith.constant 56 : index
    %c0_219 = arith.constant 0 : index
    %572 = vector.load %arg8[%c56_218, %c0_219] : memref<64x128xf32, #tpu.memory_space<vmem>>, vector<8x128xf32>
    %c0_220 = arith.constant 0 : index
    %c0_221 = arith.constant 0 : index
    %573 = vector.load %arg8[%c0_220, %c0_221] : memref<64x128xf32, #tpu.memory_space<vmem>>, vector<8x128xf32>
    %574 = arith.select %18, %572, %573 : vector<8x128xi1>, vector<8x128xf32>
    %575 = arith.addf %574, %571 : vector<8x128xf32>
    %576 = vector.extract_strided_slice %575 {offsets = [0, 0], sizes = [8, 32], strides = [1, 1]} : vector<8x128xf32> to vector<8x32xf32>
    %577 = arith.negf %576 : vector<8x32xf32>
    %578 = math.exp %577 : vector<8x32xf32>
    %cst_222 = arith.constant 1.000000e+00 : f32
    %579 = vector.broadcast %cst_222 : f32 to vector<8x32xf32>
    %580 = arith.addf %579, %578 : vector<8x32xf32>
    %581 = arith.divf %579, %580 : vector<8x32xf32>
    %582 = vector.extract_strided_slice %575 {offsets = [0, 32], sizes = [8, 32], strides = [1, 1]} : vector<8x128xf32> to vector<8x32xf32>
    %583 = arith.negf %582 : vector<8x32xf32>
    %584 = math.exp %583 : vector<8x32xf32>
    %cst_223 = arith.constant 1.000000e+00 : f32
    %585 = vector.broadcast %cst_223 : f32 to vector<8x32xf32>
    %586 = arith.addf %585, %584 : vector<8x32xf32>
    %587 = arith.divf %585, %586 : vector<8x32xf32>
    %588 = vector.extract_strided_slice %575 {offsets = [0, 64], sizes = [8, 32], strides = [1, 1]} : vector<8x128xf32> to vector<8x32xf32>
    %589 = math.tanh %588 : vector<8x32xf32>
    %590 = vector.extract_strided_slice %575 {offsets = [0, 96], sizes = [8, 32], strides = [1, 1]} : vector<8x128xf32> to vector<8x32xf32>
    %591 = arith.negf %590 : vector<8x32xf32>
    %592 = math.exp %591 : vector<8x32xf32>
    %cst_224 = arith.constant 1.000000e+00 : f32
    %593 = vector.broadcast %cst_224 : f32 to vector<8x32xf32>
    %594 = arith.addf %593, %592 : vector<8x32xf32>
    %595 = arith.divf %593, %594 : vector<8x32xf32>
    %596 = arith.mulf %587, %564 : vector<8x32xf32>
    %597 = arith.mulf %581, %589 : vector<8x32xf32>
    %598 = arith.addf %596, %597 : vector<8x32xf32>
    %599 = math.tanh %598 : vector<8x32xf32>
    %600 = arith.mulf %595, %599 : vector<8x32xf32>
    %601 = vector.extract_strided_slice %600 {offsets = [0, 0], sizes = [8, 16], strides = [1, 1]} : vector<8x32xf32> to vector<8x16xf32>
    %c56_225 = arith.constant 56 : index
    %c0_226 = arith.constant 0 : index
    %602 = vector.load %arg9[%c56_225, %c0_226] : memref<64x32xf32, #tpu.memory_space<vmem>>, vector<8x16xf32>
    tpu.vector_store %arg9[%c56_225, %c0_226], %601 {strides = array<i32>} : memref<64x32xf32, #tpu.memory_space<vmem>>, vector<8x16xf32>,
    %603 = vector.extract_strided_slice %600 {offsets = [0, 16], sizes = [8, 16], strides = [1, 1]} : vector<8x32xf32> to vector<8x16xf32>
    %c0_227 = arith.constant 0 : index
    %c16_228 = arith.constant 16 : index
    %604 = vector.load %arg9[%c0_227, %c16_228] : memref<64x32xf32, #tpu.memory_space<vmem>>, vector<8x16xf32>
    tpu.vector_store %arg9[%c0_227, %c16_228], %603 {strides = array<i32>} : memref<64x32xf32, #tpu.memory_space<vmem>>, vector<8x16xf32>,
    %605 = vector.extract_strided_slice %600 {offsets = [0, 0], sizes = [8, 16], strides = [1, 1]} : vector<8x32xf32> to vector<8x16xf32>
    %c2 = arith.constant 2 : index
    %c0_229 = arith.constant 0 : index
    %c0_230 = arith.constant 0 : index
    %606 = vector.load %arg6[%c2, %c0_229, %c0_230] : memref<8x8x16xf32, #tpu.memory_space<vmem>>, vector<1x8x16xf32>
    %607 = vector.shape_cast %606 : vector<1x8x16xf32> to vector<8x16xf32>
    %608 = vector.shape_cast %605 : vector<8x16xf32> to vector<1x8x16xf32>
    tpu.vector_store %arg6[%c2, %c0_229, %c0_230], %608 {strides = array<i32>} : memref<8x8x16xf32, #tpu.memory_space<vmem>>, vector<1x8x16xf32>,
    %609 = vector.extract_strided_slice %600 {offsets = [0, 16], sizes = [8, 16], strides = [1, 1]} : vector<8x32xf32> to vector<8x16xf32>
    %c3 = arith.constant 3 : index
    %c0_231 = arith.constant 0 : index
    %c0_232 = arith.constant 0 : index
    %610 = vector.load %arg6[%c3, %c0_231, %c0_232] : memref<8x8x16xf32, #tpu.memory_space<vmem>>, vector<1x8x16xf32>
    %611 = vector.shape_cast %610 : vector<1x8x16xf32> to vector<8x16xf32>
    %612 = vector.shape_cast %609 : vector<8x16xf32> to vector<1x8x16xf32>
    tpu.vector_store %arg6[%c3, %c0_231, %c0_232], %612 {strides = array<i32>} : memref<8x8x16xf32, #tpu.memory_space<vmem>>, vector<1x8x16xf32>,
    %613 = vector.extract_strided_slice %598 {offsets = [0, 0], sizes = [8, 16], strides = [1, 1]} : vector<8x32xf32> to vector<8x16xf32>
    %c2_233 = arith.constant 2 : index
    %c0_234 = arith.constant 0 : index
    %c0_235 = arith.constant 0 : index
    %614 = vector.load %arg7[%c2_233, %c0_234, %c0_235] : memref<8x8x16xf32, #tpu.memory_space<vmem>>, vector<1x8x16xf32>
    %615 = vector.shape_cast %614 : vector<1x8x16xf32> to vector<8x16xf32>
    %616 = vector.shape_cast %613 : vector<8x16xf32> to vector<1x8x16xf32>
    tpu.vector_store %arg7[%c2_233, %c0_234, %c0_235], %616 {strides = array<i32>} : memref<8x8x16xf32, #tpu.memory_space<vmem>>, vector<1x8x16xf32>,
    %617 = vector.extract_strided_slice %598 {offsets = [0, 16], sizes = [8, 16], strides = [1, 1]} : vector<8x32xf32> to vector<8x16xf32>
    %c3_236 = arith.constant 3 : index
    %c0_237 = arith.constant 0 : index
    %c0_238 = arith.constant 0 : index
    %618 = vector.load %arg7[%c3_236, %c0_237, %c0_238] : memref<8x8x16xf32, #tpu.memory_space<vmem>>, vector<1x8x16xf32>
    %619 = vector.shape_cast %618 : vector<1x8x16xf32> to vector<8x16xf32>
    %620 = vector.shape_cast %617 : vector<8x16xf32> to vector<1x8x16xf32>
    tpu.vector_store %arg7[%c3_236, %c0_237, %c0_238], %620 {strides = array<i32>} : memref<8x8x16xf32, #tpu.memory_space<vmem>>, vector<1x8x16xf32>,
    %c0_239 = arith.constant 0 : index
    %c0_240 = arith.constant 0 : index
    %621 = vector.load %arg9[%c0_239, %c0_240] : memref<64x32xf32, #tpu.memory_space<vmem>>, vector<64x32xf32>
    %c2_241 = arith.constant 2 : index
    %c0_242 = arith.constant 0 : index
    %c0_243 = arith.constant 0 : index
    %622 = vector.load %arg2[%c2_241, %c0_242, %c0_243] : memref<4x32x128xf32, #tpu.memory_space<vmem>>, vector<1x32x128xf32>
    %623 = vector.shape_cast %622 : vector<1x32x128xf32> to vector<32x128xf32>
    %cst_244 = arith.constant dense<0.000000e+00> : vector<64x128xf32>
    %624 = tpu.matmul %621, %623, %cst_244 {dimension_numbers = #tpu.dot_dimension_numbers<[1], [0], [0], [1], [0, 0, 1, 1], [], []>} : vector<64x32xf32>, vector<32x128xf32>, vector<64x128xf32> -> vector<64x128xf32>
    %c2_245 = arith.constant 2 : index
    %c0_246 = arith.constant 0 : index
    %c0_247 = arith.constant 0 : index
    %625 = vector.load %arg4[%c2_245, %c0_246, %c0_247] : memref<4x1x128xf32, #tpu.memory_space<vmem>>, vector<1x1x128xf32>
    %626 = vector.shape_cast %625 : vector<1x1x128xf32> to vector<1x128xf32>
    %627 = vector.broadcast %626 : vector<1x128xf32> to vector<64x128xf32>
    %628 = arith.addf %624, %627 : vector<64x128xf32>
    %c0_248 = arith.constant 0 : index
    %c0_249 = arith.constant 0 : index
    %629 = vector.load %arg8[%c0_248, %c0_249] : memref<64x128xf32, #tpu.memory_space<vmem>>, vector<64x128xf32>
    tpu.vector_store %arg8[%c0_248, %c0_249], %628 {strides = array<i32>} : memref<64x128xf32, #tpu.memory_space<vmem>>, vector<64x128xf32>,
    %c2_250 = arith.constant 2 : index
    %c0_251 = arith.constant 0 : index
    %c0_252 = arith.constant 0 : index
    %630 = vector.load %arg3[%c2_250, %c0_251, %c0_252] : memref<4x32x128xf32, #tpu.memory_space<vmem>>, vector<1x32x128xf32>
    %631 = vector.shape_cast %630 : vector<1x32x128xf32> to vector<32x128xf32>
    %cst_253 = arith.constant 0.000000e+00 : f32
    %632 = vector.broadcast %cst_253 : f32 to vector<8x32xf32>
    %cst_254 = arith.constant 0.000000e+00 : f32
    %633 = vector.broadcast %cst_254 : f32 to vector<8x32xf32>
    %cst_255 = arith.constant dense<0.000000e+00> : vector<8x128xf32>
    %634 = tpu.matmul %632, %631, %cst_255 {dimension_numbers = #tpu.dot_dimension_numbers<[1], [0], [0], [1], [0, 0, 1, 1], [], []>} : vector<8x32xf32>, vector<32x128xf32>, vector<8x128xf32> -> vector<8x128xf32>
    %c0_256 = arith.constant 0 : index
    %c0_257 = arith.constant 0 : index
    %635 = vector.load %arg8[%c0_256, %c0_257] : memref<64x128xf32, #tpu.memory_space<vmem>>, vector<8x128xf32>
    %c56_258 = arith.constant 56 : index
    %c0_259 = arith.constant 0 : index
    %636 = vector.load %arg8[%c56_258, %c0_259] : memref<64x128xf32, #tpu.memory_space<vmem>>, vector<8x128xf32>
    %637 = arith.select %18, %635, %636 : vector<8x128xi1>, vector<8x128xf32>
    %638 = arith.addf %637, %634 : vector<8x128xf32>
    %639 = vector.extract_strided_slice %638 {offsets = [0, 0], sizes = [8, 32], strides = [1, 1]} : vector<8x128xf32> to vector<8x32xf32>
    %640 = arith.negf %639 : vector<8x32xf32>
    %641 = math.exp %640 : vector<8x32xf32>
    %cst_260 = arith.constant 1.000000e+00 : f32
    %642 = vector.broadcast %cst_260 : f32 to vector<8x32xf32>
    %643 = arith.addf %642, %641 : vector<8x32xf32>
    %644 = arith.divf %642, %643 : vector<8x32xf32>
    %645 = vector.extract_strided_slice %638 {offsets = [0, 32], sizes = [8, 32], strides = [1, 1]} : vector<8x128xf32> to vector<8x32xf32>
    %646 = arith.negf %645 : vector<8x32xf32>
    %647 = math.exp %646 : vector<8x32xf32>
    %cst_261 = arith.constant 1.000000e+00 : f32
    %648 = vector.broadcast %cst_261 : f32 to vector<8x32xf32>
    %649 = arith.addf %648, %647 : vector<8x32xf32>
    %650 = arith.divf %648, %649 : vector<8x32xf32>
    %651 = vector.extract_strided_slice %638 {offsets = [0, 64], sizes = [8, 32], strides = [1, 1]} : vector<8x128xf32> to vector<8x32xf32>
    %652 = math.tanh %651 : vector<8x32xf32>
    %653 = vector.extract_strided_slice %638 {offsets = [0, 96], sizes = [8, 32], strides = [1, 1]} : vector<8x128xf32> to vector<8x32xf32>
    %654 = arith.negf %653 : vector<8x32xf32>
    %655 = math.exp %654 : vector<8x32xf32>
    %cst_262 = arith.constant 1.000000e+00 : f32
    %656 = vector.broadcast %cst_262 : f32 to vector<8x32xf32>
    %657 = arith.addf %656, %655 : vector<8x32xf32>
    %658 = arith.divf %656, %657 : vector<8x32xf32>
    %659 = arith.mulf %650, %633 : vector<8x32xf32>
    %660 = arith.mulf %644, %652 : vector<8x32xf32>
    %661 = arith.addf %659, %660 : vector<8x32xf32>
    %662 = math.tanh %661 : vector<8x32xf32>
    %663 = arith.mulf %658, %662 : vector<8x32xf32>
    %664 = vector.extract_strided_slice %663 {offsets = [0, 0], sizes = [8, 16], strides = [1, 1]} : vector<8x32xf32> to vector<8x16xf32>
    %c0_263 = arith.constant 0 : index
    %c0_264 = arith.constant 0 : index
    %665 = vector.load %arg9[%c0_263, %c0_264] : memref<64x32xf32, #tpu.memory_space<vmem>>, vector<8x16xf32>
    tpu.vector_store %arg9[%c0_263, %c0_264], %664 {strides = array<i32>} : memref<64x32xf32, #tpu.memory_space<vmem>>, vector<8x16xf32>,
    %666 = vector.extract_strided_slice %663 {offsets = [0, 16], sizes = [8, 16], strides = [1, 1]} : vector<8x32xf32> to vector<8x16xf32>
    %c56_265 = arith.constant 56 : index
    %c16_266 = arith.constant 16 : index
    %667 = vector.load %arg9[%c56_265, %c16_266] : memref<64x32xf32, #tpu.memory_space<vmem>>, vector<8x16xf32>
    tpu.vector_store %arg9[%c56_265, %c16_266], %666 {strides = array<i32>} : memref<64x32xf32, #tpu.memory_space<vmem>>, vector<8x16xf32>,
    %cst_267 = arith.constant dense<0.000000e+00> : vector<8x128xf32>
    %668 = tpu.matmul %663, %631, %cst_267 {dimension_numbers = #tpu.dot_dimension_numbers<[1], [0], [0], [1], [0, 0, 1, 1], [], []>} : vector<8x32xf32>, vector<32x128xf32>, vector<8x128xf32> -> vector<8x128xf32>
    %c8_268 = arith.constant 8 : index
    %c0_269 = arith.constant 0 : index
    %669 = vector.load %arg8[%c8_268, %c0_269] : memref<64x128xf32, #tpu.memory_space<vmem>>, vector<8x128xf32>
    %c48_270 = arith.constant 48 : index
    %c0_271 = arith.constant 0 : index
    %670 = vector.load %arg8[%c48_270, %c0_271] : memref<64x128xf32, #tpu.memory_space<vmem>>, vector<8x128xf32>
    %671 = arith.select %18, %669, %670 : vector<8x128xi1>, vector<8x128xf32>
    %672 = arith.addf %671, %668 : vector<8x128xf32>
    %673 = vector.extract_strided_slice %672 {offsets = [0, 0], sizes = [8, 32], strides = [1, 1]} : vector<8x128xf32> to vector<8x32xf32>
    %674 = arith.negf %673 : vector<8x32xf32>
    %675 = math.exp %674 : vector<8x32xf32>
    %cst_272 = arith.constant 1.000000e+00 : f32
    %676 = vector.broadcast %cst_272 : f32 to vector<8x32xf32>
    %677 = arith.addf %676, %675 : vector<8x32xf32>
    %678 = arith.divf %676, %677 : vector<8x32xf32>
    %679 = vector.extract_strided_slice %672 {offsets = [0, 32], sizes = [8, 32], strides = [1, 1]} : vector<8x128xf32> to vector<8x32xf32>
    %680 = arith.negf %679 : vector<8x32xf32>
    %681 = math.exp %680 : vector<8x32xf32>
    %cst_273 = arith.constant 1.000000e+00 : f32
    %682 = vector.broadcast %cst_273 : f32 to vector<8x32xf32>
    %683 = arith.addf %682, %681 : vector<8x32xf32>
    %684 = arith.divf %682, %683 : vector<8x32xf32>
    %685 = vector.extract_strided_slice %672 {offsets = [0, 64], sizes = [8, 32], strides = [1, 1]} : vector<8x128xf32> to vector<8x32xf32>
    %686 = math.tanh %685 : vector<8x32xf32>
    %687 = vector.extract_strided_slice %672 {offsets = [0, 96], sizes = [8, 32], strides = [1, 1]} : vector<8x128xf32> to vector<8x32xf32>
    %688 = arith.negf %687 : vector<8x32xf32>
    %689 = math.exp %688 : vector<8x32xf32>
    %cst_274 = arith.constant 1.000000e+00 : f32
    %690 = vector.broadcast %cst_274 : f32 to vector<8x32xf32>
    %691 = arith.addf %690, %689 : vector<8x32xf32>
    %692 = arith.divf %690, %691 : vector<8x32xf32>
    %693 = arith.mulf %684, %661 : vector<8x32xf32>
    %694 = arith.mulf %678, %686 : vector<8x32xf32>
    %695 = arith.addf %693, %694 : vector<8x32xf32>
    %696 = math.tanh %695 : vector<8x32xf32>
    %697 = arith.mulf %692, %696 : vector<8x32xf32>
    %698 = vector.extract_strided_slice %697 {offsets = [0, 0], sizes = [8, 16], strides = [1, 1]} : vector<8x32xf32> to vector<8x16xf32>
    %c8_275 = arith.constant 8 : index
    %c0_276 = arith.constant 0 : index
    %699 = vector.load %arg9[%c8_275, %c0_276] : memref<64x32xf32, #tpu.memory_space<vmem>>, vector<8x16xf32>
    tpu.vector_store %arg9[%c8_275, %c0_276], %698 {strides = array<i32>} : memref<64x32xf32, #tpu.memory_space<vmem>>, vector<8x16xf32>,
    %700 = vector.extract_strided_slice %697 {offsets = [0, 16], sizes = [8, 16], strides = [1, 1]} : vector<8x32xf32> to vector<8x16xf32>
    %c48_277 = arith.constant 48 : index
    %c16_278 = arith.constant 16 : index
    %701 = vector.load %arg9[%c48_277, %c16_278] : memref<64x32xf32, #tpu.memory_space<vmem>>, vector<8x16xf32>
    tpu.vector_store %arg9[%c48_277, %c16_278], %700 {strides = array<i32>} : memref<64x32xf32, #tpu.memory_space<vmem>>, vector<8x16xf32>,
    %cst_279 = arith.constant dense<0.000000e+00> : vector<8x128xf32>
    %702 = tpu.matmul %697, %631, %cst_279 {dimension_numbers = #tpu.dot_dimension_numbers<[1], [0], [0], [1], [0, 0, 1, 1], [], []>} : vector<8x32xf32>, vector<32x128xf32>, vector<8x128xf32> -> vector<8x128xf32>
    %c16_280 = arith.constant 16 : index
    %c0_281 = arith.constant 0 : index
    %703 = vector.load %arg8[%c16_280, %c0_281] : memref<64x128xf32, #tpu.memory_space<vmem>>, vector<8x128xf32>
    %c40_282 = arith.constant 40 : index
    %c0_283 = arith.constant 0 : index
    %704 = vector.load %arg8[%c40_282, %c0_283] : memref<64x128xf32, #tpu.memory_space<vmem>>, vector<8x128xf32>
    %705 = arith.select %18, %703, %704 : vector<8x128xi1>, vector<8x128xf32>
    %706 = arith.addf %705, %702 : vector<8x128xf32>
    %707 = vector.extract_strided_slice %706 {offsets = [0, 0], sizes = [8, 32], strides = [1, 1]} : vector<8x128xf32> to vector<8x32xf32>
    %708 = arith.negf %707 : vector<8x32xf32>
    %709 = math.exp %708 : vector<8x32xf32>
    %cst_284 = arith.constant 1.000000e+00 : f32
    %710 = vector.broadcast %cst_284 : f32 to vector<8x32xf32>
    %711 = arith.addf %710, %709 : vector<8x32xf32>
    %712 = arith.divf %710, %711 : vector<8x32xf32>
    %713 = vector.extract_strided_slice %706 {offsets = [0, 32], sizes = [8, 32], strides = [1, 1]} : vector<8x128xf32> to vector<8x32xf32>
    %714 = arith.negf %713 : vector<8x32xf32>
    %715 = math.exp %714 : vector<8x32xf32>
    %cst_285 = arith.constant 1.000000e+00 : f32
    %716 = vector.broadcast %cst_285 : f32 to vector<8x32xf32>
    %717 = arith.addf %716, %715 : vector<8x32xf32>
    %718 = arith.divf %716, %717 : vector<8x32xf32>
    %719 = vector.extract_strided_slice %706 {offsets = [0, 64], sizes = [8, 32], strides = [1, 1]} : vector<8x128xf32> to vector<8x32xf32>
    %720 = math.tanh %719 : vector<8x32xf32>
    %721 = vector.extract_strided_slice %706 {offsets = [0, 96], sizes = [8, 32], strides = [1, 1]} : vector<8x128xf32> to vector<8x32xf32>
    %722 = arith.negf %721 : vector<8x32xf32>
    %723 = math.exp %722 : vector<8x32xf32>
    %cst_286 = arith.constant 1.000000e+00 : f32
    %724 = vector.broadcast %cst_286 : f32 to vector<8x32xf32>
    %725 = arith.addf %724, %723 : vector<8x32xf32>
    %726 = arith.divf %724, %725 : vector<8x32xf32>
    %727 = arith.mulf %718, %695 : vector<8x32xf32>
    %728 = arith.mulf %712, %720 : vector<8x32xf32>
    %729 = arith.addf %727, %728 : vector<8x32xf32>
    %730 = math.tanh %729 : vector<8x32xf32>
    %731 = arith.mulf %726, %730 : vector<8x32xf32>
    %732 = vector.extract_strided_slice %731 {offsets = [0, 0], sizes = [8, 16], strides = [1, 1]} : vector<8x32xf32> to vector<8x16xf32>
    %c16_287 = arith.constant 16 : index
    %c0_288 = arith.constant 0 : index
    %733 = vector.load %arg9[%c16_287, %c0_288] : memref<64x32xf32, #tpu.memory_space<vmem>>, vector<8x16xf32>
    tpu.vector_store %arg9[%c16_287, %c0_288], %732 {strides = array<i32>} : memref<64x32xf32, #tpu.memory_space<vmem>>, vector<8x16xf32>,
    %734 = vector.extract_strided_slice %731 {offsets = [0, 16], sizes = [8, 16], strides = [1, 1]} : vector<8x32xf32> to vector<8x16xf32>
    %c40_289 = arith.constant 40 : index
    %c16_290 = arith.constant 16 : index
    %735 = vector.load %arg9[%c40_289, %c16_290] : memref<64x32xf32, #tpu.memory_space<vmem>>, vector<8x16xf32>
    tpu.vector_store %arg9[%c40_289, %c16_290], %734 {strides = array<i32>} : memref<64x32xf32, #tpu.memory_space<vmem>>, vector<8x16xf32>,
    %cst_291 = arith.constant dense<0.000000e+00> : vector<8x128xf32>
    %736 = tpu.matmul %731, %631, %cst_291 {dimension_numbers = #tpu.dot_dimension_numbers<[1], [0], [0], [1], [0, 0, 1, 1], [], []>} : vector<8x32xf32>, vector<32x128xf32>, vector<8x128xf32> -> vector<8x128xf32>
    %c24_292 = arith.constant 24 : index
    %c0_293 = arith.constant 0 : index
    %737 = vector.load %arg8[%c24_292, %c0_293] : memref<64x128xf32, #tpu.memory_space<vmem>>, vector<8x128xf32>
    %c32_294 = arith.constant 32 : index
    %c0_295 = arith.constant 0 : index
    %738 = vector.load %arg8[%c32_294, %c0_295] : memref<64x128xf32, #tpu.memory_space<vmem>>, vector<8x128xf32>
    %739 = arith.select %18, %737, %738 : vector<8x128xi1>, vector<8x128xf32>
    %740 = arith.addf %739, %736 : vector<8x128xf32>
    %741 = vector.extract_strided_slice %740 {offsets = [0, 0], sizes = [8, 32], strides = [1, 1]} : vector<8x128xf32> to vector<8x32xf32>
    %742 = arith.negf %741 : vector<8x32xf32>
    %743 = math.exp %742 : vector<8x32xf32>
    %cst_296 = arith.constant 1.000000e+00 : f32
    %744 = vector.broadcast %cst_296 : f32 to vector<8x32xf32>
    %745 = arith.addf %744, %743 : vector<8x32xf32>
    %746 = arith.divf %744, %745 : vector<8x32xf32>
    %747 = vector.extract_strided_slice %740 {offsets = [0, 32], sizes = [8, 32], strides = [1, 1]} : vector<8x128xf32> to vector<8x32xf32>
    %748 = arith.negf %747 : vector<8x32xf32>
    %749 = math.exp %748 : vector<8x32xf32>
    %cst_297 = arith.constant 1.000000e+00 : f32
    %750 = vector.broadcast %cst_297 : f32 to vector<8x32xf32>
    %751 = arith.addf %750, %749 : vector<8x32xf32>
    %752 = arith.divf %750, %751 : vector<8x32xf32>
    %753 = vector.extract_strided_slice %740 {offsets = [0, 64], sizes = [8, 32], strides = [1, 1]} : vector<8x128xf32> to vector<8x32xf32>
    %754 = math.tanh %753 : vector<8x32xf32>
    %755 = vector.extract_strided_slice %740 {offsets = [0, 96], sizes = [8, 32], strides = [1, 1]} : vector<8x128xf32> to vector<8x32xf32>
    %756 = arith.negf %755 : vector<8x32xf32>
    %757 = math.exp %756 : vector<8x32xf32>
    %cst_298 = arith.constant 1.000000e+00 : f32
    %758 = vector.broadcast %cst_298 : f32 to vector<8x32xf32>
    %759 = arith.addf %758, %757 : vector<8x32xf32>
    %760 = arith.divf %758, %759 : vector<8x32xf32>
    %761 = arith.mulf %752, %729 : vector<8x32xf32>
    %762 = arith.mulf %746, %754 : vector<8x32xf32>
    %763 = arith.addf %761, %762 : vector<8x32xf32>
    %764 = math.tanh %763 : vector<8x32xf32>
    %765 = arith.mulf %760, %764 : vector<8x32xf32>
    %766 = vector.extract_strided_slice %765 {offsets = [0, 0], sizes = [8, 16], strides = [1, 1]} : vector<8x32xf32> to vector<8x16xf32>
    %c24_299 = arith.constant 24 : index
    %c0_300 = arith.constant 0 : index
    %767 = vector.load %arg9[%c24_299, %c0_300] : memref<64x32xf32, #tpu.memory_space<vmem>>, vector<8x16xf32>
    tpu.vector_store %arg9[%c24_299, %c0_300], %766 {strides = array<i32>} : memref<64x32xf32, #tpu.memory_space<vmem>>, vector<8x16xf32>,
    %768 = vector.extract_strided_slice %765 {offsets = [0, 16], sizes = [8, 16], strides = [1, 1]} : vector<8x32xf32> to vector<8x16xf32>
    %c32_301 = arith.constant 32 : index
    %c16_302 = arith.constant 16 : index
    %769 = vector.load %arg9[%c32_301, %c16_302] : memref<64x32xf32, #tpu.memory_space<vmem>>, vector<8x16xf32>
    tpu.vector_store %arg9[%c32_301, %c16_302], %768 {strides = array<i32>} : memref<64x32xf32, #tpu.memory_space<vmem>>, vector<8x16xf32>,
    %cst_303 = arith.constant dense<0.000000e+00> : vector<8x128xf32>
    %770 = tpu.matmul %765, %631, %cst_303 {dimension_numbers = #tpu.dot_dimension_numbers<[1], [0], [0], [1], [0, 0, 1, 1], [], []>} : vector<8x32xf32>, vector<32x128xf32>, vector<8x128xf32> -> vector<8x128xf32>
    %c32_304 = arith.constant 32 : index
    %c0_305 = arith.constant 0 : index
    %771 = vector.load %arg8[%c32_304, %c0_305] : memref<64x128xf32, #tpu.memory_space<vmem>>, vector<8x128xf32>
    %c24_306 = arith.constant 24 : index
    %c0_307 = arith.constant 0 : index
    %772 = vector.load %arg8[%c24_306, %c0_307] : memref<64x128xf32, #tpu.memory_space<vmem>>, vector<8x128xf32>
    %773 = arith.select %18, %771, %772 : vector<8x128xi1>, vector<8x128xf32>
    %774 = arith.addf %773, %770 : vector<8x128xf32>
    %775 = vector.extract_strided_slice %774 {offsets = [0, 0], sizes = [8, 32], strides = [1, 1]} : vector<8x128xf32> to vector<8x32xf32>
    %776 = arith.negf %775 : vector<8x32xf32>
    %777 = math.exp %776 : vector<8x32xf32>
    %cst_308 = arith.constant 1.000000e+00 : f32
    %778 = vector.broadcast %cst_308 : f32 to vector<8x32xf32>
    %779 = arith.addf %778, %777 : vector<8x32xf32>
    %780 = arith.divf %778, %779 : vector<8x32xf32>
    %781 = vector.extract_strided_slice %774 {offsets = [0, 32], sizes = [8, 32], strides = [1, 1]} : vector<8x128xf32> to vector<8x32xf32>
    %782 = arith.negf %781 : vector<8x32xf32>
    %783 = math.exp %782 : vector<8x32xf32>
    %cst_309 = arith.constant 1.000000e+00 : f32
    %784 = vector.broadcast %cst_309 : f32 to vector<8x32xf32>
    %785 = arith.addf %784, %783 : vector<8x32xf32>
    %786 = arith.divf %784, %785 : vector<8x32xf32>
    %787 = vector.extract_strided_slice %774 {offsets = [0, 64], sizes = [8, 32], strides = [1, 1]} : vector<8x128xf32> to vector<8x32xf32>
    %788 = math.tanh %787 : vector<8x32xf32>
    %789 = vector.extract_strided_slice %774 {offsets = [0, 96], sizes = [8, 32], strides = [1, 1]} : vector<8x128xf32> to vector<8x32xf32>
    %790 = arith.negf %789 : vector<8x32xf32>
    %791 = math.exp %790 : vector<8x32xf32>
    %cst_310 = arith.constant 1.000000e+00 : f32
    %792 = vector.broadcast %cst_310 : f32 to vector<8x32xf32>
    %793 = arith.addf %792, %791 : vector<8x32xf32>
    %794 = arith.divf %792, %793 : vector<8x32xf32>
    %795 = arith.mulf %786, %763 : vector<8x32xf32>
    %796 = arith.mulf %780, %788 : vector<8x32xf32>
    %797 = arith.addf %795, %796 : vector<8x32xf32>
    %798 = math.tanh %797 : vector<8x32xf32>
    %799 = arith.mulf %794, %798 : vector<8x32xf32>
    %800 = vector.extract_strided_slice %799 {offsets = [0, 0], sizes = [8, 16], strides = [1, 1]} : vector<8x32xf32> to vector<8x16xf32>
    %c32_311 = arith.constant 32 : index
    %c0_312 = arith.constant 0 : index
    %801 = vector.load %arg9[%c32_311, %c0_312] : memref<64x32xf32, #tpu.memory_space<vmem>>, vector<8x16xf32>
    tpu.vector_store %arg9[%c32_311, %c0_312], %800 {strides = array<i32>} : memref<64x32xf32, #tpu.memory_space<vmem>>, vector<8x16xf32>,
    %802 = vector.extract_strided_slice %799 {offsets = [0, 16], sizes = [8, 16], strides = [1, 1]} : vector<8x32xf32> to vector<8x16xf32>
    %c24_313 = arith.constant 24 : index
    %c16_314 = arith.constant 16 : index
    %803 = vector.load %arg9[%c24_313, %c16_314] : memref<64x32xf32, #tpu.memory_space<vmem>>, vector<8x16xf32>
    tpu.vector_store %arg9[%c24_313, %c16_314], %802 {strides = array<i32>} : memref<64x32xf32, #tpu.memory_space<vmem>>, vector<8x16xf32>,
    %cst_315 = arith.constant dense<0.000000e+00> : vector<8x128xf32>
    %804 = tpu.matmul %799, %631, %cst_315 {dimension_numbers = #tpu.dot_dimension_numbers<[1], [0], [0], [1], [0, 0, 1, 1], [], []>} : vector<8x32xf32>, vector<32x128xf32>, vector<8x128xf32> -> vector<8x128xf32>
    %c40_316 = arith.constant 40 : index
    %c0_317 = arith.constant 0 : index
    %805 = vector.load %arg8[%c40_316, %c0_317] : memref<64x128xf32, #tpu.memory_space<vmem>>, vector<8x128xf32>
    %c16_318 = arith.constant 16 : index
    %c0_319 = arith.constant 0 : index
    %806 = vector.load %arg8[%c16_318, %c0_319] : memref<64x128xf32, #tpu.memory_space<vmem>>, vector<8x128xf32>
    %807 = arith.select %18, %805, %806 : vector<8x128xi1>, vector<8x128xf32>
    %808 = arith.addf %807, %804 : vector<8x128xf32>
    %809 = vector.extract_strided_slice %808 {offsets = [0, 0], sizes = [8, 32], strides = [1, 1]} : vector<8x128xf32> to vector<8x32xf32>
    %810 = arith.negf %809 : vector<8x32xf32>
    %811 = math.exp %810 : vector<8x32xf32>
    %cst_320 = arith.constant 1.000000e+00 : f32
    %812 = vector.broadcast %cst_320 : f32 to vector<8x32xf32>
    %813 = arith.addf %812, %811 : vector<8x32xf32>
    %814 = arith.divf %812, %813 : vector<8x32xf32>
    %815 = vector.extract_strided_slice %808 {offsets = [0, 32], sizes = [8, 32], strides = [1, 1]} : vector<8x128xf32> to vector<8x32xf32>
    %816 = arith.negf %815 : vector<8x32xf32>
    %817 = math.exp %816 : vector<8x32xf32>
    %cst_321 = arith.constant 1.000000e+00 : f32
    %818 = vector.broadcast %cst_321 : f32 to vector<8x32xf32>
    %819 = arith.addf %818, %817 : vector<8x32xf32>
    %820 = arith.divf %818, %819 : vector<8x32xf32>
    %821 = vector.extract_strided_slice %808 {offsets = [0, 64], sizes = [8, 32], strides = [1, 1]} : vector<8x128xf32> to vector<8x32xf32>
    %822 = math.tanh %821 : vector<8x32xf32>
    %823 = vector.extract_strided_slice %808 {offsets = [0, 96], sizes = [8, 32], strides = [1, 1]} : vector<8x128xf32> to vector<8x32xf32>
    %824 = arith.negf %823 : vector<8x32xf32>
    %825 = math.exp %824 : vector<8x32xf32>
    %cst_322 = arith.constant 1.000000e+00 : f32
    %826 = vector.broadcast %cst_322 : f32 to vector<8x32xf32>
    %827 = arith.addf %826, %825 : vector<8x32xf32>
    %828 = arith.divf %826, %827 : vector<8x32xf32>
    %829 = arith.mulf %820, %797 : vector<8x32xf32>
    %830 = arith.mulf %814, %822 : vector<8x32xf32>
    %831 = arith.addf %829, %830 : vector<8x32xf32>
    %832 = math.tanh %831 : vector<8x32xf32>
    %833 = arith.mulf %828, %832 : vector<8x32xf32>
    %834 = vector.extract_strided_slice %833 {offsets = [0, 0], sizes = [8, 16], strides = [1, 1]} : vector<8x32xf32> to vector<8x16xf32>
    %c40_323 = arith.constant 40 : index
    %c0_324 = arith.constant 0 : index
    %835 = vector.load %arg9[%c40_323, %c0_324] : memref<64x32xf32, #tpu.memory_space<vmem>>, vector<8x16xf32>
    tpu.vector_store %arg9[%c40_323, %c0_324], %834 {strides = array<i32>} : memref<64x32xf32, #tpu.memory_space<vmem>>, vector<8x16xf32>,
    %836 = vector.extract_strided_slice %833 {offsets = [0, 16], sizes = [8, 16], strides = [1, 1]} : vector<8x32xf32> to vector<8x16xf32>
    %c16_325 = arith.constant 16 : index
    %c16_326 = arith.constant 16 : index
    %837 = vector.load %arg9[%c16_325, %c16_326] : memref<64x32xf32, #tpu.memory_space<vmem>>, vector<8x16xf32>
    tpu.vector_store %arg9[%c16_325, %c16_326], %836 {strides = array<i32>} : memref<64x32xf32, #tpu.memory_space<vmem>>, vector<8x16xf32>,
    %cst_327 = arith.constant dense<0.000000e+00> : vector<8x128xf32>
    %838 = tpu.matmul %833, %631, %cst_327 {dimension_numbers = #tpu.dot_dimension_numbers<[1], [0], [0], [1], [0, 0, 1, 1], [], []>} : vector<8x32xf32>, vector<32x128xf32>, vector<8x128xf32> -> vector<8x128xf32>
    %c48_328 = arith.constant 48 : index
    %c0_329 = arith.constant 0 : index
    %839 = vector.load %arg8[%c48_328, %c0_329] : memref<64x128xf32, #tpu.memory_space<vmem>>, vector<8x128xf32>
    %c8_330 = arith.constant 8 : index
    %c0_331 = arith.constant 0 : index
    %840 = vector.load %arg8[%c8_330, %c0_331] : memref<64x128xf32, #tpu.memory_space<vmem>>, vector<8x128xf32>
    %841 = arith.select %18, %839, %840 : vector<8x128xi1>, vector<8x128xf32>
    %842 = arith.addf %841, %838 : vector<8x128xf32>
    %843 = vector.extract_strided_slice %842 {offsets = [0, 0], sizes = [8, 32], strides = [1, 1]} : vector<8x128xf32> to vector<8x32xf32>
    %844 = arith.negf %843 : vector<8x32xf32>
    %845 = math.exp %844 : vector<8x32xf32>
    %cst_332 = arith.constant 1.000000e+00 : f32
    %846 = vector.broadcast %cst_332 : f32 to vector<8x32xf32>
    %847 = arith.addf %846, %845 : vector<8x32xf32>
    %848 = arith.divf %846, %847 : vector<8x32xf32>
    %849 = vector.extract_strided_slice %842 {offsets = [0, 32], sizes = [8, 32], strides = [1, 1]} : vector<8x128xf32> to vector<8x32xf32>
    %850 = arith.negf %849 : vector<8x32xf32>
    %851 = math.exp %850 : vector<8x32xf32>
    %cst_333 = arith.constant 1.000000e+00 : f32
    %852 = vector.broadcast %cst_333 : f32 to vector<8x32xf32>
    %853 = arith.addf %852, %851 : vector<8x32xf32>
    %854 = arith.divf %852, %853 : vector<8x32xf32>
    %855 = vector.extract_strided_slice %842 {offsets = [0, 64], sizes = [8, 32], strides = [1, 1]} : vector<8x128xf32> to vector<8x32xf32>
    %856 = math.tanh %855 : vector<8x32xf32>
    %857 = vector.extract_strided_slice %842 {offsets = [0, 96], sizes = [8, 32], strides = [1, 1]} : vector<8x128xf32> to vector<8x32xf32>
    %858 = arith.negf %857 : vector<8x32xf32>
    %859 = math.exp %858 : vector<8x32xf32>
    %cst_334 = arith.constant 1.000000e+00 : f32
    %860 = vector.broadcast %cst_334 : f32 to vector<8x32xf32>
    %861 = arith.addf %860, %859 : vector<8x32xf32>
    %862 = arith.divf %860, %861 : vector<8x32xf32>
    %863 = arith.mulf %854, %831 : vector<8x32xf32>
    %864 = arith.mulf %848, %856 : vector<8x32xf32>
    %865 = arith.addf %863, %864 : vector<8x32xf32>
    %866 = math.tanh %865 : vector<8x32xf32>
    %867 = arith.mulf %862, %866 : vector<8x32xf32>
    %868 = vector.extract_strided_slice %867 {offsets = [0, 0], sizes = [8, 16], strides = [1, 1]} : vector<8x32xf32> to vector<8x16xf32>
    %c48_335 = arith.constant 48 : index
    %c0_336 = arith.constant 0 : index
    %869 = vector.load %arg9[%c48_335, %c0_336] : memref<64x32xf32, #tpu.memory_space<vmem>>, vector<8x16xf32>
    tpu.vector_store %arg9[%c48_335, %c0_336], %868 {strides = array<i32>} : memref<64x32xf32, #tpu.memory_space<vmem>>, vector<8x16xf32>,
    %870 = vector.extract_strided_slice %867 {offsets = [0, 16], sizes = [8, 16], strides = [1, 1]} : vector<8x32xf32> to vector<8x16xf32>
    %c8_337 = arith.constant 8 : index
    %c16_338 = arith.constant 16 : index
    %871 = vector.load %arg9[%c8_337, %c16_338] : memref<64x32xf32, #tpu.memory_space<vmem>>, vector<8x16xf32>
    tpu.vector_store %arg9[%c8_337, %c16_338], %870 {strides = array<i32>} : memref<64x32xf32, #tpu.memory_space<vmem>>, vector<8x16xf32>,
    %cst_339 = arith.constant dense<0.000000e+00> : vector<8x128xf32>
    %872 = tpu.matmul %867, %631, %cst_339 {dimension_numbers = #tpu.dot_dimension_numbers<[1], [0], [0], [1], [0, 0, 1, 1], [], []>} : vector<8x32xf32>, vector<32x128xf32>, vector<8x128xf32> -> vector<8x128xf32>
    %c56_340 = arith.constant 56 : index
    %c0_341 = arith.constant 0 : index
    %873 = vector.load %arg8[%c56_340, %c0_341] : memref<64x128xf32, #tpu.memory_space<vmem>>, vector<8x128xf32>
    %c0_342 = arith.constant 0 : index
    %c0_343 = arith.constant 0 : index
    %874 = vector.load %arg8[%c0_342, %c0_343] : memref<64x128xf32, #tpu.memory_space<vmem>>, vector<8x128xf32>
    %875 = arith.select %18, %873, %874 : vector<8x128xi1>, vector<8x128xf32>
    %876 = arith.addf %875, %872 : vector<8x128xf32>
    %877 = vector.extract_strided_slice %876 {offsets = [0, 0], sizes = [8, 32], strides = [1, 1]} : vector<8x128xf32> to vector<8x32xf32>
    %878 = arith.negf %877 : vector<8x32xf32>
    %879 = math.exp %878 : vector<8x32xf32>
    %cst_344 = arith.constant 1.000000e+00 : f32
    %880 = vector.broadcast %cst_344 : f32 to vector<8x32xf32>
    %881 = arith.addf %880, %879 : vector<8x32xf32>
    %882 = arith.divf %880, %881 : vector<8x32xf32>
    %883 = vector.extract_strided_slice %876 {offsets = [0, 32], sizes = [8, 32], strides = [1, 1]} : vector<8x128xf32> to vector<8x32xf32>
    %884 = arith.negf %883 : vector<8x32xf32>
    %885 = math.exp %884 : vector<8x32xf32>
    %cst_345 = arith.constant 1.000000e+00 : f32
    %886 = vector.broadcast %cst_345 : f32 to vector<8x32xf32>
    %887 = arith.addf %886, %885 : vector<8x32xf32>
    %888 = arith.divf %886, %887 : vector<8x32xf32>
    %889 = vector.extract_strided_slice %876 {offsets = [0, 64], sizes = [8, 32], strides = [1, 1]} : vector<8x128xf32> to vector<8x32xf32>
    %890 = math.tanh %889 : vector<8x32xf32>
    %891 = vector.extract_strided_slice %876 {offsets = [0, 96], sizes = [8, 32], strides = [1, 1]} : vector<8x128xf32> to vector<8x32xf32>
    %892 = arith.negf %891 : vector<8x32xf32>
    %893 = math.exp %892 : vector<8x32xf32>
    %cst_346 = arith.constant 1.000000e+00 : f32
    %894 = vector.broadcast %cst_346 : f32 to vector<8x32xf32>
    %895 = arith.addf %894, %893 : vector<8x32xf32>
    %896 = arith.divf %894, %895 : vector<8x32xf32>
    %897 = arith.mulf %888, %865 : vector<8x32xf32>
    %898 = arith.mulf %882, %890 : vector<8x32xf32>
    %899 = arith.addf %897, %898 : vector<8x32xf32>
    %900 = math.tanh %899 : vector<8x32xf32>
    %901 = arith.mulf %896, %900 : vector<8x32xf32>
    %902 = vector.extract_strided_slice %901 {offsets = [0, 0], sizes = [8, 16], strides = [1, 1]} : vector<8x32xf32> to vector<8x16xf32>
    %c56_347 = arith.constant 56 : index
    %c0_348 = arith.constant 0 : index
    %903 = vector.load %arg9[%c56_347, %c0_348] : memref<64x32xf32, #tpu.memory_space<vmem>>, vector<8x16xf32>
    tpu.vector_store %arg9[%c56_347, %c0_348], %902 {strides = array<i32>} : memref<64x32xf32, #tpu.memory_space<vmem>>, vector<8x16xf32>,
    %904 = vector.extract_strided_slice %901 {offsets = [0, 16], sizes = [8, 16], strides = [1, 1]} : vector<8x32xf32> to vector<8x16xf32>
    %c0_349 = arith.constant 0 : index
    %c16_350 = arith.constant 16 : index
    %905 = vector.load %arg9[%c0_349, %c16_350] : memref<64x32xf32, #tpu.memory_space<vmem>>, vector<8x16xf32>
    tpu.vector_store %arg9[%c0_349, %c16_350], %904 {strides = array<i32>} : memref<64x32xf32, #tpu.memory_space<vmem>>, vector<8x16xf32>,
    %906 = vector.extract_strided_slice %901 {offsets = [0, 0], sizes = [8, 16], strides = [1, 1]} : vector<8x32xf32> to vector<8x16xf32>
    %c4 = arith.constant 4 : index
    %c0_351 = arith.constant 0 : index
    %c0_352 = arith.constant 0 : index
    %907 = vector.load %arg6[%c4, %c0_351, %c0_352] : memref<8x8x16xf32, #tpu.memory_space<vmem>>, vector<1x8x16xf32>
    %908 = vector.shape_cast %907 : vector<1x8x16xf32> to vector<8x16xf32>
    %909 = vector.shape_cast %906 : vector<8x16xf32> to vector<1x8x16xf32>
    tpu.vector_store %arg6[%c4, %c0_351, %c0_352], %909 {strides = array<i32>} : memref<8x8x16xf32, #tpu.memory_space<vmem>>, vector<1x8x16xf32>,
    %910 = vector.extract_strided_slice %901 {offsets = [0, 16], sizes = [8, 16], strides = [1, 1]} : vector<8x32xf32> to vector<8x16xf32>
    %c5 = arith.constant 5 : index
    %c0_353 = arith.constant 0 : index
    %c0_354 = arith.constant 0 : index
    %911 = vector.load %arg6[%c5, %c0_353, %c0_354] : memref<8x8x16xf32, #tpu.memory_space<vmem>>, vector<1x8x16xf32>
    %912 = vector.shape_cast %911 : vector<1x8x16xf32> to vector<8x16xf32>
    %913 = vector.shape_cast %910 : vector<8x16xf32> to vector<1x8x16xf32>
    tpu.vector_store %arg6[%c5, %c0_353, %c0_354], %913 {strides = array<i32>} : memref<8x8x16xf32, #tpu.memory_space<vmem>>, vector<1x8x16xf32>,
    %914 = vector.extract_strided_slice %899 {offsets = [0, 0], sizes = [8, 16], strides = [1, 1]} : vector<8x32xf32> to vector<8x16xf32>
    %c4_355 = arith.constant 4 : index
    %c0_356 = arith.constant 0 : index
    %c0_357 = arith.constant 0 : index
    %915 = vector.load %arg7[%c4_355, %c0_356, %c0_357] : memref<8x8x16xf32, #tpu.memory_space<vmem>>, vector<1x8x16xf32>
    %916 = vector.shape_cast %915 : vector<1x8x16xf32> to vector<8x16xf32>
    %917 = vector.shape_cast %914 : vector<8x16xf32> to vector<1x8x16xf32>
    tpu.vector_store %arg7[%c4_355, %c0_356, %c0_357], %917 {strides = array<i32>} : memref<8x8x16xf32, #tpu.memory_space<vmem>>, vector<1x8x16xf32>,
    %918 = vector.extract_strided_slice %899 {offsets = [0, 16], sizes = [8, 16], strides = [1, 1]} : vector<8x32xf32> to vector<8x16xf32>
    %c5_358 = arith.constant 5 : index
    %c0_359 = arith.constant 0 : index
    %c0_360 = arith.constant 0 : index
    %919 = vector.load %arg7[%c5_358, %c0_359, %c0_360] : memref<8x8x16xf32, #tpu.memory_space<vmem>>, vector<1x8x16xf32>
    %920 = vector.shape_cast %919 : vector<1x8x16xf32> to vector<8x16xf32>
    %921 = vector.shape_cast %918 : vector<8x16xf32> to vector<1x8x16xf32>
    tpu.vector_store %arg7[%c5_358, %c0_359, %c0_360], %921 {strides = array<i32>} : memref<8x8x16xf32, #tpu.memory_space<vmem>>, vector<1x8x16xf32>,
    %c0_361 = arith.constant 0 : index
    %c0_362 = arith.constant 0 : index
    %922 = vector.load %arg9[%c0_361, %c0_362] : memref<64x32xf32, #tpu.memory_space<vmem>>, vector<64x32xf32>
    %c3_363 = arith.constant 3 : index
    %c0_364 = arith.constant 0 : index
    %c0_365 = arith.constant 0 : index
    %923 = vector.load %arg2[%c3_363, %c0_364, %c0_365] : memref<4x32x128xf32, #tpu.memory_space<vmem>>, vector<1x32x128xf32>
    %924 = vector.shape_cast %923 : vector<1x32x128xf32> to vector<32x128xf32>
    %cst_366 = arith.constant dense<0.000000e+00> : vector<64x128xf32>
    %925 = tpu.matmul %922, %924, %cst_366 {dimension_numbers = #tpu.dot_dimension_numbers<[1], [0], [0], [1], [0, 0, 1, 1], [], []>} : vector<64x32xf32>, vector<32x128xf32>, vector<64x128xf32> -> vector<64x128xf32>
    %c3_367 = arith.constant 3 : index
    %c0_368 = arith.constant 0 : index
    %c0_369 = arith.constant 0 : index
    %926 = vector.load %arg4[%c3_367, %c0_368, %c0_369] : memref<4x1x128xf32, #tpu.memory_space<vmem>>, vector<1x1x128xf32>
    %927 = vector.shape_cast %926 : vector<1x1x128xf32> to vector<1x128xf32>
    %928 = vector.broadcast %927 : vector<1x128xf32> to vector<64x128xf32>
    %929 = arith.addf %925, %928 : vector<64x128xf32>
    %c0_370 = arith.constant 0 : index
    %c0_371 = arith.constant 0 : index
    %930 = vector.load %arg8[%c0_370, %c0_371] : memref<64x128xf32, #tpu.memory_space<vmem>>, vector<64x128xf32>
    tpu.vector_store %arg8[%c0_370, %c0_371], %929 {strides = array<i32>} : memref<64x128xf32, #tpu.memory_space<vmem>>, vector<64x128xf32>,
    %c3_372 = arith.constant 3 : index
    %c0_373 = arith.constant 0 : index
    %c0_374 = arith.constant 0 : index
    %931 = vector.load %arg3[%c3_372, %c0_373, %c0_374] : memref<4x32x128xf32, #tpu.memory_space<vmem>>, vector<1x32x128xf32>
    %932 = vector.shape_cast %931 : vector<1x32x128xf32> to vector<32x128xf32>
    %cst_375 = arith.constant 0.000000e+00 : f32
    %933 = vector.broadcast %cst_375 : f32 to vector<8x32xf32>
    %cst_376 = arith.constant 0.000000e+00 : f32
    %934 = vector.broadcast %cst_376 : f32 to vector<8x32xf32>
    %cst_377 = arith.constant dense<0.000000e+00> : vector<8x128xf32>
    %935 = tpu.matmul %933, %932, %cst_377 {dimension_numbers = #tpu.dot_dimension_numbers<[1], [0], [0], [1], [0, 0, 1, 1], [], []>} : vector<8x32xf32>, vector<32x128xf32>, vector<8x128xf32> -> vector<8x128xf32>
    %c0_378 = arith.constant 0 : index
    %c0_379 = arith.constant 0 : index
    %936 = vector.load %arg8[%c0_378, %c0_379] : memref<64x128xf32, #tpu.memory_space<vmem>>, vector<8x128xf32>
    %c56_380 = arith.constant 56 : index
    %c0_381 = arith.constant 0 : index
    %937 = vector.load %arg8[%c56_380, %c0_381] : memref<64x128xf32, #tpu.memory_space<vmem>>, vector<8x128xf32>
    %938 = arith.select %18, %936, %937 : vector<8x128xi1>, vector<8x128xf32>
    %939 = arith.addf %938, %935 : vector<8x128xf32>
    %940 = vector.extract_strided_slice %939 {offsets = [0, 0], sizes = [8, 32], strides = [1, 1]} : vector<8x128xf32> to vector<8x32xf32>
    %941 = arith.negf %940 : vector<8x32xf32>
    %942 = math.exp %941 : vector<8x32xf32>
    %cst_382 = arith.constant 1.000000e+00 : f32
    %943 = vector.broadcast %cst_382 : f32 to vector<8x32xf32>
    %944 = arith.addf %943, %942 : vector<8x32xf32>
    %945 = arith.divf %943, %944 : vector<8x32xf32>
    %946 = vector.extract_strided_slice %939 {offsets = [0, 32], sizes = [8, 32], strides = [1, 1]} : vector<8x128xf32> to vector<8x32xf32>
    %947 = arith.negf %946 : vector<8x32xf32>
    %948 = math.exp %947 : vector<8x32xf32>
    %cst_383 = arith.constant 1.000000e+00 : f32
    %949 = vector.broadcast %cst_383 : f32 to vector<8x32xf32>
    %950 = arith.addf %949, %948 : vector<8x32xf32>
    %951 = arith.divf %949, %950 : vector<8x32xf32>
    %952 = vector.extract_strided_slice %939 {offsets = [0, 64], sizes = [8, 32], strides = [1, 1]} : vector<8x128xf32> to vector<8x32xf32>
    %953 = math.tanh %952 : vector<8x32xf32>
    %954 = vector.extract_strided_slice %939 {offsets = [0, 96], sizes = [8, 32], strides = [1, 1]} : vector<8x128xf32> to vector<8x32xf32>
    %955 = arith.negf %954 : vector<8x32xf32>
    %956 = math.exp %955 : vector<8x32xf32>
    %cst_384 = arith.constant 1.000000e+00 : f32
    %957 = vector.broadcast %cst_384 : f32 to vector<8x32xf32>
    %958 = arith.addf %957, %956 : vector<8x32xf32>
    %959 = arith.divf %957, %958 : vector<8x32xf32>
    %960 = arith.mulf %951, %934 : vector<8x32xf32>
    %961 = arith.mulf %945, %953 : vector<8x32xf32>
    %962 = arith.addf %960, %961 : vector<8x32xf32>
    %963 = math.tanh %962 : vector<8x32xf32>
    %964 = arith.mulf %959, %963 : vector<8x32xf32>
    %965 = vector.extract_strided_slice %964 {offsets = [0, 0], sizes = [8, 16], strides = [1, 1]} : vector<8x32xf32> to vector<8x16xf32>
    %c0_385 = arith.constant 0 : index
    %c0_386 = arith.constant 0 : index
    %966 = vector.load %arg9[%c0_385, %c0_386] : memref<64x32xf32, #tpu.memory_space<vmem>>, vector<8x16xf32>
    tpu.vector_store %arg9[%c0_385, %c0_386], %965 {strides = array<i32>} : memref<64x32xf32, #tpu.memory_space<vmem>>, vector<8x16xf32>,
    %967 = vector.extract_strided_slice %964 {offsets = [0, 16], sizes = [8, 16], strides = [1, 1]} : vector<8x32xf32> to vector<8x16xf32>
    %c56_387 = arith.constant 56 : index
    %c16_388 = arith.constant 16 : index
    %968 = vector.load %arg9[%c56_387, %c16_388] : memref<64x32xf32, #tpu.memory_space<vmem>>, vector<8x16xf32>
    tpu.vector_store %arg9[%c56_387, %c16_388], %967 {strides = array<i32>} : memref<64x32xf32, #tpu.memory_space<vmem>>, vector<8x16xf32>,
    %cst_389 = arith.constant dense<0.000000e+00> : vector<8x128xf32>
    %969 = tpu.matmul %964, %932, %cst_389 {dimension_numbers = #tpu.dot_dimension_numbers<[1], [0], [0], [1], [0, 0, 1, 1], [], []>} : vector<8x32xf32>, vector<32x128xf32>, vector<8x128xf32> -> vector<8x128xf32>
    %c8_390 = arith.constant 8 : index
    %c0_391 = arith.constant 0 : index
    %970 = vector.load %arg8[%c8_390, %c0_391] : memref<64x128xf32, #tpu.memory_space<vmem>>, vector<8x128xf32>
    %c48_392 = arith.constant 48 : index
    %c0_393 = arith.constant 0 : index
    %971 = vector.load %arg8[%c48_392, %c0_393] : memref<64x128xf32, #tpu.memory_space<vmem>>, vector<8x128xf32>
    %972 = arith.select %18, %970, %971 : vector<8x128xi1>, vector<8x128xf32>
    %973 = arith.addf %972, %969 : vector<8x128xf32>
    %974 = vector.extract_strided_slice %973 {offsets = [0, 0], sizes = [8, 32], strides = [1, 1]} : vector<8x128xf32> to vector<8x32xf32>
    %975 = arith.negf %974 : vector<8x32xf32>
    %976 = math.exp %975 : vector<8x32xf32>
    %cst_394 = arith.constant 1.000000e+00 : f32
    %977 = vector.broadcast %cst_394 : f32 to vector<8x32xf32>
    %978 = arith.addf %977, %976 : vector<8x32xf32>
    %979 = arith.divf %977, %978 : vector<8x32xf32>
    %980 = vector.extract_strided_slice %973 {offsets = [0, 32], sizes = [8, 32], strides = [1, 1]} : vector<8x128xf32> to vector<8x32xf32>
    %981 = arith.negf %980 : vector<8x32xf32>
    %982 = math.exp %981 : vector<8x32xf32>
    %cst_395 = arith.constant 1.000000e+00 : f32
    %983 = vector.broadcast %cst_395 : f32 to vector<8x32xf32>
    %984 = arith.addf %983, %982 : vector<8x32xf32>
    %985 = arith.divf %983, %984 : vector<8x32xf32>
    %986 = vector.extract_strided_slice %973 {offsets = [0, 64], sizes = [8, 32], strides = [1, 1]} : vector<8x128xf32> to vector<8x32xf32>
    %987 = math.tanh %986 : vector<8x32xf32>
    %988 = vector.extract_strided_slice %973 {offsets = [0, 96], sizes = [8, 32], strides = [1, 1]} : vector<8x128xf32> to vector<8x32xf32>
    %989 = arith.negf %988 : vector<8x32xf32>
    %990 = math.exp %989 : vector<8x32xf32>
    %cst_396 = arith.constant 1.000000e+00 : f32
    %991 = vector.broadcast %cst_396 : f32 to vector<8x32xf32>
    %992 = arith.addf %991, %990 : vector<8x32xf32>
    %993 = arith.divf %991, %992 : vector<8x32xf32>
    %994 = arith.mulf %985, %962 : vector<8x32xf32>
    %995 = arith.mulf %979, %987 : vector<8x32xf32>
    %996 = arith.addf %994, %995 : vector<8x32xf32>
    %997 = math.tanh %996 : vector<8x32xf32>
    %998 = arith.mulf %993, %997 : vector<8x32xf32>
    %999 = vector.extract_strided_slice %998 {offsets = [0, 0], sizes = [8, 16], strides = [1, 1]} : vector<8x32xf32> to vector<8x16xf32>
    %c8_397 = arith.constant 8 : index
    %c0_398 = arith.constant 0 : index
    %1000 = vector.load %arg9[%c8_397, %c0_398] : memref<64x32xf32, #tpu.memory_space<vmem>>, vector<8x16xf32>
    tpu.vector_store %arg9[%c8_397, %c0_398], %999 {strides = array<i32>} : memref<64x32xf32, #tpu.memory_space<vmem>>, vector<8x16xf32>,
    %1001 = vector.extract_strided_slice %998 {offsets = [0, 16], sizes = [8, 16], strides = [1, 1]} : vector<8x32xf32> to vector<8x16xf32>
    %c48_399 = arith.constant 48 : index
    %c16_400 = arith.constant 16 : index
    %1002 = vector.load %arg9[%c48_399, %c16_400] : memref<64x32xf32, #tpu.memory_space<vmem>>, vector<8x16xf32>
    tpu.vector_store %arg9[%c48_399, %c16_400], %1001 {strides = array<i32>} : memref<64x32xf32, #tpu.memory_space<vmem>>, vector<8x16xf32>,
    %cst_401 = arith.constant dense<0.000000e+00> : vector<8x128xf32>
    %1003 = tpu.matmul %998, %932, %cst_401 {dimension_numbers = #tpu.dot_dimension_numbers<[1], [0], [0], [1], [0, 0, 1, 1], [], []>} : vector<8x32xf32>, vector<32x128xf32>, vector<8x128xf32> -> vector<8x128xf32>
    %c16_402 = arith.constant 16 : index
    %c0_403 = arith.constant 0 : index
    %1004 = vector.load %arg8[%c16_402, %c0_403] : memref<64x128xf32, #tpu.memory_space<vmem>>, vector<8x128xf32>
    %c40_404 = arith.constant 40 : index
    %c0_405 = arith.constant 0 : index
    %1005 = vector.load %arg8[%c40_404, %c0_405] : memref<64x128xf32, #tpu.memory_space<vmem>>, vector<8x128xf32>
    %1006 = arith.select %18, %1004, %1005 : vector<8x128xi1>, vector<8x128xf32>
    %1007 = arith.addf %1006, %1003 : vector<8x128xf32>
    %1008 = vector.extract_strided_slice %1007 {offsets = [0, 0], sizes = [8, 32], strides = [1, 1]} : vector<8x128xf32> to vector<8x32xf32>
    %1009 = arith.negf %1008 : vector<8x32xf32>
    %1010 = math.exp %1009 : vector<8x32xf32>
    %cst_406 = arith.constant 1.000000e+00 : f32
    %1011 = vector.broadcast %cst_406 : f32 to vector<8x32xf32>
    %1012 = arith.addf %1011, %1010 : vector<8x32xf32>
    %1013 = arith.divf %1011, %1012 : vector<8x32xf32>
    %1014 = vector.extract_strided_slice %1007 {offsets = [0, 32], sizes = [8, 32], strides = [1, 1]} : vector<8x128xf32> to vector<8x32xf32>
    %1015 = arith.negf %1014 : vector<8x32xf32>
    %1016 = math.exp %1015 : vector<8x32xf32>
    %cst_407 = arith.constant 1.000000e+00 : f32
    %1017 = vector.broadcast %cst_407 : f32 to vector<8x32xf32>
    %1018 = arith.addf %1017, %1016 : vector<8x32xf32>
    %1019 = arith.divf %1017, %1018 : vector<8x32xf32>
    %1020 = vector.extract_strided_slice %1007 {offsets = [0, 64], sizes = [8, 32], strides = [1, 1]} : vector<8x128xf32> to vector<8x32xf32>
    %1021 = math.tanh %1020 : vector<8x32xf32>
    %1022 = vector.extract_strided_slice %1007 {offsets = [0, 96], sizes = [8, 32], strides = [1, 1]} : vector<8x128xf32> to vector<8x32xf32>
    %1023 = arith.negf %1022 : vector<8x32xf32>
    %1024 = math.exp %1023 : vector<8x32xf32>
    %cst_408 = arith.constant 1.000000e+00 : f32
    %1025 = vector.broadcast %cst_408 : f32 to vector<8x32xf32>
    %1026 = arith.addf %1025, %1024 : vector<8x32xf32>
    %1027 = arith.divf %1025, %1026 : vector<8x32xf32>
    %1028 = arith.mulf %1019, %996 : vector<8x32xf32>
    %1029 = arith.mulf %1013, %1021 : vector<8x32xf32>
    %1030 = arith.addf %1028, %1029 : vector<8x32xf32>
    %1031 = math.tanh %1030 : vector<8x32xf32>
    %1032 = arith.mulf %1027, %1031 : vector<8x32xf32>
    %1033 = vector.extract_strided_slice %1032 {offsets = [0, 0], sizes = [8, 16], strides = [1, 1]} : vector<8x32xf32> to vector<8x16xf32>
    %c16_409 = arith.constant 16 : index
    %c0_410 = arith.constant 0 : index
    %1034 = vector.load %arg9[%c16_409, %c0_410] : memref<64x32xf32, #tpu.memory_space<vmem>>, vector<8x16xf32>
    tpu.vector_store %arg9[%c16_409, %c0_410], %1033 {strides = array<i32>} : memref<64x32xf32, #tpu.memory_space<vmem>>, vector<8x16xf32>,
    %1035 = vector.extract_strided_slice %1032 {offsets = [0, 16], sizes = [8, 16], strides = [1, 1]} : vector<8x32xf32> to vector<8x16xf32>
    %c40_411 = arith.constant 40 : index
    %c16_412 = arith.constant 16 : index
    %1036 = vector.load %arg9[%c40_411, %c16_412] : memref<64x32xf32, #tpu.memory_space<vmem>>, vector<8x16xf32>
    tpu.vector_store %arg9[%c40_411, %c16_412], %1035 {strides = array<i32>} : memref<64x32xf32, #tpu.memory_space<vmem>>, vector<8x16xf32>,
    %cst_413 = arith.constant dense<0.000000e+00> : vector<8x128xf32>
    %1037 = tpu.matmul %1032, %932, %cst_413 {dimension_numbers = #tpu.dot_dimension_numbers<[1], [0], [0], [1], [0, 0, 1, 1], [], []>} : vector<8x32xf32>, vector<32x128xf32>, vector<8x128xf32> -> vector<8x128xf32>
    %c24_414 = arith.constant 24 : index
    %c0_415 = arith.constant 0 : index
    %1038 = vector.load %arg8[%c24_414, %c0_415] : memref<64x128xf32, #tpu.memory_space<vmem>>, vector<8x128xf32>
    %c32_416 = arith.constant 32 : index
    %c0_417 = arith.constant 0 : index
    %1039 = vector.load %arg8[%c32_416, %c0_417] : memref<64x128xf32, #tpu.memory_space<vmem>>, vector<8x128xf32>
    %1040 = arith.select %18, %1038, %1039 : vector<8x128xi1>, vector<8x128xf32>
    %1041 = arith.addf %1040, %1037 : vector<8x128xf32>
    %1042 = vector.extract_strided_slice %1041 {offsets = [0, 0], sizes = [8, 32], strides = [1, 1]} : vector<8x128xf32> to vector<8x32xf32>
    %1043 = arith.negf %1042 : vector<8x32xf32>
    %1044 = math.exp %1043 : vector<8x32xf32>
    %cst_418 = arith.constant 1.000000e+00 : f32
    %1045 = vector.broadcast %cst_418 : f32 to vector<8x32xf32>
    %1046 = arith.addf %1045, %1044 : vector<8x32xf32>
    %1047 = arith.divf %1045, %1046 : vector<8x32xf32>
    %1048 = vector.extract_strided_slice %1041 {offsets = [0, 32], sizes = [8, 32], strides = [1, 1]} : vector<8x128xf32> to vector<8x32xf32>
    %1049 = arith.negf %1048 : vector<8x32xf32>
    %1050 = math.exp %1049 : vector<8x32xf32>
    %cst_419 = arith.constant 1.000000e+00 : f32
    %1051 = vector.broadcast %cst_419 : f32 to vector<8x32xf32>
    %1052 = arith.addf %1051, %1050 : vector<8x32xf32>
    %1053 = arith.divf %1051, %1052 : vector<8x32xf32>
    %1054 = vector.extract_strided_slice %1041 {offsets = [0, 64], sizes = [8, 32], strides = [1, 1]} : vector<8x128xf32> to vector<8x32xf32>
    %1055 = math.tanh %1054 : vector<8x32xf32>
    %1056 = vector.extract_strided_slice %1041 {offsets = [0, 96], sizes = [8, 32], strides = [1, 1]} : vector<8x128xf32> to vector<8x32xf32>
    %1057 = arith.negf %1056 : vector<8x32xf32>
    %1058 = math.exp %1057 : vector<8x32xf32>
    %cst_420 = arith.constant 1.000000e+00 : f32
    %1059 = vector.broadcast %cst_420 : f32 to vector<8x32xf32>
    %1060 = arith.addf %1059, %1058 : vector<8x32xf32>
    %1061 = arith.divf %1059, %1060 : vector<8x32xf32>
    %1062 = arith.mulf %1053, %1030 : vector<8x32xf32>
    %1063 = arith.mulf %1047, %1055 : vector<8x32xf32>
    %1064 = arith.addf %1062, %1063 : vector<8x32xf32>
    %1065 = math.tanh %1064 : vector<8x32xf32>
    %1066 = arith.mulf %1061, %1065 : vector<8x32xf32>
    %1067 = vector.extract_strided_slice %1066 {offsets = [0, 0], sizes = [8, 16], strides = [1, 1]} : vector<8x32xf32> to vector<8x16xf32>
    %c24_421 = arith.constant 24 : index
    %c0_422 = arith.constant 0 : index
    %1068 = vector.load %arg9[%c24_421, %c0_422] : memref<64x32xf32, #tpu.memory_space<vmem>>, vector<8x16xf32>
    tpu.vector_store %arg9[%c24_421, %c0_422], %1067 {strides = array<i32>} : memref<64x32xf32, #tpu.memory_space<vmem>>, vector<8x16xf32>,
    %1069 = vector.extract_strided_slice %1066 {offsets = [0, 16], sizes = [8, 16], strides = [1, 1]} : vector<8x32xf32> to vector<8x16xf32>
    %c32_423 = arith.constant 32 : index
    %c16_424 = arith.constant 16 : index
    %1070 = vector.load %arg9[%c32_423, %c16_424] : memref<64x32xf32, #tpu.memory_space<vmem>>, vector<8x16xf32>
    tpu.vector_store %arg9[%c32_423, %c16_424], %1069 {strides = array<i32>} : memref<64x32xf32, #tpu.memory_space<vmem>>, vector<8x16xf32>,
    %cst_425 = arith.constant dense<0.000000e+00> : vector<8x128xf32>
    %1071 = tpu.matmul %1066, %932, %cst_425 {dimension_numbers = #tpu.dot_dimension_numbers<[1], [0], [0], [1], [0, 0, 1, 1], [], []>} : vector<8x32xf32>, vector<32x128xf32>, vector<8x128xf32> -> vector<8x128xf32>
    %c32_426 = arith.constant 32 : index
    %c0_427 = arith.constant 0 : index
    %1072 = vector.load %arg8[%c32_426, %c0_427] : memref<64x128xf32, #tpu.memory_space<vmem>>, vector<8x128xf32>
    %c24_428 = arith.constant 24 : index
    %c0_429 = arith.constant 0 : index
    %1073 = vector.load %arg8[%c24_428, %c0_429] : memref<64x128xf32, #tpu.memory_space<vmem>>, vector<8x128xf32>
    %1074 = arith.select %18, %1072, %1073 : vector<8x128xi1>, vector<8x128xf32>
    %1075 = arith.addf %1074, %1071 : vector<8x128xf32>
    %1076 = vector.extract_strided_slice %1075 {offsets = [0, 0], sizes = [8, 32], strides = [1, 1]} : vector<8x128xf32> to vector<8x32xf32>
    %1077 = arith.negf %1076 : vector<8x32xf32>
    %1078 = math.exp %1077 : vector<8x32xf32>
    %cst_430 = arith.constant 1.000000e+00 : f32
    %1079 = vector.broadcast %cst_430 : f32 to vector<8x32xf32>
    %1080 = arith.addf %1079, %1078 : vector<8x32xf32>
    %1081 = arith.divf %1079, %1080 : vector<8x32xf32>
    %1082 = vector.extract_strided_slice %1075 {offsets = [0, 32], sizes = [8, 32], strides = [1, 1]} : vector<8x128xf32> to vector<8x32xf32>
    %1083 = arith.negf %1082 : vector<8x32xf32>
    %1084 = math.exp %1083 : vector<8x32xf32>
    %cst_431 = arith.constant 1.000000e+00 : f32
    %1085 = vector.broadcast %cst_431 : f32 to vector<8x32xf32>
    %1086 = arith.addf %1085, %1084 : vector<8x32xf32>
    %1087 = arith.divf %1085, %1086 : vector<8x32xf32>
    %1088 = vector.extract_strided_slice %1075 {offsets = [0, 64], sizes = [8, 32], strides = [1, 1]} : vector<8x128xf32> to vector<8x32xf32>
    %1089 = math.tanh %1088 : vector<8x32xf32>
    %1090 = vector.extract_strided_slice %1075 {offsets = [0, 96], sizes = [8, 32], strides = [1, 1]} : vector<8x128xf32> to vector<8x32xf32>
    %1091 = arith.negf %1090 : vector<8x32xf32>
    %1092 = math.exp %1091 : vector<8x32xf32>
    %cst_432 = arith.constant 1.000000e+00 : f32
    %1093 = vector.broadcast %cst_432 : f32 to vector<8x32xf32>
    %1094 = arith.addf %1093, %1092 : vector<8x32xf32>
    %1095 = arith.divf %1093, %1094 : vector<8x32xf32>
    %1096 = arith.mulf %1087, %1064 : vector<8x32xf32>
    %1097 = arith.mulf %1081, %1089 : vector<8x32xf32>
    %1098 = arith.addf %1096, %1097 : vector<8x32xf32>
    %1099 = math.tanh %1098 : vector<8x32xf32>
    %1100 = arith.mulf %1095, %1099 : vector<8x32xf32>
    %1101 = vector.extract_strided_slice %1100 {offsets = [0, 0], sizes = [8, 16], strides = [1, 1]} : vector<8x32xf32> to vector<8x16xf32>
    %c32_433 = arith.constant 32 : index
    %c0_434 = arith.constant 0 : index
    %1102 = vector.load %arg9[%c32_433, %c0_434] : memref<64x32xf32, #tpu.memory_space<vmem>>, vector<8x16xf32>
    tpu.vector_store %arg9[%c32_433, %c0_434], %1101 {strides = array<i32>} : memref<64x32xf32, #tpu.memory_space<vmem>>, vector<8x16xf32>,
    %1103 = vector.extract_strided_slice %1100 {offsets = [0, 16], sizes = [8, 16], strides = [1, 1]} : vector<8x32xf32> to vector<8x16xf32>
    %c24_435 = arith.constant 24 : index
    %c16_436 = arith.constant 16 : index
    %1104 = vector.load %arg9[%c24_435, %c16_436] : memref<64x32xf32, #tpu.memory_space<vmem>>, vector<8x16xf32>
    tpu.vector_store %arg9[%c24_435, %c16_436], %1103 {strides = array<i32>} : memref<64x32xf32, #tpu.memory_space<vmem>>, vector<8x16xf32>,
    %cst_437 = arith.constant dense<0.000000e+00> : vector<8x128xf32>
    %1105 = tpu.matmul %1100, %932, %cst_437 {dimension_numbers = #tpu.dot_dimension_numbers<[1], [0], [0], [1], [0, 0, 1, 1], [], []>} : vector<8x32xf32>, vector<32x128xf32>, vector<8x128xf32> -> vector<8x128xf32>
    %c40_438 = arith.constant 40 : index
    %c0_439 = arith.constant 0 : index
    %1106 = vector.load %arg8[%c40_438, %c0_439] : memref<64x128xf32, #tpu.memory_space<vmem>>, vector<8x128xf32>
    %c16_440 = arith.constant 16 : index
    %c0_441 = arith.constant 0 : index
    %1107 = vector.load %arg8[%c16_440, %c0_441] : memref<64x128xf32, #tpu.memory_space<vmem>>, vector<8x128xf32>
    %1108 = arith.select %18, %1106, %1107 : vector<8x128xi1>, vector<8x128xf32>
    %1109 = arith.addf %1108, %1105 : vector<8x128xf32>
    %1110 = vector.extract_strided_slice %1109 {offsets = [0, 0], sizes = [8, 32], strides = [1, 1]} : vector<8x128xf32> to vector<8x32xf32>
    %1111 = arith.negf %1110 : vector<8x32xf32>
    %1112 = math.exp %1111 : vector<8x32xf32>
    %cst_442 = arith.constant 1.000000e+00 : f32
    %1113 = vector.broadcast %cst_442 : f32 to vector<8x32xf32>
    %1114 = arith.addf %1113, %1112 : vector<8x32xf32>
    %1115 = arith.divf %1113, %1114 : vector<8x32xf32>
    %1116 = vector.extract_strided_slice %1109 {offsets = [0, 32], sizes = [8, 32], strides = [1, 1]} : vector<8x128xf32> to vector<8x32xf32>
    %1117 = arith.negf %1116 : vector<8x32xf32>
    %1118 = math.exp %1117 : vector<8x32xf32>
    %cst_443 = arith.constant 1.000000e+00 : f32
    %1119 = vector.broadcast %cst_443 : f32 to vector<8x32xf32>
    %1120 = arith.addf %1119, %1118 : vector<8x32xf32>
    %1121 = arith.divf %1119, %1120 : vector<8x32xf32>
    %1122 = vector.extract_strided_slice %1109 {offsets = [0, 64], sizes = [8, 32], strides = [1, 1]} : vector<8x128xf32> to vector<8x32xf32>
    %1123 = math.tanh %1122 : vector<8x32xf32>
    %1124 = vector.extract_strided_slice %1109 {offsets = [0, 96], sizes = [8, 32], strides = [1, 1]} : vector<8x128xf32> to vector<8x32xf32>
    %1125 = arith.negf %1124 : vector<8x32xf32>
    %1126 = math.exp %1125 : vector<8x32xf32>
    %cst_444 = arith.constant 1.000000e+00 : f32
    %1127 = vector.broadcast %cst_444 : f32 to vector<8x32xf32>
    %1128 = arith.addf %1127, %1126 : vector<8x32xf32>
    %1129 = arith.divf %1127, %1128 : vector<8x32xf32>
    %1130 = arith.mulf %1121, %1098 : vector<8x32xf32>
    %1131 = arith.mulf %1115, %1123 : vector<8x32xf32>
    %1132 = arith.addf %1130, %1131 : vector<8x32xf32>
    %1133 = math.tanh %1132 : vector<8x32xf32>
    %1134 = arith.mulf %1129, %1133 : vector<8x32xf32>
    %1135 = vector.extract_strided_slice %1134 {offsets = [0, 0], sizes = [8, 16], strides = [1, 1]} : vector<8x32xf32> to vector<8x16xf32>
    %c40_445 = arith.constant 40 : index
    %c0_446 = arith.constant 0 : index
    %1136 = vector.load %arg9[%c40_445, %c0_446] : memref<64x32xf32, #tpu.memory_space<vmem>>, vector<8x16xf32>
    tpu.vector_store %arg9[%c40_445, %c0_446], %1135 {strides = array<i32>} : memref<64x32xf32, #tpu.memory_space<vmem>>, vector<8x16xf32>,
    %1137 = vector.extract_strided_slice %1134 {offsets = [0, 16], sizes = [8, 16], strides = [1, 1]} : vector<8x32xf32> to vector<8x16xf32>
    %c16_447 = arith.constant 16 : index
    %c16_448 = arith.constant 16 : index
    %1138 = vector.load %arg9[%c16_447, %c16_448] : memref<64x32xf32, #tpu.memory_space<vmem>>, vector<8x16xf32>
    tpu.vector_store %arg9[%c16_447, %c16_448], %1137 {strides = array<i32>} : memref<64x32xf32, #tpu.memory_space<vmem>>, vector<8x16xf32>,
    %cst_449 = arith.constant dense<0.000000e+00> : vector<8x128xf32>
    %1139 = tpu.matmul %1134, %932, %cst_449 {dimension_numbers = #tpu.dot_dimension_numbers<[1], [0], [0], [1], [0, 0, 1, 1], [], []>} : vector<8x32xf32>, vector<32x128xf32>, vector<8x128xf32> -> vector<8x128xf32>
    %c48_450 = arith.constant 48 : index
    %c0_451 = arith.constant 0 : index
    %1140 = vector.load %arg8[%c48_450, %c0_451] : memref<64x128xf32, #tpu.memory_space<vmem>>, vector<8x128xf32>
    %c8_452 = arith.constant 8 : index
    %c0_453 = arith.constant 0 : index
    %1141 = vector.load %arg8[%c8_452, %c0_453] : memref<64x128xf32, #tpu.memory_space<vmem>>, vector<8x128xf32>
    %1142 = arith.select %18, %1140, %1141 : vector<8x128xi1>, vector<8x128xf32>
    %1143 = arith.addf %1142, %1139 : vector<8x128xf32>
    %1144 = vector.extract_strided_slice %1143 {offsets = [0, 0], sizes = [8, 32], strides = [1, 1]} : vector<8x128xf32> to vector<8x32xf32>
    %1145 = arith.negf %1144 : vector<8x32xf32>
    %1146 = math.exp %1145 : vector<8x32xf32>
    %cst_454 = arith.constant 1.000000e+00 : f32
    %1147 = vector.broadcast %cst_454 : f32 to vector<8x32xf32>
    %1148 = arith.addf %1147, %1146 : vector<8x32xf32>
    %1149 = arith.divf %1147, %1148 : vector<8x32xf32>
    %1150 = vector.extract_strided_slice %1143 {offsets = [0, 32], sizes = [8, 32], strides = [1, 1]} : vector<8x128xf32> to vector<8x32xf32>
    %1151 = arith.negf %1150 : vector<8x32xf32>
    %1152 = math.exp %1151 : vector<8x32xf32>
    %cst_455 = arith.constant 1.000000e+00 : f32
    %1153 = vector.broadcast %cst_455 : f32 to vector<8x32xf32>
    %1154 = arith.addf %1153, %1152 : vector<8x32xf32>
    %1155 = arith.divf %1153, %1154 : vector<8x32xf32>
    %1156 = vector.extract_strided_slice %1143 {offsets = [0, 64], sizes = [8, 32], strides = [1, 1]} : vector<8x128xf32> to vector<8x32xf32>
    %1157 = math.tanh %1156 : vector<8x32xf32>
    %1158 = vector.extract_strided_slice %1143 {offsets = [0, 96], sizes = [8, 32], strides = [1, 1]} : vector<8x128xf32> to vector<8x32xf32>
    %1159 = arith.negf %1158 : vector<8x32xf32>
    %1160 = math.exp %1159 : vector<8x32xf32>
    %cst_456 = arith.constant 1.000000e+00 : f32
    %1161 = vector.broadcast %cst_456 : f32 to vector<8x32xf32>
    %1162 = arith.addf %1161, %1160 : vector<8x32xf32>
    %1163 = arith.divf %1161, %1162 : vector<8x32xf32>
    %1164 = arith.mulf %1155, %1132 : vector<8x32xf32>
    %1165 = arith.mulf %1149, %1157 : vector<8x32xf32>
    %1166 = arith.addf %1164, %1165 : vector<8x32xf32>
    %1167 = math.tanh %1166 : vector<8x32xf32>
    %1168 = arith.mulf %1163, %1167 : vector<8x32xf32>
    %1169 = vector.extract_strided_slice %1168 {offsets = [0, 0], sizes = [8, 16], strides = [1, 1]} : vector<8x32xf32> to vector<8x16xf32>
    %c48_457 = arith.constant 48 : index
    %c0_458 = arith.constant 0 : index
    %1170 = vector.load %arg9[%c48_457, %c0_458] : memref<64x32xf32, #tpu.memory_space<vmem>>, vector<8x16xf32>
    tpu.vector_store %arg9[%c48_457, %c0_458], %1169 {strides = array<i32>} : memref<64x32xf32, #tpu.memory_space<vmem>>, vector<8x16xf32>,
    %1171 = vector.extract_strided_slice %1168 {offsets = [0, 16], sizes = [8, 16], strides = [1, 1]} : vector<8x32xf32> to vector<8x16xf32>
    %c8_459 = arith.constant 8 : index
    %c16_460 = arith.constant 16 : index
    %1172 = vector.load %arg9[%c8_459, %c16_460] : memref<64x32xf32, #tpu.memory_space<vmem>>, vector<8x16xf32>
    tpu.vector_store %arg9[%c8_459, %c16_460], %1171 {strides = array<i32>} : memref<64x32xf32, #tpu.memory_space<vmem>>, vector<8x16xf32>,
    %cst_461 = arith.constant dense<0.000000e+00> : vector<8x128xf32>
    %1173 = tpu.matmul %1168, %932, %cst_461 {dimension_numbers = #tpu.dot_dimension_numbers<[1], [0], [0], [1], [0, 0, 1, 1], [], []>} : vector<8x32xf32>, vector<32x128xf32>, vector<8x128xf32> -> vector<8x128xf32>
    %c56_462 = arith.constant 56 : index
    %c0_463 = arith.constant 0 : index
    %1174 = vector.load %arg8[%c56_462, %c0_463] : memref<64x128xf32, #tpu.memory_space<vmem>>, vector<8x128xf32>
    %c0_464 = arith.constant 0 : index
    %c0_465 = arith.constant 0 : index
    %1175 = vector.load %arg8[%c0_464, %c0_465] : memref<64x128xf32, #tpu.memory_space<vmem>>, vector<8x128xf32>
    %1176 = arith.select %18, %1174, %1175 : vector<8x128xi1>, vector<8x128xf32>
    %1177 = arith.addf %1176, %1173 : vector<8x128xf32>
    %1178 = vector.extract_strided_slice %1177 {offsets = [0, 0], sizes = [8, 32], strides = [1, 1]} : vector<8x128xf32> to vector<8x32xf32>
    %1179 = arith.negf %1178 : vector<8x32xf32>
    %1180 = math.exp %1179 : vector<8x32xf32>
    %cst_466 = arith.constant 1.000000e+00 : f32
    %1181 = vector.broadcast %cst_466 : f32 to vector<8x32xf32>
    %1182 = arith.addf %1181, %1180 : vector<8x32xf32>
    %1183 = arith.divf %1181, %1182 : vector<8x32xf32>
    %1184 = vector.extract_strided_slice %1177 {offsets = [0, 32], sizes = [8, 32], strides = [1, 1]} : vector<8x128xf32> to vector<8x32xf32>
    %1185 = arith.negf %1184 : vector<8x32xf32>
    %1186 = math.exp %1185 : vector<8x32xf32>
    %cst_467 = arith.constant 1.000000e+00 : f32
    %1187 = vector.broadcast %cst_467 : f32 to vector<8x32xf32>
    %1188 = arith.addf %1187, %1186 : vector<8x32xf32>
    %1189 = arith.divf %1187, %1188 : vector<8x32xf32>
    %1190 = vector.extract_strided_slice %1177 {offsets = [0, 64], sizes = [8, 32], strides = [1, 1]} : vector<8x128xf32> to vector<8x32xf32>
    %1191 = math.tanh %1190 : vector<8x32xf32>
    %1192 = vector.extract_strided_slice %1177 {offsets = [0, 96], sizes = [8, 32], strides = [1, 1]} : vector<8x128xf32> to vector<8x32xf32>
    %1193 = arith.negf %1192 : vector<8x32xf32>
    %1194 = math.exp %1193 : vector<8x32xf32>
    %cst_468 = arith.constant 1.000000e+00 : f32
    %1195 = vector.broadcast %cst_468 : f32 to vector<8x32xf32>
    %1196 = arith.addf %1195, %1194 : vector<8x32xf32>
    %1197 = arith.divf %1195, %1196 : vector<8x32xf32>
    %1198 = arith.mulf %1189, %1166 : vector<8x32xf32>
    %1199 = arith.mulf %1183, %1191 : vector<8x32xf32>
    %1200 = arith.addf %1198, %1199 : vector<8x32xf32>
    %1201 = math.tanh %1200 : vector<8x32xf32>
    %1202 = arith.mulf %1197, %1201 : vector<8x32xf32>
    %1203 = vector.extract_strided_slice %1202 {offsets = [0, 0], sizes = [8, 16], strides = [1, 1]} : vector<8x32xf32> to vector<8x16xf32>
    %c56_469 = arith.constant 56 : index
    %c0_470 = arith.constant 0 : index
    %1204 = vector.load %arg9[%c56_469, %c0_470] : memref<64x32xf32, #tpu.memory_space<vmem>>, vector<8x16xf32>
    tpu.vector_store %arg9[%c56_469, %c0_470], %1203 {strides = array<i32>} : memref<64x32xf32, #tpu.memory_space<vmem>>, vector<8x16xf32>,
    %1205 = vector.extract_strided_slice %1202 {offsets = [0, 16], sizes = [8, 16], strides = [1, 1]} : vector<8x32xf32> to vector<8x16xf32>
    %c0_471 = arith.constant 0 : index
    %c16_472 = arith.constant 16 : index
    %1206 = vector.load %arg9[%c0_471, %c16_472] : memref<64x32xf32, #tpu.memory_space<vmem>>, vector<8x16xf32>
    tpu.vector_store %arg9[%c0_471, %c16_472], %1205 {strides = array<i32>} : memref<64x32xf32, #tpu.memory_space<vmem>>, vector<8x16xf32>,
    %1207 = vector.extract_strided_slice %1202 {offsets = [0, 0], sizes = [8, 16], strides = [1, 1]} : vector<8x32xf32> to vector<8x16xf32>
    %c6 = arith.constant 6 : index
    %c0_473 = arith.constant 0 : index
    %c0_474 = arith.constant 0 : index
    %1208 = vector.load %arg6[%c6, %c0_473, %c0_474] : memref<8x8x16xf32, #tpu.memory_space<vmem>>, vector<1x8x16xf32>
    %1209 = vector.shape_cast %1208 : vector<1x8x16xf32> to vector<8x16xf32>
    %1210 = vector.shape_cast %1207 : vector<8x16xf32> to vector<1x8x16xf32>
    tpu.vector_store %arg6[%c6, %c0_473, %c0_474], %1210 {strides = array<i32>} : memref<8x8x16xf32, #tpu.memory_space<vmem>>, vector<1x8x16xf32>,
    %1211 = vector.extract_strided_slice %1202 {offsets = [0, 16], sizes = [8, 16], strides = [1, 1]} : vector<8x32xf32> to vector<8x16xf32>
    %c7 = arith.constant 7 : index
    %c0_475 = arith.constant 0 : index
    %c0_476 = arith.constant 0 : index
    %1212 = vector.load %arg6[%c7, %c0_475, %c0_476] : memref<8x8x16xf32, #tpu.memory_space<vmem>>, vector<1x8x16xf32>
    %1213 = vector.shape_cast %1212 : vector<1x8x16xf32> to vector<8x16xf32>
    %1214 = vector.shape_cast %1211 : vector<8x16xf32> to vector<1x8x16xf32>
    tpu.vector_store %arg6[%c7, %c0_475, %c0_476], %1214 {strides = array<i32>} : memref<8x8x16xf32, #tpu.memory_space<vmem>>, vector<1x8x16xf32>,
    %1215 = vector.extract_strided_slice %1200 {offsets = [0, 0], sizes = [8, 16], strides = [1, 1]} : vector<8x32xf32> to vector<8x16xf32>
    %c6_477 = arith.constant 6 : index
    %c0_478 = arith.constant 0 : index
    %c0_479 = arith.constant 0 : index
    %1216 = vector.load %arg7[%c6_477, %c0_478, %c0_479] : memref<8x8x16xf32, #tpu.memory_space<vmem>>, vector<1x8x16xf32>
    %1217 = vector.shape_cast %1216 : vector<1x8x16xf32> to vector<8x16xf32>
    %1218 = vector.shape_cast %1215 : vector<8x16xf32> to vector<1x8x16xf32>
    tpu.vector_store %arg7[%c6_477, %c0_478, %c0_479], %1218 {strides = array<i32>} : memref<8x8x16xf32, #tpu.memory_space<vmem>>, vector<1x8x16xf32>,
    %1219 = vector.extract_strided_slice %1200 {offsets = [0, 16], sizes = [8, 16], strides = [1, 1]} : vector<8x32xf32> to vector<8x16xf32>
    %c7_480 = arith.constant 7 : index
    %c0_481 = arith.constant 0 : index
    %c0_482 = arith.constant 0 : index
    %1220 = vector.load %arg7[%c7_480, %c0_481, %c0_482] : memref<8x8x16xf32, #tpu.memory_space<vmem>>, vector<1x8x16xf32>
    %1221 = vector.shape_cast %1220 : vector<1x8x16xf32> to vector<8x16xf32>
    %1222 = vector.shape_cast %1219 : vector<8x16xf32> to vector<1x8x16xf32>
    tpu.vector_store %arg7[%c7_480, %c0_481, %c0_482], %1222 {strides = array<i32>} : memref<8x8x16xf32, #tpu.memory_space<vmem>>, vector<1x8x16xf32>,
    %c0_483 = arith.constant 0 : index
    %c0_484 = arith.constant 0 : index
    %1223 = vector.load %arg9[%c0_483, %c0_484] : memref<64x32xf32, #tpu.memory_space<vmem>>, vector<64x32xf32>
    %c0_485 = arith.constant 0 : index
    %c0_486 = arith.constant 0 : index
    %1224 = vector.load %arg5[%c0_485, %c0_486] : memref<64x32xf32, #tpu.memory_space<vmem>>, vector<64x32xf32>
    tpu.vector_store %arg5[%c0_485, %c0_486], %1223 {strides = array<i32>} : memref<64x32xf32, #tpu.memory_space<vmem>>, vector<64x32xf32>,
    return
  }
  func.func @transform_0(%arg0: i32) -> (i32, i32) {
    %c0_i32 = arith.constant 0 : i32
    %c0_i32_0 = arith.constant 0 : i32
    %c0_i32_1 = arith.constant 0 : i32
    return %c0_i32, %c0_i32_0 : i32, i32
  }
  func.func @transform_1(%arg0: i32) -> (i32, i32, i32) {
    %c0_i32 = arith.constant 0 : i32
    %c0_i32_0 = arith.constant 0 : i32
    %c0_i32_1 = arith.constant 0 : i32
    %c0_i32_2 = arith.constant 0 : i32
    return %c0_i32, %c0_i32_0, %c0_i32_1 : i32, i32, i32
  }
  func.func @transform_2(%arg0: i32) -> (i32, i32, i32) {
    %c0_i32 = arith.constant 0 : i32
    %c0_i32_0 = arith.constant 0 : i32
    %c0_i32_1 = arith.constant 0 : i32
    %c0_i32_2 = arith.constant 0 : i32
    return %c0_i32, %c0_i32_0, %c0_i32_1 : i32, i32, i32
  }
  func.func @transform_3(%arg0: i32) -> (i32, i32, i32) {
    %c0_i32 = arith.constant 0 : i32
    %c0_i32_0 = arith.constant 0 : i32
    %c0_i32_1 = arith.constant 0 : i32
    %c0_i32_2 = arith.constant 0 : i32
    return %c0_i32, %c0_i32_0, %c0_i32_1 : i32, i32, i32
  }
  func.func @transform_4(%arg0: i32) -> (i32, i32) {
    %c0_i32 = arith.constant 0 : i32
    %c0_i32_0 = arith.constant 0 : i32
    %c0_i32_1 = arith.constant 0 : i32
    return %c0_i32, %c0_i32_0 : i32, i32
  }
  func.func @transform_5(%arg0: i32) -> (i32, i32, i32) {
    %c0_i32 = arith.constant 0 : i32
    %c0_i32_0 = arith.constant 0 : i32
    %c0_i32_1 = arith.constant 0 : i32
    %c0_i32_2 = arith.constant 0 : i32
    return %c0_i32, %c0_i32_0, %c0_i32_1 : i32, i32, i32
  }
  func.func @transform_6(%arg0: i32) -> (i32, i32, i32) {
    %c0_i32 = arith.constant 0 : i32
    %c0_i32_0 = arith.constant 0 : i32
    %c0_i32_1 = arith.constant 0 : i32
    %c0_i32_2 = arith.constant 0 : i32
    return %c0_i32, %c0_i32_0, %c0_i32_1 : i32, i32, i32
  }
}

</mosaic_0001>

<llo_original>
// kernel: encoder_forward.1
$region0: #{encoder_forward.1}
  #allocation0 [shape = 'u32[]', space=smem, size = 0x4, offset = 0x4, fixed_abs, tag = 'smem constant byte address 0x4 - core index']
  #allocation1 [shape = 'u32[144,128]{1,0:T(1,128)}', space=vmem, size = 0x12000, scoped, tag = 'internal scratch']
  #allocation2 [shape = 'f32[64,128]{1,0:T(8,128)}', space=vmem, size = 0x8000, scoped, tag = 'scratch operand']
  #allocation3 [shape = 'f32[64,32]{1,0:T(8,128)}', space=vmem, size = 0x8000, scoped, tag = 'scratch operand']
  %s0 = inlined_call_operand.vmem [shape: f32[64,32], index: 0, kind: input, shape index: {}]
  %s1 = inlined_call_operand.vmem [shape: f32[4,32,128], index: 1, kind: input, shape index: {}]
  %s2 = inlined_call_operand.vmem [shape: f32[4,32,128], index: 2, kind: input, shape index: {}]
  %s3 = inlined_call_operand.vmem [shape: f32[4,1,128], index: 3, kind: input, shape index: {}]
  %s4 = inlined_call_operand.vmem [shape: f32[64,32], index: 4, kind: output, shape index: {0}]
  %s5 = inlined_call_operand.vmem [shape: f32[8,8,16], index: 5, kind: output, shape index: {1}]
  %s6 = inlined_call_operand.vmem [shape: f32[8,8,16], index: 6, kind: output, shape index: {2}]
  %7 = xla_tuple %s4, %s5, %s6
  %s8 = sld [smem:[#allocation0]]
  $region42: #{encoder_forward.1} parent=0
    _
  %s10 = ssub.s32 1, %s8
  %s11 = scalar_select 0, %s10, %s8
  // Predicated region
  $region2: #{encoder_forward.1} parent=0 // pred_check
    _
  $region3: #{encoder_forward.1} parent=0 // pred_check_branch
    %13 = sbr.rel (0) target = $region5
  $region4: #{encoder_forward.1} parent=0 // pred_region
    _
  $region5: #{encoder_forward.1} parent=0 // pred_fallthru
    _
  // Predicated region
  $region6: #{encoder_forward.1} parent=0 // pred_check
    _
  $region7: #{encoder_forward.1} parent=0 // pred_check_branch
    %15 = sbr.rel (0) target = $region9
  $region8: #{encoder_forward.1} parent=0 // pred_region
    _
  $region9: #{encoder_forward.1} parent=0 // pred_fallthru
    _
  // Predicated region
  $region10: #{encoder_forward.1} parent=0 // pred_check
    _
  $region11: #{encoder_forward.1} parent=0 // pred_check_branch
    %17 = sbr.rel (0) target = $region13
  $region12: #{encoder_forward.1} parent=0 // pred_region
    _
  $region13: #{encoder_forward.1} parent=0 // pred_fallthru
    _
  // Predicated region
  $region14: #{encoder_forward.1} parent=0 // pred_check
    _
  $region15: #{encoder_forward.1} parent=0 // pred_check_branch
    %19 = sbr.rel (0) target = $region17
  $region16: #{encoder_forward.1} parent=0 // pred_region
    _
  $region17: #{encoder_forward.1} parent=0 // pred_fallthru
    _
  %v20 = vlaneseq
  %v21 = vand.u32 %v20, 127
  %vm22 = vcmp.lt.s32.totalorder %v21, 0
  %v23 = vsub.s32 0, %v21
  %v24 = vsel %vm22, %v23, %v21
  %v25 = vshrl.u32 %v24, 5
  %v26 = vand.u32 %v24, 31
  %v27 = vsub.s32 0, %v26
  %v28 = vsel %vm22, %v27, %v26
  %vm29 = vcmp.ne.s32.totalorder %v28, 0
  %vm30 = vcmp.lt.s32.totalorder %v28, 0
  %vm31 = vmand %vm30, %vm29
  %v32 = vadd.s32 %v28, 32
  %v33 = vsel %vm31, %v32, %v28
  %vm34 = vcmp.lt.s32.totalorder %v33, 16
  %v35 = vld [vmem:[%s0] sm:$0xff]
  %v36 = vld [vmem:[%s0 + $0x8] sm:$0xff]
  %v37 = vld [vmem:[%s0 + $0x10] sm:$0xff]
  %v38 = vld [vmem:[%s0 + $0x18] sm:$0xff]
  %v39 = vld [vmem:[%s0 + $0x20] sm:$0xff]
  %v40 = vld [vmem:[%s0 + $0x28] sm:$0xff]
  %v41 = vld [vmem:[%s0 + $0x30] sm:$0xff]
  %v42 = vld [vmem:[%s0 + $0x38] sm:$0xff]
  %v43 = vld [vmem:[%s1] sm:$0xff]
  %v44 = vld [vmem:[%s1 + $0x8] sm:$0xff]
  %v45 = vld [vmem:[%s1 + $0x10] sm:$0xff]
  %v46 = vld [vmem:[%s1 + $0x18] sm:$0xff]
  %v47 = vld [vmem:[%s3] sm:$0x1]
  %v49 = vlaneseq
  %v50 = vshrl.u32 %v49, 7
  %v51 = vsub.s32 0, %v50
  %v52 = vrot.slane %v47, %v51
  %vm54 = vcmask 261120
  %v56 = vsel %vm54, %v35, 0
  %v59 = vsel %vm54, %v36, 0
  %v62 = vsel %vm54, %v37, 0
  %v65 = vsel %vm54, %v38, 0
  %v68 = vsel %vm54, %v39, 0
  %v71 = vsel %vm54, %v40, 0
  %v74 = vsel %vm54, %v41, 0
  %v77 = vsel %vm54, %v42, 0
  %79 = vmatprep.subr.mxu0 0.0
  %80 = vmatpush1.msra.mxu0 0.0
  %81 = vmatprep.subr.mxu0 0.0
  %82 = vmatpush1.msra.mxu0 0.0
  %83 = vmatprep.subr.mxu0 0.0
  %84 = vmatpush1.msra.mxu0 0.0
  %85 = vmatprep.subr.mxu0 0.0
  %86 = vmatpush1.msra.mxu0 0.0
  %87 = vmatprep.subr.mxu0 0.0
  %88 = vmatpush1.msra.mxu0 0.0
  %89 = vmatprep.subr.mxu0 0.0
  %90 = vmatpush1.msra.mxu0 0.0
  %91 = vmatprep.subr.mxu0 0.0
  %92 = vmatpush1.msra.mxu0 0.0
  %93 = vmatprep.subr.mxu0 0.0
  %94 = vmatpush1.msra.mxu0 0.0
  %95 = vmatprep.subr.mxu0 0.0
  %96 = vmatpush1.msra.mxu0 0.0
  %97 = vmatprep.subr.mxu0 0.0
  %98 = vmatpush1.msra.mxu0 0.0
  %99 = vmatprep.subr.mxu0 0.0
  %100 = vmatpush1.msra.mxu0 0.0
  %101 = vmatprep.subr.mxu0 0.0
  %102 = vmatpush1.msra.mxu0 0.0
  %103 = vmatprep.subr.mxu0 0.0
  %104 = vmatpush1.msra.mxu0 %v46
  %105 = vmatprep.subr.mxu0 0.0
  %106 = vmatpush1.msra.mxu0 %v45
  %107 = vmatprep.subr.mxu0 0.0
  %108 = vmatpush1.msra.mxu0 %v44
  %109 = vmatprep.subr.mxu0 0.0
  %110 = vmatpush1.msra.mxu0 %v43
  %111 = vmatprep.subr.mxu0 0.0
  %112 = vmatpush2.msra.mxu0 0.0
  %113 = vmatprep.subr.mxu0 0.0
  %114 = vmatpush2.msra.mxu0 0.0
  %115 = vmatprep.subr.mxu0 0.0
  %116 = vmatpush2.msra.mxu0 0.0
  %117 = vmatprep.subr.mxu0 0.0
  %118 = vmatpush2.msra.mxu0 0.0
  %119 = vmatprep.subr.mxu0 0.0
  %120 = vmatpush2.msra.mxu0 0.0
  %121 = vmatprep.subr.mxu0 0.0
  %122 = vmatpush2.msra.mxu0 0.0
  %123 = vmatprep.subr.mxu0 0.0
  %124 = vmatpush2.msra.mxu0 0.0
  %125 = vmatprep.subr.mxu0 0.0
  %126 = vmatpush2.msra.mxu0 0.0
  %127 = vmatprep.subr.mxu0 0.0
  %128 = vmatpush2.msra.mxu0 0.0
  %129 = vmatprep.subr.mxu0 0.0
  %130 = vmatpush2.msra.mxu0 0.0
  %131 = vmatprep.subr.mxu0 0.0
  %132 = vmatpush2.msra.mxu0 0.0
  %133 = vmatprep.subr.mxu0 0.0
  %134 = vmatpush2.msra.mxu0 0.0
  %135 = vmatprep.subr.mxu0 0.0
  %136 = vmatpush2.msra.mxu0 0.0
  %137 = vmatprep.subr.mxu0 0.0
  %138 = vmatpush2.msra.mxu0 0.0
  %139 = vmatprep.subr.mxu0 0.0
  %140 = vmatpush2.msra.mxu0 0.0
  %141 = vmatprep.subr.mxu0 0.0
  %142 = vmatpush2.msra.mxu0 0.0
  %143 = vmatprep.mubr.f32.mxu0 0.0
  %144 = vmatmul.mubr.f32.gmra.mxu0 %v56
  %v145 = vpop.f32.mrf.mxu0
  %v146 = vadd.f32 %v52, %v145
  %v147 = vpop.f32.mrf.mxu0
  %148 = vmatprep.mubr.f32.mxu0 0.0
  %149 = vmatmul.mubr.f32.gmra.mxu0 %v59
  %v150 = vpop.f32.mrf.mxu0
  %v151 = vadd.f32 %v52, %v150
  %v152 = vpop.f32.mrf.mxu0
  %153 = vmatprep.mubr.f32.mxu0 0.0
  %154 = vmatmul.mubr.f32.gmra.mxu0 %v62
  %v155 = vpop.f32.mrf.mxu0
  %v156 = vadd.f32 %v52, %v155
  %v157 = vpop.f32.mrf.mxu0
  %158 = vmatprep.mubr.f32.mxu0 0.0
  %159 = vmatmul.mubr.f32.gmra.mxu0 %v65
  %v160 = vpop.f32.mrf.mxu0
  %v161 = vadd.f32 %v52, %v160
  %v162 = vpop.f32.mrf.mxu0
  %163 = vmatprep.mubr.f32.mxu0 0.0
  %164 = vmatmul.mubr.f32.gmra.mxu0 %v68
  %v165 = vpop.f32.mrf.mxu0
  %v166 = vadd.f32 %v52, %v165
  %v167 = vpop.f32.mrf.mxu0
  %168 = vmatprep.mubr.f32.mxu0 0.0
  %169 = vmatmul.mubr.f32.gmra.mxu0 %v71
  %v170 = vpop.f32.mrf.mxu0
  %v171 = vadd.f32 %v52, %v170
  %v172 = vpop.f32.mrf.mxu0
  %173 = vmatprep.mubr.f32.mxu0 0.0
  %174 = vmatmul.mubr.f32.gmra.mxu0 %v74
  %v175 = vpop.f32.mrf.mxu0
  %v176 = vadd.f32 %v52, %v175
  %v177 = vpop.f32.mrf.mxu0
  %178 = vmatprep.mubr.f32.mxu0 0.0
  %179 = vmatmul.mubr.f32.gmra.mxu0 %v77
  %v180 = vpop.f32.mrf.mxu0
  %v181 = vadd.f32 %v52, %v180
  %v182 = vpop.f32.mrf.mxu0
  %183 = vdwg.mxu0
  %184 = vst [vmem:[#allocation2] sm:$0xff] %v146
  %185 = vst [vmem:[#allocation2 + $0x8] sm:$0xff] %v151
  %186 = vst [vmem:[#allocation2 + $0x10] sm:$0xff] %v156
  %187 = vst [vmem:[#allocation2 + $0x18] sm:$0xff] %v161
  %188 = vst [vmem:[#allocation2 + $0x20] sm:$0xff] %v166
  %189 = vst [vmem:[#allocation2 + $0x28] sm:$0xff] %v171
  %190 = vst [vmem:[#allocation2 + $0x30] sm:$0xff] %v176
  %191 = vst [vmem:[#allocation2 + $0x38] sm:$0xff] %v181
  %v192 = vld [vmem:[%s2] sm:$0xff]
  %v193 = vld [vmem:[%s2 + $0x8] sm:$0xff]
  %v194 = vld [vmem:[%s2 + $0x10] sm:$0xff]
  %v195 = vld [vmem:[%s2 + $0x18] sm:$0xff]
  %v197 = vsel %vm54, 0.0, 0
  %199 = vmatprep.subr.mxu0 0.0
  %200 = vmatpush1.msra.mxu0 0.0
  %201 = vmatprep.subr.mxu0 0.0
  %202 = vmatpush1.msra.mxu0 0.0
  %203 = vmatprep.subr.mxu0 0.0
  %204 = vmatpush1.msra.mxu0 0.0
  %205 = vmatprep.subr.mxu0 0.0
  %206 = vmatpush1.msra.mxu0 0.0
  %207 = vmatprep.subr.mxu0 0.0
  %208 = vmatpush1.msra.mxu0 0.0
  %209 = vmatprep.subr.mxu0 0.0
  %210 = vmatpush1.msra.mxu0 0.0
  %211 = vmatprep.subr.mxu0 0.0
  %212 = vmatpush1.msra.mxu0 0.0
  %213 = vmatprep.subr.mxu0 0.0
  %214 = vmatpush1.msra.mxu0 0.0
  %215 = vmatprep.subr.mxu0 0.0
  %216 = vmatpush1.msra.mxu0 0.0
  %217 = vmatprep.subr.mxu0 0.0
  %218 = vmatpush1.msra.mxu0 0.0
  %219 = vmatprep.subr.mxu0 0.0
  %220 = vmatpush1.msra.mxu0 0.0
  %221 = vmatprep.subr.mxu0 0.0
  %222 = vmatpush1.msra.mxu0 0.0
  %223 = vmatprep.subr.mxu0 0.0
  %224 = vmatpush1.msra.mxu0 %v195
  %225 = vmatprep.subr.mxu0 0.0
  %226 = vmatpush1.msra.mxu0 %v194
  %227 = vmatprep.subr.mxu0 0.0
  %228 = vmatpush1.msra.mxu0 %v193
  %229 = vmatprep.subr.mxu0 0.0
  %230 = vmatpush1.msra.mxu0 %v192
  %231 = vmatprep.subr.mxu0 0.0
  %232 = vmatpush2.msra.mxu0 0.0
  %233 = vmatprep.subr.mxu0 0.0
  %234 = vmatpush2.msra.mxu0 0.0
  %235 = vmatprep.subr.mxu0 0.0
  %236 = vmatpush2.msra.mxu0 0.0
  %237 = vmatprep.subr.mxu0 0.0
  %238 = vmatpush2.msra.mxu0 0.0
  %239 = vmatprep.subr.mxu0 0.0
  %240 = vmatpush2.msra.mxu0 0.0
  %241 = vmatprep.subr.mxu0 0.0
  %242 = vmatpush2.msra.mxu0 0.0
  %243 = vmatprep.subr.mxu0 0.0
  %244 = vmatpush2.msra.mxu0 0.0
  %245 = vmatprep.subr.mxu0 0.0
  %246 = vmatpush2.msra.mxu0 0.0
  %247 = vmatprep.subr.mxu0 0.0
  %248 = vmatpush2.msra.mxu0 0.0
  %249 = vmatprep.subr.mxu0 0.0
  %250 = vmatpush2.msra.mxu0 0.0
  %251 = vmatprep.subr.mxu0 0.0
  %252 = vmatpush2.msra.mxu0 0.0
  %253 = vmatprep.subr.mxu0 0.0
  %254 = vmatpush2.msra.mxu0 0.0
  %255 = vmatprep.subr.mxu0 0.0
  %256 = vmatpush2.msra.mxu0 0.0
  %257 = vmatprep.subr.mxu0 0.0
  %258 = vmatpush2.msra.mxu0 0.0
  %259 = vmatprep.subr.mxu0 0.0
  %260 = vmatpush2.msra.mxu0 0.0
  %261 = vmatprep.subr.mxu0 0.0
  %262 = vmatpush2.msra.mxu0 0.0
  %263 = vmatprep.mubr.f32.mxu0 0.0
  %264 = vmatmul.mubr.f32.gmra.mxu0 %v197
  %v265 = vpop.f32.mrf.mxu0
  %v266 = vadd.f32 0.0, %v265
  %v267 = vpop.f32.mrf.mxu0
  %268 = vdwg.mxu0
  %v269 = vld [vmem:[#allocation2] sm:$0xff]
  %v270 = vld [vmem:[#allocation2 + $0x38] sm:$0xff]
  %v271 = vsel %vm34, %v269, %v270
  %v272 = vadd.f32 %v271, %v266
  %v273 = vxor.u32 %v272, 2147483648
  %v274 = vmul.f32 %v273, 1.442695
  %v275 = vpow.pop %v274
  %v276 = vadd.f32 %v275, 1.0
  %v277 = vrcp.pop %v276
  %v278 = vmul.f32 1.0, %v277
  %v279 = vtanh.pop %v272
  %v280 = vmul.f32 %v278, 0.0
  %282 = vrot.lane.b32.xlu0 %v279, 64
  %v283 = vpop.permute.xlu0 %282
  %v285 = vmul.f32 %v278, %v283
  %287 = vrot.lane.b32.xlu0 %v285, 32
  %v288 = vpop.permute.xlu0 %287
  %v290 = vadd.f32 %v280, %v288
  %v291 = vtanh.pop %v290
  %293 = vrot.lane.b32.xlu0 %v291, 64
  %v294 = vpop.permute.xlu0 %293
  %v296 = vmul.f32 %v278, %v294
  %298 = vrot.lane.b32.xlu0 %v296, 32
  %v299 = vpop.permute.xlu0 %298
  %vm301 = vcmask 130048
  %302 = vst.msk [vmem:[#allocation3] sm:$0xff] %vm301, %v299
  %vm303 = vcmask 261248
  %304 = vst.msk [vmem:[#allocation3 + $0x38] sm:$0xff] %vm303, %v299
  %v305 = vsel %vm54, %v299, 0
  %307 = vmatprep.subr.mxu0 0.0
  %308 = vmatpush1.msra.mxu0 0.0
  %309 = vmatprep.subr.mxu0 0.0
  %310 = vmatpush1.msra.mxu0 0.0
  %311 = vmatprep.subr.mxu0 0.0
  %312 = vmatpush1.msra.mxu0 0.0
  %313 = vmatprep.subr.mxu0 0.0
  %314 = vmatpush1.msra.mxu0 0.0
  %315 = vmatprep.subr.mxu0 0.0
  %316 = vmatpush1.msra.mxu0 0.0
  %317 = vmatprep.subr.mxu0 0.0
  %318 = vmatpush1.msra.mxu0 0.0
  %319 = vmatprep.subr.mxu0 0.0
  %320 = vmatpush1.msra.mxu0 0.0
  %321 = vmatprep.subr.mxu0 0.0
  %322 = vmatpush1.msra.mxu0 0.0
  %323 = vmatprep.subr.mxu0 0.0
  %324 = vmatpush1.msra.mxu0 0.0
  %325 = vmatprep.subr.mxu0 0.0
  %326 = vmatpush1.msra.mxu0 0.0
  %327 = vmatprep.subr.mxu0 0.0
  %328 = vmatpush1.msra.mxu0 0.0
  %329 = vmatprep.subr.mxu0 0.0
  %330 = vmatpush1.msra.mxu0 0.0
  %331 = vmatprep.subr.mxu0 0.0
  %332 = vmatpush1.msra.mxu0 %v195
  %333 = vmatprep.subr.mxu0 0.0
  %334 = vmatpush1.msra.mxu0 %v194
  %335 = vmatprep.subr.mxu0 0.0
  %336 = vmatpush1.msra.mxu0 %v193
  %337 = vmatprep.subr.mxu0 0.0
  %338 = vmatpush1.msra.mxu0 %v192
  %339 = vmatprep.subr.mxu0 0.0
  %340 = vmatpush2.msra.mxu0 0.0
  %341 = vmatprep.subr.mxu0 0.0
  %342 = vmatpush2.msra.mxu0 0.0
  %343 = vmatprep.subr.mxu0 0.0
  %344 = vmatpush2.msra.mxu0 0.0
  %345 = vmatprep.subr.mxu0 0.0
  %346 = vmatpush2.msra.mxu0 0.0
  %347 = vmatprep.subr.mxu0 0.0
  %348 = vmatpush2.msra.mxu0 0.0
  %349 = vmatprep.subr.mxu0 0.0
  %350 = vmatpush2.msra.mxu0 0.0
  %351 = vmatprep.subr.mxu0 0.0
  %352 = vmatpush2.msra.mxu0 0.0
  %353 = vmatprep.subr.mxu0 0.0
  %354 = vmatpush2.msra.mxu0 0.0
  %355 = vmatprep.subr.mxu0 0.0
  %356 = vmatpush2.msra.mxu0 0.0
  %357 = vmatprep.subr.mxu0 0.0
  %358 = vmatpush2.msra.mxu0 0.0
  %359 = vmatprep.subr.mxu0 0.0
  %360 = vmatpush2.msra.mxu0 0.0
  %361 = vmatprep.subr.mxu0 0.0
  %362 = vmatpush2.msra.mxu0 0.0
  %363 = vmatprep.subr.mxu0 0.0
  %364 = vmatpush2.msra.mxu0 0.0
  %365 = vmatprep.subr.mxu0 0.0
  %366 = vmatpush2.msra.mxu0 0.0
  %367 = vmatprep.subr.mxu0 0.0
  %368 = vmatpush2.msra.mxu0 0.0
  %369 = vmatprep.subr.mxu0 0.0
  %370 = vmatpush2.msra.mxu0 0.0
  %371 = vmatprep.mubr.f32.mxu0 0.0
  %372 = vmatmul.mubr.f32.gmra.mxu0 %v305
  %v373 = vpop.f32.mrf.mxu0
  %v374 = vadd.f32 0.0, %v373
  %v375 = vpop.f32.mrf.mxu0
  %376 = vdwg.mxu0
  %v377 = vld [vmem:[#allocation2 + $0x8] sm:$0xff]
  %v378 = vld [vmem:[#allocation2 + $0x30] sm:$0xff]
  %v379 = vsel %vm34, %v377, %v378
  %v380 = vadd.f32 %v379, %v374
  %v381 = vxor.u32 %v380, 2147483648
  %v382 = vmul.f32 %v381, 1.442695
  %v383 = vpow.pop %v382
  %v384 = vadd.f32 %v383, 1.0
  %v385 = vrcp.pop %v384
  %v386 = vmul.f32 1.0, %v385
  %v387 = vtanh.pop %v380
  %v388 = vmul.f32 %v386, %v290
  %390 = vrot.lane.b32.xlu0 %v387, 64
  %v391 = vpop.permute.xlu0 %390
  %v393 = vmul.f32 %v386, %v391
  %395 = vrot.lane.b32.xlu0 %v393, 32
  %v396 = vpop.permute.xlu0 %395
  %v398 = vadd.f32 %v388, %v396
  %v399 = vtanh.pop %v398
  %401 = vrot.lane.b32.xlu0 %v399, 64
  %v402 = vpop.permute.xlu0 %401
  %v404 = vmul.f32 %v386, %v402
  %406 = vrot.lane.b32.xlu0 %v404, 32
  %v407 = vpop.permute.xlu0 %406
  %409 = vst.msk [vmem:[#allocation3 + $0x8] sm:$0xff] %vm301, %v407
  %410 = vst.msk [vmem:[#allocation3 + $0x30] sm:$0xff] %vm303, %v407
  %v411 = vsel %vm54, %v407, 0
  %413 = vmatprep.subr.mxu0 0.0
  %414 = vmatpush1.msra.mxu0 0.0
  %415 = vmatprep.subr.mxu0 0.0
  %416 = vmatpush1.msra.mxu0 0.0
  %417 = vmatprep.subr.mxu0 0.0
  %418 = vmatpush1.msra.mxu0 0.0
  %419 = vmatprep.subr.mxu0 0.0
  %420 = vmatpush1.msra.mxu0 0.0
  %421 = vmatprep.subr.mxu0 0.0
  %422 = vmatpush1.msra.mxu0 0.0
  %423 = vmatprep.subr.mxu0 0.0
  %424 = vmatpush1.msra.mxu0 0.0
  %425 = vmatprep.subr.mxu0 0.0
  %426 = vmatpush1.msra.mxu0 0.0
  %427 = vmatprep.subr.mxu0 0.0
  %428 = vmatpush1.msra.mxu0 0.0
  %429 = vmatprep.subr.mxu0 0.0
  %430 = vmatpush1.msra.mxu0 0.0
  %431 = vmatprep.subr.mxu0 0.0
  %432 = vmatpush1.msra.mxu0 0.0
  %433 = vmatprep.subr.mxu0 0.0
  %434 = vmatpush1.msra.mxu0 0.0
  %435 = vmatprep.subr.mxu0 0.0
  %436 = vmatpush1.msra.mxu0 0.0
  %437 = vmatprep.subr.mxu0 0.0
  %438 = vmatpush1.msra.mxu0 %v195
  %439 = vmatprep.subr.mxu0 0.0
  %440 = vmatpush1.msra.mxu0 %v194
  %441 = vmatprep.subr.mxu0 0.0
  %442 = vmatpush1.msra.mxu0 %v193
  %443 = vmatprep.subr.mxu0 0.0
  %444 = vmatpush1.msra.mxu0 %v192
  %445 = vmatprep.subr.mxu0 0.0
  %446 = vmatpush2.msra.mxu0 0.0
  %447 = vmatprep.subr.mxu0 0.0
  %448 = vmatpush2.msra.mxu0 0.0
  %449 = vmatprep.subr.mxu0 0.0
  %450 = vmatpush2.msra.mxu0 0.0
  %451 = vmatprep.subr.mxu0 0.0
  %452 = vmatpush2.msra.mxu0 0.0
  %453 = vmatprep.subr.mxu0 0.0
  %454 = vmatpush2.msra.mxu0 0.0
  %455 = vmatprep.subr.mxu0 0.0
  %456 = vmatpush2.msra.mxu0 0.0
  %457 = vmatprep.subr.mxu0 0.0
  %458 = vmatpush2.msra.mxu0 0.0
  %459 = vmatprep.subr.mxu0 0.0
  %460 = vmatpush2.msra.mxu0 0.0
  %461 = vmatprep.subr.mxu0 0.0
  %462 = vmatpush2.msra.mxu0 0.0
  %463 = vmatprep.subr.mxu0 0.0
  %464 = vmatpush2.msra.mxu0 0.0
  %465 = vmatprep.subr.mxu0 0.0
  %466 = vmatpush2.msra.mxu0 0.0
  %467 = vmatprep.subr.mxu0 0.0
  %468 = vmatpush2.msra.mxu0 0.0
  %469 = vmatprep.subr.mxu0 0.0
  %470 = vmatpush2.msra.mxu0 0.0
  %471 = vmatprep.subr.mxu0 0.0
  %472 = vmatpush2.msra.mxu0 0.0
  %473 = vmatprep.subr.mxu0 0.0
  %474 = vmatpush2.msra.mxu0 0.0
  %475 = vmatprep.subr.mxu0 0.0
  %476 = vmatpush2.msra.mxu0 0.0
  %477 = vmatprep.mubr.f32.mxu0 0.0
  %478 = vmatmul.mubr.f32.gmra.mxu0 %v411
  %v479 = vpop.f32.mrf.mxu0
  %v480 = vadd.f32 0.0, %v479
  %v481 = vpop.f32.mrf.mxu0
  %482 = vdwg.mxu0
  %v483 = vld [vmem:[#allocation2 + $0x10] sm:$0xff]
  %v484 = vld [vmem:[#allocation2 + $0x28] sm:$0xff]
  %v485 = vsel %vm34, %v483, %v484
  %v486 = vadd.f32 %v485, %v480
  %v487 = vxor.u32 %v486, 2147483648
  %v488 = vmul.f32 %v487, 1.442695
  %v489 = vpow.pop %v488
  %v490 = vadd.f32 %v489, 1.0
  %v491 = vrcp.pop %v490
  %v492 = vmul.f32 1.0, %v491
  %v493 = vtanh.pop %v486
  %v494 = vmul.f32 %v492, %v398
  %496 = vrot.lane.b32.xlu0 %v493, 64
  %v497 = vpop.permute.xlu0 %496
  %v499 = vmul.f32 %v492, %v497
  %501 = vrot.lane.b32.xlu0 %v499, 32
  %v502 = vpop.permute.xlu0 %501
  %v504 = vadd.f32 %v494, %v502
  %v505 = vtanh.pop %v504
  %507 = vrot.lane.b32.xlu0 %v505, 64
  %v508 = vpop.permute.xlu0 %507
  %v510 = vmul.f32 %v492, %v508
  %512 = vrot.lane.b32.xlu0 %v510, 32
  %v513 = vpop.permute.xlu0 %512
  %515 = vst.msk [vmem:[#allocation3 + $0x10] sm:$0xff] %vm301, %v513
  %516 = vst.msk [vmem:[#allocation3 + $0x28] sm:$0xff] %vm303, %v513
  %v517 = vsel %vm54, %v513, 0
  %519 = vmatprep.subr.mxu0 0.0
  %520 = vmatpush1.msra.mxu0 0.0
  %521 = vmatprep.subr.mxu0 0.0
  %522 = vmatpush1.msra.mxu0 0.0
  %523 = vmatprep.subr.mxu0 0.0
  %524 = vmatpush1.msra.mxu0 0.0
  %525 = vmatprep.subr.mxu0 0.0
  %526 = vmatpush1.msra.mxu0 0.0
  %527 = vmatprep.subr.mxu0 0.0
  %528 = vmatpush1.msra.mxu0 0.0
  %529 = vmatprep.subr.mxu0 0.0
  %530 = vmatpush1.msra.mxu0 0.0
  %531 = vmatprep.subr.mxu0 0.0
  %532 = vmatpush1.msra.mxu0 0.0
  %533 = vmatprep.subr.mxu0 0.0
  %534 = vmatpush1.msra.mxu0 0.0
  %535 = vmatprep.subr.mxu0 0.0
  %536 = vmatpush1.msra.mxu0 0.0
  %537 = vmatprep.subr.mxu0 0.0
  %538 = vmatpush1.msra.mxu0 0.0
  %539 = vmatprep.subr.mxu0 0.0
  %540 = vmatpush1.msra.mxu0 0.0
  %541 = vmatprep.subr.mxu0 0.0
  %542 = vmatpush1.msra.mxu0 0.0
  %543 = vmatprep.subr.mxu0 0.0
  %544 = vmatpush1.msra.mxu0 %v195
  %545 = vmatprep.subr.mxu0 0.0
  %546 = vmatpush1.msra.mxu0 %v194
  %547 = vmatprep.subr.mxu0 0.0
  %548 = vmatpush1.msra.mxu0 %v193
  %549 = vmatprep.subr.mxu0 0.0
  %550 = vmatpush1.msra.mxu0 %v192
  %551 = vmatprep.subr.mxu0 0.0
  %552 = vmatpush2.msra.mxu0 0.0
  %553 = vmatprep.subr.mxu0 0.0
  %554 = vmatpush2.msra.mxu0 0.0
  %555 = vmatprep.subr.mxu0 0.0
  %556 = vmatpush2.msra.mxu0 0.0
  %557 = vmatprep.subr.mxu0 0.0
  %558 = vmatpush2.msra.mxu0 0.0
  %559 = vmatprep.subr.mxu0 0.0
  %560 = vmatpush2.msra.mxu0 0.0
  %561 = vmatprep.subr.mxu0 0.0
  %562 = vmatpush2.msra.mxu0 0.0
  %563 = vmatprep.subr.mxu0 0.0
  %564 = vmatpush2.msra.mxu0 0.0
  %565 = vmatprep.subr.mxu0 0.0
  %566 = vmatpush2.msra.mxu0 0.0
  %567 = vmatprep.subr.mxu0 0.0
  %568 = vmatpush2.msra.mxu0 0.0
  %569 = vmatprep.subr.mxu0 0.0
  %570 = vmatpush2.msra.mxu0 0.0
  %571 = vmatprep.subr.mxu0 0.0
  %572 = vmatpush2.msra.mxu0 0.0
  %573 = vmatprep.subr.mxu0 0.0
  %574 = vmatpush2.msra.mxu0 0.0
  %575 = vmatprep.subr.mxu0 0.0
  %576 = vmatpush2.msra.mxu0 0.0
  %577 = vmatprep.subr.mxu0 0.0
  %578 = vmatpush2.msra.mxu0 0.0
  %579 = vmatprep.subr.mxu0 0.0
  %580 = vmatpush2.msra.mxu0 0.0
  %581 = vmatprep.subr.mxu0 0.0
  %582 = vmatpush2.msra.mxu0 0.0
  %583 = vmatprep.mubr.f32.mxu0 0.0
  %584 = vmatmul.mubr.f32.gmra.mxu0 %v517
  %v585 = vpop.f32.mrf.mxu0
  %v586 = vadd.f32 0.0, %v585
  %v587 = vpop.f32.mrf.mxu0
  %588 = vdwg.mxu0
  %v589 = vld [vmem:[#allocation2 + $0x18] sm:$0xff]
  %v590 = vld [vmem:[#allocation2 + $0x20] sm:$0xff]
  %v591 = vsel %vm34, %v589, %v590
  %v592 = vadd.f32 %v591, %v586
  %v593 = vxor.u32 %v592, 2147483648
  %v594 = vmul.f32 %v593, 1.442695
  %v595 = vpow.pop %v594
  %v596 = vadd.f32 %v595, 1.0
  %v597 = vrcp.pop %v596
  %v598 = vmul.f32 1.0, %v597
  %v599 = vtanh.pop %v592
  %v600 = vmul.f32 %v598, %v504
  %602 = vrot.lane.b32.xlu0 %v599, 64
  %v603 = vpop.permute.xlu0 %602
  %v605 = vmul.f32 %v598, %v603
  %607 = vrot.lane.b32.xlu0 %v605, 32
  %v608 = vpop.permute.xlu0 %607
  %v610 = vadd.f32 %v600, %v608
  %v611 = vtanh.pop %v610
  %613 = vrot.lane.b32.xlu0 %v611, 64
  %v614 = vpop.permute.xlu0 %613
  %v616 = vmul.f32 %v598, %v614
  %618 = vrot.lane.b32.xlu0 %v616, 32
  %v619 = vpop.permute.xlu0 %618
  %621 = vst.msk [vmem:[#allocation3 + $0x18] sm:$0xff] %vm301, %v619
  %622 = vst.msk [vmem:[#allocation3 + $0x20] sm:$0xff] %vm303, %v619
  %v623 = vsel %vm54, %v619, 0
  %625 = vmatprep.subr.mxu0 0.0
  %626 = vmatpush1.msra.mxu0 0.0
  %627 = vmatprep.subr.mxu0 0.0
  %628 = vmatpush1.msra.mxu0 0.0
  %629 = vmatprep.subr.mxu0 0.0
  %630 = vmatpush1.msra.mxu0 0.0
  %631 = vmatprep.subr.mxu0 0.0
  %632 = vmatpush1.msra.mxu0 0.0
  %633 = vmatprep.subr.mxu0 0.0
  %634 = vmatpush1.msra.mxu0 0.0
  %635 = vmatprep.subr.mxu0 0.0
  %636 = vmatpush1.msra.mxu0 0.0
  %637 = vmatprep.subr.mxu0 0.0
  %638 = vmatpush1.msra.mxu0 0.0
  %639 = vmatprep.subr.mxu0 0.0
  %640 = vmatpush1.msra.mxu0 0.0
  %641 = vmatprep.subr.mxu0 0.0
  %642 = vmatpush1.msra.mxu0 0.0
  %643 = vmatprep.subr.mxu0 0.0
  %644 = vmatpush1.msra.mxu0 0.0
  %645 = vmatprep.subr.mxu0 0.0
  %646 = vmatpush1.msra.mxu0 0.0
  %647 = vmatprep.subr.mxu0 0.0
  %648 = vmatpush1.msra.mxu0 0.0
  %649 = vmatprep.subr.mxu0 0.0
  %650 = vmatpush1.msra.mxu0 %v195
  %651 = vmatprep.subr.mxu0 0.0
  %652 = vmatpush1.msra.mxu0 %v194
  %653 = vmatprep.subr.mxu0 0.0
  %654 = vmatpush1.msra.mxu0 %v193
  %655 = vmatprep.subr.mxu0 0.0
  %656 = vmatpush1.msra.mxu0 %v192
  %657 = vmatprep.subr.mxu0 0.0
  %658 = vmatpush2.msra.mxu0 0.0
  %659 = vmatprep.subr.mxu0 0.0
  %660 = vmatpush2.msra.mxu0 0.0
  %661 = vmatprep.subr.mxu0 0.0
  %662 = vmatpush2.msra.mxu0 0.0
  %663 = vmatprep.subr.mxu0 0.0
  %664 = vmatpush2.msra.mxu0 0.0
  %665 = vmatprep.subr.mxu0 0.0
  %666 = vmatpush2.msra.mxu0 0.0
  %667 = vmatprep.subr.mxu0 0.0
  %668 = vmatpush2.msra.mxu0 0.0
  %669 = vmatprep.subr.mxu0 0.0
  %670 = vmatpush2.msra.mxu0 0.0
  %671 = vmatprep.subr.mxu0 0.0
  %672 = vmatpush2.msra.mxu0 0.0
  %673 = vmatprep.subr.mxu0 0.0
  %674 = vmatpush2.msra.mxu0 0.0
  %675 = vmatprep.subr.mxu0 0.0
  %676 = vmatpush2.msra.mxu0 0.0
  %677 = vmatprep.subr.mxu0 0.0
  %678 = vmatpush2.msra.mxu0 0.0
  %679 = vmatprep.subr.mxu0 0.0
  %680 = vmatpush2.msra.mxu0 0.0
  %681 = vmatprep.subr.mxu0 0.0
  %682 = vmatpush2.msra.mxu0 0.0
  %683 = vmatprep.subr.mxu0 0.0
  %684 = vmatpush2.msra.mxu0 0.0
  %685 = vmatprep.subr.mxu0 0.0
  %686 = vmatpush2.msra.mxu0 0.0
  %687 = vmatprep.subr.mxu0 0.0
  %688 = vmatpush2.msra.mxu0 0.0
  %689 = vmatprep.mubr.f32.mxu0 0.0
  %690 = vmatmul.mubr.f32.gmra.mxu0 %v623
  %v691 = vpop.f32.mrf.mxu0
  %v692 = vadd.f32 0.0, %v691
  %v693 = vpop.f32.mrf.mxu0
  %694 = vdwg.mxu0
  %v695 = vld [vmem:[#allocation2 + $0x20] sm:$0xff]
  %v696 = vld [vmem:[#allocation2 + $0x18] sm:$0xff]
  %v697 = vsel %vm34, %v695, %v696
  %v698 = vadd.f32 %v697, %v692
  %v699 = vxor.u32 %v698, 2147483648
  %v700 = vmul.f32 %v699, 1.442695
  %v701 = vpow.pop %v700
  %v702 = vadd.f32 %v701, 1.0
  %v703 = vrcp.pop %v702
  %v704 = vmul.f32 1.0, %v703
  %v705 = vtanh.pop %v698
  %v706 = vmul.f32 %v704, %v610
  %708 = vrot.lane.b32.xlu0 %v705, 64
  %v709 = vpop.permute.xlu0 %708
  %v711 = vmul.f32 %v704, %v709
  %713 = vrot.lane.b32.xlu0 %v711, 32
  %v714 = vpop.permute.xlu0 %713
  %v716 = vadd.f32 %v706, %v714
  %v717 = vtanh.pop %v716
  %719 = vrot.lane.b32.xlu0 %v717, 64
  %v720 = vpop.permute.xlu0 %719
  %v722 = vmul.f32 %v704, %v720
  %724 = vrot.lane.b32.xlu0 %v722, 32
  %v725 = vpop.permute.xlu0 %724
  %727 = vst.msk [vmem:[#allocation3 + $0x20] sm:$0xff] %vm301, %v725
  %728 = vst.msk [vmem:[#allocation3 + $0x18] sm:$0xff] %vm303, %v725
  %v729 = vsel %vm54, %v725, 0
  %731 = vmatprep.subr.mxu0 0.0
  %732 = vmatpush1.msra.mxu0 0.0
  %733 = vmatprep.subr.mxu0 0.0
  %734 = vmatpush1.msra.mxu0 0.0
  %735 = vmatprep.subr.mxu0 0.0
  %736 = vmatpush1.msra.mxu0 0.0
  %737 = vmatprep.subr.mxu0 0.0
  %738 = vmatpush1.msra.mxu0 0.0
  %739 = vmatprep.subr.mxu0 0.0
  %740 = vmatpush1.msra.mxu0 0.0
  %741 = vmatprep.subr.mxu0 0.0
  %742 = vmatpush1.msra.mxu0 0.0
  %743 = vmatprep.subr.mxu0 0.0
  %744 = vmatpush1.msra.mxu0 0.0
  %745 = vmatprep.subr.mxu0 0.0
  %746 = vmatpush1.msra.mxu0 0.0
  %747 = vmatprep.subr.mxu0 0.0
  %748 = vmatpush1.msra.mxu0 0.0
  %749 = vmatprep.subr.mxu0 0.0
  %750 = vmatpush1.msra.mxu0 0.0
  %751 = vmatprep.subr.mxu0 0.0
  %752 = vmatpush1.msra.mxu0 0.0
  %753 = vmatprep.subr.mxu0 0.0
  %754 = vmatpush1.msra.mxu0 0.0
  %755 = vmatprep.subr.mxu0 0.0
  %756 = vmatpush1.msra.mxu0 %v195
  %757 = vmatprep.subr.mxu0 0.0
  %758 = vmatpush1.msra.mxu0 %v194
  %759 = vmatprep.subr.mxu0 0.0
  %760 = vmatpush1.msra.mxu0 %v193
  %761 = vmatprep.subr.mxu0 0.0
  %762 = vmatpush1.msra.mxu0 %v192
  %763 = vmatprep.subr.mxu0 0.0
  %764 = vmatpush2.msra.mxu0 0.0
  %765 = vmatprep.subr.mxu0 0.0
  %766 = vmatpush2.msra.mxu0 0.0
  %767 = vmatprep.subr.mxu0 0.0
  %768 = vmatpush2.msra.mxu0 0.0
  %769 = vmatprep.subr.mxu0 0.0
  %770 = vmatpush2.msra.mxu0 0.0
  %771 = vmatprep.subr.mxu0 0.0
  %772 = vmatpush2.msra.mxu0 0.0
  %773 = vmatprep.subr.mxu0 0.0
  %774 = vmatpush2.msra.mxu0 0.0
  %775 = vmatprep.subr.mxu0 0.0
  %776 = vmatpush2.msra.mxu0 0.0
  %777 = vmatprep.subr.mxu0 0.0
  %778 = vmatpush2.msra.mxu0 0.0
  %779 = vmatprep.subr.mxu0 0.0
  %780 = vmatpush2.msra.mxu0 0.0
  %781 = vmatprep.subr.mxu0 0.0
  %782 = vmatpush2.msra.mxu0 0.0
  %783 = vmatprep.subr.mxu0 0.0
  %784 = vmatpush2.msra.mxu0 0.0
  %785 = vmatprep.subr.mxu0 0.0
  %786 = vmatpush2.msra.mxu0 0.0
  %787 = vmatprep.subr.mxu0 0.0
  %788 = vmatpush2.msra.mxu0 0.0
  %789 = vmatprep.subr.mxu0 0.0
  %790 = vmatpush2.msra.mxu0 0.0
  %791 = vmatprep.subr.mxu0 0.0
  %792 = vmatpush2.msra.mxu0 0.0
  %793 = vmatprep.subr.mxu0 0.0
  %794 = vmatpush2.msra.mxu0 0.0
  %795 = vmatprep.mubr.f32.mxu0 0.0
  %796 = vmatmul.mubr.f32.gmra.mxu0 %v729
  %v797 = vpop.f32.mrf.mxu0
  %v798 = vadd.f32 0.0, %v797
  %v799 = vpop.f32.mrf.mxu0
  %800 = vdwg.mxu0
  %v801 = vld [vmem:[#allocation2 + $0x28] sm:$0xff]
  %v802 = vld [vmem:[#allocation2 + $0x10] sm:$0xff]
  %v803 = vsel %vm34, %v801, %v802
  %v804 = vadd.f32 %v803, %v798
  %v805 = vxor.u32 %v804, 2147483648
  %v806 = vmul.f32 %v805, 1.442695
  %v807 = vpow.pop %v806
  %v808 = vadd.f32 %v807, 1.0
  %v809 = vrcp.pop %v808
  %v810 = vmul.f32 1.0, %v809
  %v811 = vtanh.pop %v804
  %v812 = vmul.f32 %v810, %v716
  %814 = vrot.lane.b32.xlu0 %v811, 64
  %v815 = vpop.permute.xlu0 %814
  %v817 = vmul.f32 %v810, %v815
  %819 = vrot.lane.b32.xlu0 %v817, 32
  %v820 = vpop.permute.xlu0 %819
  %v822 = vadd.f32 %v812, %v820
  %v823 = vtanh.pop %v822
  %825 = vrot.lane.b32.xlu0 %v823, 64
  %v826 = vpop.permute.xlu0 %825
  %v828 = vmul.f32 %v810, %v826
  %830 = vrot.lane.b32.xlu0 %v828, 32
  %v831 = vpop.permute.xlu0 %830
  %833 = vst.msk [vmem:[#allocation3 + $0x28] sm:$0xff] %vm301, %v831
  %834 = vst.msk [vmem:[#allocation3 + $0x10] sm:$0xff] %vm303, %v831
  %v835 = vsel %vm54, %v831, 0
  %837 = vmatprep.subr.mxu0 0.0
  %838 = vmatpush1.msra.mxu0 0.0
  %839 = vmatprep.subr.mxu0 0.0
  %840 = vmatpush1.msra.mxu0 0.0
  %841 = vmatprep.subr.mxu0 0.0
  %842 = vmatpush1.msra.mxu0 0.0
  %843 = vmatprep.subr.mxu0 0.0
  %844 = vmatpush1.msra.mxu0 0.0
  %845 = vmatprep.subr.mxu0 0.0
  %846 = vmatpush1.msra.mxu0 0.0
  %847 = vmatprep.subr.mxu0 0.0
  %848 = vmatpush1.msra.mxu0 0.0
  %849 = vmatprep.subr.mxu0 0.0
  %850 = vmatpush1.msra.mxu0 0.0
  %851 = vmatprep.subr.mxu0 0.0
  %852 = vmatpush1.msra.mxu0 0.0
  %853 = vmatprep.subr.mxu0 0.0
  %854 = vmatpush1.msra.mxu0 0.0
  %855 = vmatprep.subr.mxu0 0.0
  %856 = vmatpush1.msra.mxu0 0.0
  %857 = vmatprep.subr.mxu0 0.0
  %858 = vmatpush1.msra.mxu0 0.0
  %859 = vmatprep.subr.mxu0 0.0
  %860 = vmatpush1.msra.mxu0 0.0
  %861 = vmatprep.subr.mxu0 0.0
  %862 = vmatpush1.msra.mxu0 %v195
  %863 = vmatprep.subr.mxu0 0.0
  %864 = vmatpush1.msra.mxu0 %v194
  %865 = vmatprep.subr.mxu0 0.0
  %866 = vmatpush1.msra.mxu0 %v193
  %867 = vmatprep.subr.mxu0 0.0
  %868 = vmatpush1.msra.mxu0 %v192
  %869 = vmatprep.subr.mxu0 0.0
  %870 = vmatpush2.msra.mxu0 0.0
  %871 = vmatprep.subr.mxu0 0.0
  %872 = vmatpush2.msra.mxu0 0.0
  %873 = vmatprep.subr.mxu0 0.0
  %874 = vmatpush2.msra.mxu0 0.0
  %875 = vmatprep.subr.mxu0 0.0
  %876 = vmatpush2.msra.mxu0 0.0
  %877 = vmatprep.subr.mxu0 0.0
  %878 = vmatpush2.msra.mxu0 0.0
  %879 = vmatprep.subr.mxu0 0.0
  %880 = vmatpush2.msra.mxu0 0.0
  %881 = vmatprep.subr.mxu0 0.0
  %882 = vmatpush2.msra.mxu0 0.0
  %883 = vmatprep.subr.mxu0 0.0
  %884 = vmatpush2.msra.mxu0 0.0
  %885 = vmatprep.subr.mxu0 0.0
  %886 = vmatpush2.msra.mxu0 0.0
  %887 = vmatprep.subr.mxu0 0.0
  %888 = vmatpush2.msra.mxu0 0.0
  %889 = vmatprep.subr.mxu0 0.0
  %890 = vmatpush2.msra.mxu0 0.0
  %891 = vmatprep.subr.mxu0 0.0
  %892 = vmatpush2.msra.mxu0 0.0
  %893 = vmatprep.subr.mxu0 0.0
  %894 = vmatpush2.msra.mxu0 0.0
  %895 = vmatprep.subr.mxu0 0.0
  %896 = vmatpush2.msra.mxu0 0.0
  %897 = vmatprep.subr.mxu0 0.0
  %898 = vmatpush2.msra.mxu0 0.0
  %899 = vmatprep.subr.mxu0 0.0
  %900 = vmatpush2.msra.mxu0 0.0
  %901 = vmatprep.mubr.f32.mxu0 0.0
  %902 = vmatmul.mubr.f32.gmra.mxu0 %v835
  %v903 = vpop.f32.mrf.mxu0
  %v904 = vadd.f32 0.0, %v903
  %v905 = vpop.f32.mrf.mxu0
  %906 = vdwg.mxu0
  %v907 = vld [vmem:[#allocation2 + $0x30] sm:$0xff]
  %v908 = vld [vmem:[#allocation2 + $0x8] sm:$0xff]
  %v909 = vsel %vm34, %v907, %v908
  %v910 = vadd.f32 %v909, %v904
  %v911 = vxor.u32 %v910, 2147483648
  %v912 = vmul.f32 %v911, 1.442695
  %v913 = vpow.pop %v912
  %v914 = vadd.f32 %v913, 1.0
  %v915 = vrcp.pop %v914
  %v916 = vmul.f32 1.0, %v915
  %v917 = vtanh.pop %v910
  %v918 = vmul.f32 %v916, %v822
  %920 = vrot.lane.b32.xlu0 %v917, 64
  %v921 = vpop.permute.xlu0 %920
  %v923 = vmul.f32 %v916, %v921
  %925 = vrot.lane.b32.xlu0 %v923, 32
  %v926 = vpop.permute.xlu0 %925
  %v928 = vadd.f32 %v918, %v926
  %v929 = vtanh.pop %v928
  %931 = vrot.lane.b32.xlu0 %v929, 64
  %v932 = vpop.permute.xlu0 %931
  %v934 = vmul.f32 %v916, %v932
  %936 = vrot.lane.b32.xlu0 %v934, 32
  %v937 = vpop.permute.xlu0 %936
  %939 = vst.msk [vmem:[#allocation3 + $0x30] sm:$0xff] %vm301, %v937
  %940 = vst.msk [vmem:[#allocation3 + $0x8] sm:$0xff] %vm303, %v937
  %v941 = vsel %vm54, %v937, 0
  %943 = vmatprep.subr.mxu0 0.0
  %944 = vmatpush1.msra.mxu0 0.0
  %945 = vmatprep.subr.mxu0 0.0
  %946 = vmatpush1.msra.mxu0 0.0
  %947 = vmatprep.subr.mxu0 0.0
  %948 = vmatpush1.msra.mxu0 0.0
  %949 = vmatprep.subr.mxu0 0.0
  %950 = vmatpush1.msra.mxu0 0.0
  %951 = vmatprep.subr.mxu0 0.0
  %952 = vmatpush1.msra.mxu0 0.0
  %953 = vmatprep.subr.mxu0 0.0
  %954 = vmatpush1.msra.mxu0 0.0
  %955 = vmatprep.subr.mxu0 0.0
  %956 = vmatpush1.msra.mxu0 0.0
  %957 = vmatprep.subr.mxu0 0.0
  %958 = vmatpush1.msra.mxu0 0.0
  %959 = vmatprep.subr.mxu0 0.0
  %960 = vmatpush1.msra.mxu0 0.0
  %961 = vmatprep.subr.mxu0 0.0
  %962 = vmatpush1.msra.mxu0 0.0
  %963 = vmatprep.subr.mxu0 0.0
  %964 = vmatpush1.msra.mxu0 0.0
  %965 = vmatprep.subr.mxu0 0.0
  %966 = vmatpush1.msra.mxu0 0.0
  %967 = vmatprep.subr.mxu0 0.0
  %968 = vmatpush1.msra.mxu0 %v195
  %969 = vmatprep.subr.mxu0 0.0
  %970 = vmatpush1.msra.mxu0 %v194
  %971 = vmatprep.subr.mxu0 0.0
  %972 = vmatpush1.msra.mxu0 %v193
  %973 = vmatprep.subr.mxu0 0.0
  %974 = vmatpush1.msra.mxu0 %v192
  %975 = vmatprep.subr.mxu0 0.0
  %976 = vmatpush2.msra.mxu0 0.0
  %977 = vmatprep.subr.mxu0 0.0
  %978 = vmatpush2.msra.mxu0 0.0
  %979 = vmatprep.subr.mxu0 0.0
  %980 = vmatpush2.msra.mxu0 0.0
  %981 = vmatprep.subr.mxu0 0.0
  %982 = vmatpush2.msra.mxu0 0.0
  %983 = vmatprep.subr.mxu0 0.0
  %984 = vmatpush2.msra.mxu0 0.0
  %985 = vmatprep.subr.mxu0 0.0
  %986 = vmatpush2.msra.mxu0 0.0
  %987 = vmatprep.subr.mxu0 0.0
  %988 = vmatpush2.msra.mxu0 0.0
  %989 = vmatprep.subr.mxu0 0.0
  %990 = vmatpush2.msra.mxu0 0.0
  %991 = vmatprep.subr.mxu0 0.0
  %992 = vmatpush2.msra.mxu0 0.0
  %993 = vmatprep.subr.mxu0 0.0
  %994 = vmatpush2.msra.mxu0 0.0
  %995 = vmatprep.subr.mxu0 0.0
  %996 = vmatpush2.msra.mxu0 0.0
  %997 = vmatprep.subr.mxu0 0.0
  %998 = vmatpush2.msra.mxu0 0.0
  %999 = vmatprep.subr.mxu0 0.0
  %1000 = vmatpush2.msra.mxu0 0.0
  %1001 = vmatprep.subr.mxu0 0.0
  %1002 = vmatpush2.msra.mxu0 0.0
  %1003 = vmatprep.subr.mxu0 0.0
  %1004 = vmatpush2.msra.mxu0 0.0
  %1005 = vmatprep.subr.mxu0 0.0
  %1006 = vmatpush2.msra.mxu0 0.0
  %1007 = vmatprep.mubr.f32.mxu0 0.0
  %1008 = vmatmul.mubr.f32.gmra.mxu0 %v941
  %v1009 = vpop.f32.mrf.mxu0
  %v1010 = vadd.f32 0.0, %v1009
  %v1011 = vpop.f32.mrf.mxu0
  %1012 = vdwg.mxu0
  %v1013 = vld [vmem:[#allocation2 + $0x38] sm:$0xff]
  %v1014 = vld [vmem:[#allocation2] sm:$0xff]
  %v1015 = vsel %vm34, %v1013, %v1014
  %v1016 = vadd.f32 %v1015, %v1010
  %v1017 = vxor.u32 %v1016, 2147483648
  %v1018 = vmul.f32 %v1017, 1.442695
  %v1019 = vpow.pop %v1018
  %v1020 = vadd.f32 %v1019, 1.0
  %v1021 = vrcp.pop %v1020
  %v1022 = vmul.f32 1.0, %v1021
  %v1023 = vtanh.pop %v1016
  %v1024 = vmul.f32 %v1022, %v928
  %1026 = vrot.lane.b32.xlu0 %v1023, 64
  %v1027 = vpop.permute.xlu0 %1026
  %v1029 = vmul.f32 %v1022, %v1027
  %1031 = vrot.lane.b32.xlu0 %v1029, 32
  %v1032 = vpop.permute.xlu0 %1031
  %v1034 = vadd.f32 %v1024, %v1032
  %v1035 = vtanh.pop %v1034
  %1037 = vrot.lane.b32.xlu0 %v1035, 64
  %v1038 = vpop.permute.xlu0 %1037
  %v1040 = vmul.f32 %v1022, %v1038
  %1042 = vrot.lane.b32.xlu0 %v1040, 32
  %v1043 = vpop.permute.xlu0 %1042
  %1045 = vst.msk [vmem:[#allocation3 + $0x38] sm:$0xff] %vm301, %v1043
  %1046 = vst.msk [vmem:[#allocation3] sm:$0xff] %vm303, %v1043
  %1047 = vst.msk [vmem:[%s5] sm:$0xff] %vm301, %v1043
  %1048 = vrot.lane.b32.xlu0 %v1040, 16
  %v1049 = vpop.permute.xlu0 %1048
  %s1051 = scalar_lea.vmem %s5, 8
  %1052 = vst.msk [vmem:[%s1051] sm:$0xff] %vm301, %v1049
  %1054 = vrot.lane.b32.xlu0 %v1034, 96
  %v1055 = vpop.permute.xlu0 %1054
  %1057 = vst.msk [vmem:[%s6] sm:$0xff] %vm301, %v1055
  %1058 = vrot.lane.b32.xlu0 %v1034, 80
  %v1059 = vpop.permute.xlu0 %1058
  %s1061 = scalar_lea.vmem %s6, 8
  %1062 = vst.msk [vmem:[%s1061] sm:$0xff] %vm301, %v1059
  %v1063 = vld [vmem:[#allocation3] sm:$0xff]
  %v1064 = vld [vmem:[#allocation3 + $0x8] sm:$0xff]
  %v1065 = vld [vmem:[#allocation3 + $0x10] sm:$0xff]
  %v1066 = vld [vmem:[#allocation3 + $0x18] sm:$0xff]
  %v1067 = vld [vmem:[#allocation3 + $0x20] sm:$0xff]
  %v1068 = vld [vmem:[#allocation3 + $0x28] sm:$0xff]
  %v1069 = vld [vmem:[#allocation3 + $0x30] sm:$0xff]
  %v1070 = vld [vmem:[#allocation3 + $0x38] sm:$0xff]
  %s1071 = scalar_lea.vmem %s1, 32
  %v1072 = vld [vmem:[%s1071] sm:$0xff]
  %v1073 = vld [vmem:[%s1071 + $0x8] sm:$0xff]
  %v1074 = vld [vmem:[%s1071 + $0x10] sm:$0xff]
  %v1075 = vld [vmem:[%s1071 + $0x18] sm:$0xff]
  %s1076 = scalar_lea.vmem %s3, 1
  %v1077 = vld [vmem:[%s1076] sm:$0x1]
  %v1079 = vlaneseq
  %v1080 = vshrl.u32 %v1079, 7
  %v1081 = vsub.s32 0, %v1080
  %v1082 = vrot.slane %v1077, %v1081
  %v1085 = vsel %vm54, %v1063, 0
  %v1088 = vsel %vm54, %v1064, 0
  %v1091 = vsel %vm54, %v1065, 0
  %v1094 = vsel %vm54, %v1066, 0
  %v1097 = vsel %vm54, %v1067, 0
  %v1100 = vsel %vm54, %v1068, 0
  %v1103 = vsel %vm54, %v1069, 0
  %v1106 = vsel %vm54, %v1070, 0
  %1108 = vmatprep.subr.mxu0 0.0
  %1109 = vmatpush1.msra.mxu0 0.0
  %1110 = vmatprep.subr.mxu0 0.0
  %1111 = vmatpush1.msra.mxu0 0.0
  %1112 = vmatprep.subr.mxu0 0.0
  %1113 = vmatpush1.msra.mxu0 0.0
  %1114 = vmatprep.subr.mxu0 0.0
  %1115 = vmatpush1.msra.mxu0 0.0
  %1116 = vmatprep.subr.mxu0 0.0
  %1117 = vmatpush1.msra.mxu0 0.0
  %1118 = vmatprep.subr.mxu0 0.0
  %1119 = vmatpush1.msra.mxu0 0.0
  %1120 = vmatprep.subr.mxu0 0.0
  %1121 = vmatpush1.msra.mxu0 0.0
  %1122 = vmatprep.subr.mxu0 0.0
  %1123 = vmatpush1.msra.mxu0 0.0
  %1124 = vmatprep.subr.mxu0 0.0
  %1125 = vmatpush1.msra.mxu0 0.0
  %1126 = vmatprep.subr.mxu0 0.0
  %1127 = vmatpush1.msra.mxu0 0.0
  %1128 = vmatprep.subr.mxu0 0.0
  %1129 = vmatpush1.msra.mxu0 0.0
  %1130 = vmatprep.subr.mxu0 0.0
  %1131 = vmatpush1.msra.mxu0 0.0
  %1132 = vmatprep.subr.mxu0 0.0
  %1133 = vmatpush1.msra.mxu0 %v1075
  %1134 = vmatprep.subr.mxu0 0.0
  %1135 = vmatpush1.msra.mxu0 %v1074
  %1136 = vmatprep.subr.mxu0 0.0
  %1137 = vmatpush1.msra.mxu0 %v1073
  %1138 = vmatprep.subr.mxu0 0.0
  %1139 = vmatpush1.msra.mxu0 %v1072
  %1140 = vmatprep.subr.mxu0 0.0
  %1141 = vmatpush2.msra.mxu0 0.0
  %1142 = vmatprep.subr.mxu0 0.0
  %1143 = vmatpush2.msra.mxu0 0.0
  %1144 = vmatprep.subr.mxu0 0.0
  %1145 = vmatpush2.msra.mxu0 0.0
  %1146 = vmatprep.subr.mxu0 0.0
  %1147 = vmatpush2.msra.mxu0 0.0
  %1148 = vmatprep.subr.mxu0 0.0
  %1149 = vmatpush2.msra.mxu0 0.0
  %1150 = vmatprep.subr.mxu0 0.0
  %1151 = vmatpush2.msra.mxu0 0.0
  %1152 = vmatprep.subr.mxu0 0.0
  %1153 = vmatpush2.msra.mxu0 0.0
  %1154 = vmatprep.subr.mxu0 0.0
  %1155 = vmatpush2.msra.mxu0 0.0
  %1156 = vmatprep.subr.mxu0 0.0
  %1157 = vmatpush2.msra.mxu0 0.0
  %1158 = vmatprep.subr.mxu0 0.0
  %1159 = vmatpush2.msra.mxu0 0.0
  %1160 = vmatprep.subr.mxu0 0.0
  %1161 = vmatpush2.msra.mxu0 0.0
  %1162 = vmatprep.subr.mxu0 0.0
  %1163 = vmatpush2.msra.mxu0 0.0
  %1164 = vmatprep.subr.mxu0 0.0
  %1165 = vmatpush2.msra.mxu0 0.0
  %1166 = vmatprep.subr.mxu0 0.0
  %1167 = vmatpush2.msra.mxu0 0.0
  %1168 = vmatprep.subr.mxu0 0.0
  %1169 = vmatpush2.msra.mxu0 0.0
  %1170 = vmatprep.subr.mxu0 0.0
  %1171 = vmatpush2.msra.mxu0 0.0
  %1172 = vmatprep.mubr.f32.mxu0 0.0
  %1173 = vmatmul.mubr.f32.gmra.mxu0 %v1085
  %v1174 = vpop.f32.mrf.mxu0
  %v1175 = vadd.f32 %v1082, %v1174
  %v1176 = vpop.f32.mrf.mxu0
  %1177 = vmatprep.mubr.f32.mxu0 0.0
  %1178 = vmatmul.mubr.f32.gmra.mxu0 %v1088
  %v1179 = vpop.f32.mrf.mxu0
  %v1180 = vadd.f32 %v1082, %v1179
  %v1181 = vpop.f32.mrf.mxu0
  %1182 = vmatprep.mubr.f32.mxu0 0.0
  %1183 = vmatmul.mubr.f32.gmra.mxu0 %v1091
  %v1184 = vpop.f32.mrf.mxu0
  %v1185 = vadd.f32 %v1082, %v1184
  %v1186 = vpop.f32.mrf.mxu0
  %1187 = vmatprep.mubr.f32.mxu0 0.0
  %1188 = vmatmul.mubr.f32.gmra.mxu0 %v1094
  %v1189 = vpop.f32.mrf.mxu0
  %v1190 = vadd.f32 %v1082, %v1189
  %v1191 = vpop.f32.mrf.mxu0
  %1192 = vmatprep.mubr.f32.mxu0 0.0
  %1193 = vmatmul.mubr.f32.gmra.mxu0 %v1097
  %v1194 = vpop.f32.mrf.mxu0
  %v1195 = vadd.f32 %v1082, %v1194
  %v1196 = vpop.f32.mrf.mxu0
  %1197 = vmatprep.mubr.f32.mxu0 0.0
  %1198 = vmatmul.mubr.f32.gmra.mxu0 %v1100
  %v1199 = vpop.f32.mrf.mxu0
  %v1200 = vadd.f32 %v1082, %v1199
  %v1201 = vpop.f32.mrf.mxu0
  %1202 = vmatprep.mubr.f32.mxu0 0.0
  %1203 = vmatmul.mubr.f32.gmra.mxu0 %v1103
  %v1204 = vpop.f32.mrf.mxu0
  %v1205 = vadd.f32 %v1082, %v1204
  %v1206 = vpop.f32.mrf.mxu0
  %1207 = vmatprep.mubr.f32.mxu0 0.0
  %1208 = vmatmul.mubr.f32.gmra.mxu0 %v1106
  %v1209 = vpop.f32.mrf.mxu0
  %v1210 = vadd.f32 %v1082, %v1209
  %v1211 = vpop.f32.mrf.mxu0
  %1212 = vdwg.mxu0
  %1213 = vst [vmem:[#allocation2] sm:$0xff] %v1175
  %1214 = vst [vmem:[#allocation2 + $0x8] sm:$0xff] %v1180
  %1215 = vst [vmem:[#allocation2 + $0x10] sm:$0xff] %v1185
  %1216 = vst [vmem:[#allocation2 + $0x18] sm:$0xff] %v1190
  %1217 = vst [vmem:[#allocation2 + $0x20] sm:$0xff] %v1195
  %1218 = vst [vmem:[#allocation2 + $0x28] sm:$0xff] %v1200
  %1219 = vst [vmem:[#allocation2 + $0x30] sm:$0xff] %v1205
  %1220 = vst [vmem:[#allocation2 + $0x38] sm:$0xff] %v1210
  %s1221 = scalar_lea.vmem %s2, 32
  %v1222 = vld [vmem:[%s1221] sm:$0xff]
  %v1223 = vld [vmem:[%s1221 + $0x8] sm:$0xff]
  %v1224 = vld [vmem:[%s1221 + $0x10] sm:$0xff]
  %v1225 = vld [vmem:[%s1221 + $0x18] sm:$0xff]
  %1226 = vmatprep.subr.mxu0 0.0
  %1227 = vmatpush1.msra.mxu0 0.0
  %1228 = vmatprep.subr.mxu0 0.0
  %1229 = vmatpush1.msra.mxu0 0.0
  %1230 = vmatprep.subr.mxu0 0.0
  %1231 = vmatpush1.msra.mxu0 0.0
  %1232 = vmatprep.subr.mxu0 0.0
  %1233 = vmatpush1.msra.mxu0 0.0
  %1234 = vmatprep.subr.mxu0 0.0
  %1235 = vmatpush1.msra.mxu0 0.0
  %1236 = vmatprep.subr.mxu0 0.0
  %1237 = vmatpush1.msra.mxu0 0.0
  %1238 = vmatprep.subr.mxu0 0.0
  %1239 = vmatpush1.msra.mxu0 0.0
  %1240 = vmatprep.subr.mxu0 0.0
  %1241 = vmatpush1.msra.mxu0 0.0
  %1242 = vmatprep.subr.mxu0 0.0
  %1243 = vmatpush1.msra.mxu0 0.0
  %1244 = vmatprep.subr.mxu0 0.0
  %1245 = vmatpush1.msra.mxu0 0.0
  %1246 = vmatprep.subr.mxu0 0.0
  %1247 = vmatpush1.msra.mxu0 0.0
  %1248 = vmatprep.subr.mxu0 0.0
  %1249 = vmatpush1.msra.mxu0 0.0
  %1250 = vmatprep.subr.mxu0 0.0
  %1251 = vmatpush1.msra.mxu0 %v1225
  %1252 = vmatprep.subr.mxu0 0.0
  %1253 = vmatpush1.msra.mxu0 %v1224
  %1254 = vmatprep.subr.mxu0 0.0
  %1255 = vmatpush1.msra.mxu0 %v1223
  %1256 = vmatprep.subr.mxu0 0.0
  %1257 = vmatpush1.msra.mxu0 %v1222
  %1258 = vmatprep.subr.mxu0 0.0
  %1259 = vmatpush2.msra.mxu0 0.0
  %1260 = vmatprep.subr.mxu0 0.0
  %1261 = vmatpush2.msra.mxu0 0.0
  %1262 = vmatprep.subr.mxu0 0.0
  %1263 = vmatpush2.msra.mxu0 0.0
  %1264 = vmatprep.subr.mxu0 0.0
  %1265 = vmatpush2.msra.mxu0 0.0
  %1266 = vmatprep.subr.mxu0 0.0
  %1267 = vmatpush2.msra.mxu0 0.0
  %1268 = vmatprep.subr.mxu0 0.0
  %1269 = vmatpush2.msra.mxu0 0.0
  %1270 = vmatprep.subr.mxu0 0.0
  %1271 = vmatpush2.msra.mxu0 0.0
  %1272 = vmatprep.subr.mxu0 0.0
  %1273 = vmatpush2.msra.mxu0 0.0
  %1274 = vmatprep.subr.mxu0 0.0
  %1275 = vmatpush2.msra.mxu0 0.0
  %1276 = vmatprep.subr.mxu0 0.0
  %1277 = vmatpush2.msra.mxu0 0.0
  %1278 = vmatprep.subr.mxu0 0.0
  %1279 = vmatpush2.msra.mxu0 0.0
  %1280 = vmatprep.subr.mxu0 0.0
  %1281 = vmatpush2.msra.mxu0 0.0
  %1282 = vmatprep.subr.mxu0 0.0
  %1283 = vmatpush2.msra.mxu0 0.0
  %1284 = vmatprep.subr.mxu0 0.0
  %1285 = vmatpush2.msra.mxu0 0.0
  %1286 = vmatprep.subr.mxu0 0.0
  %1287 = vmatpush2.msra.mxu0 0.0
  %1288 = vmatprep.subr.mxu0 0.0
  %1289 = vmatpush2.msra.mxu0 0.0
  %1290 = vmatprep.mubr.f32.mxu0 0.0
  %1291 = vmatmul.mubr.f32.gmra.mxu0 %v197
  %v1292 = vpop.f32.mrf.mxu0
  %v1293 = vadd.f32 0.0, %v1292
  %v1294 = vpop.f32.mrf.mxu0
  %1295 = vdwg.mxu0
  %v1296 = vld [vmem:[#allocation2] sm:$0xff]
  %v1297 = vld [vmem:[#allocation2 + $0x38] sm:$0xff]
  %v1298 = vsel %vm34, %v1296, %v1297
  %v1299 = vadd.f32 %v1298, %v1293
  %v1300 = vxor.u32 %v1299, 2147483648
  %v1301 = vmul.f32 %v1300, 1.442695
  %v1302 = vpow.pop %v1301
  %v1303 = vadd.f32 %v1302, 1.0
  %v1304 = vrcp.pop %v1303
  %v1305 = vmul.f32 1.0, %v1304
  %v1306 = vtanh.pop %v1299
  %v1307 = vmul.f32 %v1305, 0.0
  %1309 = vrot.lane.b32.xlu0 %v1306, 64
  %v1310 = vpop.permute.xlu0 %1309
  %v1312 = vmul.f32 %v1305, %v1310
  %1314 = vrot.lane.b32.xlu0 %v1312, 32
  %v1315 = vpop.permute.xlu0 %1314
  %v1317 = vadd.f32 %v1307, %v1315
  %v1318 = vtanh.pop %v1317
  %1320 = vrot.lane.b32.xlu0 %v1318, 64
  %v1321 = vpop.permute.xlu0 %1320
  %v1323 = vmul.f32 %v1305, %v1321
  %1325 = vrot.lane.b32.xlu0 %v1323, 32
  %v1326 = vpop.permute.xlu0 %1325
  %1328 = vst.msk [vmem:[#allocation3] sm:$0xff] %vm301, %v1326
  %1329 = vst.msk [vmem:[#allocation3 + $0x38] sm:$0xff] %vm303, %v1326
  %v1330 = vsel %vm54, %v1326, 0
  %1332 = vmatprep.subr.mxu0 0.0
  %1333 = vmatpush1.msra.mxu0 0.0
  %1334 = vmatprep.subr.mxu0 0.0
  %1335 = vmatpush1.msra.mxu0 0.0
  %1336 = vmatprep.subr.mxu0 0.0
  %1337 = vmatpush1.msra.mxu0 0.0
  %1338 = vmatprep.subr.mxu0 0.0
  %1339 = vmatpush1.msra.mxu0 0.0
  %1340 = vmatprep.subr.mxu0 0.0
  %1341 = vmatpush1.msra.mxu0 0.0
  %1342 = vmatprep.subr.mxu0 0.0
  %1343 = vmatpush1.msra.mxu0 0.0
  %1344 = vmatprep.subr.mxu0 0.0
  %1345 = vmatpush1.msra.mxu0 0.0
  %1346 = vmatprep.subr.mxu0 0.0
  %1347 = vmatpush1.msra.mxu0 0.0
  %1348 = vmatprep.subr.mxu0 0.0
  %1349 = vmatpush1.msra.mxu0 0.0
  %1350 = vmatprep.subr.mxu0 0.0
  %1351 = vmatpush1.msra.mxu0 0.0
  %1352 = vmatprep.subr.mxu0 0.0
  %1353 = vmatpush1.msra.mxu0 0.0
  %1354 = vmatprep.subr.mxu0 0.0
  %1355 = vmatpush1.msra.mxu0 0.0
  %1356 = vmatprep.subr.mxu0 0.0
  %1357 = vmatpush1.msra.mxu0 %v1225
  %1358 = vmatprep.subr.mxu0 0.0
  %1359 = vmatpush1.msra.mxu0 %v1224
  %1360 = vmatprep.subr.mxu0 0.0
  %1361 = vmatpush1.msra.mxu0 %v1223
  %1362 = vmatprep.subr.mxu0 0.0
  %1363 = vmatpush1.msra.mxu0 %v1222
  %1364 = vmatprep.subr.mxu0 0.0
  %1365 = vmatpush2.msra.mxu0 0.0
  %1366 = vmatprep.subr.mxu0 0.0
  %1367 = vmatpush2.msra.mxu0 0.0
  %1368 = vmatprep.subr.mxu0 0.0
  %1369 = vmatpush2.msra.mxu0 0.0
  %1370 = vmatprep.subr.mxu0 0.0
  %1371 = vmatpush2.msra.mxu0 0.0
  %1372 = vmatprep.subr.mxu0 0.0
  %1373 = vmatpush2.msra.mxu0 0.0
  %1374 = vmatprep.subr.mxu0 0.0
  %1375 = vmatpush2.msra.mxu0 0.0
  %1376 = vmatprep.subr.mxu0 0.0
  %1377 = vmatpush2.msra.mxu0 0.0
  %1378 = vmatprep.subr.mxu0 0.0
  %1379 = vmatpush2.msra.mxu0 0.0
  %1380 = vmatprep.subr.mxu0 0.0
  %1381 = vmatpush2.msra.mxu0 0.0
  %1382 = vmatprep.subr.mxu0 0.0
  %1383 = vmatpush2.msra.mxu0 0.0
  %1384 = vmatprep.subr.mxu0 0.0
  %1385 = vmatpush2.msra.mxu0 0.0
  %1386 = vmatprep.subr.mxu0 0.0
  %1387 = vmatpush2.msra.mxu0 0.0
  %1388 = vmatprep.subr.mxu0 0.0
  %1389 = vmatpush2.msra.mxu0 0.0
  %1390 = vmatprep.subr.mxu0 0.0
  %1391 = vmatpush2.msra.mxu0 0.0
  %1392 = vmatprep.subr.mxu0 0.0
  %1393 = vmatpush2.msra.mxu0 0.0
  %1394 = vmatprep.subr.mxu0 0.0
  %1395 = vmatpush2.msra.mxu0 0.0
  %1396 = vmatprep.mubr.f32.mxu0 0.0
  %1397 = vmatmul.mubr.f32.gmra.mxu0 %v1330
  %v1398 = vpop.f32.mrf.mxu0
  %v1399 = vadd.f32 0.0, %v1398
  %v1400 = vpop.f32.mrf.mxu0
  %1401 = vdwg.mxu0
  %v1402 = vld [vmem:[#allocation2 + $0x8] sm:$0xff]
  %v1403 = vld [vmem:[#allocation2 + $0x30] sm:$0xff]
  %v1404 = vsel %vm34, %v1402, %v1403
  %v1405 = vadd.f32 %v1404, %v1399
  %v1406 = vxor.u32 %v1405, 2147483648
  %v1407 = vmul.f32 %v1406, 1.442695
  %v1408 = vpow.pop %v1407
  %v1409 = vadd.f32 %v1408, 1.0
  %v1410 = vrcp.pop %v1409
  %v1411 = vmul.f32 1.0, %v1410
  %v1412 = vtanh.pop %v1405
  %v1413 = vmul.f32 %v1411, %v1317
  %1415 = vrot.lane.b32.xlu0 %v1412, 64
  %v1416 = vpop.permute.xlu0 %1415
  %v1418 = vmul.f32 %v1411, %v1416
  %1420 = vrot.lane.b32.xlu0 %v1418, 32
  %v1421 = vpop.permute.xlu0 %1420
  %v1423 = vadd.f32 %v1413, %v1421
  %v1424 = vtanh.pop %v1423
  %1426 = vrot.lane.b32.xlu0 %v1424, 64
  %v1427 = vpop.permute.xlu0 %1426
  %v1429 = vmul.f32 %v1411, %v1427
  %1431 = vrot.lane.b32.xlu0 %v1429, 32
  %v1432 = vpop.permute.xlu0 %1431
  %1434 = vst.msk [vmem:[#allocation3 + $0x8] sm:$0xff] %vm301, %v1432
  %1435 = vst.msk [vmem:[#allocation3 + $0x30] sm:$0xff] %vm303, %v1432
  %v1436 = vsel %vm54, %v1432, 0
  %1438 = vmatprep.subr.mxu0 0.0
  %1439 = vmatpush1.msra.mxu0 0.0
  %1440 = vmatprep.subr.mxu0 0.0
  %1441 = vmatpush1.msra.mxu0 0.0
  %1442 = vmatprep.subr.mxu0 0.0
  %1443 = vmatpush1.msra.mxu0 0.0
  %1444 = vmatprep.subr.mxu0 0.0
  %1445 = vmatpush1.msra.mxu0 0.0
  %1446 = vmatprep.subr.mxu0 0.0
  %1447 = vmatpush1.msra.mxu0 0.0
  %1448 = vmatprep.subr.mxu0 0.0
  %1449 = vmatpush1.msra.mxu0 0.0
  %1450 = vmatprep.subr.mxu0 0.0
  %1451 = vmatpush1.msra.mxu0 0.0
  %1452 = vmatprep.subr.mxu0 0.0
  %1453 = vmatpush1.msra.mxu0 0.0
  %1454 = vmatprep.subr.mxu0 0.0
  %1455 = vmatpush1.msra.mxu0 0.0
  %1456 = vmatprep.subr.mxu0 0.0
  %1457 = vmatpush1.msra.mxu0 0.0
  %1458 = vmatprep.subr.mxu0 0.0
  %1459 = vmatpush1.msra.mxu0 0.0
  %1460 = vmatprep.subr.mxu0 0.0
  %1461 = vmatpush1.msra.mxu0 0.0
  %1462 = vmatprep.subr.mxu0 0.0
  %1463 = vmatpush1.msra.mxu0 %v1225
  %1464 = vmatprep.subr.mxu0 0.0
  %1465 = vmatpush1.msra.mxu0 %v1224
  %1466 = vmatprep.subr.mxu0 0.0
  %1467 = vmatpush1.msra.mxu0 %v1223
  %1468 = vmatprep.subr.mxu0 0.0
  %1469 = vmatpush1.msra.mxu0 %v1222
  %1470 = vmatprep.subr.mxu0 0.0
  %1471 = vmatpush2.msra.mxu0 0.0
  %1472 = vmatprep.subr.mxu0 0.0
  %1473 = vmatpush2.msra.mxu0 0.0
  %1474 = vmatprep.subr.mxu0 0.0
  %1475 = vmatpush2.msra.mxu0 0.0
  %1476 = vmatprep.subr.mxu0 0.0
  %1477 = vmatpush2.msra.mxu0 0.0
  %1478 = vmatprep.subr.mxu0 0.0
  %1479 = vmatpush2.msra.mxu0 0.0
  %1480 = vmatprep.subr.mxu0 0.0
  %1481 = vmatpush2.msra.mxu0 0.0
  %1482 = vmatprep.subr.mxu0 0.0
  %1483 = vmatpush2.msra.mxu0 0.0
  %1484 = vmatprep.subr.mxu0 0.0
  %1485 = vmatpush2.msra.mxu0 0.0
  %1486 = vmatprep.subr.mxu0 0.0
  %1487 = vmatpush2.msra.mxu0 0.0
  %1488 = vmatprep.subr.mxu0 0.0
  %1489 = vmatpush2.msra.mxu0 0.0
  %1490 = vmatprep.subr.mxu0 0.0
  %1491 = vmatpush2.msra.mxu0 0.0
  %1492 = vmatprep.subr.mxu0 0.0
  %1493 = vmatpush2.msra.mxu0 0.0
  %1494 = vmatprep.subr.mxu0 0.0
  %1495 = vmatpush2.msra.mxu0 0.0
  %1496 = vmatprep.subr.mxu0 0.0
  %1497 = vmatpush2.msra.mxu0 0.0
  %1498 = vmatprep.subr.mxu0 0.0
  %1499 = vmatpush2.msra.mxu0 0.0
  %1500 = vmatprep.subr.mxu0 0.0
  %1501 = vmatpush2.msra.mxu0 0.0
  %1502 = vmatprep.mubr.f32.mxu0 0.0
  %1503 = vmatmul.mubr.f32.gmra.mxu0 %v1436
  %v1504 = vpop.f32.mrf.mxu0
  %v1505 = vadd.f32 0.0, %v1504
  %v1506 = vpop.f32.mrf.mxu0
  %1507 = vdwg.mxu0
  %v1508 = vld [vmem:[#allocation2 + $0x10] sm:$0xff]
  %v1509 = vld [vmem:[#allocation2 + $0x28] sm:$0xff]
  %v1510 = vsel %vm34, %v1508, %v1509
  %v1511 = vadd.f32 %v1510, %v1505
  %v1512 = vxor.u32 %v1511, 2147483648
  %v1513 = vmul.f32 %v1512, 1.442695
  %v1514 = vpow.pop %v1513
  %v1515 = vadd.f32 %v1514, 1.0
  %v1516 = vrcp.pop %v1515
  %v1517 = vmul.f32 1.0, %v1516
  %v1518 = vtanh.pop %v1511
  %v1519 = vmul.f32 %v1517, %v1423
  %1521 = vrot.lane.b32.xlu0 %v1518, 64
  %v1522 = vpop.permute.xlu0 %1521
  %v1524 = vmul.f32 %v1517, %v1522
  %1526 = vrot.lane.b32.xlu0 %v1524, 32
  %v1527 = vpop.permute.xlu0 %1526
  %v1529 = vadd.f32 %v1519, %v1527
  %v1530 = vtanh.pop %v1529
  %1532 = vrot.lane.b32.xlu0 %v1530, 64
  %v1533 = vpop.permute.xlu0 %1532
  %v1535 = vmul.f32 %v1517, %v1533
  %1537 = vrot.lane.b32.xlu0 %v1535, 32
  %v1538 = vpop.permute.xlu0 %1537
  %1540 = vst.msk [vmem:[#allocation3 + $0x10] sm:$0xff] %vm301, %v1538
  %1541 = vst.msk [vmem:[#allocation3 + $0x28] sm:$0xff] %vm303, %v1538
  %v1542 = vsel %vm54, %v1538, 0
  %1544 = vmatprep.subr.mxu0 0.0
  %1545 = vmatpush1.msra.mxu0 0.0
  %1546 = vmatprep.subr.mxu0 0.0
  %1547 = vmatpush1.msra.mxu0 0.0
  %1548 = vmatprep.subr.mxu0 0.0
  %1549 = vmatpush1.msra.mxu0 0.0
  %1550 = vmatprep.subr.mxu0 0.0
  %1551 = vmatpush1.msra.mxu0 0.0
  %1552 = vmatprep.subr.mxu0 0.0
  %1553 = vmatpush1.msra.mxu0 0.0
  %1554 = vmatprep.subr.mxu0 0.0
  %1555 = vmatpush1.msra.mxu0 0.0
  %1556 = vmatprep.subr.mxu0 0.0
  %1557 = vmatpush1.msra.mxu0 0.0
  %1558 = vmatprep.subr.mxu0 0.0
  %1559 = vmatpush1.msra.mxu0 0.0
  %1560 = vmatprep.subr.mxu0 0.0
  %1561 = vmatpush1.msra.mxu0 0.0
  %1562 = vmatprep.subr.mxu0 0.0
  %1563 = vmatpush1.msra.mxu0 0.0
  %1564 = vmatprep.subr.mxu0 0.0
  %1565 = vmatpush1.msra.mxu0 0.0
  %1566 = vmatprep.subr.mxu0 0.0
  %1567 = vmatpush1.msra.mxu0 0.0
  %1568 = vmatprep.subr.mxu0 0.0
  %1569 = vmatpush1.msra.mxu0 %v1225
  %1570 = vmatprep.subr.mxu0 0.0
  %1571 = vmatpush1.msra.mxu0 %v1224
  %1572 = vmatprep.subr.mxu0 0.0
  %1573 = vmatpush1.msra.mxu0 %v1223
  %1574 = vmatprep.subr.mxu0 0.0
  %1575 = vmatpush1.msra.mxu0 %v1222
  %1576 = vmatprep.subr.mxu0 0.0
  %1577 = vmatpush2.msra.mxu0 0.0
  %1578 = vmatprep.subr.mxu0 0.0
  %1579 = vmatpush2.msra.mxu0 0.0
  %1580 = vmatprep.subr.mxu0 0.0
  %1581 = vmatpush2.msra.mxu0 0.0
  %1582 = vmatprep.subr.mxu0 0.0
  %1583 = vmatpush2.msra.mxu0 0.0
  %1584 = vmatprep.subr.mxu0 0.0
  %1585 = vmatpush2.msra.mxu0 0.0
  %1586 = vmatprep.subr.mxu0 0.0
  %1587 = vmatpush2.msra.mxu0 0.0
  %1588 = vmatprep.subr.mxu0 0.0
  %1589 = vmatpush2.msra.mxu0 0.0
  %1590 = vmatprep.subr.mxu0 0.0
  %1591 = vmatpush2.msra.mxu0 0.0
  %1592 = vmatprep.subr.mxu0 0.0
  %1593 = vmatpush2.msra.mxu0 0.0
  %1594 = vmatprep.subr.mxu0 0.0
  %1595 = vmatpush2.msra.mxu0 0.0
  %1596 = vmatprep.subr.mxu0 0.0
  %1597 = vmatpush2.msra.mxu0 0.0
  %1598 = vmatprep.subr.mxu0 0.0
  %1599 = vmatpush2.msra.mxu0 0.0
  %1600 = vmatprep.subr.mxu0 0.0
  %1601 = vmatpush2.msra.mxu0 0.0
  %1602 = vmatprep.subr.mxu0 0.0
  %1603 = vmatpush2.msra.mxu0 0.0
  %1604 = vmatprep.subr.mxu0 0.0
  %1605 = vmatpush2.msra.mxu0 0.0
  %1606 = vmatprep.subr.mxu0 0.0
  %1607 = vmatpush2.msra.mxu0 0.0
  %1608 = vmatprep.mubr.f32.mxu0 0.0
  %1609 = vmatmul.mubr.f32.gmra.mxu0 %v1542
  %v1610 = vpop.f32.mrf.mxu0
  %v1611 = vadd.f32 0.0, %v1610
  %v1612 = vpop.f32.mrf.mxu0
  %1613 = vdwg.mxu0
  %v1614 = vld [vmem:[#allocation2 + $0x18] sm:$0xff]
  %v1615 = vld [vmem:[#allocation2 + $0x20] sm:$0xff]
  %v1616 = vsel %vm34, %v1614, %v1615
  %v1617 = vadd.f32 %v1616, %v1611
  %v1618 = vxor.u32 %v1617, 2147483648
  %v1619 = vmul.f32 %v1618, 1.442695
  %v1620 = vpow.pop %v1619
  %v1621 = vadd.f32 %v1620, 1.0
  %v1622 = vrcp.pop %v1621
  %v1623 = vmul.f32 1.0, %v1622
  %v1624 = vtanh.pop %v1617
  %v1625 = vmul.f32 %v1623, %v1529
  %1627 = vrot.lane.b32.xlu0 %v1624, 64
  %v1628 = vpop.permute.xlu0 %1627
  %v1630 = vmul.f32 %v1623, %v1628
  %1632 = vrot.lane.b32.xlu0 %v1630, 32
  %v1633 = vpop.permute.xlu0 %1632
  %v1635 = vadd.f32 %v1625, %v1633
  %v1636 = vtanh.pop %v1635
  %1638 = vrot.lane.b32.xlu0 %v1636, 64
  %v1639 = vpop.permute.xlu0 %1638
  %v1641 = vmul.f32 %v1623, %v1639
  %1643 = vrot.lane.b32.xlu0 %v1641, 32
  %v1644 = vpop.permute.xlu0 %1643
  %1646 = vst.msk [vmem:[#allocation3 + $0x18] sm:$0xff] %vm301, %v1644
  %1647 = vst.msk [vmem:[#allocation3 + $0x20] sm:$0xff] %vm303, %v1644
  %v1648 = vsel %vm54, %v1644, 0
  %1650 = vmatprep.subr.mxu0 0.0
  %1651 = vmatpush1.msra.mxu0 0.0
  %1652 = vmatprep.subr.mxu0 0.0
  %1653 = vmatpush1.msra.mxu0 0.0
  %1654 = vmatprep.subr.mxu0 0.0
  %1655 = vmatpush1.msra.mxu0 0.0
  %1656 = vmatprep.subr.mxu0 0.0
  %1657 = vmatpush1.msra.mxu0 0.0
  %1658 = vmatprep.subr.mxu0 0.0
  %1659 = vmatpush1.msra.mxu0 0.0
  %1660 = vmatprep.subr.mxu0 0.0
  %1661 = vmatpush1.msra.mxu0 0.0
  %1662 = vmatprep.subr.mxu0 0.0
  %1663 = vmatpush1.msra.mxu0 0.0
  %1664 = vmatprep.subr.mxu0 0.0
  %1665 = vmatpush1.msra.mxu0 0.0
  %1666 = vmatprep.subr.mxu0 0.0
  %1667 = vmatpush1.msra.mxu0 0.0
  %1668 = vmatprep.subr.mxu0 0.0
  %1669 = vmatpush1.msra.mxu0 0.0
  %1670 = vmatprep.subr.mxu0 0.0
  %1671 = vmatpush1.msra.mxu0 0.0
  %1672 = vmatprep.subr.mxu0 0.0
  %1673 = vmatpush1.msra.mxu0 0.0
  %1674 = vmatprep.subr.mxu0 0.0
  %1675 = vmatpush1.msra.mxu0 %v1225
  %1676 = vmatprep.subr.mxu0 0.0
  %1677 = vmatpush1.msra.mxu0 %v1224
  %1678 = vmatprep.subr.mxu0 0.0
  %1679 = vmatpush1.msra.mxu0 %v1223
  %1680 = vmatprep.subr.mxu0 0.0
  %1681 = vmatpush1.msra.mxu0 %v1222
  %1682 = vmatprep.subr.mxu0 0.0
  %1683 = vmatpush2.msra.mxu0 0.0
  %1684 = vmatprep.subr.mxu0 0.0
  %1685 = vmatpush2.msra.mxu0 0.0
  %1686 = vmatprep.subr.mxu0 0.0
  %1687 = vmatpush2.msra.mxu0 0.0
  %1688 = vmatprep.subr.mxu0 0.0
  %1689 = vmatpush2.msra.mxu0 0.0
  %1690 = vmatprep.subr.mxu0 0.0
  %1691 = vmatpush2.msra.mxu0 0.0
  %1692 = vmatprep.subr.mxu0 0.0
  %1693 = vmatpush2.msra.mxu0 0.0
  %1694 = vmatprep.subr.mxu0 0.0
  %1695 = vmatpush2.msra.mxu0 0.0
  %1696 = vmatprep.subr.mxu0 0.0
  %1697 = vmatpush2.msra.mxu0 0.0
  %1698 = vmatprep.subr.mxu0 0.0
  %1699 = vmatpush2.msra.mxu0 0.0
  %1700 = vmatprep.subr.mxu0 0.0
  %1701 = vmatpush2.msra.mxu0 0.0
  %1702 = vmatprep.subr.mxu0 0.0
  %1703 = vmatpush2.msra.mxu0 0.0
  %1704 = vmatprep.subr.mxu0 0.0
  %1705 = vmatpush2.msra.mxu0 0.0
  %1706 = vmatprep.subr.mxu0 0.0
  %1707 = vmatpush2.msra.mxu0 0.0
  %1708 = vmatprep.subr.mxu0 0.0
  %1709 = vmatpush2.msra.mxu0 0.0
  %1710 = vmatprep.subr.mxu0 0.0
  %1711 = vmatpush2.msra.mxu0 0.0
  %1712 = vmatprep.subr.mxu0 0.0
  %1713 = vmatpush2.msra.mxu0 0.0
  %1714 = vmatprep.mubr.f32.mxu0 0.0
  %1715 = vmatmul.mubr.f32.gmra.mxu0 %v1648
  %v1716 = vpop.f32.mrf.mxu0
  %v1717 = vadd.f32 0.0, %v1716
  %v1718 = vpop.f32.mrf.mxu0
  %1719 = vdwg.mxu0
  %v1720 = vld [vmem:[#allocation2 + $0x20] sm:$0xff]
  %v1721 = vld [vmem:[#allocation2 + $0x18] sm:$0xff]
  %v1722 = vsel %vm34, %v1720, %v1721
  %v1723 = vadd.f32 %v1722, %v1717
  %v1724 = vxor.u32 %v1723, 2147483648
  %v1725 = vmul.f32 %v1724, 1.442695
  %v1726 = vpow.pop %v1725
  %v1727 = vadd.f32 %v1726, 1.0
  %v1728 = vrcp.pop %v1727
  %v1729 = vmul.f32 1.0, %v1728
  %v1730 = vtanh.pop %v1723
  %v1731 = vmul.f32 %v1729, %v1635
  %1733 = vrot.lane.b32.xlu0 %v1730, 64
  %v1734 = vpop.permute.xlu0 %1733
  %v1736 = vmul.f32 %v1729, %v1734
  %1738 = vrot.lane.b32.xlu0 %v1736, 32
  %v1739 = vpop.permute.xlu0 %1738
  %v1741 = vadd.f32 %v1731, %v1739
  %v1742 = vtanh.pop %v1741
  %1744 = vrot.lane.b32.xlu0 %v1742, 64
  %v1745 = vpop.permute.xlu0 %1744
  %v1747 = vmul.f32 %v1729, %v1745
  %1749 = vrot.lane.b32.xlu0 %v1747, 32
  %v1750 = vpop.permute.xlu0 %1749
  %1752 = vst.msk [vmem:[#allocation3 + $0x20] sm:$0xff] %vm301, %v1750
  %1753 = vst.msk [vmem:[#allocation3 + $0x18] sm:$0xff] %vm303, %v1750
  %v1754 = vsel %vm54, %v1750, 0
  %1756 = vmatprep.subr.mxu0 0.0
  %1757 = vmatpush1.msra.mxu0 0.0
  %1758 = vmatprep.subr.mxu0 0.0
  %1759 = vmatpush1.msra.mxu0 0.0
  %1760 = vmatprep.subr.mxu0 0.0
  %1761 = vmatpush1.msra.mxu0 0.0
  %1762 = vmatprep.subr.mxu0 0.0
  %1763 = vmatpush1.msra.mxu0 0.0
  %1764 = vmatprep.subr.mxu0 0.0
  %1765 = vmatpush1.msra.mxu0 0.0
  %1766 = vmatprep.subr.mxu0 0.0
  %1767 = vmatpush1.msra.mxu0 0.0
  %1768 = vmatprep.subr.mxu0 0.0
  %1769 = vmatpush1.msra.mxu0 0.0
  %1770 = vmatprep.subr.mxu0 0.0
  %1771 = vmatpush1.msra.mxu0 0.0
  %1772 = vmatprep.subr.mxu0 0.0
  %1773 = vmatpush1.msra.mxu0 0.0
  %1774 = vmatprep.subr.mxu0 0.0
  %1775 = vmatpush1.msra.mxu0 0.0
  %1776 = vmatprep.subr.mxu0 0.0
  %1777 = vmatpush1.msra.mxu0 0.0
  %1778 = vmatprep.subr.mxu0 0.0
  %1779 = vmatpush1.msra.mxu0 0.0
  %1780 = vmatprep.subr.mxu0 0.0
  %1781 = vmatpush1.msra.mxu0 %v1225
  %1782 = vmatprep.subr.mxu0 0.0
  %1783 = vmatpush1.msra.mxu0 %v1224
  %1784 = vmatprep.subr.mxu0 0.0
  %1785 = vmatpush1.msra.mxu0 %v1223
  %1786 = vmatprep.subr.mxu0 0.0
  %1787 = vmatpush1.msra.mxu0 %v1222
  %1788 = vmatprep.subr.mxu0 0.0
  %1789 = vmatpush2.msra.mxu0 0.0
  %1790 = vmatprep.subr.mxu0 0.0
  %1791 = vmatpush2.msra.mxu0 0.0
  %1792 = vmatprep.subr.mxu0 0.0
  %1793 = vmatpush2.msra.mxu0 0.0
  %1794 = vmatprep.subr.mxu0 0.0
  %1795 = vmatpush2.msra.mxu0 0.0
  %1796 = vmatprep.subr.mxu0 0.0
  %1797 = vmatpush2.msra.mxu0 0.0
  %1798 = vmatprep.subr.mxu0 0.0
  %1799 = vmatpush2.msra.mxu0 0.0
  %1800 = vmatprep.subr.mxu0 0.0
  %1801 = vmatpush2.msra.mxu0 0.0
  %1802 = vmatprep.subr.mxu0 0.0
  %1803 = vmatpush2.msra.mxu0 0.0
  %1804 = vmatprep.subr.mxu0 0.0
  %1805 = vmatpush2.msra.mxu0 0.0
  %1806 = vmatprep.subr.mxu0 0.0
  %1807 = vmatpush2.msra.mxu0 0.0
  %1808 = vmatprep.subr.mxu0 0.0
  %1809 = vmatpush2.msra.mxu0 0.0
  %1810 = vmatprep.subr.mxu0 0.0
  %1811 = vmatpush2.msra.mxu0 0.0
  %1812 = vmatprep.subr.mxu0 0.0
  %1813 = vmatpush2.msra.mxu0 0.0
  %1814 = vmatprep.subr.mxu0 0.0
  %1815 = vmatpush2.msra.mxu0 0.0
  %1816 = vmatprep.subr.mxu0 0.0
  %1817 = vmatpush2.msra.mxu0 0.0
  %1818 = vmatprep.subr.mxu0 0.0
  %1819 = vmatpush2.msra.mxu0 0.0
  %1820 = vmatprep.mubr.f32.mxu0 0.0
  %1821 = vmatmul.mubr.f32.gmra.mxu0 %v1754
  %v1822 = vpop.f32.mrf.mxu0
  %v1823 = vadd.f32 0.0, %v1822
  %v1824 = vpop.f32.mrf.mxu0
  %1825 = vdwg.mxu0
  %v1826 = vld [vmem:[#allocation2 + $0x28] sm:$0xff]
  %v1827 = vld [vmem:[#allocation2 + $0x10] sm:$0xff]
  %v1828 = vsel %vm34, %v1826, %v1827
  %v1829 = vadd.f32 %v1828, %v1823
  %v1830 = vxor.u32 %v1829, 2147483648
  %v1831 = vmul.f32 %v1830, 1.442695
  %v1832 = vpow.pop %v1831
  %v1833 = vadd.f32 %v1832, 1.0
  %v1834 = vrcp.pop %v1833
  %v1835 = vmul.f32 1.0, %v1834
  %v1836 = vtanh.pop %v1829
  %v1837 = vmul.f32 %v1835, %v1741
  %1839 = vrot.lane.b32.xlu0 %v1836, 64
  %v1840 = vpop.permute.xlu0 %1839
  %v1842 = vmul.f32 %v1835, %v1840
  %1844 = vrot.lane.b32.xlu0 %v1842, 32
  %v1845 = vpop.permute.xlu0 %1844
  %v1847 = vadd.f32 %v1837, %v1845
  %v1848 = vtanh.pop %v1847
  %1850 = vrot.lane.b32.xlu0 %v1848, 64
  %v1851 = vpop.permute.xlu0 %1850
  %v1853 = vmul.f32 %v1835, %v1851
  %1855 = vrot.lane.b32.xlu0 %v1853, 32
  %v1856 = vpop.permute.xlu0 %1855
  %1858 = vst.msk [vmem:[#allocation3 + $0x28] sm:$0xff] %vm301, %v1856
  %1859 = vst.msk [vmem:[#allocation3 + $0x10] sm:$0xff] %vm303, %v1856
  %v1860 = vsel %vm54, %v1856, 0
  %1862 = vmatprep.subr.mxu0 0.0
  %1863 = vmatpush1.msra.mxu0 0.0
  %1864 = vmatprep.subr.mxu0 0.0
  %1865 = vmatpush1.msra.mxu0 0.0
  %1866 = vmatprep.subr.mxu0 0.0
  %1867 = vmatpush1.msra.mxu0 0.0
  %1868 = vmatprep.subr.mxu0 0.0
  %1869 = vmatpush1.msra.mxu0 0.0
  %1870 = vmatprep.subr.mxu0 0.0
  %1871 = vmatpush1.msra.mxu0 0.0
  %1872 = vmatprep.subr.mxu0 0.0
  %1873 = vmatpush1.msra.mxu0 0.0
  %1874 = vmatprep.subr.mxu0 0.0
  %1875 = vmatpush1.msra.mxu0 0.0
  %1876 = vmatprep.subr.mxu0 0.0
  %1877 = vmatpush1.msra.mxu0 0.0
  %1878 = vmatprep.subr.mxu0 0.0
  %1879 = vmatpush1.msra.mxu0 0.0
  %1880 = vmatprep.subr.mxu0 0.0
  %1881 = vmatpush1.msra.mxu0 0.0
  %1882 = vmatprep.subr.mxu0 0.0
  %1883 = vmatpush1.msra.mxu0 0.0
  %1884 = vmatprep.subr.mxu0 0.0
  %1885 = vmatpush1.msra.mxu0 0.0
  %1886 = vmatprep.subr.mxu0 0.0
  %1887 = vmatpush1.msra.mxu0 %v1225
  %1888 = vmatprep.subr.mxu0 0.0
  %1889 = vmatpush1.msra.mxu0 %v1224
  %1890 = vmatprep.subr.mxu0 0.0
  %1891 = vmatpush1.msra.mxu0 %v1223
  %1892 = vmatprep.subr.mxu0 0.0
  %1893 = vmatpush1.msra.mxu0 %v1222
  %1894 = vmatprep.subr.mxu0 0.0
  %1895 = vmatpush2.msra.mxu0 0.0
  %1896 = vmatprep.subr.mxu0 0.0
  %1897 = vmatpush2.msra.mxu0 0.0
  %1898 = vmatprep.subr.mxu0 0.0
  %1899 = vmatpush2.msra.mxu0 0.0
  %1900 = vmatprep.subr.mxu0 0.0
  %1901 = vmatpush2.msra.mxu0 0.0
  %1902 = vmatprep.subr.mxu0 0.0
  %1903 = vmatpush2.msra.mxu0 0.0
  %1904 = vmatprep.subr.mxu0 0.0
  %1905 = vmatpush2.msra.mxu0 0.0
  %1906 = vmatprep.subr.mxu0 0.0
  %1907 = vmatpush2.msra.mxu0 0.0
  %1908 = vmatprep.subr.mxu0 0.0
  %1909 = vmatpush2.msra.mxu0 0.0
  %1910 = vmatprep.subr.mxu0 0.0
  %1911 = vmatpush2.msra.mxu0 0.0
  %1912 = vmatprep.subr.mxu0 0.0
  %1913 = vmatpush2.msra.mxu0 0.0
  %1914 = vmatprep.subr.mxu0 0.0
  %1915 = vmatpush2.msra.mxu0 0.0
  %1916 = vmatprep.subr.mxu0 0.0
  %1917 = vmatpush2.msra.mxu0 0.0
  %1918 = vmatprep.subr.mxu0 0.0
  %1919 = vmatpush2.msra.mxu0 0.0
  %1920 = vmatprep.subr.mxu0 0.0
  %1921 = vmatpush2.msra.mxu0 0.0
  %1922 = vmatprep.subr.mxu0 0.0
  %1923 = vmatpush2.msra.mxu0 0.0
  %1924 = vmatprep.subr.mxu0 0.0
  %1925 = vmatpush2.msra.mxu0 0.0
  %1926 = vmatprep.mubr.f32.mxu0 0.0
  %1927 = vmatmul.mubr.f32.gmra.mxu0 %v1860
  %v1928 = vpop.f32.mrf.mxu0
  %v1929 = vadd.f32 0.0, %v1928
  %v1930 = vpop.f32.mrf.mxu0
  %1931 = vdwg.mxu0
  %v1932 = vld [vmem:[#allocation2 + $0x30] sm:$0xff]
  %v1933 = vld [vmem:[#allocation2 + $0x8] sm:$0xff]
  %v1934 = vsel %vm34, %v1932, %v1933
  %v1935 = vadd.f32 %v1934, %v1929
  %v1936 = vxor.u32 %v1935, 2147483648
  %v1937 = vmul.f32 %v1936, 1.442695
  %v1938 = vpow.pop %v1937
  %v1939 = vadd.f32 %v1938, 1.0
  %v1940 = vrcp.pop %v1939
  %v1941 = vmul.f32 1.0, %v1940
  %v1942 = vtanh.pop %v1935
  %v1943 = vmul.f32 %v1941, %v1847
  %1945 = vrot.lane.b32.xlu0 %v1942, 64
  %v1946 = vpop.permute.xlu0 %1945
  %v1948 = vmul.f32 %v1941, %v1946
  %1950 = vrot.lane.b32.xlu0 %v1948, 32
  %v1951 = vpop.permute.xlu0 %1950
  %v1953 = vadd.f32 %v1943, %v1951
  %v1954 = vtanh.pop %v1953
  %1956 = vrot.lane.b32.xlu0 %v1954, 64
  %v1957 = vpop.permute.xlu0 %1956
  %v1959 = vmul.f32 %v1941, %v1957
  %1961 = vrot.lane.b32.xlu0 %v1959, 32
  %v1962 = vpop.permute.xlu0 %1961
  %1964 = vst.msk [vmem:[#allocation3 + $0x30] sm:$0xff] %vm301, %v1962
  %1965 = vst.msk [vmem:[#allocation3 + $0x8] sm:$0xff] %vm303, %v1962
  %v1966 = vsel %vm54, %v1962, 0
  %1968 = vmatprep.subr.mxu0 0.0
  %1969 = vmatpush1.msra.mxu0 0.0
  %1970 = vmatprep.subr.mxu0 0.0
  %1971 = vmatpush1.msra.mxu0 0.0
  %1972 = vmatprep.subr.mxu0 0.0
  %1973 = vmatpush1.msra.mxu0 0.0
  %1974 = vmatprep.subr.mxu0 0.0
  %1975 = vmatpush1.msra.mxu0 0.0
  %1976 = vmatprep.subr.mxu0 0.0
  %1977 = vmatpush1.msra.mxu0 0.0
  %1978 = vmatprep.subr.mxu0 0.0
  %1979 = vmatpush1.msra.mxu0 0.0
  %1980 = vmatprep.subr.mxu0 0.0
  %1981 = vmatpush1.msra.mxu0 0.0
  %1982 = vmatprep.subr.mxu0 0.0
  %1983 = vmatpush1.msra.mxu0 0.0
  %1984 = vmatprep.subr.mxu0 0.0
  %1985 = vmatpush1.msra.mxu0 0.0
  %1986 = vmatprep.subr.mxu0 0.0
  %1987 = vmatpush1.msra.mxu0 0.0
  %1988 = vmatprep.subr.mxu0 0.0
  %1989 = vmatpush1.msra.mxu0 0.0
  %1990 = vmatprep.subr.mxu0 0.0
  %1991 = vmatpush1.msra.mxu0 0.0
  %1992 = vmatprep.subr.mxu0 0.0
  %1993 = vmatpush1.msra.mxu0 %v1225
  %1994 = vmatprep.subr.mxu0 0.0
  %1995 = vmatpush1.msra.mxu0 %v1224
  %1996 = vmatprep.subr.mxu0 0.0
  %1997 = vmatpush1.msra.mxu0 %v1223
  %1998 = vmatprep.subr.mxu0 0.0
  %1999 = vmatpush1.msra.mxu0 %v1222
  %2000 = vmatprep.subr.mxu0 0.0
  %2001 = vmatpush2.msra.mxu0 0.0
  %2002 = vmatprep.subr.mxu0 0.0
  %2003 = vmatpush2.msra.mxu0 0.0
  %2004 = vmatprep.subr.mxu0 0.0
  %2005 = vmatpush2.msra.mxu0 0.0
  %2006 = vmatprep.subr.mxu0 0.0
  %2007 = vmatpush2.msra.mxu0 0.0
  %2008 = vmatprep.subr.mxu0 0.0
  %2009 = vmatpush2.msra.mxu0 0.0
  %2010 = vmatprep.subr.mxu0 0.0
  %2011 = vmatpush2.msra.mxu0 0.0
  %2012 = vmatprep.subr.mxu0 0.0
  %2013 = vmatpush2.msra.mxu0 0.0
  %2014 = vmatprep.subr.mxu0 0.0
  %2015 = vmatpush2.msra.mxu0 0.0
  %2016 = vmatprep.subr.mxu0 0.0
  %2017 = vmatpush2.msra.mxu0 0.0
  %2018 = vmatprep.subr.mxu0 0.0
  %2019 = vmatpush2.msra.mxu0 0.0
  %2020 = vmatprep.subr.mxu0 0.0
  %2021 = vmatpush2.msra.mxu0 0.0
  %2022 = vmatprep.subr.mxu0 0.0
  %2023 = vmatpush2.msra.mxu0 0.0
  %2024 = vmatprep.subr.mxu0 0.0
  %2025 = vmatpush2.msra.mxu0 0.0
  %2026 = vmatprep.subr.mxu0 0.0
  %2027 = vmatpush2.msra.mxu0 0.0
  %2028 = vmatprep.subr.mxu0 0.0
  %2029 = vmatpush2.msra.mxu0 0.0
  %2030 = vmatprep.subr.mxu0 0.0
  %2031 = vmatpush2.msra.mxu0 0.0
  %2032 = vmatprep.mubr.f32.mxu0 0.0
  %2033 = vmatmul.mubr.f32.gmra.mxu0 %v1966
  %v2034 = vpop.f32.mrf.mxu0
  %v2035 = vadd.f32 0.0, %v2034
  %v2036 = vpop.f32.mrf.mxu0
  %2037 = vdwg.mxu0
  %v2038 = vld [vmem:[#allocation2 + $0x38] sm:$0xff]
  %v2039 = vld [vmem:[#allocation2] sm:$0xff]
  %v2040 = vsel %vm34, %v2038, %v2039
  %v2041 = vadd.f32 %v2040, %v2035
  %v2042 = vxor.u32 %v2041, 2147483648
  %v2043 = vmul.f32 %v2042, 1.442695
  %v2044 = vpow.pop %v2043
  %v2045 = vadd.f32 %v2044, 1.0
  %v2046 = vrcp.pop %v2045
  %v2047 = vmul.f32 1.0, %v2046
  %v2048 = vtanh.pop %v2041
  %v2049 = vmul.f32 %v2047, %v1953
  %2051 = vrot.lane.b32.xlu0 %v2048, 64
  %v2052 = vpop.permute.xlu0 %2051
  %v2054 = vmul.f32 %v2047, %v2052
  %2056 = vrot.lane.b32.xlu0 %v2054, 32
  %v2057 = vpop.permute.xlu0 %2056
  %v2059 = vadd.f32 %v2049, %v2057
  %v2060 = vtanh.pop %v2059
  %2062 = vrot.lane.b32.xlu0 %v2060, 64
  %v2063 = vpop.permute.xlu0 %2062
  %v2065 = vmul.f32 %v2047, %v2063
  %2067 = vrot.lane.b32.xlu0 %v2065, 32
  %v2068 = vpop.permute.xlu0 %2067
  %2070 = vst.msk [vmem:[#allocation3 + $0x38] sm:$0xff] %vm301, %v2068
  %2071 = vst.msk [vmem:[#allocation3] sm:$0xff] %vm303, %v2068
  %s2072 = scalar_lea.vmem %s5, 16
  %2073 = vst.msk [vmem:[%s2072] sm:$0xff] %vm301, %v2068
  %2074 = vrot.lane.b32.xlu0 %v2065, 16
  %v2075 = vpop.permute.xlu0 %2074
  %s2077 = scalar_lea.vmem %s5, 24
  %2078 = vst.msk [vmem:[%s2077] sm:$0xff] %vm301, %v2075
  %2080 = vrot.lane.b32.xlu0 %v2059, 96
  %v2081 = vpop.permute.xlu0 %2080
  %s2083 = scalar_lea.vmem %s6, 16
  %2084 = vst.msk [vmem:[%s2083] sm:$0xff] %vm301, %v2081
  %2085 = vrot.lane.b32.xlu0 %v2059, 80
  %v2086 = vpop.permute.xlu0 %2085
  %s2088 = scalar_lea.vmem %s6, 24
  %2089 = vst.msk [vmem:[%s2088] sm:$0xff] %vm301, %v2086
  %v2090 = vld [vmem:[#allocation3] sm:$0xff]
  %v2091 = vld [vmem:[#allocation3 + $0x8] sm:$0xff]
  %v2092 = vld [vmem:[#allocation3 + $0x10] sm:$0xff]
  %v2093 = vld [vmem:[#allocation3 + $0x18] sm:$0xff]
  %v2094 = vld [vmem:[#allocation3 + $0x20] sm:$0xff]
  %v2095 = vld [vmem:[#allocation3 + $0x28] sm:$0xff]
  %v2096 = vld [vmem:[#allocation3 + $0x30] sm:$0xff]
  %v2097 = vld [vmem:[#allocation3 + $0x38] sm:$0xff]
  %s2098 = scalar_lea.vmem %s1, 64
  %v2099 = vld [vmem:[%s2098] sm:$0xff]
  %v2100 = vld [vmem:[%s2098 + $0x8] sm:$0xff]
  %v2101 = vld [vmem:[%s2098 + $0x10] sm:$0xff]
  %v2102 = vld [vmem:[%s2098 + $0x18] sm:$0xff]
  %s2103 = scalar_lea.vmem %s3, 2
  %v2104 = vld [vmem:[%s2103] sm:$0x1]
  %v2106 = vlaneseq
  %v2107 = vshrl.u32 %v2106, 7
  %v2108 = vsub.s32 0, %v2107
  %v2109 = vrot.slane %v2104, %v2108
  %v2112 = vsel %vm54, %v2090, 0
  %v2115 = vsel %vm54, %v2091, 0
  %v2118 = vsel %vm54, %v2092, 0
  %v2121 = vsel %vm54, %v2093, 0
  %v2124 = vsel %vm54, %v2094, 0
  %v2127 = vsel %vm54, %v2095, 0
  %v2130 = vsel %vm54, %v2096, 0
  %v2133 = vsel %vm54, %v2097, 0
  %2135 = vmatprep.subr.mxu0 0.0
  %2136 = vmatpush1.msra.mxu0 0.0
  %2137 = vmatprep.subr.mxu0 0.0
  %2138 = vmatpush1.msra.mxu0 0.0
  %2139 = vmatprep.subr.mxu0 0.0
  %2140 = vmatpush1.msra.mxu0 0.0
  %2141 = vmatprep.subr.mxu0 0.0
  %2142 = vmatpush1.msra.mxu0 0.0
  %2143 = vmatprep.subr.mxu0 0.0
  %2144 = vmatpush1.msra.mxu0 0.0
  %2145 = vmatprep.subr.mxu0 0.0
  %2146 = vmatpush1.msra.mxu0 0.0
  %2147 = vmatprep.subr.mxu0 0.0
  %2148 = vmatpush1.msra.mxu0 0.0
  %2149 = vmatprep.subr.mxu0 0.0
  %2150 = vmatpush1.msra.mxu0 0.0
  %2151 = vmatprep.subr.mxu0 0.0
  %2152 = vmatpush1.msra.mxu0 0.0
  %2153 = vmatprep.subr.mxu0 0.0
  %2154 = vmatpush1.msra.mxu0 0.0
  %2155 = vmatprep.subr.mxu0 0.0
  %2156 = vmatpush1.msra.mxu0 0.0
  %2157 = vmatprep.subr.mxu0 0.0
  %2158 = vmatpush1.msra.mxu0 0.0
  %2159 = vmatprep.subr.mxu0 0.0
  %2160 = vmatpush1.msra.mxu0 %v2102
  %2161 = vmatprep.subr.mxu0 0.0
  %2162 = vmatpush1.msra.mxu0 %v2101
  %2163 = vmatprep.subr.mxu0 0.0
  %2164 = vmatpush1.msra.mxu0 %v2100
  %2165 = vmatprep.subr.mxu0 0.0
  %2166 = vmatpush1.msra.mxu0 %v2099
  %2167 = vmatprep.subr.mxu0 0.0
  %2168 = vmatpush2.msra.mxu0 0.0
  %2169 = vmatprep.subr.mxu0 0.0
  %2170 = vmatpush2.msra.mxu0 0.0
  %2171 = vmatprep.subr.mxu0 0.0
  %2172 = vmatpush2.msra.mxu0 0.0
  %2173 = vmatprep.subr.mxu0 0.0
  %2174 = vmatpush2.msra.mxu0 0.0
  %2175 = vmatprep.subr.mxu0 0.0
  %2176 = vmatpush2.msra.mxu0 0.0
  %2177 = vmatprep.subr.mxu0 0.0
  %2178 = vmatpush2.msra.mxu0 0.0
  %2179 = vmatprep.subr.mxu0 0.0
  %2180 = vmatpush2.msra.mxu0 0.0
  %2181 = vmatprep.subr.mxu0 0.0
  %2182 = vmatpush2.msra.mxu0 0.0
  %2183 = vmatprep.subr.mxu0 0.0
  %2184 = vmatpush2.msra.mxu0 0.0
  %2185 = vmatprep.subr.mxu0 0.0
  %2186 = vmatpush2.msra.mxu0 0.0
  %2187 = vmatprep.subr.mxu0 0.0
  %2188 = vmatpush2.msra.mxu0 0.0
  %2189 = vmatprep.subr.mxu0 0.0
  %2190 = vmatpush2.msra.mxu0 0.0
  %2191 = vmatprep.subr.mxu0 0.0
  %2192 = vmatpush2.msra.mxu0 0.0
  %2193 = vmatprep.subr.mxu0 0.0
  %2194 = vmatpush2.msra.mxu0 0.0
  %2195 = vmatprep.subr.mxu0 0.0
  %2196 = vmatpush2.msra.mxu0 0.0
  %2197 = vmatprep.subr.mxu0 0.0
  %2198 = vmatpush2.msra.mxu0 0.0
  %2199 = vmatprep.mubr.f32.mxu0 0.0
  %2200 = vmatmul.mubr.f32.gmra.mxu0 %v2112
  %v2201 = vpop.f32.mrf.mxu0
  %v2202 = vadd.f32 %v2109, %v2201
  %v2203 = vpop.f32.mrf.mxu0
  %2204 = vmatprep.mubr.f32.mxu0 0.0
  %2205 = vmatmul.mubr.f32.gmra.mxu0 %v2115
  %v2206 = vpop.f32.mrf.mxu0
  %v2207 = vadd.f32 %v2109, %v2206
  %v2208 = vpop.f32.mrf.mxu0
  %2209 = vmatprep.mubr.f32.mxu0 0.0
  %2210 = vmatmul.mubr.f32.gmra.mxu0 %v2118
  %v2211 = vpop.f32.mrf.mxu0
  %v2212 = vadd.f32 %v2109, %v2211
  %v2213 = vpop.f32.mrf.mxu0
  %2214 = vmatprep.mubr.f32.mxu0 0.0
  %2215 = vmatmul.mubr.f32.gmra.mxu0 %v2121
  %v2216 = vpop.f32.mrf.mxu0
  %v2217 = vadd.f32 %v2109, %v2216
  %v2218 = vpop.f32.mrf.mxu0
  %2219 = vmatprep.mubr.f32.mxu0 0.0
  %2220 = vmatmul.mubr.f32.gmra.mxu0 %v2124
  %v2221 = vpop.f32.mrf.mxu0
  %v2222 = vadd.f32 %v2109, %v2221
  %v2223 = vpop.f32.mrf.mxu0
  %2224 = vmatprep.mubr.f32.mxu0 0.0
  %2225 = vmatmul.mubr.f32.gmra.mxu0 %v2127
  %v2226 = vpop.f32.mrf.mxu0
  %v2227 = vadd.f32 %v2109, %v2226
  %v2228 = vpop.f32.mrf.mxu0
  %2229 = vmatprep.mubr.f32.mxu0 0.0
  %2230 = vmatmul.mubr.f32.gmra.mxu0 %v2130
  %v2231 = vpop.f32.mrf.mxu0
  %v2232 = vadd.f32 %v2109, %v2231
  %v2233 = vpop.f32.mrf.mxu0
  %2234 = vmatprep.mubr.f32.mxu0 0.0
  %2235 = vmatmul.mubr.f32.gmra.mxu0 %v2133
  %v2236 = vpop.f32.mrf.mxu0
  %v2237 = vadd.f32 %v2109, %v2236
  %v2238 = vpop.f32.mrf.mxu0
  %2239 = vdwg.mxu0
  %2240 = vst [vmem:[#allocation2] sm:$0xff] %v2202
  %2241 = vst [vmem:[#allocation2 + $0x8] sm:$0xff] %v2207
  %2242 = vst [vmem:[#allocation2 + $0x10] sm:$0xff] %v2212
  %2243 = vst [vmem:[#allocation2 + $0x18] sm:$0xff] %v2217
  %2244 = vst [vmem:[#allocation2 + $0x20] sm:$0xff] %v2222
  %2245 = vst [vmem:[#allocation2 + $0x28] sm:$0xff] %v2227
  %2246 = vst [vmem:[#allocation2 + $0x30] sm:$0xff] %v2232
  %2247 = vst [vmem:[#allocation2 + $0x38] sm:$0xff] %v2237
  %s2248 = scalar_lea.vmem %s2, 64
  %v2249 = vld [vmem:[%s2248] sm:$0xff]
  %v2250 = vld [vmem:[%s2248 + $0x8] sm:$0xff]
  %v2251 = vld [vmem:[%s2248 + $0x10] sm:$0xff]
  %v2252 = vld [vmem:[%s2248 + $0x18] sm:$0xff]
  %2253 = vmatprep.subr.mxu0 0.0
  %2254 = vmatpush1.msra.mxu0 0.0
  %2255 = vmatprep.subr.mxu0 0.0
  %2256 = vmatpush1.msra.mxu0 0.0
  %2257 = vmatprep.subr.mxu0 0.0
  %2258 = vmatpush1.msra.mxu0 0.0
  %2259 = vmatprep.subr.mxu0 0.0
  %2260 = vmatpush1.msra.mxu0 0.0
  %2261 = vmatprep.subr.mxu0 0.0
  %2262 = vmatpush1.msra.mxu0 0.0
  %2263 = vmatprep.subr.mxu0 0.0
  %2264 = vmatpush1.msra.mxu0 0.0
  %2265 = vmatprep.subr.mxu0 0.0
  %2266 = vmatpush1.msra.mxu0 0.0
  %2267 = vmatprep.subr.mxu0 0.0
  %2268 = vmatpush1.msra.mxu0 0.0
  %2269 = vmatprep.subr.mxu0 0.0
  %2270 = vmatpush1.msra.mxu0 0.0
  %2271 = vmatprep.subr.mxu0 0.0
  %2272 = vmatpush1.msra.mxu0 0.0
  %2273 = vmatprep.subr.mxu0 0.0
  %2274 = vmatpush1.msra.mxu0 0.0
  %2275 = vmatprep.subr.mxu0 0.0
  %2276 = vmatpush1.msra.mxu0 0.0
  %2277 = vmatprep.subr.mxu0 0.0
  %2278 = vmatpush1.msra.mxu0 %v2252
  %2279 = vmatprep.subr.mxu0 0.0
  %2280 = vmatpush1.msra.mxu0 %v2251
  %2281 = vmatprep.subr.mxu0 0.0
  %2282 = vmatpush1.msra.mxu0 %v2250
  %2283 = vmatprep.subr.mxu0 0.0
  %2284 = vmatpush1.msra.mxu0 %v2249
  %2285 = vmatprep.subr.mxu0 0.0
  %2286 = vmatpush2.msra.mxu0 0.0
  %2287 = vmatprep.subr.mxu0 0.0
  %2288 = vmatpush2.msra.mxu0 0.0
  %2289 = vmatprep.subr.mxu0 0.0
  %2290 = vmatpush2.msra.mxu0 0.0
  %2291 = vmatprep.subr.mxu0 0.0
  %2292 = vmatpush2.msra.mxu0 0.0
  %2293 = vmatprep.subr.mxu0 0.0
  %2294 = vmatpush2.msra.mxu0 0.0
  %2295 = vmatprep.subr.mxu0 0.0
  %2296 = vmatpush2.msra.mxu0 0.0
  %2297 = vmatprep.subr.mxu0 0.0
  %2298 = vmatpush2.msra.mxu0 0.0
  %2299 = vmatprep.subr.mxu0 0.0
  %2300 = vmatpush2.msra.mxu0 0.0
  %2301 = vmatprep.subr.mxu0 0.0
  %2302 = vmatpush2.msra.mxu0 0.0
  %2303 = vmatprep.subr.mxu0 0.0
  %2304 = vmatpush2.msra.mxu0 0.0
  %2305 = vmatprep.subr.mxu0 0.0
  %2306 = vmatpush2.msra.mxu0 0.0
  %2307 = vmatprep.subr.mxu0 0.0
  %2308 = vmatpush2.msra.mxu0 0.0
  %2309 = vmatprep.subr.mxu0 0.0
  %2310 = vmatpush2.msra.mxu0 0.0
  %2311 = vmatprep.subr.mxu0 0.0
  %2312 = vmatpush2.msra.mxu0 0.0
  %2313 = vmatprep.subr.mxu0 0.0
  %2314 = vmatpush2.msra.mxu0 0.0
  %2315 = vmatprep.subr.mxu0 0.0
  %2316 = vmatpush2.msra.mxu0 0.0
  %2317 = vmatprep.mubr.f32.mxu0 0.0
  %2318 = vmatmul.mubr.f32.gmra.mxu0 %v197
  %v2319 = vpop.f32.mrf.mxu0
  %v2320 = vadd.f32 0.0, %v2319
  %v2321 = vpop.f32.mrf.mxu0
  %2322 = vdwg.mxu0
  %v2323 = vld [vmem:[#allocation2] sm:$0xff]
  %v2324 = vld [vmem:[#allocation2 + $0x38] sm:$0xff]
  %v2325 = vsel %vm34, %v2323, %v2324
  %v2326 = vadd.f32 %v2325, %v2320
  %v2327 = vxor.u32 %v2326, 2147483648
  %v2328 = vmul.f32 %v2327, 1.442695
  %v2329 = vpow.pop %v2328
  %v2330 = vadd.f32 %v2329, 1.0
  %v2331 = vrcp.pop %v2330
  %v2332 = vmul.f32 1.0, %v2331
  %v2333 = vtanh.pop %v2326
  %v2334 = vmul.f32 %v2332, 0.0
  %2336 = vrot.lane.b32.xlu0 %v2333, 64
  %v2337 = vpop.permute.xlu0 %2336
  %v2339 = vmul.f32 %v2332, %v2337
  %2341 = vrot.lane.b32.xlu0 %v2339, 32
  %v2342 = vpop.permute.xlu0 %2341
  %v2344 = vadd.f32 %v2334, %v2342
  %v2345 = vtanh.pop %v2344
  %2347 = vrot.lane.b32.xlu0 %v2345, 64
  %v2348 = vpop.permute.xlu0 %2347
  %v2350 = vmul.f32 %v2332, %v2348
  %2352 = vrot.lane.b32.xlu0 %v2350, 32
  %v2353 = vpop.permute.xlu0 %2352
  %2355 = vst.msk [vmem:[#allocation3] sm:$0xff] %vm301, %v2353
  %2356 = vst.msk [vmem:[#allocation3 + $0x38] sm:$0xff] %vm303, %v2353
  %v2357 = vsel %vm54, %v2353, 0
  %2359 = vmatprep.subr.mxu0 0.0
  %2360 = vmatpush1.msra.mxu0 0.0
  %2361 = vmatprep.subr.mxu0 0.0
  %2362 = vmatpush1.msra.mxu0 0.0
  %2363 = vmatprep.subr.mxu0 0.0
  %2364 = vmatpush1.msra.mxu0 0.0
  %2365 = vmatprep.subr.mxu0 0.0
  %2366 = vmatpush1.msra.mxu0 0.0
  %2367 = vmatprep.subr.mxu0 0.0
  %2368 = vmatpush1.msra.mxu0 0.0
  %2369 = vmatprep.subr.mxu0 0.0
  %2370 = vmatpush1.msra.mxu0 0.0
  %2371 = vmatprep.subr.mxu0 0.0
  %2372 = vmatpush1.msra.mxu0 0.0
  %2373 = vmatprep.subr.mxu0 0.0
  %2374 = vmatpush1.msra.mxu0 0.0
  %2375 = vmatprep.subr.mxu0 0.0
  %2376 = vmatpush1.msra.mxu0 0.0
  %2377 = vmatprep.subr.mxu0 0.0
  %2378 = vmatpush1.msra.mxu0 0.0
  %2379 = vmatprep.subr.mxu0 0.0
  %2380 = vmatpush1.msra.mxu0 0.0
  %2381 = vmatprep.subr.mxu0 0.0
  %2382 = vmatpush1.msra.mxu0 0.0
  %2383 = vmatprep.subr.mxu0 0.0
  %2384 = vmatpush1.msra.mxu0 %v2252
  %2385 = vmatprep.subr.mxu0 0.0
  %2386 = vmatpush1.msra.mxu0 %v2251
  %2387 = vmatprep.subr.mxu0 0.0
  %2388 = vmatpush1.msra.mxu0 %v2250
  %2389 = vmatprep.subr.mxu0 0.0
  %2390 = vmatpush1.msra.mxu0 %v2249
  %2391 = vmatprep.subr.mxu0 0.0
  %2392 = vmatpush2.msra.mxu0 0.0
  %2393 = vmatprep.subr.mxu0 0.0
  %2394 = vmatpush2.msra.mxu0 0.0
  %2395 = vmatprep.subr.mxu0 0.0
  %2396 = vmatpush2.msra.mxu0 0.0
  %2397 = vmatprep.subr.mxu0 0.0
  %2398 = vmatpush2.msra.mxu0 0.0
  %2399 = vmatprep.subr.mxu0 0.0
  %2400 = vmatpush2.msra.mxu0 0.0
  %2401 = vmatprep.subr.mxu0 0.0
  %2402 = vmatpush2.msra.mxu0 0.0
  %2403 = vmatprep.subr.mxu0 0.0
  %2404 = vmatpush2.msra.mxu0 0.0
  %2405 = vmatprep.subr.mxu0 0.0
  %2406 = vmatpush2.msra.mxu0 0.0
  %2407 = vmatprep.subr.mxu0 0.0
  %2408 = vmatpush2.msra.mxu0 0.0
  %2409 = vmatprep.subr.mxu0 0.0
  %2410 = vmatpush2.msra.mxu0 0.0
  %2411 = vmatprep.subr.mxu0 0.0
  %2412 = vmatpush2.msra.mxu0 0.0
  %2413 = vmatprep.subr.mxu0 0.0
  %2414 = vmatpush2.msra.mxu0 0.0
  %2415 = vmatprep.subr.mxu0 0.0
  %2416 = vmatpush2.msra.mxu0 0.0
  %2417 = vmatprep.subr.mxu0 0.0
  %2418 = vmatpush2.msra.mxu0 0.0
  %2419 = vmatprep.subr.mxu0 0.0
  %2420 = vmatpush2.msra.mxu0 0.0
  %2421 = vmatprep.subr.mxu0 0.0
  %2422 = vmatpush2.msra.mxu0 0.0
  %2423 = vmatprep.mubr.f32.mxu0 0.0
  %2424 = vmatmul.mubr.f32.gmra.mxu0 %v2357
  %v2425 = vpop.f32.mrf.mxu0
  %v2426 = vadd.f32 0.0, %v2425
  %v2427 = vpop.f32.mrf.mxu0
  %2428 = vdwg.mxu0
  %v2429 = vld [vmem:[#allocation2 + $0x8] sm:$0xff]
  %v2430 = vld [vmem:[#allocation2 + $0x30] sm:$0xff]
  %v2431 = vsel %vm34, %v2429, %v2430
  %v2432 = vadd.f32 %v2431, %v2426
  %v2433 = vxor.u32 %v2432, 2147483648
  %v2434 = vmul.f32 %v2433, 1.442695
  %v2435 = vpow.pop %v2434
  %v2436 = vadd.f32 %v2435, 1.0
  %v2437 = vrcp.pop %v2436
  %v2438 = vmul.f32 1.0, %v2437
  %v2439 = vtanh.pop %v2432
  %v2440 = vmul.f32 %v2438, %v2344
  %2442 = vrot.lane.b32.xlu0 %v2439, 64
  %v2443 = vpop.permute.xlu0 %2442
  %v2445 = vmul.f32 %v2438, %v2443
  %2447 = vrot.lane.b32.xlu0 %v2445, 32
  %v2448 = vpop.permute.xlu0 %2447
  %v2450 = vadd.f32 %v2440, %v2448
  %v2451 = vtanh.pop %v2450
  %2453 = vrot.lane.b32.xlu0 %v2451, 64
  %v2454 = vpop.permute.xlu0 %2453
  %v2456 = vmul.f32 %v2438, %v2454
  %2458 = vrot.lane.b32.xlu0 %v2456, 32
  %v2459 = vpop.permute.xlu0 %2458
  %2461 = vst.msk [vmem:[#allocation3 + $0x8] sm:$0xff] %vm301, %v2459
  %2462 = vst.msk [vmem:[#allocation3 + $0x30] sm:$0xff] %vm303, %v2459
  %v2463 = vsel %vm54, %v2459, 0
  %2465 = vmatprep.subr.mxu0 0.0
  %2466 = vmatpush1.msra.mxu0 0.0
  %2467 = vmatprep.subr.mxu0 0.0
  %2468 = vmatpush1.msra.mxu0 0.0
  %2469 = vmatprep.subr.mxu0 0.0
  %2470 = vmatpush1.msra.mxu0 0.0
  %2471 = vmatprep.subr.mxu0 0.0
  %2472 = vmatpush1.msra.mxu0 0.0
  %2473 = vmatprep.subr.mxu0 0.0
  %2474 = vmatpush1.msra.mxu0 0.0
  %2475 = vmatprep.subr.mxu0 0.0
  %2476 = vmatpush1.msra.mxu0 0.0
  %2477 = vmatprep.subr.mxu0 0.0
  %2478 = vmatpush1.msra.mxu0 0.0
  %2479 = vmatprep.subr.mxu0 0.0
  %2480 = vmatpush1.msra.mxu0 0.0
  %2481 = vmatprep.subr.mxu0 0.0
  %2482 = vmatpush1.msra.mxu0 0.0
  %2483 = vmatprep.subr.mxu0 0.0
  %2484 = vmatpush1.msra.mxu0 0.0
  %2485 = vmatprep.subr.mxu0 0.0
  %2486 = vmatpush1.msra.mxu0 0.0
  %2487 = vmatprep.subr.mxu0 0.0
  %2488 = vmatpush1.msra.mxu0 0.0
  %2489 = vmatprep.subr.mxu0 0.0
  %2490 = vmatpush1.msra.mxu0 %v2252
  %2491 = vmatprep.subr.mxu0 0.0
  %2492 = vmatpush1.msra.mxu0 %v2251
  %2493 = vmatprep.subr.mxu0 0.0
  %2494 = vmatpush1.msra.mxu0 %v2250
  %2495 = vmatprep.subr.mxu0 0.0
  %2496 = vmatpush1.msra.mxu0 %v2249
  %2497 = vmatprep.subr.mxu0 0.0
  %2498 = vmatpush2.msra.mxu0 0.0
  %2499 = vmatprep.subr.mxu0 0.0
  %2500 = vmatpush2.msra.mxu0 0.0
  %2501 = vmatprep.subr.mxu0 0.0
  %2502 = vmatpush2.msra.mxu0 0.0
  %2503 = vmatprep.subr.mxu0 0.0
  %2504 = vmatpush2.msra.mxu0 0.0
  %2505 = vmatprep.subr.mxu0 0.0
  %2506 = vmatpush2.msra.mxu0 0.0
  %2507 = vmatprep.subr.mxu0 0.0
  %2508 = vmatpush2.msra.mxu0 0.0
  %2509 = vmatprep.subr.mxu0 0.0
  %2510 = vmatpush2.msra.mxu0 0.0
  %2511 = vmatprep.subr.mxu0 0.0
  %2512 = vmatpush2.msra.mxu0 0.0
  %2513 = vmatprep.subr.mxu0 0.0
  %2514 = vmatpush2.msra.mxu0 0.0
  %2515 = vmatprep.subr.mxu0 0.0
  %2516 = vmatpush2.msra.mxu0 0.0
  %2517 = vmatprep.subr.mxu0 0.0
  %2518 = vmatpush2.msra.mxu0 0.0
  %2519 = vmatprep.subr.mxu0 0.0
  %2520 = vmatpush2.msra.mxu0 0.0
  %2521 = vmatprep.subr.mxu0 0.0
  %2522 = vmatpush2.msra.mxu0 0.0
  %2523 = vmatprep.subr.mxu0 0.0
  %2524 = vmatpush2.msra.mxu0 0.0
  %2525 = vmatprep.subr.mxu0 0.0
  %2526 = vmatpush2.msra.mxu0 0.0
  %2527 = vmatprep.subr.mxu0 0.0
  %2528 = vmatpush2.msra.mxu0 0.0
  %2529 = vmatprep.mubr.f32.mxu0 0.0
  %2530 = vmatmul.mubr.f32.gmra.mxu0 %v2463
  %v2531 = vpop.f32.mrf.mxu0
  %v2532 = vadd.f32 0.0, %v2531
  %v2533 = vpop.f32.mrf.mxu0
  %2534 = vdwg.mxu0
  %v2535 = vld [vmem:[#allocation2 + $0x10] sm:$0xff]
  %v2536 = vld [vmem:[#allocation2 + $0x28] sm:$0xff]
  %v2537 = vsel %vm34, %v2535, %v2536
  %v2538 = vadd.f32 %v2537, %v2532
  %v2539 = vxor.u32 %v2538, 2147483648
  %v2540 = vmul.f32 %v2539, 1.442695
  %v2541 = vpow.pop %v2540
  %v2542 = vadd.f32 %v2541, 1.0
  %v2543 = vrcp.pop %v2542
  %v2544 = vmul.f32 1.0, %v2543
  %v2545 = vtanh.pop %v2538
  %v2546 = vmul.f32 %v2544, %v2450
  %2548 = vrot.lane.b32.xlu0 %v2545, 64
  %v2549 = vpop.permute.xlu0 %2548
  %v2551 = vmul.f32 %v2544, %v2549
  %2553 = vrot.lane.b32.xlu0 %v2551, 32
  %v2554 = vpop.permute.xlu0 %2553
  %v2556 = vadd.f32 %v2546, %v2554
  %v2557 = vtanh.pop %v2556
  %2559 = vrot.lane.b32.xlu0 %v2557, 64
  %v2560 = vpop.permute.xlu0 %2559
  %v2562 = vmul.f32 %v2544, %v2560
  %2564 = vrot.lane.b32.xlu0 %v2562, 32
  %v2565 = vpop.permute.xlu0 %2564
  %2567 = vst.msk [vmem:[#allocation3 + $0x10] sm:$0xff] %vm301, %v2565
  %2568 = vst.msk [vmem:[#allocation3 + $0x28] sm:$0xff] %vm303, %v2565
  %v2569 = vsel %vm54, %v2565, 0
  %2571 = vmatprep.subr.mxu0 0.0
  %2572 = vmatpush1.msra.mxu0 0.0
  %2573 = vmatprep.subr.mxu0 0.0
  %2574 = vmatpush1.msra.mxu0 0.0
  %2575 = vmatprep.subr.mxu0 0.0
  %2576 = vmatpush1.msra.mxu0 0.0
  %2577 = vmatprep.subr.mxu0 0.0
  %2578 = vmatpush1.msra.mxu0 0.0
  %2579 = vmatprep.subr.mxu0 0.0
  %2580 = vmatpush1.msra.mxu0 0.0
  %2581 = vmatprep.subr.mxu0 0.0
  %2582 = vmatpush1.msra.mxu0 0.0
  %2583 = vmatprep.subr.mxu0 0.0
  %2584 = vmatpush1.msra.mxu0 0.0
  %2585 = vmatprep.subr.mxu0 0.0
  %2586 = vmatpush1.msra.mxu0 0.0
  %2587 = vmatprep.subr.mxu0 0.0
  %2588 = vmatpush1.msra.mxu0 0.0
  %2589 = vmatprep.subr.mxu0 0.0
  %2590 = vmatpush1.msra.mxu0 0.0
  %2591 = vmatprep.subr.mxu0 0.0
  %2592 = vmatpush1.msra.mxu0 0.0
  %2593 = vmatprep.subr.mxu0 0.0
  %2594 = vmatpush1.msra.mxu0 0.0
  %2595 = vmatprep.subr.mxu0 0.0
  %2596 = vmatpush1.msra.mxu0 %v2252
  %2597 = vmatprep.subr.mxu0 0.0
  %2598 = vmatpush1.msra.mxu0 %v2251
  %2599 = vmatprep.subr.mxu0 0.0
  %2600 = vmatpush1.msra.mxu0 %v2250
  %2601 = vmatprep.subr.mxu0 0.0
  %2602 = vmatpush1.msra.mxu0 %v2249
  %2603 = vmatprep.subr.mxu0 0.0
  %2604 = vmatpush2.msra.mxu0 0.0
  %2605 = vmatprep.subr.mxu0 0.0
  %2606 = vmatpush2.msra.mxu0 0.0
  %2607 = vmatprep.subr.mxu0 0.0
  %2608 = vmatpush2.msra.mxu0 0.0
  %2609 = vmatprep.subr.mxu0 0.0
  %2610 = vmatpush2.msra.mxu0 0.0
  %2611 = vmatprep.subr.mxu0 0.0
  %2612 = vmatpush2.msra.mxu0 0.0
  %2613 = vmatprep.subr.mxu0 0.0
  %2614 = vmatpush2.msra.mxu0 0.0
  %2615 = vmatprep.subr.mxu0 0.0
  %2616 = vmatpush2.msra.mxu0 0.0
  %2617 = vmatprep.subr.mxu0 0.0
  %2618 = vmatpush2.msra.mxu0 0.0
  %2619 = vmatprep.subr.mxu0 0.0
  %2620 = vmatpush2.msra.mxu0 0.0
  %2621 = vmatprep.subr.mxu0 0.0
  %2622 = vmatpush2.msra.mxu0 0.0
  %2623 = vmatprep.subr.mxu0 0.0
  %2624 = vmatpush2.msra.mxu0 0.0
  %2625 = vmatprep.subr.mxu0 0.0
  %2626 = vmatpush2.msra.mxu0 0.0
  %2627 = vmatprep.subr.mxu0 0.0
  %2628 = vmatpush2.msra.mxu0 0.0
  %2629 = vmatprep.subr.mxu0 0.0
  %2630 = vmatpush2.msra.mxu0 0.0
  %2631 = vmatprep.subr.mxu0 0.0
  %2632 = vmatpush2.msra.mxu0 0.0
  %2633 = vmatprep.subr.mxu0 0.0
  %2634 = vmatpush2.msra.mxu0 0.0
  %2635 = vmatprep.mubr.f32.mxu0 0.0
  %2636 = vmatmul.mubr.f32.gmra.mxu0 %v2569
  %v2637 = vpop.f32.mrf.mxu0
  %v2638 = vadd.f32 0.0, %v2637
  %v2639 = vpop.f32.mrf.mxu0
  %2640 = vdwg.mxu0
  %v2641 = vld [vmem:[#allocation2 + $0x18] sm:$0xff]
  %v2642 = vld [vmem:[#allocation2 + $0x20] sm:$0xff]
  %v2643 = vsel %vm34, %v2641, %v2642
  %v2644 = vadd.f32 %v2643, %v2638
  %v2645 = vxor.u32 %v2644, 2147483648
  %v2646 = vmul.f32 %v2645, 1.442695
  %v2647 = vpow.pop %v2646
  %v2648 = vadd.f32 %v2647, 1.0
  %v2649 = vrcp.pop %v2648
  %v2650 = vmul.f32 1.0, %v2649
  %v2651 = vtanh.pop %v2644
  %v2652 = vmul.f32 %v2650, %v2556
  %2654 = vrot.lane.b32.xlu0 %v2651, 64
  %v2655 = vpop.permute.xlu0 %2654
  %v2657 = vmul.f32 %v2650, %v2655
  %2659 = vrot.lane.b32.xlu0 %v2657, 32
  %v2660 = vpop.permute.xlu0 %2659
  %v2662 = vadd.f32 %v2652, %v2660
  %v2663 = vtanh.pop %v2662
  %2665 = vrot.lane.b32.xlu0 %v2663, 64
  %v2666 = vpop.permute.xlu0 %2665
  %v2668 = vmul.f32 %v2650, %v2666
  %2670 = vrot.lane.b32.xlu0 %v2668, 32
  %v2671 = vpop.permute.xlu0 %2670
  %2673 = vst.msk [vmem:[#allocation3 + $0x18] sm:$0xff] %vm301, %v2671
  %2674 = vst.msk [vmem:[#allocation3 + $0x20] sm:$0xff] %vm303, %v2671
  %v2675 = vsel %vm54, %v2671, 0
  %2677 = vmatprep.subr.mxu0 0.0
  %2678 = vmatpush1.msra.mxu0 0.0
  %2679 = vmatprep.subr.mxu0 0.0
  %2680 = vmatpush1.msra.mxu0 0.0
  %2681 = vmatprep.subr.mxu0 0.0
  %2682 = vmatpush1.msra.mxu0 0.0
  %2683 = vmatprep.subr.mxu0 0.0
  %2684 = vmatpush1.msra.mxu0 0.0
  %2685 = vmatprep.subr.mxu0 0.0
  %2686 = vmatpush1.msra.mxu0 0.0
  %2687 = vmatprep.subr.mxu0 0.0
  %2688 = vmatpush1.msra.mxu0 0.0
  %2689 = vmatprep.subr.mxu0 0.0
  %2690 = vmatpush1.msra.mxu0 0.0
  %2691 = vmatprep.subr.mxu0 0.0
  %2692 = vmatpush1.msra.mxu0 0.0
  %2693 = vmatprep.subr.mxu0 0.0
  %2694 = vmatpush1.msra.mxu0 0.0
  %2695 = vmatprep.subr.mxu0 0.0
  %2696 = vmatpush1.msra.mxu0 0.0
  %2697 = vmatprep.subr.mxu0 0.0
  %2698 = vmatpush1.msra.mxu0 0.0
  %2699 = vmatprep.subr.mxu0 0.0
  %2700 = vmatpush1.msra.mxu0 0.0
  %2701 = vmatprep.subr.mxu0 0.0
  %2702 = vmatpush1.msra.mxu0 %v2252
  %2703 = vmatprep.subr.mxu0 0.0
  %2704 = vmatpush1.msra.mxu0 %v2251
  %2705 = vmatprep.subr.mxu0 0.0
  %2706 = vmatpush1.msra.mxu0 %v2250
  %2707 = vmatprep.subr.mxu0 0.0
  %2708 = vmatpush1.msra.mxu0 %v2249
  %2709 = vmatprep.subr.mxu0 0.0
  %2710 = vmatpush2.msra.mxu0 0.0
  %2711 = vmatprep.subr.mxu0 0.0
  %2712 = vmatpush2.msra.mxu0 0.0
  %2713 = vmatprep.subr.mxu0 0.0
  %2714 = vmatpush2.msra.mxu0 0.0
  %2715 = vmatprep.subr.mxu0 0.0
  %2716 = vmatpush2.msra.mxu0 0.0
  %2717 = vmatprep.subr.mxu0 0.0
  %2718 = vmatpush2.msra.mxu0 0.0
  %2719 = vmatprep.subr.mxu0 0.0
  %2720 = vmatpush2.msra.mxu0 0.0
  %2721 = vmatprep.subr.mxu0 0.0
  %2722 = vmatpush2.msra.mxu0 0.0
  %2723 = vmatprep.subr.mxu0 0.0
  %2724 = vmatpush2.msra.mxu0 0.0
  %2725 = vmatprep.subr.mxu0 0.0
  %2726 = vmatpush2.msra.mxu0 0.0
  %2727 = vmatprep.subr.mxu0 0.0
  %2728 = vmatpush2.msra.mxu0 0.0
  %2729 = vmatprep.subr.mxu0 0.0
  %2730 = vmatpush2.msra.mxu0 0.0
  %2731 = vmatprep.subr.mxu0 0.0
  %2732 = vmatpush2.msra.mxu0 0.0
  %2733 = vmatprep.subr.mxu0 0.0
  %2734 = vmatpush2.msra.mxu0 0.0
  %2735 = vmatprep.subr.mxu0 0.0
  %2736 = vmatpush2.msra.mxu0 0.0
  %2737 = vmatprep.subr.mxu0 0.0
  %2738 = vmatpush2.msra.mxu0 0.0
  %2739 = vmatprep.subr.mxu0 0.0
  %2740 = vmatpush2.msra.mxu0 0.0
  %2741 = vmatprep.mubr.f32.mxu0 0.0
  %2742 = vmatmul.mubr.f32.gmra.mxu0 %v2675
  %v2743 = vpop.f32.mrf.mxu0
  %v2744 = vadd.f32 0.0, %v2743
  %v2745 = vpop.f32.mrf.mxu0
  %2746 = vdwg.mxu0
  %v2747 = vld [vmem:[#allocation2 + $0x20] sm:$0xff]
  %v2748 = vld [vmem:[#allocation2 + $0x18] sm:$0xff]
  %v2749 = vsel %vm34, %v2747, %v2748
  %v2750 = vadd.f32 %v2749, %v2744
  %v2751 = vxor.u32 %v2750, 2147483648
  %v2752 = vmul.f32 %v2751, 1.442695
  %v2753 = vpow.pop %v2752
  %v2754 = vadd.f32 %v2753, 1.0
  %v2755 = vrcp.pop %v2754
  %v2756 = vmul.f32 1.0, %v2755
  %v2757 = vtanh.pop %v2750
  %v2758 = vmul.f32 %v2756, %v2662
  %2760 = vrot.lane.b32.xlu0 %v2757, 64
  %v2761 = vpop.permute.xlu0 %2760
  %v2763 = vmul.f32 %v2756, %v2761
  %2765 = vrot.lane.b32.xlu0 %v2763, 32
  %v2766 = vpop.permute.xlu0 %2765
  %v2768 = vadd.f32 %v2758, %v2766
  %v2769 = vtanh.pop %v2768
  %2771 = vrot.lane.b32.xlu0 %v2769, 64
  %v2772 = vpop.permute.xlu0 %2771
  %v2774 = vmul.f32 %v2756, %v2772
  %2776 = vrot.lane.b32.xlu0 %v2774, 32
  %v2777 = vpop.permute.xlu0 %2776
  %2779 = vst.msk [vmem:[#allocation3 + $0x20] sm:$0xff] %vm301, %v2777
  %2780 = vst.msk [vmem:[#allocation3 + $0x18] sm:$0xff] %vm303, %v2777
  %v2781 = vsel %vm54, %v2777, 0
  %2783 = vmatprep.subr.mxu0 0.0
  %2784 = vmatpush1.msra.mxu0 0.0
  %2785 = vmatprep.subr.mxu0 0.0
  %2786 = vmatpush1.msra.mxu0 0.0
  %2787 = vmatprep.subr.mxu0 0.0
  %2788 = vmatpush1.msra.mxu0 0.0
  %2789 = vmatprep.subr.mxu0 0.0
  %2790 = vmatpush1.msra.mxu0 0.0
  %2791 = vmatprep.subr.mxu0 0.0
  %2792 = vmatpush1.msra.mxu0 0.0
  %2793 = vmatprep.subr.mxu0 0.0
  %2794 = vmatpush1.msra.mxu0 0.0
  %2795 = vmatprep.subr.mxu0 0.0
  %2796 = vmatpush1.msra.mxu0 0.0
  %2797 = vmatprep.subr.mxu0 0.0
  %2798 = vmatpush1.msra.mxu0 0.0
  %2799 = vmatprep.subr.mxu0 0.0
  %2800 = vmatpush1.msra.mxu0 0.0
  %2801 = vmatprep.subr.mxu0 0.0
  %2802 = vmatpush1.msra.mxu0 0.0
  %2803 = vmatprep.subr.mxu0 0.0
  %2804 = vmatpush1.msra.mxu0 0.0
  %2805 = vmatprep.subr.mxu0 0.0
  %2806 = vmatpush1.msra.mxu0 0.0
  %2807 = vmatprep.subr.mxu0 0.0
  %2808 = vmatpush1.msra.mxu0 %v2252
  %2809 = vmatprep.subr.mxu0 0.0
  %2810 = vmatpush1.msra.mxu0 %v2251
  %2811 = vmatprep.subr.mxu0 0.0
  %2812 = vmatpush1.msra.mxu0 %v2250
  %2813 = vmatprep.subr.mxu0 0.0
  %2814 = vmatpush1.msra.mxu0 %v2249
  %2815 = vmatprep.subr.mxu0 0.0
  %2816 = vmatpush2.msra.mxu0 0.0
  %2817 = vmatprep.subr.mxu0 0.0
  %2818 = vmatpush2.msra.mxu0 0.0
  %2819 = vmatprep.subr.mxu0 0.0
  %2820 = vmatpush2.msra.mxu0 0.0
  %2821 = vmatprep.subr.mxu0 0.0
  %2822 = vmatpush2.msra.mxu0 0.0
  %2823 = vmatprep.subr.mxu0 0.0
  %2824 = vmatpush2.msra.mxu0 0.0
  %2825 = vmatprep.subr.mxu0 0.0
  %2826 = vmatpush2.msra.mxu0 0.0
  %2827 = vmatprep.subr.mxu0 0.0
  %2828 = vmatpush2.msra.mxu0 0.0
  %2829 = vmatprep.subr.mxu0 0.0
  %2830 = vmatpush2.msra.mxu0 0.0
  %2831 = vmatprep.subr.mxu0 0.0
  %2832 = vmatpush2.msra.mxu0 0.0
  %2833 = vmatprep.subr.mxu0 0.0
  %2834 = vmatpush2.msra.mxu0 0.0
  %2835 = vmatprep.subr.mxu0 0.0
  %2836 = vmatpush2.msra.mxu0 0.0
  %2837 = vmatprep.subr.mxu0 0.0
  %2838 = vmatpush2.msra.mxu0 0.0
  %2839 = vmatprep.subr.mxu0 0.0
  %2840 = vmatpush2.msra.mxu0 0.0
  %2841 = vmatprep.subr.mxu0 0.0
  %2842 = vmatpush2.msra.mxu0 0.0
  %2843 = vmatprep.subr.mxu0 0.0
  %2844 = vmatpush2.msra.mxu0 0.0
  %2845 = vmatprep.subr.mxu0 0.0
  %2846 = vmatpush2.msra.mxu0 0.0
  %2847 = vmatprep.mubr.f32.mxu0 0.0
  %2848 = vmatmul.mubr.f32.gmra.mxu0 %v2781
  %v2849 = vpop.f32.mrf.mxu0
  %v2850 = vadd.f32 0.0, %v2849
  %v2851 = vpop.f32.mrf.mxu0
  %2852 = vdwg.mxu0
  %v2853 = vld [vmem:[#allocation2 + $0x28] sm:$0xff]
  %v2854 = vld [vmem:[#allocation2 + $0x10] sm:$0xff]
  %v2855 = vsel %vm34, %v2853, %v2854
  %v2856 = vadd.f32 %v2855, %v2850
  %v2857 = vxor.u32 %v2856, 2147483648
  %v2858 = vmul.f32 %v2857, 1.442695
  %v2859 = vpow.pop %v2858
  %v2860 = vadd.f32 %v2859, 1.0
  %v2861 = vrcp.pop %v2860
  %v2862 = vmul.f32 1.0, %v2861
  %v2863 = vtanh.pop %v2856
  %v2864 = vmul.f32 %v2862, %v2768
  %2866 = vrot.lane.b32.xlu0 %v2863, 64
  %v2867 = vpop.permute.xlu0 %2866
  %v2869 = vmul.f32 %v2862, %v2867
  %2871 = vrot.lane.b32.xlu0 %v2869, 32
  %v2872 = vpop.permute.xlu0 %2871
  %v2874 = vadd.f32 %v2864, %v2872
  %v2875 = vtanh.pop %v2874
  %2877 = vrot.lane.b32.xlu0 %v2875, 64
  %v2878 = vpop.permute.xlu0 %2877
  %v2880 = vmul.f32 %v2862, %v2878
  %2882 = vrot.lane.b32.xlu0 %v2880, 32
  %v2883 = vpop.permute.xlu0 %2882
  %2885 = vst.msk [vmem:[#allocation3 + $0x28] sm:$0xff] %vm301, %v2883
  %2886 = vst.msk [vmem:[#allocation3 + $0x10] sm:$0xff] %vm303, %v2883
  %v2887 = vsel %vm54, %v2883, 0
  %2889 = vmatprep.subr.mxu0 0.0
  %2890 = vmatpush1.msra.mxu0 0.0
  %2891 = vmatprep.subr.mxu0 0.0
  %2892 = vmatpush1.msra.mxu0 0.0
  %2893 = vmatprep.subr.mxu0 0.0
  %2894 = vmatpush1.msra.mxu0 0.0
  %2895 = vmatprep.subr.mxu0 0.0
  %2896 = vmatpush1.msra.mxu0 0.0
  %2897 = vmatprep.subr.mxu0 0.0
  %2898 = vmatpush1.msra.mxu0 0.0
  %2899 = vmatprep.subr.mxu0 0.0
  %2900 = vmatpush1.msra.mxu0 0.0
  %2901 = vmatprep.subr.mxu0 0.0
  %2902 = vmatpush1.msra.mxu0 0.0
  %2903 = vmatprep.subr.mxu0 0.0
  %2904 = vmatpush1.msra.mxu0 0.0
  %2905 = vmatprep.subr.mxu0 0.0
  %2906 = vmatpush1.msra.mxu0 0.0
  %2907 = vmatprep.subr.mxu0 0.0
  %2908 = vmatpush1.msra.mxu0 0.0
  %2909 = vmatprep.subr.mxu0 0.0
  %2910 = vmatpush1.msra.mxu0 0.0
  %2911 = vmatprep.subr.mxu0 0.0
  %2912 = vmatpush1.msra.mxu0 0.0
  %2913 = vmatprep.subr.mxu0 0.0
  %2914 = vmatpush1.msra.mxu0 %v2252
  %2915 = vmatprep.subr.mxu0 0.0
  %2916 = vmatpush1.msra.mxu0 %v2251
  %2917 = vmatprep.subr.mxu0 0.0
  %2918 = vmatpush1.msra.mxu0 %v2250
  %2919 = vmatprep.subr.mxu0 0.0
  %2920 = vmatpush1.msra.mxu0 %v2249
  %2921 = vmatprep.subr.mxu0 0.0
  %2922 = vmatpush2.msra.mxu0 0.0
  %2923 = vmatprep.subr.mxu0 0.0
  %2924 = vmatpush2.msra.mxu0 0.0
  %2925 = vmatprep.subr.mxu0 0.0
  %2926 = vmatpush2.msra.mxu0 0.0
  %2927 = vmatprep.subr.mxu0 0.0
  %2928 = vmatpush2.msra.mxu0 0.0
  %2929 = vmatprep.subr.mxu0 0.0
  %2930 = vmatpush2.msra.mxu0 0.0
  %2931 = vmatprep.subr.mxu0 0.0
  %2932 = vmatpush2.msra.mxu0 0.0
  %2933 = vmatprep.subr.mxu0 0.0
  %2934 = vmatpush2.msra.mxu0 0.0
  %2935 = vmatprep.subr.mxu0 0.0
  %2936 = vmatpush2.msra.mxu0 0.0
  %2937 = vmatprep.subr.mxu0 0.0
  %2938 = vmatpush2.msra.mxu0 0.0
  %2939 = vmatprep.subr.mxu0 0.0
  %2940 = vmatpush2.msra.mxu0 0.0
  %2941 = vmatprep.subr.mxu0 0.0
  %2942 = vmatpush2.msra.mxu0 0.0
  %2943 = vmatprep.subr.mxu0 0.0
  %2944 = vmatpush2.msra.mxu0 0.0
  %2945 = vmatprep.subr.mxu0 0.0
  %2946 = vmatpush2.msra.mxu0 0.0
  %2947 = vmatprep.subr.mxu0 0.0
  %2948 = vmatpush2.msra.mxu0 0.0
  %2949 = vmatprep.subr.mxu0 0.0
  %2950 = vmatpush2.msra.mxu0 0.0
  %2951 = vmatprep.subr.mxu0 0.0
  %2952 = vmatpush2.msra.mxu0 0.0
  %2953 = vmatprep.mubr.f32.mxu0 0.0
  %2954 = vmatmul.mubr.f32.gmra.mxu0 %v2887
  %v2955 = vpop.f32.mrf.mxu0
  %v2956 = vadd.f32 0.0, %v2955
  %v2957 = vpop.f32.mrf.mxu0
  %2958 = vdwg.mxu0
  %v2959 = vld [vmem:[#allocation2 + $0x30] sm:$0xff]
  %v2960 = vld [vmem:[#allocation2 + $0x8] sm:$0xff]
  %v2961 = vsel %vm34, %v2959, %v2960
  %v2962 = vadd.f32 %v2961, %v2956
  %v2963 = vxor.u32 %v2962, 2147483648
  %v2964 = vmul.f32 %v2963, 1.442695
  %v2965 = vpow.pop %v2964
  %v2966 = vadd.f32 %v2965, 1.0
  %v2967 = vrcp.pop %v2966
  %v2968 = vmul.f32 1.0, %v2967
  %v2969 = vtanh.pop %v2962
  %v2970 = vmul.f32 %v2968, %v2874
  %2972 = vrot.lane.b32.xlu0 %v2969, 64
  %v2973 = vpop.permute.xlu0 %2972
  %v2975 = vmul.f32 %v2968, %v2973
  %2977 = vrot.lane.b32.xlu0 %v2975, 32
  %v2978 = vpop.permute.xlu0 %2977
  %v2980 = vadd.f32 %v2970, %v2978
  %v2981 = vtanh.pop %v2980
  %2983 = vrot.lane.b32.xlu0 %v2981, 64
  %v2984 = vpop.permute.xlu0 %2983
  %v2986 = vmul.f32 %v2968, %v2984
  %2988 = vrot.lane.b32.xlu0 %v2986, 32
  %v2989 = vpop.permute.xlu0 %2988
  %2991 = vst.msk [vmem:[#allocation3 + $0x30] sm:$0xff] %vm301, %v2989
  %2992 = vst.msk [vmem:[#allocation3 + $0x8] sm:$0xff] %vm303, %v2989
  %v2993 = vsel %vm54, %v2989, 0
  %2995 = vmatprep.subr.mxu0 0.0
  %2996 = vmatpush1.msra.mxu0 0.0
  %2997 = vmatprep.subr.mxu0 0.0
  %2998 = vmatpush1.msra.mxu0 0.0
  %2999 = vmatprep.subr.mxu0 0.0
  %3000 = vmatpush1.msra.mxu0 0.0
  %3001 = vmatprep.subr.mxu0 0.0
  %3002 = vmatpush1.msra.mxu0 0.0
  %3003 = vmatprep.subr.mxu0 0.0
  %3004 = vmatpush1.msra.mxu0 0.0
  %3005 = vmatprep.subr.mxu0 0.0
  %3006 = vmatpush1.msra.mxu0 0.0
  %3007 = vmatprep.subr.mxu0 0.0
  %3008 = vmatpush1.msra.mxu0 0.0
  %3009 = vmatprep.subr.mxu0 0.0
  %3010 = vmatpush1.msra.mxu0 0.0
  %3011 = vmatprep.subr.mxu0 0.0
  %3012 = vmatpush1.msra.mxu0 0.0
  %3013 = vmatprep.subr.mxu0 0.0
  %3014 = vmatpush1.msra.mxu0 0.0
  %3015 = vmatprep.subr.mxu0 0.0
  %3016 = vmatpush1.msra.mxu0 0.0
  %3017 = vmatprep.subr.mxu0 0.0
  %3018 = vmatpush1.msra.mxu0 0.0
  %3019 = vmatprep.subr.mxu0 0.0
  %3020 = vmatpush1.msra.mxu0 %v2252
  %3021 = vmatprep.subr.mxu0 0.0
  %3022 = vmatpush1.msra.mxu0 %v2251
  %3023 = vmatprep.subr.mxu0 0.0
  %3024 = vmatpush1.msra.mxu0 %v2250
  %3025 = vmatprep.subr.mxu0 0.0
  %3026 = vmatpush1.msra.mxu0 %v2249
  %3027 = vmatprep.subr.mxu0 0.0
  %3028 = vmatpush2.msra.mxu0 0.0
  %3029 = vmatprep.subr.mxu0 0.0
  %3030 = vmatpush2.msra.mxu0 0.0
  %3031 = vmatprep.subr.mxu0 0.0
  %3032 = vmatpush2.msra.mxu0 0.0
  %3033 = vmatprep.subr.mxu0 0.0
  %3034 = vmatpush2.msra.mxu0 0.0
  %3035 = vmatprep.subr.mxu0 0.0
  %3036 = vmatpush2.msra.mxu0 0.0
  %3037 = vmatprep.subr.mxu0 0.0
  %3038 = vmatpush2.msra.mxu0 0.0
  %3039 = vmatprep.subr.mxu0 0.0
  %3040 = vmatpush2.msra.mxu0 0.0
  %3041 = vmatprep.subr.mxu0 0.0
  %3042 = vmatpush2.msra.mxu0 0.0
  %3043 = vmatprep.subr.mxu0 0.0
  %3044 = vmatpush2.msra.mxu0 0.0
  %3045 = vmatprep.subr.mxu0 0.0
  %3046 = vmatpush2.msra.mxu0 0.0
  %3047 = vmatprep.subr.mxu0 0.0
  %3048 = vmatpush2.msra.mxu0 0.0
  %3049 = vmatprep.subr.mxu0 0.0
  %3050 = vmatpush2.msra.mxu0 0.0
  %3051 = vmatprep.subr.mxu0 0.0
  %3052 = vmatpush2.msra.mxu0 0.0
  %3053 = vmatprep.subr.mxu0 0.0
  %3054 = vmatpush2.msra.mxu0 0.0
  %3055 = vmatprep.subr.mxu0 0.0
  %3056 = vmatpush2.msra.mxu0 0.0
  %3057 = vmatprep.subr.mxu0 0.0
  %3058 = vmatpush2.msra.mxu0 0.0
  %3059 = vmatprep.mubr.f32.mxu0 0.0
  %3060 = vmatmul.mubr.f32.gmra.mxu0 %v2993
  %v3061 = vpop.f32.mrf.mxu0
  %v3062 = vadd.f32 0.0, %v3061
  %v3063 = vpop.f32.mrf.mxu0
  %3064 = vdwg.mxu0
  %v3065 = vld [vmem:[#allocation2 + $0x38] sm:$0xff]
  %v3066 = vld [vmem:[#allocation2] sm:$0xff]
  %v3067 = vsel %vm34, %v3065, %v3066
  %v3068 = vadd.f32 %v3067, %v3062
  %v3069 = vxor.u32 %v3068, 2147483648
  %v3070 = vmul.f32 %v3069, 1.442695
  %v3071 = vpow.pop %v3070
  %v3072 = vadd.f32 %v3071, 1.0
  %v3073 = vrcp.pop %v3072
  %v3074 = vmul.f32 1.0, %v3073
  %v3075 = vtanh.pop %v3068
  %v3076 = vmul.f32 %v3074, %v2980
  %3078 = vrot.lane.b32.xlu0 %v3075, 64
  %v3079 = vpop.permute.xlu0 %3078
  %v3081 = vmul.f32 %v3074, %v3079
  %3083 = vrot.lane.b32.xlu0 %v3081, 32
  %v3084 = vpop.permute.xlu0 %3083
  %v3086 = vadd.f32 %v3076, %v3084
  %v3087 = vtanh.pop %v3086
  %3089 = vrot.lane.b32.xlu0 %v3087, 64
  %v3090 = vpop.permute.xlu0 %3089
  %v3092 = vmul.f32 %v3074, %v3090
  %3094 = vrot.lane.b32.xlu0 %v3092, 32
  %v3095 = vpop.permute.xlu0 %3094
  %3097 = vst.msk [vmem:[#allocation3 + $0x38] sm:$0xff] %vm301, %v3095
  %3098 = vst.msk [vmem:[#allocation3] sm:$0xff] %vm303, %v3095
  %s3099 = scalar_lea.vmem %s5, 32
  %3100 = vst.msk [vmem:[%s3099] sm:$0xff] %vm301, %v3095
  %3101 = vrot.lane.b32.xlu0 %v3092, 16
  %v3102 = vpop.permute.xlu0 %3101
  %s3104 = scalar_lea.vmem %s5, 40
  %3105 = vst.msk [vmem:[%s3104] sm:$0xff] %vm301, %v3102
  %3107 = vrot.lane.b32.xlu0 %v3086, 96
  %v3108 = vpop.permute.xlu0 %3107
  %s3110 = scalar_lea.vmem %s6, 32
  %3111 = vst.msk [vmem:[%s3110] sm:$0xff] %vm301, %v3108
  %3112 = vrot.lane.b32.xlu0 %v3086, 80
  %v3113 = vpop.permute.xlu0 %3112
  %s3115 = scalar_lea.vmem %s6, 40
  %3116 = vst.msk [vmem:[%s3115] sm:$0xff] %vm301, %v3113
  %v3117 = vld [vmem:[#allocation3] sm:$0xff]
  %v3118 = vld [vmem:[#allocation3 + $0x8] sm:$0xff]
  %v3119 = vld [vmem:[#allocation3 + $0x10] sm:$0xff]
  %v3120 = vld [vmem:[#allocation3 + $0x18] sm:$0xff]
  %v3121 = vld [vmem:[#allocation3 + $0x20] sm:$0xff]
  %v3122 = vld [vmem:[#allocation3 + $0x28] sm:$0xff]
  %v3123 = vld [vmem:[#allocation3 + $0x30] sm:$0xff]
  %v3124 = vld [vmem:[#allocation3 + $0x38] sm:$0xff]
  %s3125 = scalar_lea.vmem %s1, 96
  %v3126 = vld [vmem:[%s3125] sm:$0xff]
  %v3127 = vld [vmem:[%s3125 + $0x8] sm:$0xff]
  %v3128 = vld [vmem:[%s3125 + $0x10] sm:$0xff]
  %v3129 = vld [vmem:[%s3125 + $0x18] sm:$0xff]
  %s3130 = scalar_lea.vmem %s3, 3
  %v3131 = vld [vmem:[%s3130] sm:$0x1]
  %v3133 = vlaneseq
  %v3134 = vshrl.u32 %v3133, 7
  %v3135 = vsub.s32 0, %v3134
  %v3136 = vrot.slane %v3131, %v3135
  %v3139 = vsel %vm54, %v3117, 0
  %v3142 = vsel %vm54, %v3118, 0
  %v3145 = vsel %vm54, %v3119, 0
  %v3148 = vsel %vm54, %v3120, 0
  %v3151 = vsel %vm54, %v3121, 0
  %v3154 = vsel %vm54, %v3122, 0
  %v3157 = vsel %vm54, %v3123, 0
  %v3160 = vsel %vm54, %v3124, 0
  %3162 = vmatprep.subr.mxu0 0.0
  %3163 = vmatpush1.msra.mxu0 0.0
  %3164 = vmatprep.subr.mxu0 0.0
  %3165 = vmatpush1.msra.mxu0 0.0
  %3166 = vmatprep.subr.mxu0 0.0
  %3167 = vmatpush1.msra.mxu0 0.0
  %3168 = vmatprep.subr.mxu0 0.0
  %3169 = vmatpush1.msra.mxu0 0.0
  %3170 = vmatprep.subr.mxu0 0.0
  %3171 = vmatpush1.msra.mxu0 0.0
  %3172 = vmatprep.subr.mxu0 0.0
  %3173 = vmatpush1.msra.mxu0 0.0
  %3174 = vmatprep.subr.mxu0 0.0
  %3175 = vmatpush1.msra.mxu0 0.0
  %3176 = vmatprep.subr.mxu0 0.0
  %3177 = vmatpush1.msra.mxu0 0.0
  %3178 = vmatprep.subr.mxu0 0.0
  %3179 = vmatpush1.msra.mxu0 0.0
  %3180 = vmatprep.subr.mxu0 0.0
  %3181 = vmatpush1.msra.mxu0 0.0
  %3182 = vmatprep.subr.mxu0 0.0
  %3183 = vmatpush1.msra.mxu0 0.0
  %3184 = vmatprep.subr.mxu0 0.0
  %3185 = vmatpush1.msra.mxu0 0.0
  %3186 = vmatprep.subr.mxu0 0.0
  %3187 = vmatpush1.msra.mxu0 %v3129
  %3188 = vmatprep.subr.mxu0 0.0
  %3189 = vmatpush1.msra.mxu0 %v3128
  %3190 = vmatprep.subr.mxu0 0.0
  %3191 = vmatpush1.msra.mxu0 %v3127
  %3192 = vmatprep.subr.mxu0 0.0
  %3193 = vmatpush1.msra.mxu0 %v3126
  %3194 = vmatprep.subr.mxu0 0.0
  %3195 = vmatpush2.msra.mxu0 0.0
  %3196 = vmatprep.subr.mxu0 0.0
  %3197 = vmatpush2.msra.mxu0 0.0
  %3198 = vmatprep.subr.mxu0 0.0
  %3199 = vmatpush2.msra.mxu0 0.0
  %3200 = vmatprep.subr.mxu0 0.0
  %3201 = vmatpush2.msra.mxu0 0.0
  %3202 = vmatprep.subr.mxu0 0.0
  %3203 = vmatpush2.msra.mxu0 0.0
  %3204 = vmatprep.subr.mxu0 0.0
  %3205 = vmatpush2.msra.mxu0 0.0
  %3206 = vmatprep.subr.mxu0 0.0
  %3207 = vmatpush2.msra.mxu0 0.0
  %3208 = vmatprep.subr.mxu0 0.0
  %3209 = vmatpush2.msra.mxu0 0.0
  %3210 = vmatprep.subr.mxu0 0.0
  %3211 = vmatpush2.msra.mxu0 0.0
  %3212 = vmatprep.subr.mxu0 0.0
  %3213 = vmatpush2.msra.mxu0 0.0
  %3214 = vmatprep.subr.mxu0 0.0
  %3215 = vmatpush2.msra.mxu0 0.0
  %3216 = vmatprep.subr.mxu0 0.0
  %3217 = vmatpush2.msra.mxu0 0.0
  %3218 = vmatprep.subr.mxu0 0.0
  %3219 = vmatpush2.msra.mxu0 0.0
  %3220 = vmatprep.subr.mxu0 0.0
  %3221 = vmatpush2.msra.mxu0 0.0
  %3222 = vmatprep.subr.mxu0 0.0
  %3223 = vmatpush2.msra.mxu0 0.0
  %3224 = vmatprep.subr.mxu0 0.0
  %3225 = vmatpush2.msra.mxu0 0.0
  %3226 = vmatprep.mubr.f32.mxu0 0.0
  %3227 = vmatmul.mubr.f32.gmra.mxu0 %v3139
  %v3228 = vpop.f32.mrf.mxu0
  %v3229 = vadd.f32 %v3136, %v3228
  %v3230 = vpop.f32.mrf.mxu0
  %3231 = vmatprep.mubr.f32.mxu0 0.0
  %3232 = vmatmul.mubr.f32.gmra.mxu0 %v3142
  %v3233 = vpop.f32.mrf.mxu0
  %v3234 = vadd.f32 %v3136, %v3233
  %v3235 = vpop.f32.mrf.mxu0
  %3236 = vmatprep.mubr.f32.mxu0 0.0
  %3237 = vmatmul.mubr.f32.gmra.mxu0 %v3145
  %v3238 = vpop.f32.mrf.mxu0
  %v3239 = vadd.f32 %v3136, %v3238
  %v3240 = vpop.f32.mrf.mxu0
  %3241 = vmatprep.mubr.f32.mxu0 0.0
  %3242 = vmatmul.mubr.f32.gmra.mxu0 %v3148
  %v3243 = vpop.f32.mrf.mxu0
  %v3244 = vadd.f32 %v3136, %v3243
  %v3245 = vpop.f32.mrf.mxu0
  %3246 = vmatprep.mubr.f32.mxu0 0.0
  %3247 = vmatmul.mubr.f32.gmra.mxu0 %v3151
  %v3248 = vpop.f32.mrf.mxu0
  %v3249 = vadd.f32 %v3136, %v3248
  %v3250 = vpop.f32.mrf.mxu0
  %3251 = vmatprep.mubr.f32.mxu0 0.0
  %3252 = vmatmul.mubr.f32.gmra.mxu0 %v3154
  %v3253 = vpop.f32.mrf.mxu0
  %v3254 = vadd.f32 %v3136, %v3253
  %v3255 = vpop.f32.mrf.mxu0
  %3256 = vmatprep.mubr.f32.mxu0 0.0
  %3257 = vmatmul.mubr.f32.gmra.mxu0 %v3157
  %v3258 = vpop.f32.mrf.mxu0
  %v3259 = vadd.f32 %v3136, %v3258
  %v3260 = vpop.f32.mrf.mxu0
  %3261 = vmatprep.mubr.f32.mxu0 0.0
  %3262 = vmatmul.mubr.f32.gmra.mxu0 %v3160
  %v3263 = vpop.f32.mrf.mxu0
  %v3264 = vadd.f32 %v3136, %v3263
  %v3265 = vpop.f32.mrf.mxu0
  %3266 = vdwg.mxu0
  %3267 = vst [vmem:[#allocation2] sm:$0xff] %v3229
  %3268 = vst [vmem:[#allocation2 + $0x8] sm:$0xff] %v3234
  %3269 = vst [vmem:[#allocation2 + $0x10] sm:$0xff] %v3239
  %3270 = vst [vmem:[#allocation2 + $0x18] sm:$0xff] %v3244
  %3271 = vst [vmem:[#allocation2 + $0x20] sm:$0xff] %v3249
  %3272 = vst [vmem:[#allocation2 + $0x28] sm:$0xff] %v3254
  %3273 = vst [vmem:[#allocation2 + $0x30] sm:$0xff] %v3259
  %3274 = vst [vmem:[#allocation2 + $0x38] sm:$0xff] %v3264
  %s3275 = scalar_lea.vmem %s2, 96
  %v3276 = vld [vmem:[%s3275] sm:$0xff]
  %v3277 = vld [vmem:[%s3275 + $0x8] sm:$0xff]
  %v3278 = vld [vmem:[%s3275 + $0x10] sm:$0xff]
  %v3279 = vld [vmem:[%s3275 + $0x18] sm:$0xff]
  %3280 = vmatprep.subr.mxu0 0.0
  %3281 = vmatpush1.msra.mxu0 0.0
  %3282 = vmatprep.subr.mxu0 0.0
  %3283 = vmatpush1.msra.mxu0 0.0
  %3284 = vmatprep.subr.mxu0 0.0
  %3285 = vmatpush1.msra.mxu0 0.0
  %3286 = vmatprep.subr.mxu0 0.0
  %3287 = vmatpush1.msra.mxu0 0.0
  %3288 = vmatprep.subr.mxu0 0.0
  %3289 = vmatpush1.msra.mxu0 0.0
  %3290 = vmatprep.subr.mxu0 0.0
  %3291 = vmatpush1.msra.mxu0 0.0
  %3292 = vmatprep.subr.mxu0 0.0
  %3293 = vmatpush1.msra.mxu0 0.0
  %3294 = vmatprep.subr.mxu0 0.0
  %3295 = vmatpush1.msra.mxu0 0.0
  %3296 = vmatprep.subr.mxu0 0.0
  %3297 = vmatpush1.msra.mxu0 0.0
  %3298 = vmatprep.subr.mxu0 0.0
  %3299 = vmatpush1.msra.mxu0 0.0
  %3300 = vmatprep.subr.mxu0 0.0
  %3301 = vmatpush1.msra.mxu0 0.0
  %3302 = vmatprep.subr.mxu0 0.0
  %3303 = vmatpush1.msra.mxu0 0.0
  %3304 = vmatprep.subr.mxu0 0.0
  %3305 = vmatpush1.msra.mxu0 %v3279
  %3306 = vmatprep.subr.mxu0 0.0
  %3307 = vmatpush1.msra.mxu0 %v3278
  %3308 = vmatprep.subr.mxu0 0.0
  %3309 = vmatpush1.msra.mxu0 %v3277
  %3310 = vmatprep.subr.mxu0 0.0
  %3311 = vmatpush1.msra.mxu0 %v3276
  %3312 = vmatprep.subr.mxu0 0.0
  %3313 = vmatpush2.msra.mxu0 0.0
  %3314 = vmatprep.subr.mxu0 0.0
  %3315 = vmatpush2.msra.mxu0 0.0
  %3316 = vmatprep.subr.mxu0 0.0
  %3317 = vmatpush2.msra.mxu0 0.0
  %3318 = vmatprep.subr.mxu0 0.0
  %3319 = vmatpush2.msra.mxu0 0.0
  %3320 = vmatprep.subr.mxu0 0.0
  %3321 = vmatpush2.msra.mxu0 0.0
  %3322 = vmatprep.subr.mxu0 0.0
  %3323 = vmatpush2.msra.mxu0 0.0
  %3324 = vmatprep.subr.mxu0 0.0
  %3325 = vmatpush2.msra.mxu0 0.0
  %3326 = vmatprep.subr.mxu0 0.0
  %3327 = vmatpush2.msra.mxu0 0.0
  %3328 = vmatprep.subr.mxu0 0.0
  %3329 = vmatpush2.msra.mxu0 0.0
  %3330 = vmatprep.subr.mxu0 0.0
  %3331 = vmatpush2.msra.mxu0 0.0
  %3332 = vmatprep.subr.mxu0 0.0
  %3333 = vmatpush2.msra.mxu0 0.0
  %3334 = vmatprep.subr.mxu0 0.0
  %3335 = vmatpush2.msra.mxu0 0.0
  %3336 = vmatprep.subr.mxu0 0.0
  %3337 = vmatpush2.msra.mxu0 0.0
  %3338 = vmatprep.subr.mxu0 0.0
  %3339 = vmatpush2.msra.mxu0 0.0
  %3340 = vmatprep.subr.mxu0 0.0
  %3341 = vmatpush2.msra.mxu0 0.0
  %3342 = vmatprep.subr.mxu0 0.0
  %3343 = vmatpush2.msra.mxu0 0.0
  %3344 = vmatprep.mubr.f32.mxu0 0.0
  %3345 = vmatmul.mubr.f32.gmra.mxu0 %v197
  %v3346 = vpop.f32.mrf.mxu0
  %v3347 = vadd.f32 0.0, %v3346
  %v3348 = vpop.f32.mrf.mxu0
  %3349 = vdwg.mxu0
  %v3350 = vld [vmem:[#allocation2] sm:$0xff]
  %v3351 = vld [vmem:[#allocation2 + $0x38] sm:$0xff]
  %v3352 = vsel %vm34, %v3350, %v3351
  %v3353 = vadd.f32 %v3352, %v3347
  %v3354 = vxor.u32 %v3353, 2147483648
  %v3355 = vmul.f32 %v3354, 1.442695
  %v3356 = vpow.pop %v3355
  %v3357 = vadd.f32 %v3356, 1.0
  %v3358 = vrcp.pop %v3357
  %v3359 = vmul.f32 1.0, %v3358
  %v3360 = vtanh.pop %v3353
  %v3361 = vmul.f32 %v3359, 0.0
  %3363 = vrot.lane.b32.xlu0 %v3360, 64
  %v3364 = vpop.permute.xlu0 %3363
  %v3366 = vmul.f32 %v3359, %v3364
  %3368 = vrot.lane.b32.xlu0 %v3366, 32
  %v3369 = vpop.permute.xlu0 %3368
  %v3371 = vadd.f32 %v3361, %v3369
  %v3372 = vtanh.pop %v3371
  %3374 = vrot.lane.b32.xlu0 %v3372, 64
  %v3375 = vpop.permute.xlu0 %3374
  %v3377 = vmul.f32 %v3359, %v3375
  %3379 = vrot.lane.b32.xlu0 %v3377, 32
  %v3380 = vpop.permute.xlu0 %3379
  %3382 = vst.msk [vmem:[#allocation3] sm:$0xff] %vm301, %v3380
  %3383 = vst.msk [vmem:[#allocation3 + $0x38] sm:$0xff] %vm303, %v3380
  %v3384 = vsel %vm54, %v3380, 0
  %3386 = vmatprep.subr.mxu0 0.0
  %3387 = vmatpush1.msra.mxu0 0.0
  %3388 = vmatprep.subr.mxu0 0.0
  %3389 = vmatpush1.msra.mxu0 0.0
  %3390 = vmatprep.subr.mxu0 0.0
  %3391 = vmatpush1.msra.mxu0 0.0
  %3392 = vmatprep.subr.mxu0 0.0
  %3393 = vmatpush1.msra.mxu0 0.0
  %3394 = vmatprep.subr.mxu0 0.0
  %3395 = vmatpush1.msra.mxu0 0.0
  %3396 = vmatprep.subr.mxu0 0.0
  %3397 = vmatpush1.msra.mxu0 0.0
  %3398 = vmatprep.subr.mxu0 0.0
  %3399 = vmatpush1.msra.mxu0 0.0
  %3400 = vmatprep.subr.mxu0 0.0
  %3401 = vmatpush1.msra.mxu0 0.0
  %3402 = vmatprep.subr.mxu0 0.0
  %3403 = vmatpush1.msra.mxu0 0.0
  %3404 = vmatprep.subr.mxu0 0.0
  %3405 = vmatpush1.msra.mxu0 0.0
  %3406 = vmatprep.subr.mxu0 0.0
  %3407 = vmatpush1.msra.mxu0 0.0
  %3408 = vmatprep.subr.mxu0 0.0
  %3409 = vmatpush1.msra.mxu0 0.0
  %3410 = vmatprep.subr.mxu0 0.0
  %3411 = vmatpush1.msra.mxu0 %v3279
  %3412 = vmatprep.subr.mxu0 0.0
  %3413 = vmatpush1.msra.mxu0 %v3278
  %3414 = vmatprep.subr.mxu0 0.0
  %3415 = vmatpush1.msra.mxu0 %v3277
  %3416 = vmatprep.subr.mxu0 0.0
  %3417 = vmatpush1.msra.mxu0 %v3276
  %3418 = vmatprep.subr.mxu0 0.0
  %3419 = vmatpush2.msra.mxu0 0.0
  %3420 = vmatprep.subr.mxu0 0.0
  %3421 = vmatpush2.msra.mxu0 0.0
  %3422 = vmatprep.subr.mxu0 0.0
  %3423 = vmatpush2.msra.mxu0 0.0
  %3424 = vmatprep.subr.mxu0 0.0
  %3425 = vmatpush2.msra.mxu0 0.0
  %3426 = vmatprep.subr.mxu0 0.0
  %3427 = vmatpush2.msra.mxu0 0.0
  %3428 = vmatprep.subr.mxu0 0.0
  %3429 = vmatpush2.msra.mxu0 0.0
  %3430 = vmatprep.subr.mxu0 0.0
  %3431 = vmatpush2.msra.mxu0 0.0
  %3432 = vmatprep.subr.mxu0 0.0
  %3433 = vmatpush2.msra.mxu0 0.0
  %3434 = vmatprep.subr.mxu0 0.0
  %3435 = vmatpush2.msra.mxu0 0.0
  %3436 = vmatprep.subr.mxu0 0.0
  %3437 = vmatpush2.msra.mxu0 0.0
  %3438 = vmatprep.subr.mxu0 0.0
  %3439 = vmatpush2.msra.mxu0 0.0
  %3440 = vmatprep.subr.mxu0 0.0
  %3441 = vmatpush2.msra.mxu0 0.0
  %3442 = vmatprep.subr.mxu0 0.0
  %3443 = vmatpush2.msra.mxu0 0.0
  %3444 = vmatprep.subr.mxu0 0.0
  %3445 = vmatpush2.msra.mxu0 0.0
  %3446 = vmatprep.subr.mxu0 0.0
  %3447 = vmatpush2.msra.mxu0 0.0
  %3448 = vmatprep.subr.mxu0 0.0
  %3449 = vmatpush2.msra.mxu0 0.0
  %3450 = vmatprep.mubr.f32.mxu0 0.0
  %3451 = vmatmul.mubr.f32.gmra.mxu0 %v3384
  %v3452 = vpop.f32.mrf.mxu0
  %v3453 = vadd.f32 0.0, %v3452
  %v3454 = vpop.f32.mrf.mxu0
  %3455 = vdwg.mxu0
  %v3456 = vld [vmem:[#allocation2 + $0x8] sm:$0xff]
  %v3457 = vld [vmem:[#allocation2 + $0x30] sm:$0xff]
  %v3458 = vsel %vm34, %v3456, %v3457
  %v3459 = vadd.f32 %v3458, %v3453
  %v3460 = vxor.u32 %v3459, 2147483648
  %v3461 = vmul.f32 %v3460, 1.442695
  %v3462 = vpow.pop %v3461
  %v3463 = vadd.f32 %v3462, 1.0
  %v3464 = vrcp.pop %v3463
  %v3465 = vmul.f32 1.0, %v3464
  %v3466 = vtanh.pop %v3459
  %v3467 = vmul.f32 %v3465, %v3371
  %3469 = vrot.lane.b32.xlu0 %v3466, 64
  %v3470 = vpop.permute.xlu0 %3469
  %v3472 = vmul.f32 %v3465, %v3470
  %3474 = vrot.lane.b32.xlu0 %v3472, 32
  %v3475 = vpop.permute.xlu0 %3474
  %v3477 = vadd.f32 %v3467, %v3475
  %v3478 = vtanh.pop %v3477
  %3480 = vrot.lane.b32.xlu0 %v3478, 64
  %v3481 = vpop.permute.xlu0 %3480
  %v3483 = vmul.f32 %v3465, %v3481
  %3485 = vrot.lane.b32.xlu0 %v3483, 32
  %v3486 = vpop.permute.xlu0 %3485
  %3488 = vst.msk [vmem:[#allocation3 + $0x8] sm:$0xff] %vm301, %v3486
  %3489 = vst.msk [vmem:[#allocation3 + $0x30] sm:$0xff] %vm303, %v3486
  %v3490 = vsel %vm54, %v3486, 0
  %3492 = vmatprep.subr.mxu0 0.0
  %3493 = vmatpush1.msra.mxu0 0.0
  %3494 = vmatprep.subr.mxu0 0.0
  %3495 = vmatpush1.msra.mxu0 0.0
  %3496 = vmatprep.subr.mxu0 0.0
  %3497 = vmatpush1.msra.mxu0 0.0
  %3498 = vmatprep.subr.mxu0 0.0
  %3499 = vmatpush1.msra.mxu0 0.0
  %3500 = vmatprep.subr.mxu0 0.0
  %3501 = vmatpush1.msra.mxu0 0.0
  %3502 = vmatprep.subr.mxu0 0.0
  %3503 = vmatpush1.msra.mxu0 0.0
  %3504 = vmatprep.subr.mxu0 0.0
  %3505 = vmatpush1.msra.mxu0 0.0
  %3506 = vmatprep.subr.mxu0 0.0
  %3507 = vmatpush1.msra.mxu0 0.0
  %3508 = vmatprep.subr.mxu0 0.0
  %3509 = vmatpush1.msra.mxu0 0.0
  %3510 = vmatprep.subr.mxu0 0.0
  %3511 = vmatpush1.msra.mxu0 0.0
  %3512 = vmatprep.subr.mxu0 0.0
  %3513 = vmatpush1.msra.mxu0 0.0
  %3514 = vmatprep.subr.mxu0 0.0
  %3515 = vmatpush1.msra.mxu0 0.0
  %3516 = vmatprep.subr.mxu0 0.0
  %3517 = vmatpush1.msra.mxu0 %v3279
  %3518 = vmatprep.subr.mxu0 0.0
  %3519 = vmatpush1.msra.mxu0 %v3278
  %3520 = vmatprep.subr.mxu0 0.0
  %3521 = vmatpush1.msra.mxu0 %v3277
  %3522 = vmatprep.subr.mxu0 0.0
  %3523 = vmatpush1.msra.mxu0 %v3276
  %3524 = vmatprep.subr.mxu0 0.0
  %3525 = vmatpush2.msra.mxu0 0.0
  %3526 = vmatprep.subr.mxu0 0.0
  %3527 = vmatpush2.msra.mxu0 0.0
  %3528 = vmatprep.subr.mxu0 0.0
  %3529 = vmatpush2.msra.mxu0 0.0
  %3530 = vmatprep.subr.mxu0 0.0
  %3531 = vmatpush2.msra.mxu0 0.0
  %3532 = vmatprep.subr.mxu0 0.0
  %3533 = vmatpush2.msra.mxu0 0.0
  %3534 = vmatprep.subr.mxu0 0.0
  %3535 = vmatpush2.msra.mxu0 0.0
  %3536 = vmatprep.subr.mxu0 0.0
  %3537 = vmatpush2.msra.mxu0 0.0
  %3538 = vmatprep.subr.mxu0 0.0
  %3539 = vmatpush2.msra.mxu0 0.0
  %3540 = vmatprep.subr.mxu0 0.0
  %3541 = vmatpush2.msra.mxu0 0.0
  %3542 = vmatprep.subr.mxu0 0.0
  %3543 = vmatpush2.msra.mxu0 0.0
  %3544 = vmatprep.subr.mxu0 0.0
  %3545 = vmatpush2.msra.mxu0 0.0
  %3546 = vmatprep.subr.mxu0 0.0
  %3547 = vmatpush2.msra.mxu0 0.0
  %3548 = vmatprep.subr.mxu0 0.0
  %3549 = vmatpush2.msra.mxu0 0.0
  %3550 = vmatprep.subr.mxu0 0.0
  %3551 = vmatpush2.msra.mxu0 0.0
  %3552 = vmatprep.subr.mxu0 0.0
  %3553 = vmatpush2.msra.mxu0 0.0
  %3554 = vmatprep.subr.mxu0 0.0
  %3555 = vmatpush2.msra.mxu0 0.0
  %3556 = vmatprep.mubr.f32.mxu0 0.0
  %3557 = vmatmul.mubr.f32.gmra.mxu0 %v3490
  %v3558 = vpop.f32.mrf.mxu0
  %v3559 = vadd.f32 0.0, %v3558
  %v3560 = vpop.f32.mrf.mxu0
  %3561 = vdwg.mxu0
  %v3562 = vld [vmem:[#allocation2 + $0x10] sm:$0xff]
  %v3563 = vld [vmem:[#allocation2 + $0x28] sm:$0xff]
  %v3564 = vsel %vm34, %v3562, %v3563
  %v3565 = vadd.f32 %v3564, %v3559
  %v3566 = vxor.u32 %v3565, 2147483648
  %v3567 = vmul.f32 %v3566, 1.442695
  %v3568 = vpow.pop %v3567
  %v3569 = vadd.f32 %v3568, 1.0
  %v3570 = vrcp.pop %v3569
  %v3571 = vmul.f32 1.0, %v3570
  %v3572 = vtanh.pop %v3565
  %v3573 = vmul.f32 %v3571, %v3477
  %3575 = vrot.lane.b32.xlu0 %v3572, 64
  %v3576 = vpop.permute.xlu0 %3575
  %v3578 = vmul.f32 %v3571, %v3576
  %3580 = vrot.lane.b32.xlu0 %v3578, 32
  %v3581 = vpop.permute.xlu0 %3580
  %v3583 = vadd.f32 %v3573, %v3581
  %v3584 = vtanh.pop %v3583
  %3586 = vrot.lane.b32.xlu0 %v3584, 64
  %v3587 = vpop.permute.xlu0 %3586
  %v3589 = vmul.f32 %v3571, %v3587
  %3591 = vrot.lane.b32.xlu0 %v3589, 32
  %v3592 = vpop.permute.xlu0 %3591
  %3594 = vst.msk [vmem:[#allocation3 + $0x10] sm:$0xff] %vm301, %v3592
  %3595 = vst.msk [vmem:[#allocation3 + $0x28] sm:$0xff] %vm303, %v3592
  %v3596 = vsel %vm54, %v3592, 0
  %3598 = vmatprep.subr.mxu0 0.0
  %3599 = vmatpush1.msra.mxu0 0.0
  %3600 = vmatprep.subr.mxu0 0.0
  %3601 = vmatpush1.msra.mxu0 0.0
  %3602 = vmatprep.subr.mxu0 0.0
  %3603 = vmatpush1.msra.mxu0 0.0
  %3604 = vmatprep.subr.mxu0 0.0
  %3605 = vmatpush1.msra.mxu0 0.0
  %3606 = vmatprep.subr.mxu0 0.0
  %3607 = vmatpush1.msra.mxu0 0.0
  %3608 = vmatprep.subr.mxu0 0.0
  %3609 = vmatpush1.msra.mxu0 0.0
  %3610 = vmatprep.subr.mxu0 0.0
  %3611 = vmatpush1.msra.mxu0 0.0
  %3612 = vmatprep.subr.mxu0 0.0
  %3613 = vmatpush1.msra.mxu0 0.0
  %3614 = vmatprep.subr.mxu0 0.0
  %3615 = vmatpush1.msra.mxu0 0.0
  %3616 = vmatprep.subr.mxu0 0.0
  %3617 = vmatpush1.msra.mxu0 0.0
  %3618 = vmatprep.subr.mxu0 0.0
  %3619 = vmatpush1.msra.mxu0 0.0
  %3620 = vmatprep.subr.mxu0 0.0
  %3621 = vmatpush1.msra.mxu0 0.0
  %3622 = vmatprep.subr.mxu0 0.0
  %3623 = vmatpush1.msra.mxu0 %v3279
  %3624 = vmatprep.subr.mxu0 0.0
  %3625 = vmatpush1.msra.mxu0 %v3278
  %3626 = vmatprep.subr.mxu0 0.0
  %3627 = vmatpush1.msra.mxu0 %v3277
  %3628 = vmatprep.subr.mxu0 0.0
  %3629 = vmatpush1.msra.mxu0 %v3276
  %3630 = vmatprep.subr.mxu0 0.0
  %3631 = vmatpush2.msra.mxu0 0.0
  %3632 = vmatprep.subr.mxu0 0.0
  %3633 = vmatpush2.msra.mxu0 0.0
  %3634 = vmatprep.subr.mxu0 0.0
  %3635 = vmatpush2.msra.mxu0 0.0
  %3636 = vmatprep.subr.mxu0 0.0
  %3637 = vmatpush2.msra.mxu0 0.0
  %3638 = vmatprep.subr.mxu0 0.0
  %3639 = vmatpush2.msra.mxu0 0.0
  %3640 = vmatprep.subr.mxu0 0.0
  %3641 = vmatpush2.msra.mxu0 0.0
  %3642 = vmatprep.subr.mxu0 0.0
  %3643 = vmatpush2.msra.mxu0 0.0
  %3644 = vmatprep.subr.mxu0 0.0
  %3645 = vmatpush2.msra.mxu0 0.0
  %3646 = vmatprep.subr.mxu0 0.0
  %3647 = vmatpush2.msra.mxu0 0.0
  %3648 = vmatprep.subr.mxu0 0.0
  %3649 = vmatpush2.msra.mxu0 0.0
  %3650 = vmatprep.subr.mxu0 0.0
  %3651 = vmatpush2.msra.mxu0 0.0
  %3652 = vmatprep.subr.mxu0 0.0
  %3653 = vmatpush2.msra.mxu0 0.0
  %3654 = vmatprep.subr.mxu0 0.0
  %3655 = vmatpush2.msra.mxu0 0.0
  %3656 = vmatprep.subr.mxu0 0.0
  %3657 = vmatpush2.msra.mxu0 0.0
  %3658 = vmatprep.subr.mxu0 0.0
  %3659 = vmatpush2.msra.mxu0 0.0
  %3660 = vmatprep.subr.mxu0 0.0
  %3661 = vmatpush2.msra.mxu0 0.0
  %3662 = vmatprep.mubr.f32.mxu0 0.0
  %3663 = vmatmul.mubr.f32.gmra.mxu0 %v3596
  %v3664 = vpop.f32.mrf.mxu0
  %v3665 = vadd.f32 0.0, %v3664
  %v3666 = vpop.f32.mrf.mxu0
  %3667 = vdwg.mxu0
  %v3668 = vld [vmem:[#allocation2 + $0x18] sm:$0xff]
  %v3669 = vld [vmem:[#allocation2 + $0x20] sm:$0xff]
  %v3670 = vsel %vm34, %v3668, %v3669
  %v3671 = vadd.f32 %v3670, %v3665
  %v3672 = vxor.u32 %v3671, 2147483648
  %v3673 = vmul.f32 %v3672, 1.442695
  %v3674 = vpow.pop %v3673
  %v3675 = vadd.f32 %v3674, 1.0
  %v3676 = vrcp.pop %v3675
  %v3677 = vmul.f32 1.0, %v3676
  %v3678 = vtanh.pop %v3671
  %v3679 = vmul.f32 %v3677, %v3583
  %3681 = vrot.lane.b32.xlu0 %v3678, 64
  %v3682 = vpop.permute.xlu0 %3681
  %v3684 = vmul.f32 %v3677, %v3682
  %3686 = vrot.lane.b32.xlu0 %v3684, 32
  %v3687 = vpop.permute.xlu0 %3686
  %v3689 = vadd.f32 %v3679, %v3687
  %v3690 = vtanh.pop %v3689
  %3692 = vrot.lane.b32.xlu0 %v3690, 64
  %v3693 = vpop.permute.xlu0 %3692
  %v3695 = vmul.f32 %v3677, %v3693
  %3697 = vrot.lane.b32.xlu0 %v3695, 32
  %v3698 = vpop.permute.xlu0 %3697
  %3700 = vst.msk [vmem:[#allocation3 + $0x18] sm:$0xff] %vm301, %v3698
  %3701 = vst.msk [vmem:[#allocation3 + $0x20] sm:$0xff] %vm303, %v3698
  %v3702 = vsel %vm54, %v3698, 0
  %3704 = vmatprep.subr.mxu0 0.0
  %3705 = vmatpush1.msra.mxu0 0.0
  %3706 = vmatprep.subr.mxu0 0.0
  %3707 = vmatpush1.msra.mxu0 0.0
  %3708 = vmatprep.subr.mxu0 0.0
  %3709 = vmatpush1.msra.mxu0 0.0
  %3710 = vmatprep.subr.mxu0 0.0
  %3711 = vmatpush1.msra.mxu0 0.0
  %3712 = vmatprep.subr.mxu0 0.0
  %3713 = vmatpush1.msra.mxu0 0.0
  %3714 = vmatprep.subr.mxu0 0.0
  %3715 = vmatpush1.msra.mxu0 0.0
  %3716 = vmatprep.subr.mxu0 0.0
  %3717 = vmatpush1.msra.mxu0 0.0
  %3718 = vmatprep.subr.mxu0 0.0
  %3719 = vmatpush1.msra.mxu0 0.0
  %3720 = vmatprep.subr.mxu0 0.0
  %3721 = vmatpush1.msra.mxu0 0.0
  %3722 = vmatprep.subr.mxu0 0.0
  %3723 = vmatpush1.msra.mxu0 0.0
  %3724 = vmatprep.subr.mxu0 0.0
  %3725 = vmatpush1.msra.mxu0 0.0
  %3726 = vmatprep.subr.mxu0 0.0
  %3727 = vmatpush1.msra.mxu0 0.0
  %3728 = vmatprep.subr.mxu0 0.0
  %3729 = vmatpush1.msra.mxu0 %v3279
  %3730 = vmatprep.subr.mxu0 0.0
  %3731 = vmatpush1.msra.mxu0 %v3278
  %3732 = vmatprep.subr.mxu0 0.0
  %3733 = vmatpush1.msra.mxu0 %v3277
  %3734 = vmatprep.subr.mxu0 0.0
  %3735 = vmatpush1.msra.mxu0 %v3276
  %3736 = vmatprep.subr.mxu0 0.0
  %3737 = vmatpush2.msra.mxu0 0.0
  %3738 = vmatprep.subr.mxu0 0.0
  %3739 = vmatpush2.msra.mxu0 0.0
  %3740 = vmatprep.subr.mxu0 0.0
  %3741 = vmatpush2.msra.mxu0 0.0
  %3742 = vmatprep.subr.mxu0 0.0
  %3743 = vmatpush2.msra.mxu0 0.0
  %3744 = vmatprep.subr.mxu0 0.0
  %3745 = vmatpush2.msra.mxu0 0.0
  %3746 = vmatprep.subr.mxu0 0.0
  %3747 = vmatpush2.msra.mxu0 0.0
  %3748 = vmatprep.subr.mxu0 0.0
  %3749 = vmatpush2.msra.mxu0 0.0
  %3750 = vmatprep.subr.mxu0 0.0
  %3751 = vmatpush2.msra.mxu0 0.0
  %3752 = vmatprep.subr.mxu0 0.0
  %3753 = vmatpush2.msra.mxu0 0.0
  %3754 = vmatprep.subr.mxu0 0.0
  %3755 = vmatpush2.msra.mxu0 0.0
  %3756 = vmatprep.subr.mxu0 0.0
  %3757 = vmatpush2.msra.mxu0 0.0
  %3758 = vmatprep.subr.mxu0 0.0
  %3759 = vmatpush2.msra.mxu0 0.0
  %3760 = vmatprep.subr.mxu0 0.0
  %3761 = vmatpush2.msra.mxu0 0.0
  %3762 = vmatprep.subr.mxu0 0.0
  %3763 = vmatpush2.msra.mxu0 0.0
  %3764 = vmatprep.subr.mxu0 0.0
  %3765 = vmatpush2.msra.mxu0 0.0
  %3766 = vmatprep.subr.mxu0 0.0
  %3767 = vmatpush2.msra.mxu0 0.0
  %3768 = vmatprep.mubr.f32.mxu0 0.0
  %3769 = vmatmul.mubr.f32.gmra.mxu0 %v3702
  %v3770 = vpop.f32.mrf.mxu0
  %v3771 = vadd.f32 0.0, %v3770
  %v3772 = vpop.f32.mrf.mxu0
  %3773 = vdwg.mxu0
  %v3774 = vld [vmem:[#allocation2 + $0x20] sm:$0xff]
  %v3775 = vld [vmem:[#allocation2 + $0x18] sm:$0xff]
  %v3776 = vsel %vm34, %v3774, %v3775
  %v3777 = vadd.f32 %v3776, %v3771
  %v3778 = vxor.u32 %v3777, 2147483648
  %v3779 = vmul.f32 %v3778, 1.442695
  %v3780 = vpow.pop %v3779
  %v3781 = vadd.f32 %v3780, 1.0
  %v3782 = vrcp.pop %v3781
  %v3783 = vmul.f32 1.0, %v3782
  %v3784 = vtanh.pop %v3777
  %v3785 = vmul.f32 %v3783, %v3689
  %3787 = vrot.lane.b32.xlu0 %v3784, 64
  %v3788 = vpop.permute.xlu0 %3787
  %v3790 = vmul.f32 %v3783, %v3788
  %3792 = vrot.lane.b32.xlu0 %v3790, 32
  %v3793 = vpop.permute.xlu0 %3792
  %v3795 = vadd.f32 %v3785, %v3793
  %v3796 = vtanh.pop %v3795
  %3798 = vrot.lane.b32.xlu0 %v3796, 64
  %v3799 = vpop.permute.xlu0 %3798
  %v3801 = vmul.f32 %v3783, %v3799
  %3803 = vrot.lane.b32.xlu0 %v3801, 32
  %v3804 = vpop.permute.xlu0 %3803
  %3806 = vst.msk [vmem:[#allocation3 + $0x20] sm:$0xff] %vm301, %v3804
  %3807 = vst.msk [vmem:[#allocation3 + $0x18] sm:$0xff] %vm303, %v3804
  %v3808 = vsel %vm54, %v3804, 0
  %3810 = vmatprep.subr.mxu0 0.0
  %3811 = vmatpush1.msra.mxu0 0.0
  %3812 = vmatprep.subr.mxu0 0.0
  %3813 = vmatpush1.msra.mxu0 0.0
  %3814 = vmatprep.subr.mxu0 0.0
  %3815 = vmatpush1.msra.mxu0 0.0
  %3816 = vmatprep.subr.mxu0 0.0
  %3817 = vmatpush1.msra.mxu0 0.0
  %3818 = vmatprep.subr.mxu0 0.0
  %3819 = vmatpush1.msra.mxu0 0.0
  %3820 = vmatprep.subr.mxu0 0.0
  %3821 = vmatpush1.msra.mxu0 0.0
  %3822 = vmatprep.subr.mxu0 0.0
  %3823 = vmatpush1.msra.mxu0 0.0
  %3824 = vmatprep.subr.mxu0 0.0
  %3825 = vmatpush1.msra.mxu0 0.0
  %3826 = vmatprep.subr.mxu0 0.0
  %3827 = vmatpush1.msra.mxu0 0.0
  %3828 = vmatprep.subr.mxu0 0.0
  %3829 = vmatpush1.msra.mxu0 0.0
  %3830 = vmatprep.subr.mxu0 0.0
  %3831 = vmatpush1.msra.mxu0 0.0
  %3832 = vmatprep.subr.mxu0 0.0
  %3833 = vmatpush1.msra.mxu0 0.0
  %3834 = vmatprep.subr.mxu0 0.0
  %3835 = vmatpush1.msra.mxu0 %v3279
  %3836 = vmatprep.subr.mxu0 0.0
  %3837 = vmatpush1.msra.mxu0 %v3278
  %3838 = vmatprep.subr.mxu0 0.0
  %3839 = vmatpush1.msra.mxu0 %v3277
  %3840 = vmatprep.subr.mxu0 0.0
  %3841 = vmatpush1.msra.mxu0 %v3276
  %3842 = vmatprep.subr.mxu0 0.0
  %3843 = vmatpush2.msra.mxu0 0.0
  %3844 = vmatprep.subr.mxu0 0.0
  %3845 = vmatpush2.msra.mxu0 0.0
  %3846 = vmatprep.subr.mxu0 0.0
  %3847 = vmatpush2.msra.mxu0 0.0
  %3848 = vmatprep.subr.mxu0 0.0
  %3849 = vmatpush2.msra.mxu0 0.0
  %3850 = vmatprep.subr.mxu0 0.0
  %3851 = vmatpush2.msra.mxu0 0.0
  %3852 = vmatprep.subr.mxu0 0.0
  %3853 = vmatpush2.msra.mxu0 0.0
  %3854 = vmatprep.subr.mxu0 0.0
  %3855 = vmatpush2.msra.mxu0 0.0
  %3856 = vmatprep.subr.mxu0 0.0
  %3857 = vmatpush2.msra.mxu0 0.0
  %3858 = vmatprep.subr.mxu0 0.0
  %3859 = vmatpush2.msra.mxu0 0.0
  %3860 = vmatprep.subr.mxu0 0.0
  %3861 = vmatpush2.msra.mxu0 0.0
  %3862 = vmatprep.subr.mxu0 0.0
  %3863 = vmatpush2.msra.mxu0 0.0
  %3864 = vmatprep.subr.mxu0 0.0
  %3865 = vmatpush2.msra.mxu0 0.0
  %3866 = vmatprep.subr.mxu0 0.0
  %3867 = vmatpush2.msra.mxu0 0.0
  %3868 = vmatprep.subr.mxu0 0.0
  %3869 = vmatpush2.msra.mxu0 0.0
  %3870 = vmatprep.subr.mxu0 0.0
  %3871 = vmatpush2.msra.mxu0 0.0
  %3872 = vmatprep.subr.mxu0 0.0
  %3873 = vmatpush2.msra.mxu0 0.0
  %3874 = vmatprep.mubr.f32.mxu0 0.0
  %3875 = vmatmul.mubr.f32.gmra.mxu0 %v3808
  %v3876 = vpop.f32.mrf.mxu0
  %v3877 = vadd.f32 0.0, %v3876
  %v3878 = vpop.f32.mrf.mxu0
  %3879 = vdwg.mxu0
  %v3880 = vld [vmem:[#allocation2 + $0x28] sm:$0xff]
  %v3881 = vld [vmem:[#allocation2 + $0x10] sm:$0xff]
  %v3882 = vsel %vm34, %v3880, %v3881
  %v3883 = vadd.f32 %v3882, %v3877
  %v3884 = vxor.u32 %v3883, 2147483648
  %v3885 = vmul.f32 %v3884, 1.442695
  %v3886 = vpow.pop %v3885
  %v3887 = vadd.f32 %v3886, 1.0
  %v3888 = vrcp.pop %v3887
  %v3889 = vmul.f32 1.0, %v3888
  %v3890 = vtanh.pop %v3883
  %v3891 = vmul.f32 %v3889, %v3795
  %3893 = vrot.lane.b32.xlu0 %v3890, 64
  %v3894 = vpop.permute.xlu0 %3893
  %v3896 = vmul.f32 %v3889, %v3894
  %3898 = vrot.lane.b32.xlu0 %v3896, 32
  %v3899 = vpop.permute.xlu0 %3898
  %v3901 = vadd.f32 %v3891, %v3899
  %v3902 = vtanh.pop %v3901
  %3904 = vrot.lane.b32.xlu0 %v3902, 64
  %v3905 = vpop.permute.xlu0 %3904
  %v3907 = vmul.f32 %v3889, %v3905
  %3909 = vrot.lane.b32.xlu0 %v3907, 32
  %v3910 = vpop.permute.xlu0 %3909
  %3912 = vst.msk [vmem:[#allocation3 + $0x28] sm:$0xff] %vm301, %v3910
  %3913 = vst.msk [vmem:[#allocation3 + $0x10] sm:$0xff] %vm303, %v3910
  %v3914 = vsel %vm54, %v3910, 0
  %3916 = vmatprep.subr.mxu0 0.0
  %3917 = vmatpush1.msra.mxu0 0.0
  %3918 = vmatprep.subr.mxu0 0.0
  %3919 = vmatpush1.msra.mxu0 0.0
  %3920 = vmatprep.subr.mxu0 0.0
  %3921 = vmatpush1.msra.mxu0 0.0
  %3922 = vmatprep.subr.mxu0 0.0
  %3923 = vmatpush1.msra.mxu0 0.0
  %3924 = vmatprep.subr.mxu0 0.0
  %3925 = vmatpush1.msra.mxu0 0.0
  %3926 = vmatprep.subr.mxu0 0.0
  %3927 = vmatpush1.msra.mxu0 0.0
  %3928 = vmatprep.subr.mxu0 0.0
  %3929 = vmatpush1.msra.mxu0 0.0
  %3930 = vmatprep.subr.mxu0 0.0
  %3931 = vmatpush1.msra.mxu0 0.0
  %3932 = vmatprep.subr.mxu0 0.0
  %3933 = vmatpush1.msra.mxu0 0.0
  %3934 = vmatprep.subr.mxu0 0.0
  %3935 = vmatpush1.msra.mxu0 0.0
  %3936 = vmatprep.subr.mxu0 0.0
  %3937 = vmatpush1.msra.mxu0 0.0
  %3938 = vmatprep.subr.mxu0 0.0
  %3939 = vmatpush1.msra.mxu0 0.0
  %3940 = vmatprep.subr.mxu0 0.0
  %3941 = vmatpush1.msra.mxu0 %v3279
  %3942 = vmatprep.subr.mxu0 0.0
  %3943 = vmatpush1.msra.mxu0 %v3278
  %3944 = vmatprep.subr.mxu0 0.0
  %3945 = vmatpush1.msra.mxu0 %v3277
  %3946 = vmatprep.subr.mxu0 0.0
  %3947 = vmatpush1.msra.mxu0 %v3276
  %3948 = vmatprep.subr.mxu0 0.0
  %3949 = vmatpush2.msra.mxu0 0.0
  %3950 = vmatprep.subr.mxu0 0.0
  %3951 = vmatpush2.msra.mxu0 0.0
  %3952 = vmatprep.subr.mxu0 0.0
  %3953 = vmatpush2.msra.mxu0 0.0
  %3954 = vmatprep.subr.mxu0 0.0
  %3955 = vmatpush2.msra.mxu0 0.0
  %3956 = vmatprep.subr.mxu0 0.0
  %3957 = vmatpush2.msra.mxu0 0.0
  %3958 = vmatprep.subr.mxu0 0.0
  %3959 = vmatpush2.msra.mxu0 0.0
  %3960 = vmatprep.subr.mxu0 0.0
  %3961 = vmatpush2.msra.mxu0 0.0
  %3962 = vmatprep.subr.mxu0 0.0
  %3963 = vmatpush2.msra.mxu0 0.0
  %3964 = vmatprep.subr.mxu0 0.0
  %3965 = vmatpush2.msra.mxu0 0.0
  %3966 = vmatprep.subr.mxu0 0.0
  %3967 = vmatpush2.msra.mxu0 0.0
  %3968 = vmatprep.subr.mxu0 0.0
  %3969 = vmatpush2.msra.mxu0 0.0
  %3970 = vmatprep.subr.mxu0 0.0
  %3971 = vmatpush2.msra.mxu0 0.0
  %3972 = vmatprep.subr.mxu0 0.0
  %3973 = vmatpush2.msra.mxu0 0.0
  %3974 = vmatprep.subr.mxu0 0.0
  %3975 = vmatpush2.msra.mxu0 0.0
  %3976 = vmatprep.subr.mxu0 0.0
  %3977 = vmatpush2.msra.mxu0 0.0
  %3978 = vmatprep.subr.mxu0 0.0
  %3979 = vmatpush2.msra.mxu0 0.0
  %3980 = vmatprep.mubr.f32.mxu0 0.0
  %3981 = vmatmul.mubr.f32.gmra.mxu0 %v3914
  %v3982 = vpop.f32.mrf.mxu0
  %v3983 = vadd.f32 0.0, %v3982
  %v3984 = vpop.f32.mrf.mxu0
  %3985 = vdwg.mxu0
  %v3986 = vld [vmem:[#allocation2 + $0x30] sm:$0xff]
  %v3987 = vld [vmem:[#allocation2 + $0x8] sm:$0xff]
  %v3988 = vsel %vm34, %v3986, %v3987
  %v3989 = vadd.f32 %v3988, %v3983
  %v3990 = vxor.u32 %v3989, 2147483648
  %v3991 = vmul.f32 %v3990, 1.442695
  %v3992 = vpow.pop %v3991
  %v3993 = vadd.f32 %v3992, 1.0
  %v3994 = vrcp.pop %v3993
  %v3995 = vmul.f32 1.0, %v3994
  %v3996 = vtanh.pop %v3989
  %v3997 = vmul.f32 %v3995, %v3901
  %3999 = vrot.lane.b32.xlu0 %v3996, 64
  %v4000 = vpop.permute.xlu0 %3999
  %v4002 = vmul.f32 %v3995, %v4000
  %4004 = vrot.lane.b32.xlu0 %v4002, 32
  %v4005 = vpop.permute.xlu0 %4004
  %v4007 = vadd.f32 %v3997, %v4005
  %v4008 = vtanh.pop %v4007
  %4010 = vrot.lane.b32.xlu0 %v4008, 64
  %v4011 = vpop.permute.xlu0 %4010
  %v4013 = vmul.f32 %v3995, %v4011
  %4015 = vrot.lane.b32.xlu0 %v4013, 32
  %v4016 = vpop.permute.xlu0 %4015
  %4018 = vst.msk [vmem:[#allocation3 + $0x30] sm:$0xff] %vm301, %v4016
  %4019 = vst.msk [vmem:[#allocation3 + $0x8] sm:$0xff] %vm303, %v4016
  %v4020 = vsel %vm54, %v4016, 0
  %4022 = vmatprep.subr.mxu0 0.0
  %4023 = vmatpush1.msra.mxu0 0.0
  %4024 = vmatprep.subr.mxu0 0.0
  %4025 = vmatpush1.msra.mxu0 0.0
  %4026 = vmatprep.subr.mxu0 0.0
  %4027 = vmatpush1.msra.mxu0 0.0
  %4028 = vmatprep.subr.mxu0 0.0
  %4029 = vmatpush1.msra.mxu0 0.0
  %4030 = vmatprep.subr.mxu0 0.0
  %4031 = vmatpush1.msra.mxu0 0.0
  %4032 = vmatprep.subr.mxu0 0.0
  %4033 = vmatpush1.msra.mxu0 0.0
  %4034 = vmatprep.subr.mxu0 0.0
  %4035 = vmatpush1.msra.mxu0 0.0
  %4036 = vmatprep.subr.mxu0 0.0
  %4037 = vmatpush1.msra.mxu0 0.0
  %4038 = vmatprep.subr.mxu0 0.0
  %4039 = vmatpush1.msra.mxu0 0.0
  %4040 = vmatprep.subr.mxu0 0.0
  %4041 = vmatpush1.msra.mxu0 0.0
  %4042 = vmatprep.subr.mxu0 0.0
  %4043 = vmatpush1.msra.mxu0 0.0
  %4044 = vmatprep.subr.mxu0 0.0
  %4045 = vmatpush1.msra.mxu0 0.0
  %4046 = vmatprep.subr.mxu0 0.0
  %4047 = vmatpush1.msra.mxu0 %v3279
  %4048 = vmatprep.subr.mxu0 0.0
  %4049 = vmatpush1.msra.mxu0 %v3278
  %4050 = vmatprep.subr.mxu0 0.0
  %4051 = vmatpush1.msra.mxu0 %v3277
  %4052 = vmatprep.subr.mxu0 0.0
  %4053 = vmatpush1.msra.mxu0 %v3276
  %4054 = vmatprep.subr.mxu0 0.0
  %4055 = vmatpush2.msra.mxu0 0.0
  %4056 = vmatprep.subr.mxu0 0.0
  %4057 = vmatpush2.msra.mxu0 0.0
  %4058 = vmatprep.subr.mxu0 0.0
  %4059 = vmatpush2.msra.mxu0 0.0
  %4060 = vmatprep.subr.mxu0 0.0
  %4061 = vmatpush2.msra.mxu0 0.0
  %4062 = vmatprep.subr.mxu0 0.0
  %4063 = vmatpush2.msra.mxu0 0.0
  %4064 = vmatprep.subr.mxu0 0.0
  %4065 = vmatpush2.msra.mxu0 0.0
  %4066 = vmatprep.subr.mxu0 0.0
  %4067 = vmatpush2.msra.mxu0 0.0
  %4068 = vmatprep.subr.mxu0 0.0
  %4069 = vmatpush2.msra.mxu0 0.0
  %4070 = vmatprep.subr.mxu0 0.0
  %4071 = vmatpush2.msra.mxu0 0.0
  %4072 = vmatprep.subr.mxu0 0.0
  %4073 = vmatpush2.msra.mxu0 0.0
  %4074 = vmatprep.subr.mxu0 0.0
  %4075 = vmatpush2.msra.mxu0 0.0
  %4076 = vmatprep.subr.mxu0 0.0
  %4077 = vmatpush2.msra.mxu0 0.0
  %4078 = vmatprep.subr.mxu0 0.0
  %4079 = vmatpush2.msra.mxu0 0.0
  %4080 = vmatprep.subr.mxu0 0.0
  %4081 = vmatpush2.msra.mxu0 0.0
  %4082 = vmatprep.subr.mxu0 0.0
  %4083 = vmatpush2.msra.mxu0 0.0
  %4084 = vmatprep.subr.mxu0 0.0
  %4085 = vmatpush2.msra.mxu0 0.0
  %4086 = vmatprep.mubr.f32.mxu0 0.0
  %4087 = vmatmul.mubr.f32.gmra.mxu0 %v4020
  %v4088 = vpop.f32.mrf.mxu0
  %v4089 = vadd.f32 0.0, %v4088
  %v4090 = vpop.f32.mrf.mxu0
  %4091 = vdwg.mxu0
  %v4092 = vld [vmem:[#allocation2 + $0x38] sm:$0xff]
  %v4093 = vld [vmem:[#allocation2] sm:$0xff]
  %v4094 = vsel %vm34, %v4092, %v4093
  %v4095 = vadd.f32 %v4094, %v4089
  %v4096 = vxor.u32 %v4095, 2147483648
  %v4097 = vmul.f32 %v4096, 1.442695
  %v4098 = vpow.pop %v4097
  %v4099 = vadd.f32 %v4098, 1.0
  %v4100 = vrcp.pop %v4099
  %v4101 = vmul.f32 1.0, %v4100
  %v4102 = vtanh.pop %v4095
  %v4103 = vmul.f32 %v4101, %v4007
  %4105 = vrot.lane.b32.xlu0 %v4102, 64
  %v4106 = vpop.permute.xlu0 %4105
  %v4108 = vmul.f32 %v4101, %v4106
  %4110 = vrot.lane.b32.xlu0 %v4108, 32
  %v4111 = vpop.permute.xlu0 %4110
  %v4113 = vadd.f32 %v4103, %v4111
  %v4114 = vtanh.pop %v4113
  %4116 = vrot.lane.b32.xlu0 %v4114, 64
  %v4117 = vpop.permute.xlu0 %4116
  %v4119 = vmul.f32 %v4101, %v4117
  %4121 = vrot.lane.b32.xlu0 %v4119, 32
  %v4122 = vpop.permute.xlu0 %4121
  %4124 = vst.msk [vmem:[#allocation3 + $0x38] sm:$0xff] %vm301, %v4122
  %4125 = vst.msk [vmem:[#allocation3] sm:$0xff] %vm303, %v4122
  %s4126 = scalar_lea.vmem %s5, 48
  %4127 = vst.msk [vmem:[%s4126] sm:$0xff] %vm301, %v4122
  %4128 = vrot.lane.b32.xlu0 %v4119, 16
  %v4129 = vpop.permute.xlu0 %4128
  %s4131 = scalar_lea.vmem %s5, 56
  %4132 = vst.msk [vmem:[%s4131] sm:$0xff] %vm301, %v4129
  %4134 = vrot.lane.b32.xlu0 %v4113, 96
  %v4135 = vpop.permute.xlu0 %4134
  %s4137 = scalar_lea.vmem %s6, 48
  %4138 = vst.msk [vmem:[%s4137] sm:$0xff] %vm301, %v4135
  %4139 = vrot.lane.b32.xlu0 %v4113, 80
  %v4140 = vpop.permute.xlu0 %4139
  %s4142 = scalar_lea.vmem %s6, 56
  %4143 = vst.msk [vmem:[%s4142] sm:$0xff] %vm301, %v4140
  %v4144 = vld [vmem:[#allocation3] sm:$0xff]
  %v4145 = vld [vmem:[#allocation3 + $0x8] sm:$0xff]
  %v4146 = vld [vmem:[#allocation3 + $0x10] sm:$0xff]
  %v4147 = vld [vmem:[#allocation3 + $0x18] sm:$0xff]
  %v4148 = vld [vmem:[#allocation3 + $0x20] sm:$0xff]
  %v4149 = vld [vmem:[#allocation3 + $0x28] sm:$0xff]
  %v4150 = vld [vmem:[#allocation3 + $0x30] sm:$0xff]
  %v4151 = vld [vmem:[#allocation3 + $0x38] sm:$0xff]
  %4152 = vst.msk [vmem:[%s4] sm:$0xff] %vm54, %v4144
  %4153 = vst.msk [vmem:[%s4 + $0x8] sm:$0xff] %vm54, %v4145
  %4154 = vst.msk [vmem:[%s4 + $0x10] sm:$0xff] %vm54, %v4146
  %4155 = vst.msk [vmem:[%s4 + $0x18] sm:$0xff] %vm54, %v4147
  %4156 = vst.msk [vmem:[%s4 + $0x20] sm:$0xff] %vm54, %v4148
  %4157 = vst.msk [vmem:[%s4 + $0x28] sm:$0xff] %vm54, %v4149
  %4158 = vst.msk [vmem:[%s4 + $0x30] sm:$0xff] %vm54, %v4150
  %4159 = vst.msk [vmem:[%s4 + $0x38] sm:$0xff] %vm54, %v4151
  // Predicated region
  $region18: #{encoder_forward.1} parent=0 // pred_check
    _
  $region19: #{encoder_forward.1} parent=0 // pred_check_branch
    %4161 = sbr.rel (0) target = $region21
  $region20: #{encoder_forward.1} parent=0 // pred_region
    _
  $region21: #{encoder_forward.1} parent=0 // pred_fallthru
    _
  // Predicated region
  $region22: #{encoder_forward.1} parent=0 // pred_check
    _
  $region23: #{encoder_forward.1} parent=0 // pred_check_branch
    %4163 = sbr.rel (0) target = $region25
  $region24: #{encoder_forward.1} parent=0 // pred_region
    _
  $region25: #{encoder_forward.1} parent=0 // pred_fallthru
    _
  // Predicated region
  $region26: #{encoder_forward.1} parent=0 // pred_check
    _
  $region27: #{encoder_forward.1} parent=0 // pred_check_branch
    %4165 = sbr.rel (0) target = $region29
  $region28: #{encoder_forward.1} parent=0 // pred_region
    _
  $region29: #{encoder_forward.1} parent=0 // pred_fallthru
    _
  // Predicated region
  $region30: #{encoder_forward.1} parent=0 // pred_check
    _
  $region31: #{encoder_forward.1} parent=0 // pred_check_branch
    %4167 = sbr.rel (0) target = $region33
  $region32: #{encoder_forward.1} parent=0 // pred_region
    _
  $region33: #{encoder_forward.1} parent=0 // pred_fallthru
    _
  // Predicated region
  $region34: #{encoder_forward.1} parent=0 // pred_check
    _
  $region35: #{encoder_forward.1} parent=0 // pred_check_branch
    %4169 = sbr.rel (0) target = $region37
  $region36: #{encoder_forward.1} parent=0 // pred_region
    _
  $region37: #{encoder_forward.1} parent=0 // pred_fallthru
    _
  // Predicated region
  $region38: #{encoder_forward.1} parent=0 // pred_check
    _
  $region39: #{encoder_forward.1} parent=0 // pred_check_branch
    %4171 = sbr.rel (0) target = $region41
  $region40: #{encoder_forward.1} parent=0 // pred_region
    _
  $region41: #{encoder_forward.1} parent=0 // pred_fallthru
    _

</llo_original>
